<compile_context>
chip_gen: v7x
topology: tpu7x:2x2x1
jax: 0.10.0
libtpu: 0.0.40
codegen_flags: <defaults>
</compile_context>

<pallas_src>
import jax
import jax.numpy as jnp
from jax import lax
from jax.experimental import pallas as pl
from jax.experimental.pallas import tpu as pltpu


# ----------------------------------------------------------------------------
# small helpers
# ----------------------------------------------------------------------------

def _row_tile(r, cap=512):
    """Largest row tile <= cap that divides r (multiple of 8 when actually tiling)."""
    if r <= cap:
        return r
    for t in range(cap, 7, -8):
        if r % t == 0:
            return t
    return r


def _div_tile(n, cap):
    """Largest divisor of n that is <= cap."""
    t = min(n, cap)
    while n % t:
        t -= 1
    return t


def _im2col_3x3(x):
    """(N,H,W,C) -> (N*H*W, 9*C) contiguous patches for 3x3 conv, stride 1, pad 1.

    Column index = (dy*3 + dx) * C + c, matching the (9*Cin, Cout) weight layout,
    so each R-tile is one dense DMA stream into the GEMM kernel.
    """
    n, h, w, c = x.shape
    xp = jnp.pad(x, ((0, 0), (1, 1), (1, 1), (0, 0)))
    taps = [xp[:, dy:dy + h, dx:dx + w, :] for dy in range(3) for dx in range(3)]
    return jnp.concatenate(taps, axis=-1).reshape(n * h * w, 9 * c)


def _bn_scale_shift(gamma, beta, mean, var, eps=1e-5):
    scale = gamma.astype(jnp.float32) * lax.rsqrt(var + eps)
    shift = beta.astype(jnp.float32) - mean * scale
    cout = scale.shape[0]
    return scale.reshape(1, cout), shift.reshape(1, cout)


# ----------------------------------------------------------------------------
# Pallas kernels
# ----------------------------------------------------------------------------

def _gemm_stats_kernel(x_ref, w_ref, y_ref, s_ref):
    # One GEMM per R-tile (taps folded into K), plus per-tile BN partial sums.
    acc = jnp.dot(x_ref[...], w_ref[...], preferred_element_type=jnp.float32)
    y_ref[...] = acc
    ssum = jnp.sum(acc, axis=0, keepdims=True)          # (1, Cout)
    ssq = jnp.sum(acc * acc, axis=0, keepdims=True)     # (1, Cout)
    s_ref[...] = jnp.concatenate([ssum, ssq], axis=0)[None]


def _bn_relu_kernel(y_ref, sc_ref, sh_ref, o_ref):
    o_ref[...] = jnp.maximum(
        y_ref[...] * sc_ref[...] + sh_ref[...], 0.0).astype(o_ref.dtype)


def _bn_relu_proj_kernel(y_ref, sc_ref, sh_ref, w_ref, b_ref, o_ref):
    # BN + ReLU fused with the final 1x1 conv (+bias) epilogue.
    a = jnp.maximum(y_ref[...] * sc_ref[...] + sh_ref[...], 0.0)
    o_ref[...] = jnp.dot(a, w_ref[...],
                         preferred_element_type=jnp.float32) + b_ref[...]


def _gemm_bias_kernel(x_ref, w_ref, b_ref, o_ref):
    o_ref[...] = (jnp.dot(x_ref[...], w_ref[...],
                          preferred_element_type=jnp.float32)
                  + b_ref[...]).astype(o_ref.dtype)


def _maxpool_kernel(x_ref, o_ref):
    v = x_ref[0]                          # (TH, 2, Wh, 2, C)
    v = jnp.maximum(v[:, 0], v[:, 1])     # max over the two pooled rows
    o_ref[0] = jnp.max(v, axis=2)         # max over the two pooled columns


# ----------------------------------------------------------------------------
# op wrappers
# ----------------------------------------------------------------------------

def _conv3x3_gemm(x, w):
    """x: (N,H,W,Cin) bf16, w: (9*Cin, Cout) f32 -> (y (R,Cout) f32, mean, var)."""
    n, h, wd, cin = x.shape
    r = n * h * wd
    cout = w.shape[-1]
    cols = _im2col_3x3(x)                 # (R, 9*Cin) bf16, contiguous
    k = cols.shape[-1]
    tm = _row_tile(r)
    nt = r // tm

    y, stats = pl.pallas_call(
        _gemm_stats_kernel,
        out_shape=(jax.ShapeDtypeStruct((r, cout), jnp.float32),
                   jax.ShapeDtypeStruct((nt, 2, cout), jnp.float32)),
        grid=(nt,),
        in_specs=[
            pl.BlockSpec((tm, k), lambda i: (i, 0)),
            pl.BlockSpec((k, cout), lambda i: (0, 0)),
        ],
        out_specs=(
            pl.BlockSpec((tm, cout), lambda i: (i, 0)),
            pl.BlockSpec((1, 2, cout), lambda i: (i, 0, 0)),
        ),
        compiler_params=pltpu.CompilerParams(
            dimension_semantics=("parallel",)),
    )(cols, w.astype(jnp.bfloat16))

    # Tiny (nt, Cout) reductions: do them in plain JAX.
    ssum = jnp.sum(stats[:, 0, :], axis=0)
    ssq = jnp.sum(stats[:, 1, :], axis=0)
    mean = ssum / r
    # TODO(synk): for very large R a mean-centered variance pass would be safer;
    # fine in f32 at these sizes.
    var = jnp.maximum(ssq / r - mean * mean, 0.0)       # biased (train-mode) var
    return y, mean, var


def conv3x3_bn_relu(x, w, gamma, beta):
    """Fused Conv2d(3,1,1,no bias) + train-mode BatchNorm + ReLU. NHWC bf16 in/out."""
    n, h, wd, _ = x.shape
    cout = w.shape[-1]
    y, mean, var = _conv3x3_gemm(x, w)
    sc, sh = _bn_scale_shift(gamma, beta, mean, var)
    r = n * h * wd
    tm = _row_tile(r)

    out = pl.pallas_call(
        _bn_relu_kernel,
        out_shape=jax.ShapeDtypeStruct((r, cout), jnp.bfloat16),
        grid=(r // tm,),
        in_specs=[
            pl.BlockSpec((tm, cout), lambda i: (i, 0)),
            pl.BlockSpec((1, cout), lambda i: (0, 0)),
            pl.BlockSpec((1, cout), lambda i: (0, 0)),
        ],
        out_specs=pl.BlockSpec((tm, cout), lambda i: (i, 0)),
        compiler_params=pltpu.CompilerParams(
            dimension_semantics=("parallel",)),
    )(y, sc, sh)
    return out.reshape(n, h, wd, cout)


def conv3x3_bn_relu_project(x, w, gamma, beta, w1, b1):
    """Last conv of the network: BN + ReLU fused with the final 1x1 conv + bias."""
    n, h, wd, _ = x.shape
    cout = w.shape[-1]
    outc = w1.shape[-1]
    y, mean, var = _conv3x3_gemm(x, w)
    sc, sh = _bn_scale_shift(gamma, beta, mean, var)
    r = n * h * wd
    tm = _row_tile(r)

    out = pl.pallas_call(
        _bn_relu_proj_kernel,
        out_shape=jax.ShapeDtypeStruct((r, outc), jnp.float32),
        grid=(r // tm,),
        in_specs=[
            pl.BlockSpec((tm, cout), lambda i: (i, 0)),
            pl.BlockSpec((1, cout), lambda i: (0, 0)),
            pl.BlockSpec((1, cout), lambda i: (0, 0)),
            pl.BlockSpec((cout, outc), lambda i: (0, 0)),
            pl.BlockSpec((1, outc), lambda i: (0, 0)),
        ],
        out_specs=pl.BlockSpec((tm, outc), lambda i: (i, 0)),
        compiler_params=pltpu.CompilerParams(
            dimension_semantics=("parallel",)),
    )(y, sc, sh, w1.astype(jnp.float32), b1.reshape(1, outc).astype(jnp.float32))
    return out.reshape(n, h, wd, outc)


def maxpool2x2(x):
    """MaxPool2d(kernel=2, stride=2) on NHWC input; reads x once, writes out once."""
    n, h, w, c = x.shape
    hh, wh = h // 2, w // 2
    xr = x.reshape(n, hh, 2, wh, 2, c)    # contiguous view, no data movement
    th = _div_tile(hh, cap=64)

    return pl.pallas_call(
        _maxpool_kernel,
        out_shape=jax.ShapeDtypeStruct((n, hh, wh, c), x.dtype),
        grid=(n, hh // th),
        in_specs=[pl.BlockSpec((1, th, 2, wh, 2, c),
                               lambda i, j: (i, j, 0, 0, 0, 0))],
        out_specs=pl.BlockSpec((1, th, wh, c), lambda i, j: (i, j, 0, 0)),
        compiler_params=pltpu.CompilerParams(
            dimension_semantics=("parallel", "parallel")),
    )(xr)


def conv_transpose2x2(x, w, bias):
    """ConvTranspose2d(kernel=2, stride=2) on NHWC input.

    x    : (N, H, W, Cin) bf16
    w    : (Cin, 4*Cout) f32, column = (dy*2+dx)*Cout + co  (== PyTorch w[ci,co,dy,dx])
    bias : (Cout,)
    returns (N, 2H, 2W, Cout) bf16
    """
    n, h, wd, cin = x.shape
    cout4 = w.shape[-1]
    cout = cout4 // 4
    r = n * h * wd
    tm = _row_tile(r)
    xf = x.reshape(r, cin)
    b4 = jnp.tile(bias.astype(jnp.float32), 4).reshape(1, cout4)

    y = pl.pallas_call(
        _gemm_bias_kernel,
        out_shape=jax.ShapeDtypeStruct((r, cout4), jnp.bfloat16),
        grid=(r // tm,),
        in_specs=[
            pl.BlockSpec((tm, cin), lambda i: (i, 0)),
            pl.BlockSpec((cin, cout4), lambda i: (0, 0)),
            pl.BlockSpec((1, cout4), lambda i: (0, 0)),
        ],
        out_specs=pl.BlockSpec((tm, cout4), lambda i: (i, 0)),
        compiler_params=pltpu.CompilerParams(
            dimension_semantics=("parallel",)),
    )(xf, w.astype(jnp.bfloat16), b4)

    # glue: interleave the 4 taps back into the upsampled spatial grid
    t = y.reshape(n, h, wd, 2, 2, cout)
    t = jnp.transpose(t, (0, 1, 3, 2, 4, 5))     # (N, H, 2, W, 2, Cout)
    return t.reshape(n, 2 * h, 2 * wd, cout)


# ----------------------------------------------------------------------------
# UNET forward
# ----------------------------------------------------------------------------

def double_conv_apply(x, dc):
    (w1, g1, b1), (w2, g2, b2) = dc
    x = conv3x3_bn_relu(x, w1, g1, b1)
    x = conv3x3_bn_relu(x, w2, g2, b2)
    return x


def unet_forward(x_nchw, params):
    # NCHW at the boundary (PyTorch convention); NHWC bf16 inside the kernels.
    x = jnp.transpose(x_nchw, (0, 2, 3, 1)).astype(jnp.bfloat16)

    skips = []
    for dc in params["downs"]:
        x = double_conv_apply(x, dc)
        skips.append(x)
        x = maxpool2x2(x)

    x = double_conv_apply(x, params["bottom"])

    skips = skips[::-1]
    n_up = len(params["ups"])
    for idx, ((wt, bt, dc), skip) in enumerate(zip(params["ups"], skips)):
        x = conv_transpose2x2(x, wt, bt)
        # TODO(synk): TF.resize fallback not implemented; with power-of-2 spatial
        # sizes the shapes always match, so the branch is never taken.
        x = jnp.concatenate([skip, x], axis=-1)          # == torch.cat((skip, x), dim=1)
        (w1, g1, b1), (w2, g2, b2) = dc
        x = conv3x3_bn_relu(x, w1, g1, b1)
        if idx == n_up - 1:
            # Fuse the last BN+ReLU with the final 1x1 conv + bias epilogue.
            y = conv3x3_bn_relu_project(x, w2, g2, b2,
                                        params["final_w"], params["final_b"])
            return jnp.transpose(y, (0, 3, 1, 2)).astype(jnp.float32)   # back to NCHW
        x = conv3x3_bn_relu(x, w2, g2, b2)


# ----------------------------------------------------------------------------
# Deterministic parameter initialization (shapes follow the PyTorch __init__)
# ----------------------------------------------------------------------------

def init_unet_params(key, in_channels=3, out_channels=1, features=(8, 16)):
    def conv3_w(k, cin, cout):
        # (9*Cin, Cout): row = (dy*3+dx)*Cin + ci  (== PyTorch weight[co, ci, dy, dx])
        return jax.random.normal(k, (9 * cin, cout), jnp.float32) * (1.0 / (9 * cin) ** 0.5)

    def dc_params(k, cin, cout):
        k1, k2 = jax.random.split(k)
        # gamma=1, beta=0: PyTorch BatchNorm2d default init
        return (
            (conv3_w(k1, cin, cout), jnp.ones((cout,), jnp.float32), jnp.zeros((cout,), jnp.float32)),
            (conv3_w(k2, cout, cout), jnp.ones((cout,), jnp.float32), jnp.zeros((cout,), jnp.float32)),
        )

    params = {"downs": [], "ups": []}
    cin = in_channels
    for f in features:
        key, sub = jax.random.split(key)
        params["downs"].append(dc_params(sub, cin, f))
        cin = f

    key, sub = jax.random.split(key)
    params["bottom"] = dc_params(sub, features[-1], features[-1] * 2)

    for f in reversed(features):
        key, k1, k2, k3 = jax.random.split(key, 4)
        # (Cin, 4*Cout): col = (dy*2+dx)*Cout + co  (== PyTorch weight[ci, co, dy, dx])
        wt = jax.random.normal(k1, (f * 2, 4 * f), jnp.float32) * (1.0 / (4 * f * 2) ** 0.5)
        bt = jax.random.normal(k2, (f,), jnp.float32) * 0.01
        params["ups"].append((wt, bt, dc_params(k3, f * 2, f)))

    key, k1, k2 = jax.random.split(key, 3)
    params["final_w"] = jax.random.normal(k1, (features[0], out_channels), jnp.float32) * (1.0 / features[0] ** 0.5)
    params["final_b"] = jax.random.normal(k2, (out_channels,), jnp.float32) * 0.01
    return params


# ----------------------------------------------------------------------------

if __name__ == "__main__":
    key = jax.random.PRNGKey(0)
    kp, kx = jax.random.split(key)

    # Small synthetic config: UNET(in_channels=3, out_channels=1, features=[8, 16])
    params = init_unet_params(kp, in_channels=3, out_channels=1, features=(8, 16))
    x = jax.random.normal(kx, (2, 3, 16, 16), jnp.float32)   # NCHW like PyTorch

    fwd = jax.jit(unet_forward)
    out = jax.block_until_ready(fwd(x, params))

    assert out.shape == (2, 1, 16, 16), out.shape
    assert out.dtype == jnp.float32
    assert bool(jnp.all(jnp.isfinite(out)))
    print("KERNEL_OK")
</pallas_src>

<mosaic_0001>
module attributes {stable_mosaic.version = 11 : i64} {
  func.func @_bn_relu_kernel(%arg0: i32, %arg1: memref<512x8xf32, #tpu.memory_space<vmem>>, %arg2: memref<1x8xf32, #tpu.memory_space<vmem>>, %arg3: memref<1x8xf32, #tpu.memory_space<vmem>>, %arg4: memref<512x8xbf16, #tpu.memory_space<vmem>>) attributes {dimension_semantics = [#tpu.dimension_semantics<parallel>], iteration_bounds = array<i64: 1>, scalar_prefetch = 0 : i64, scratch_operands = 0 : i64, tpu.core_type = #tpu.core_type<tc>, window_params = [{transform_indices = @transform_0, window_bounds = array<i64: 512, 8>}, {pipeline_mode = #tpu.pipeline_mode<synchronous>, transform_indices = @transform_1, window_bounds = array<i64: 1, 8>}, {pipeline_mode = #tpu.pipeline_mode<synchronous>, transform_indices = @transform_2, window_bounds = array<i64: 1, 8>}, {transform_indices = @transform_3, window_bounds = array<i64: 512, 8>}]} {
    %c0 = arith.constant 0 : index
    %c0_0 = arith.constant 0 : index
    %0 = vector.load %arg1[%c0, %c0_0] : memref<512x8xf32, #tpu.memory_space<vmem>>, vector<512x8xf32>
    %c0_1 = arith.constant 0 : index
    %c0_2 = arith.constant 0 : index
    %1 = vector.load %arg2[%c0_1, %c0_2] : memref<1x8xf32, #tpu.memory_space<vmem>>, vector<1x8xf32>
    %2 = vector.broadcast %1 : vector<1x8xf32> to vector<512x8xf32>
    %3 = arith.mulf %0, %2 : vector<512x8xf32>
    %c0_3 = arith.constant 0 : index
    %c0_4 = arith.constant 0 : index
    %4 = vector.load %arg3[%c0_3, %c0_4] : memref<1x8xf32, #tpu.memory_space<vmem>>, vector<1x8xf32>
    %5 = vector.broadcast %4 : vector<1x8xf32> to vector<512x8xf32>
    %6 = arith.addf %3, %5 : vector<512x8xf32>
    %cst = arith.constant 0.000000e+00 : f32
    %7 = vector.broadcast %cst : f32 to vector<512x8xf32>
    %8 = arith.maximumf %6, %7 : vector<512x8xf32>
    %9 = arith.truncf %8 : vector<512x8xf32> to vector<512x8xbf16>
    %c0_5 = arith.constant 0 : index
    %c0_6 = arith.constant 0 : index
    %10 = vector.load %arg4[%c0_5, %c0_6] : memref<512x8xbf16, #tpu.memory_space<vmem>>, vector<512x8xbf16>
    tpu.vector_store %arg4[%c0_5, %c0_6], %9 {strides = array<i32>} : memref<512x8xbf16, #tpu.memory_space<vmem>>, vector<512x8xbf16>,
    return
  }
  func.func @transform_0(%arg0: i32) -> (i32, i32) {
    %c0_i32 = arith.constant 0 : i32
    %c0_i32_0 = arith.constant 0 : i32
    return %arg0, %c0_i32 : i32, i32
  }
  func.func @transform_1(%arg0: i32) -> (i32, i32) {
    %c0_i32 = arith.constant 0 : i32
    %c0_i32_0 = arith.constant 0 : i32
    %c0_i32_1 = arith.constant 0 : i32
    return %c0_i32, %c0_i32_0 : i32, i32
  }
  func.func @transform_2(%arg0: i32) -> (i32, i32) {
    %c0_i32 = arith.constant 0 : i32
    %c0_i32_0 = arith.constant 0 : i32
    %c0_i32_1 = arith.constant 0 : i32
    return %c0_i32, %c0_i32_0 : i32, i32
  }
  func.func @transform_3(%arg0: i32) -> (i32, i32) {
    %c0_i32 = arith.constant 0 : i32
    %c0_i32_0 = arith.constant 0 : i32
    return %arg0, %c0_i32 : i32, i32
  }
}

module attributes {stable_mosaic.version = 11 : i64} {
  func.func @_gemm_stats_kernel(%arg0: i32, %arg1: memref<512x27xbf16, #tpu.memory_space<vmem>>, %arg2: memref<27x8xbf16, #tpu.memory_space<vmem>>, %arg3: memref<512x8xf32, #tpu.memory_space<vmem>>, %arg4: memref<1x2x8xf32, #tpu.memory_space<vmem>>) attributes {dimension_semantics = [#tpu.dimension_semantics<parallel>], iteration_bounds = array<i64: 1>, scalar_prefetch = 0 : i64, scratch_operands = 0 : i64, tpu.core_type = #tpu.core_type<tc>, window_params = [{transform_indices = @transform_0, window_bounds = array<i64: 512, 27>}, {pipeline_mode = #tpu.pipeline_mode<synchronous>, transform_indices = @transform_1, window_bounds = array<i64: 27, 8>}, {transform_indices = @transform_2, window_bounds = array<i64: 512, 8>}, {transform_indices = @transform_3, window_bounds = array<i64: 1, 2, 8>}]} {
    %c0 = arith.constant 0 : index
    %c0_0 = arith.constant 0 : index
    %0 = vector.load %arg1[%c0, %c0_0] : memref<512x27xbf16, #tpu.memory_space<vmem>>, vector<512x27xbf16>
    %c0_1 = arith.constant 0 : index
    %c0_2 = arith.constant 0 : index
    %1 = vector.load %arg2[%c0_1, %c0_2] : memref<27x8xbf16, #tpu.memory_space<vmem>>, vector<27x8xbf16>
    %cst = arith.constant dense<0.000000e+00> : vector<512x8xf32>
    %2 = tpu.matmul %0, %1, %cst {dimension_numbers = #tpu.dot_dimension_numbers<[1], [0], [0], [1], [0, 0, 1, 1], [], []>} : vector<512x27xbf16>, vector<27x8xbf16>, vector<512x8xf32> -> vector<512x8xf32>
    %c0_3 = arith.constant 0 : index
    %c0_4 = arith.constant 0 : index
    %3 = vector.load %arg3[%c0_3, %c0_4] : memref<512x8xf32, #tpu.memory_space<vmem>>, vector<512x8xf32>
    tpu.vector_store %arg3[%c0_3, %c0_4], %2 {strides = array<i32>} : memref<512x8xf32, #tpu.memory_space<vmem>>, vector<512x8xf32>,
    %cst_5 = arith.constant dense<0.000000e+00> : vector<8xf32>
    %4 = vector.multi_reduction <add>, %2, %cst_5 [0] : vector<512x8xf32> to vector<8xf32>
    %5 = vector.shape_cast %4 : vector<8xf32> to vector<1x8xf32>
    %6 = arith.mulf %2, %2 : vector<512x8xf32>
    %cst_6 = arith.constant dense<0.000000e+00> : vector<8xf32>
    %7 = vector.multi_reduction <add>, %6, %cst_6 [0] : vector<512x8xf32> to vector<8xf32>
    %8 = vector.shape_cast %7 : vector<8xf32> to vector<1x8xf32>
    %9 = tpu.concatenate %5, %8 in 0 : vector<1x8xf32>, vector<1x8xf32> -> vector<2x8xf32>
    %10 = vector.shape_cast %9 : vector<2x8xf32> to vector<1x2x8xf32>
    %c0_7 = arith.constant 0 : index
    %c0_8 = arith.constant 0 : index
    %c0_9 = arith.constant 0 : index
    %11 = vector.load %arg4[%c0_7, %c0_8, %c0_9] : memref<1x2x8xf32, #tpu.memory_space<vmem>>, vector<1x2x8xf32>
    tpu.vector_store %arg4[%c0_7, %c0_8, %c0_9], %10 {strides = array<i32>} : memref<1x2x8xf32, #tpu.memory_space<vmem>>, vector<1x2x8xf32>,
    return
  }
  func.func @transform_0(%arg0: i32) -> (i32, i32) {
    %c0_i32 = arith.constant 0 : i32
    %c0_i32_0 = arith.constant 0 : i32
    return %arg0, %c0_i32 : i32, i32
  }
  func.func @transform_1(%arg0: i32) -> (i32, i32) {
    %c0_i32 = arith.constant 0 : i32
    %c0_i32_0 = arith.constant 0 : i32
    %c0_i32_1 = arith.constant 0 : i32
    return %c0_i32, %c0_i32_0 : i32, i32
  }
  func.func @transform_2(%arg0: i32) -> (i32, i32) {
    %c0_i32 = arith.constant 0 : i32
    %c0_i32_0 = arith.constant 0 : i32
    return %arg0, %c0_i32 : i32, i32
  }
  func.func @transform_3(%arg0: i32) -> (i32, i32, i32) {
    %c0_i32 = arith.constant 0 : i32
    %c0_i32_0 = arith.constant 0 : i32
    %c0_i32_1 = arith.constant 0 : i32
    return %arg0, %c0_i32, %c0_i32_0 : i32, i32, i32
  }
}

module attributes {stable_mosaic.version = 11 : i64} {
  func.func @_gemm_stats_kernel(%arg0: i32, %arg1: memref<512x72xbf16, #tpu.memory_space<vmem>>, %arg2: memref<72x8xbf16, #tpu.memory_space<vmem>>, %arg3: memref<512x8xf32, #tpu.memory_space<vmem>>, %arg4: memref<1x2x8xf32, #tpu.memory_space<vmem>>) attributes {dimension_semantics = [#tpu.dimension_semantics<parallel>], iteration_bounds = array<i64: 1>, scalar_prefetch = 0 : i64, scratch_operands = 0 : i64, tpu.core_type = #tpu.core_type<tc>, window_params = [{transform_indices = @transform_0, window_bounds = array<i64: 512, 72>}, {pipeline_mode = #tpu.pipeline_mode<synchronous>, transform_indices = @transform_1, window_bounds = array<i64: 72, 8>}, {transform_indices = @transform_2, window_bounds = array<i64: 512, 8>}, {transform_indices = @transform_3, window_bounds = array<i64: 1, 2, 8>}]} {
    %c0 = arith.constant 0 : index
    %c0_0 = arith.constant 0 : index
    %0 = vector.load %arg1[%c0, %c0_0] : memref<512x72xbf16, #tpu.memory_space<vmem>>, vector<512x72xbf16>
    %c0_1 = arith.constant 0 : index
    %c0_2 = arith.constant 0 : index
    %1 = vector.load %arg2[%c0_1, %c0_2] : memref<72x8xbf16, #tpu.memory_space<vmem>>, vector<72x8xbf16>
    %cst = arith.constant dense<0.000000e+00> : vector<512x8xf32>
    %2 = tpu.matmul %0, %1, %cst {dimension_numbers = #tpu.dot_dimension_numbers<[1], [0], [0], [1], [0, 0, 1, 1], [], []>} : vector<512x72xbf16>, vector<72x8xbf16>, vector<512x8xf32> -> vector<512x8xf32>
    %c0_3 = arith.constant 0 : index
    %c0_4 = arith.constant 0 : index
    %3 = vector.load %arg3[%c0_3, %c0_4] : memref<512x8xf32, #tpu.memory_space<vmem>>, vector<512x8xf32>
    tpu.vector_store %arg3[%c0_3, %c0_4], %2 {strides = array<i32>} : memref<512x8xf32, #tpu.memory_space<vmem>>, vector<512x8xf32>,
    %cst_5 = arith.constant dense<0.000000e+00> : vector<8xf32>
    %4 = vector.multi_reduction <add>, %2, %cst_5 [0] : vector<512x8xf32> to vector<8xf32>
    %5 = vector.shape_cast %4 : vector<8xf32> to vector<1x8xf32>
    %6 = arith.mulf %2, %2 : vector<512x8xf32>
    %cst_6 = arith.constant dense<0.000000e+00> : vector<8xf32>
    %7 = vector.multi_reduction <add>, %6, %cst_6 [0] : vector<512x8xf32> to vector<8xf32>
    %8 = vector.shape_cast %7 : vector<8xf32> to vector<1x8xf32>
    %9 = tpu.concatenate %5, %8 in 0 : vector<1x8xf32>, vector<1x8xf32> -> vector<2x8xf32>
    %10 = vector.shape_cast %9 : vector<2x8xf32> to vector<1x2x8xf32>
    %c0_7 = arith.constant 0 : index
    %c0_8 = arith.constant 0 : index
    %c0_9 = arith.constant 0 : index
    %11 = vector.load %arg4[%c0_7, %c0_8, %c0_9] : memref<1x2x8xf32, #tpu.memory_space<vmem>>, vector<1x2x8xf32>
    tpu.vector_store %arg4[%c0_7, %c0_8, %c0_9], %10 {strides = array<i32>} : memref<1x2x8xf32, #tpu.memory_space<vmem>>, vector<1x2x8xf32>,
    return
  }
  func.func @transform_0(%arg0: i32) -> (i32, i32) {
    %c0_i32 = arith.constant 0 : i32
    %c0_i32_0 = arith.constant 0 : i32
    return %arg0, %c0_i32 : i32, i32
  }
  func.func @transform_1(%arg0: i32) -> (i32, i32) {
    %c0_i32 = arith.constant 0 : i32
    %c0_i32_0 = arith.constant 0 : i32
    %c0_i32_1 = arith.constant 0 : i32
    return %c0_i32, %c0_i32_0 : i32, i32
  }
  func.func @transform_2(%arg0: i32) -> (i32, i32) {
    %c0_i32 = arith.constant 0 : i32
    %c0_i32_0 = arith.constant 0 : i32
    return %arg0, %c0_i32 : i32, i32
  }
  func.func @transform_3(%arg0: i32) -> (i32, i32, i32) {
    %c0_i32 = arith.constant 0 : i32
    %c0_i32_0 = arith.constant 0 : i32
    %c0_i32_1 = arith.constant 0 : i32
    return %arg0, %c0_i32, %c0_i32_0 : i32, i32, i32
  }
}

module attributes {stable_mosaic.version = 11 : i64} {
  func.func @_maxpool_kernel(%arg0: i32, %arg1: i32, %arg2: memref<1x8x2x8x2x8xbf16, #tpu.memory_space<vmem>>, %arg3: memref<1x8x8x8xbf16, #tpu.memory_space<vmem>>) attributes {dimension_semantics = [#tpu.dimension_semantics<parallel>, #tpu.dimension_semantics<parallel>], iteration_bounds = array<i64: 2, 1>, scalar_prefetch = 0 : i64, scratch_operands = 0 : i64, tpu.core_type = #tpu.core_type<tc>, window_params = [{transform_indices = @transform_0, window_bounds = array<i64: 1, 8, 2, 8, 2, 8>}, {transform_indices = @transform_1, window_bounds = array<i64: 1, 8, 8, 8>}]} {
    %c0 = arith.constant 0 : index
    %c0_0 = arith.constant 0 : index
    %c0_1 = arith.constant 0 : index
    %c0_2 = arith.constant 0 : index
    %c0_3 = arith.constant 0 : index
    %c0_4 = arith.constant 0 : index
    %0 = vector.load %arg2[%c0, %c0_0, %c0_1, %c0_2, %c0_3, %c0_4] : memref<1x8x2x8x2x8xbf16, #tpu.memory_space<vmem>>, vector<1x8x2x8x2x8xbf16>
    %1 = vector.shape_cast %0 : vector<1x8x2x8x2x8xbf16> to vector<8x2x8x2x8xbf16>
    %2 = vector.extract_strided_slice %1 {offsets = [0, 0, 0, 0, 0], sizes = [8, 1, 8, 2, 8], strides = [1, 1, 1, 1, 1]} : vector<8x2x8x2x8xbf16> to vector<8x1x8x2x8xbf16>
    %3 = vector.shape_cast %2 : vector<8x1x8x2x8xbf16> to vector<8x8x2x8xbf16>
    %4 = vector.extract_strided_slice %1 {offsets = [0, 1, 0, 0, 0], sizes = [8, 1, 8, 2, 8], strides = [1, 1, 1, 1, 1]} : vector<8x2x8x2x8xbf16> to vector<8x1x8x2x8xbf16>
    %5 = vector.shape_cast %4 : vector<8x1x8x2x8xbf16> to vector<8x8x2x8xbf16>
    %6 = arith.maximumf %3, %5 : vector<8x8x2x8xbf16>
    %cst = arith.constant dense<0xFF80> : vector<8x8x8xbf16>
    %7 = vector.multi_reduction <maximumf>, %6, %cst [2] : vector<8x8x2x8xbf16> to vector<8x8x8xbf16>
    %c0_5 = arith.constant 0 : index
    %c0_6 = arith.constant 0 : index
    %c0_7 = arith.constant 0 : index
    %c0_8 = arith.constant 0 : index
    %8 = vector.load %arg3[%c0_5, %c0_6, %c0_7, %c0_8] : memref<1x8x8x8xbf16, #tpu.memory_space<vmem>>, vector<1x8x8x8xbf16>
    %9 = vector.shape_cast %8 : vector<1x8x8x8xbf16> to vector<8x8x8xbf16>
    %10 = vector.shape_cast %7 : vector<8x8x8xbf16> to vector<1x8x8x8xbf16>
    tpu.vector_store %arg3[%c0_5, %c0_6, %c0_7, %c0_8], %10 {strides = array<i32>} : memref<1x8x8x8xbf16, #tpu.memory_space<vmem>>, vector<1x8x8x8xbf16>,
    return
  }
  func.func @transform_0(%arg0: i32, %arg1: i32) -> (i32, i32, i32, i32, i32, i32) {
    %c0_i32 = arith.constant 0 : i32
    %c0_i32_0 = arith.constant 0 : i32
    %c0_i32_1 = arith.constant 0 : i32
    %c0_i32_2 = arith.constant 0 : i32
    %c0_i32_3 = arith.constant 0 : i32
    return %arg0, %arg1, %c0_i32, %c0_i32_0, %c0_i32_1, %c0_i32_2 : i32, i32, i32, i32, i32, i32
  }
  func.func @transform_1(%arg0: i32, %arg1: i32) -> (i32, i32, i32, i32) {
    %c0_i32 = arith.constant 0 : i32
    %c0_i32_0 = arith.constant 0 : i32
    %c0_i32_1 = arith.constant 0 : i32
    return %arg0, %arg1, %c0_i32, %c0_i32_0 : i32, i32, i32, i32
  }
}

module attributes {stable_mosaic.version = 11 : i64} {
  func.func @_gemm_stats_kernel(%arg0: i32, %arg1: memref<128x72xbf16, #tpu.memory_space<vmem>>, %arg2: memref<72x16xbf16, #tpu.memory_space<vmem>>, %arg3: memref<128x16xf32, #tpu.memory_space<vmem>>, %arg4: memref<1x2x16xf32, #tpu.memory_space<vmem>>) attributes {dimension_semantics = [#tpu.dimension_semantics<parallel>], iteration_bounds = array<i64: 1>, scalar_prefetch = 0 : i64, scratch_operands = 0 : i64, tpu.core_type = #tpu.core_type<tc>, window_params = [{transform_indices = @transform_0, window_bounds = array<i64: 128, 72>}, {pipeline_mode = #tpu.pipeline_mode<synchronous>, transform_indices = @transform_1, window_bounds = array<i64: 72, 16>}, {transform_indices = @transform_2, window_bounds = array<i64: 128, 16>}, {transform_indices = @transform_3, window_bounds = array<i64: 1, 2, 16>}]} {
    %c0 = arith.constant 0 : index
    %c0_0 = arith.constant 0 : index
    %0 = vector.load %arg1[%c0, %c0_0] : memref<128x72xbf16, #tpu.memory_space<vmem>>, vector<128x72xbf16>
    %c0_1 = arith.constant 0 : index
    %c0_2 = arith.constant 0 : index
    %1 = vector.load %arg2[%c0_1, %c0_2] : memref<72x16xbf16, #tpu.memory_space<vmem>>, vector<72x16xbf16>
    %cst = arith.constant dense<0.000000e+00> : vector<128x16xf32>
    %2 = tpu.matmul %0, %1, %cst {dimension_numbers = #tpu.dot_dimension_numbers<[1], [0], [0], [1], [0, 0, 1, 1], [], []>} : vector<128x72xbf16>, vector<72x16xbf16>, vector<128x16xf32> -> vector<128x16xf32>
    %c0_3 = arith.constant 0 : index
    %c0_4 = arith.constant 0 : index
    %3 = vector.load %arg3[%c0_3, %c0_4] : memref<128x16xf32, #tpu.memory_space<vmem>>, vector<128x16xf32>
    tpu.vector_store %arg3[%c0_3, %c0_4], %2 {strides = array<i32>} : memref<128x16xf32, #tpu.memory_space<vmem>>, vector<128x16xf32>,
    %cst_5 = arith.constant dense<0.000000e+00> : vector<16xf32>
    %4 = vector.multi_reduction <add>, %2, %cst_5 [0] : vector<128x16xf32> to vector<16xf32>
    %5 = vector.shape_cast %4 : vector<16xf32> to vector<1x16xf32>
    %6 = arith.mulf %2, %2 : vector<128x16xf32>
    %cst_6 = arith.constant dense<0.000000e+00> : vector<16xf32>
    %7 = vector.multi_reduction <add>, %6, %cst_6 [0] : vector<128x16xf32> to vector<16xf32>
    %8 = vector.shape_cast %7 : vector<16xf32> to vector<1x16xf32>
    %9 = tpu.concatenate %5, %8 in 0 : vector<1x16xf32>, vector<1x16xf32> -> vector<2x16xf32>
    %10 = vector.shape_cast %9 : vector<2x16xf32> to vector<1x2x16xf32>
    %c0_7 = arith.constant 0 : index
    %c0_8 = arith.constant 0 : index
    %c0_9 = arith.constant 0 : index
    %11 = vector.load %arg4[%c0_7, %c0_8, %c0_9] : memref<1x2x16xf32, #tpu.memory_space<vmem>>, vector<1x2x16xf32>
    tpu.vector_store %arg4[%c0_7, %c0_8, %c0_9], %10 {strides = array<i32>} : memref<1x2x16xf32, #tpu.memory_space<vmem>>, vector<1x2x16xf32>,
    return
  }
  func.func @transform_0(%arg0: i32) -> (i32, i32) {
    %c0_i32 = arith.constant 0 : i32
    %c0_i32_0 = arith.constant 0 : i32
    return %arg0, %c0_i32 : i32, i32
  }
  func.func @transform_1(%arg0: i32) -> (i32, i32) {
    %c0_i32 = arith.constant 0 : i32
    %c0_i32_0 = arith.constant 0 : i32
    %c0_i32_1 = arith.constant 0 : i32
    return %c0_i32, %c0_i32_0 : i32, i32
  }
  func.func @transform_2(%arg0: i32) -> (i32, i32) {
    %c0_i32 = arith.constant 0 : i32
    %c0_i32_0 = arith.constant 0 : i32
    return %arg0, %c0_i32 : i32, i32
  }
  func.func @transform_3(%arg0: i32) -> (i32, i32, i32) {
    %c0_i32 = arith.constant 0 : i32
    %c0_i32_0 = arith.constant 0 : i32
    %c0_i32_1 = arith.constant 0 : i32
    return %arg0, %c0_i32, %c0_i32_0 : i32, i32, i32
  }
}

module attributes {stable_mosaic.version = 11 : i64} {
  func.func @_bn_relu_kernel(%arg0: i32, %arg1: memref<128x16xf32, #tpu.memory_space<vmem>>, %arg2: memref<1x16xf32, #tpu.memory_space<vmem>>, %arg3: memref<1x16xf32, #tpu.memory_space<vmem>>, %arg4: memref<128x16xbf16, #tpu.memory_space<vmem>>) attributes {dimension_semantics = [#tpu.dimension_semantics<parallel>], iteration_bounds = array<i64: 1>, scalar_prefetch = 0 : i64, scratch_operands = 0 : i64, tpu.core_type = #tpu.core_type<tc>, window_params = [{transform_indices = @transform_0, window_bounds = array<i64: 128, 16>}, {pipeline_mode = #tpu.pipeline_mode<synchronous>, transform_indices = @transform_1, window_bounds = array<i64: 1, 16>}, {pipeline_mode = #tpu.pipeline_mode<synchronous>, transform_indices = @transform_2, window_bounds = array<i64: 1, 16>}, {transform_indices = @transform_3, window_bounds = array<i64: 128, 16>}]} {
    %c0 = arith.constant 0 : index
    %c0_0 = arith.constant 0 : index
    %0 = vector.load %arg1[%c0, %c0_0] : memref<128x16xf32, #tpu.memory_space<vmem>>, vector<128x16xf32>
    %c0_1 = arith.constant 0 : index
    %c0_2 = arith.constant 0 : index
    %1 = vector.load %arg2[%c0_1, %c0_2] : memref<1x16xf32, #tpu.memory_space<vmem>>, vector<1x16xf32>
    %2 = vector.broadcast %1 : vector<1x16xf32> to vector<128x16xf32>
    %3 = arith.mulf %0, %2 : vector<128x16xf32>
    %c0_3 = arith.constant 0 : index
    %c0_4 = arith.constant 0 : index
    %4 = vector.load %arg3[%c0_3, %c0_4] : memref<1x16xf32, #tpu.memory_space<vmem>>, vector<1x16xf32>
    %5 = vector.broadcast %4 : vector<1x16xf32> to vector<128x16xf32>
    %6 = arith.addf %3, %5 : vector<128x16xf32>
    %cst = arith.constant 0.000000e+00 : f32
    %7 = vector.broadcast %cst : f32 to vector<128x16xf32>
    %8 = arith.maximumf %6, %7 : vector<128x16xf32>
    %9 = arith.truncf %8 : vector<128x16xf32> to vector<128x16xbf16>
    %c0_5 = arith.constant 0 : index
    %c0_6 = arith.constant 0 : index
    %10 = vector.load %arg4[%c0_5, %c0_6] : memref<128x16xbf16, #tpu.memory_space<vmem>>, vector<128x16xbf16>
    tpu.vector_store %arg4[%c0_5, %c0_6], %9 {strides = array<i32>} : memref<128x16xbf16, #tpu.memory_space<vmem>>, vector<128x16xbf16>,
    return
  }
  func.func @transform_0(%arg0: i32) -> (i32, i32) {
    %c0_i32 = arith.constant 0 : i32
    %c0_i32_0 = arith.constant 0 : i32
    return %arg0, %c0_i32 : i32, i32
  }
  func.func @transform_1(%arg0: i32) -> (i32, i32) {
    %c0_i32 = arith.constant 0 : i32
    %c0_i32_0 = arith.constant 0 : i32
    %c0_i32_1 = arith.constant 0 : i32
    return %c0_i32, %c0_i32_0 : i32, i32
  }
  func.func @transform_2(%arg0: i32) -> (i32, i32) {
    %c0_i32 = arith.constant 0 : i32
    %c0_i32_0 = arith.constant 0 : i32
    %c0_i32_1 = arith.constant 0 : i32
    return %c0_i32, %c0_i32_0 : i32, i32
  }
  func.func @transform_3(%arg0: i32) -> (i32, i32) {
    %c0_i32 = arith.constant 0 : i32
    %c0_i32_0 = arith.constant 0 : i32
    return %arg0, %c0_i32 : i32, i32
  }
}

module attributes {stable_mosaic.version = 11 : i64} {
  func.func @_maxpool_kernel(%arg0: i32, %arg1: i32, %arg2: memref<1x4x2x4x2x16xbf16, #tpu.memory_space<vmem>>, %arg3: memref<1x4x4x16xbf16, #tpu.memory_space<vmem>>) attributes {dimension_semantics = [#tpu.dimension_semantics<parallel>, #tpu.dimension_semantics<parallel>], iteration_bounds = array<i64: 2, 1>, scalar_prefetch = 0 : i64, scratch_operands = 0 : i64, tpu.core_type = #tpu.core_type<tc>, window_params = [{transform_indices = @transform_0, window_bounds = array<i64: 1, 4, 2, 4, 2, 16>}, {transform_indices = @transform_1, window_bounds = array<i64: 1, 4, 4, 16>}]} {
    %c0 = arith.constant 0 : index
    %c0_0 = arith.constant 0 : index
    %c0_1 = arith.constant 0 : index
    %c0_2 = arith.constant 0 : index
    %c0_3 = arith.constant 0 : index
    %c0_4 = arith.constant 0 : index
    %0 = vector.load %arg2[%c0, %c0_0, %c0_1, %c0_2, %c0_3, %c0_4] : memref<1x4x2x4x2x16xbf16, #tpu.memory_space<vmem>>, vector<1x4x2x4x2x16xbf16>
    %1 = vector.shape_cast %0 : vector<1x4x2x4x2x16xbf16> to vector<4x2x4x2x16xbf16>
    %2 = vector.extract_strided_slice %1 {offsets = [0, 0, 0, 0, 0], sizes = [4, 1, 4, 2, 16], strides = [1, 1, 1, 1, 1]} : vector<4x2x4x2x16xbf16> to vector<4x1x4x2x16xbf16>
    %3 = vector.shape_cast %2 : vector<4x1x4x2x16xbf16> to vector<4x4x2x16xbf16>
    %4 = vector.extract_strided_slice %1 {offsets = [0, 1, 0, 0, 0], sizes = [4, 1, 4, 2, 16], strides = [1, 1, 1, 1, 1]} : vector<4x2x4x2x16xbf16> to vector<4x1x4x2x16xbf16>
    %5 = vector.shape_cast %4 : vector<4x1x4x2x16xbf16> to vector<4x4x2x16xbf16>
    %6 = arith.maximumf %3, %5 : vector<4x4x2x16xbf16>
    %cst = arith.constant dense<0xFF80> : vector<4x4x16xbf16>
    %7 = vector.multi_reduction <maximumf>, %6, %cst [2] : vector<4x4x2x16xbf16> to vector<4x4x16xbf16>
    %c0_5 = arith.constant 0 : index
    %c0_6 = arith.constant 0 : index
    %c0_7 = arith.constant 0 : index
    %c0_8 = arith.constant 0 : index
    %8 = vector.load %arg3[%c0_5, %c0_6, %c0_7, %c0_8] : memref<1x4x4x16xbf16, #tpu.memory_space<vmem>>, vector<1x4x4x16xbf16>
    %9 = vector.shape_cast %8 : vector<1x4x4x16xbf16> to vector<4x4x16xbf16>
    %10 = vector.shape_cast %7 : vector<4x4x16xbf16> to vector<1x4x4x16xbf16>
    tpu.vector_store %arg3[%c0_5, %c0_6, %c0_7, %c0_8], %10 {strides = array<i32>} : memref<1x4x4x16xbf16, #tpu.memory_space<vmem>>, vector<1x4x4x16xbf16>,
    return
  }
  func.func @transform_0(%arg0: i32, %arg1: i32) -> (i32, i32, i32, i32, i32, i32) {
    %c0_i32 = arith.constant 0 : i32
    %c0_i32_0 = arith.constant 0 : i32
    %c0_i32_1 = arith.constant 0 : i32
    %c0_i32_2 = arith.constant 0 : i32
    %c0_i32_3 = arith.constant 0 : i32
    return %arg0, %arg1, %c0_i32, %c0_i32_0, %c0_i32_1, %c0_i32_2 : i32, i32, i32, i32, i32, i32
  }
  func.func @transform_1(%arg0: i32, %arg1: i32) -> (i32, i32, i32, i32) {
    %c0_i32 = arith.constant 0 : i32
    %c0_i32_0 = arith.constant 0 : i32
    %c0_i32_1 = arith.constant 0 : i32
    return %arg0, %arg1, %c0_i32, %c0_i32_0 : i32, i32, i32, i32
  }
}

module attributes {stable_mosaic.version = 11 : i64} {
  func.func @_gemm_stats_kernel(%arg0: i32, %arg1: memref<128x144xbf16, #tpu.memory_space<vmem>>, %arg2: memref<144x16xbf16, #tpu.memory_space<vmem>>, %arg3: memref<128x16xf32, #tpu.memory_space<vmem>>, %arg4: memref<1x2x16xf32, #tpu.memory_space<vmem>>) attributes {dimension_semantics = [#tpu.dimension_semantics<parallel>], iteration_bounds = array<i64: 1>, scalar_prefetch = 0 : i64, scratch_operands = 0 : i64, tpu.core_type = #tpu.core_type<tc>, window_params = [{transform_indices = @transform_0, window_bounds = array<i64: 128, 144>}, {pipeline_mode = #tpu.pipeline_mode<synchronous>, transform_indices = @transform_1, window_bounds = array<i64: 144, 16>}, {transform_indices = @transform_2, window_bounds = array<i64: 128, 16>}, {transform_indices = @transform_3, window_bounds = array<i64: 1, 2, 16>}]} {
    %c0 = arith.constant 0 : index
    %c0_0 = arith.constant 0 : index
    %0 = vector.load %arg1[%c0, %c0_0] : memref<128x144xbf16, #tpu.memory_space<vmem>>, vector<128x144xbf16>
    %c0_1 = arith.constant 0 : index
    %c0_2 = arith.constant 0 : index
    %1 = vector.load %arg2[%c0_1, %c0_2] : memref<144x16xbf16, #tpu.memory_space<vmem>>, vector<144x16xbf16>
    %cst = arith.constant dense<0.000000e+00> : vector<128x16xf32>
    %2 = tpu.matmul %0, %1, %cst {dimension_numbers = #tpu.dot_dimension_numbers<[1], [0], [0], [1], [0, 0, 1, 1], [], []>} : vector<128x144xbf16>, vector<144x16xbf16>, vector<128x16xf32> -> vector<128x16xf32>
    %c0_3 = arith.constant 0 : index
    %c0_4 = arith.constant 0 : index
    %3 = vector.load %arg3[%c0_3, %c0_4] : memref<128x16xf32, #tpu.memory_space<vmem>>, vector<128x16xf32>
    tpu.vector_store %arg3[%c0_3, %c0_4], %2 {strides = array<i32>} : memref<128x16xf32, #tpu.memory_space<vmem>>, vector<128x16xf32>,
    %cst_5 = arith.constant dense<0.000000e+00> : vector<16xf32>
    %4 = vector.multi_reduction <add>, %2, %cst_5 [0] : vector<128x16xf32> to vector<16xf32>
    %5 = vector.shape_cast %4 : vector<16xf32> to vector<1x16xf32>
    %6 = arith.mulf %2, %2 : vector<128x16xf32>
    %cst_6 = arith.constant dense<0.000000e+00> : vector<16xf32>
    %7 = vector.multi_reduction <add>, %6, %cst_6 [0] : vector<128x16xf32> to vector<16xf32>
    %8 = vector.shape_cast %7 : vector<16xf32> to vector<1x16xf32>
    %9 = tpu.concatenate %5, %8 in 0 : vector<1x16xf32>, vector<1x16xf32> -> vector<2x16xf32>
    %10 = vector.shape_cast %9 : vector<2x16xf32> to vector<1x2x16xf32>
    %c0_7 = arith.constant 0 : index
    %c0_8 = arith.constant 0 : index
    %c0_9 = arith.constant 0 : index
    %11 = vector.load %arg4[%c0_7, %c0_8, %c0_9] : memref<1x2x16xf32, #tpu.memory_space<vmem>>, vector<1x2x16xf32>
    tpu.vector_store %arg4[%c0_7, %c0_8, %c0_9], %10 {strides = array<i32>} : memref<1x2x16xf32, #tpu.memory_space<vmem>>, vector<1x2x16xf32>,
    return
  }
  func.func @transform_0(%arg0: i32) -> (i32, i32) {
    %c0_i32 = arith.constant 0 : i32
    %c0_i32_0 = arith.constant 0 : i32
    return %arg0, %c0_i32 : i32, i32
  }
  func.func @transform_1(%arg0: i32) -> (i32, i32) {
    %c0_i32 = arith.constant 0 : i32
    %c0_i32_0 = arith.constant 0 : i32
    %c0_i32_1 = arith.constant 0 : i32
    return %c0_i32, %c0_i32_0 : i32, i32
  }
  func.func @transform_2(%arg0: i32) -> (i32, i32) {
    %c0_i32 = arith.constant 0 : i32
    %c0_i32_0 = arith.constant 0 : i32
    return %arg0, %c0_i32 : i32, i32
  }
  func.func @transform_3(%arg0: i32) -> (i32, i32, i32) {
    %c0_i32 = arith.constant 0 : i32
    %c0_i32_0 = arith.constant 0 : i32
    %c0_i32_1 = arith.constant 0 : i32
    return %arg0, %c0_i32, %c0_i32_0 : i32, i32, i32
  }
}

module attributes {stable_mosaic.version = 11 : i64} {
  func.func @_gemm_stats_kernel(%arg0: i32, %arg1: memref<32x144xbf16, #tpu.memory_space<vmem>>, %arg2: memref<144x32xbf16, #tpu.memory_space<vmem>>, %arg3: memref<32x32xf32, #tpu.memory_space<vmem>>, %arg4: memref<1x2x32xf32, #tpu.memory_space<vmem>>) attributes {dimension_semantics = [#tpu.dimension_semantics<parallel>], iteration_bounds = array<i64: 1>, scalar_prefetch = 0 : i64, scratch_operands = 0 : i64, tpu.core_type = #tpu.core_type<tc>, window_params = [{transform_indices = @transform_0, window_bounds = array<i64: 32, 144>}, {pipeline_mode = #tpu.pipeline_mode<synchronous>, transform_indices = @transform_1, window_bounds = array<i64: 144, 32>}, {transform_indices = @transform_2, window_bounds = array<i64: 32, 32>}, {transform_indices = @transform_3, window_bounds = array<i64: 1, 2, 32>}]} {
    %c0 = arith.constant 0 : index
    %c0_0 = arith.constant 0 : index
    %0 = vector.load %arg1[%c0, %c0_0] : memref<32x144xbf16, #tpu.memory_space<vmem>>, vector<32x144xbf16>
    %c0_1 = arith.constant 0 : index
    %c0_2 = arith.constant 0 : index
    %1 = vector.load %arg2[%c0_1, %c0_2] : memref<144x32xbf16, #tpu.memory_space<vmem>>, vector<144x32xbf16>
    %cst = arith.constant dense<0.000000e+00> : vector<32x32xf32>
    %2 = tpu.matmul %0, %1, %cst {dimension_numbers = #tpu.dot_dimension_numbers<[1], [0], [0], [1], [0, 0, 1, 1], [], []>} : vector<32x144xbf16>, vector<144x32xbf16>, vector<32x32xf32> -> vector<32x32xf32>
    %c0_3 = arith.constant 0 : index
    %c0_4 = arith.constant 0 : index
    %3 = vector.load %arg3[%c0_3, %c0_4] : memref<32x32xf32, #tpu.memory_space<vmem>>, vector<32x32xf32>
    tpu.vector_store %arg3[%c0_3, %c0_4], %2 {strides = array<i32>} : memref<32x32xf32, #tpu.memory_space<vmem>>, vector<32x32xf32>,
    %cst_5 = arith.constant dense<0.000000e+00> : vector<32xf32>
    %4 = vector.multi_reduction <add>, %2, %cst_5 [0] : vector<32x32xf32> to vector<32xf32>
    %5 = vector.shape_cast %4 : vector<32xf32> to vector<1x32xf32>
    %6 = arith.mulf %2, %2 : vector<32x32xf32>
    %cst_6 = arith.constant dense<0.000000e+00> : vector<32xf32>
    %7 = vector.multi_reduction <add>, %6, %cst_6 [0] : vector<32x32xf32> to vector<32xf32>
    %8 = vector.shape_cast %7 : vector<32xf32> to vector<1x32xf32>
    %9 = tpu.concatenate %5, %8 in 0 : vector<1x32xf32>, vector<1x32xf32> -> vector<2x32xf32>
    %10 = vector.shape_cast %9 : vector<2x32xf32> to vector<1x2x32xf32>
    %c0_7 = arith.constant 0 : index
    %c0_8 = arith.constant 0 : index
    %c0_9 = arith.constant 0 : index
    %11 = vector.load %arg4[%c0_7, %c0_8, %c0_9] : memref<1x2x32xf32, #tpu.memory_space<vmem>>, vector<1x2x32xf32>
    tpu.vector_store %arg4[%c0_7, %c0_8, %c0_9], %10 {strides = array<i32>} : memref<1x2x32xf32, #tpu.memory_space<vmem>>, vector<1x2x32xf32>,
    return
  }
  func.func @transform_0(%arg0: i32) -> (i32, i32) {
    %c0_i32 = arith.constant 0 : i32
    %c0_i32_0 = arith.constant 0 : i32
    return %arg0, %c0_i32 : i32, i32
  }
  func.func @transform_1(%arg0: i32) -> (i32, i32) {
    %c0_i32 = arith.constant 0 : i32
    %c0_i32_0 = arith.constant 0 : i32
    %c0_i32_1 = arith.constant 0 : i32
    return %c0_i32, %c0_i32_0 : i32, i32
  }
  func.func @transform_2(%arg0: i32) -> (i32, i32) {
    %c0_i32 = arith.constant 0 : i32
    %c0_i32_0 = arith.constant 0 : i32
    return %arg0, %c0_i32 : i32, i32
  }
  func.func @transform_3(%arg0: i32) -> (i32, i32, i32) {
    %c0_i32 = arith.constant 0 : i32
    %c0_i32_0 = arith.constant 0 : i32
    %c0_i32_1 = arith.constant 0 : i32
    return %arg0, %c0_i32, %c0_i32_0 : i32, i32, i32
  }
}

module attributes {stable_mosaic.version = 11 : i64} {
  func.func @_bn_relu_kernel(%arg0: i32, %arg1: memref<32x32xf32, #tpu.memory_space<vmem>>, %arg2: memref<1x32xf32, #tpu.memory_space<vmem>>, %arg3: memref<1x32xf32, #tpu.memory_space<vmem>>, %arg4: memref<32x32xbf16, #tpu.memory_space<vmem>>) attributes {dimension_semantics = [#tpu.dimension_semantics<parallel>], iteration_bounds = array<i64: 1>, scalar_prefetch = 0 : i64, scratch_operands = 0 : i64, tpu.core_type = #tpu.core_type<tc>, window_params = [{transform_indices = @transform_0, window_bounds = array<i64: 32, 32>}, {pipeline_mode = #tpu.pipeline_mode<synchronous>, transform_indices = @transform_1, window_bounds = array<i64: 1, 32>}, {pipeline_mode = #tpu.pipeline_mode<synchronous>, transform_indices = @transform_2, window_bounds = array<i64: 1, 32>}, {transform_indices = @transform_3, window_bounds = array<i64: 32, 32>}]} {
    %c0 = arith.constant 0 : index
    %c0_0 = arith.constant 0 : index
    %0 = vector.load %arg1[%c0, %c0_0] : memref<32x32xf32, #tpu.memory_space<vmem>>, vector<32x32xf32>
    %c0_1 = arith.constant 0 : index
    %c0_2 = arith.constant 0 : index
    %1 = vector.load %arg2[%c0_1, %c0_2] : memref<1x32xf32, #tpu.memory_space<vmem>>, vector<1x32xf32>
    %2 = vector.broadcast %1 : vector<1x32xf32> to vector<32x32xf32>
    %3 = arith.mulf %0, %2 : vector<32x32xf32>
    %c0_3 = arith.constant 0 : index
    %c0_4 = arith.constant 0 : index
    %4 = vector.load %arg3[%c0_3, %c0_4] : memref<1x32xf32, #tpu.memory_space<vmem>>, vector<1x32xf32>
    %5 = vector.broadcast %4 : vector<1x32xf32> to vector<32x32xf32>
    %6 = arith.addf %3, %5 : vector<32x32xf32>
    %cst = arith.constant 0.000000e+00 : f32
    %7 = vector.broadcast %cst : f32 to vector<32x32xf32>
    %8 = arith.maximumf %6, %7 : vector<32x32xf32>
    %9 = arith.truncf %8 : vector<32x32xf32> to vector<32x32xbf16>
    %c0_5 = arith.constant 0 : index
    %c0_6 = arith.constant 0 : index
    %10 = vector.load %arg4[%c0_5, %c0_6] : memref<32x32xbf16, #tpu.memory_space<vmem>>, vector<32x32xbf16>
    tpu.vector_store %arg4[%c0_5, %c0_6], %9 {strides = array<i32>} : memref<32x32xbf16, #tpu.memory_space<vmem>>, vector<32x32xbf16>,
    return
  }
  func.func @transform_0(%arg0: i32) -> (i32, i32) {
    %c0_i32 = arith.constant 0 : i32
    %c0_i32_0 = arith.constant 0 : i32
    return %arg0, %c0_i32 : i32, i32
  }
  func.func @transform_1(%arg0: i32) -> (i32, i32) {
    %c0_i32 = arith.constant 0 : i32
    %c0_i32_0 = arith.constant 0 : i32
    %c0_i32_1 = arith.constant 0 : i32
    return %c0_i32, %c0_i32_0 : i32, i32
  }
  func.func @transform_2(%arg0: i32) -> (i32, i32) {
    %c0_i32 = arith.constant 0 : i32
    %c0_i32_0 = arith.constant 0 : i32
    %c0_i32_1 = arith.constant 0 : i32
    return %c0_i32, %c0_i32_0 : i32, i32
  }
  func.func @transform_3(%arg0: i32) -> (i32, i32) {
    %c0_i32 = arith.constant 0 : i32
    %c0_i32_0 = arith.constant 0 : i32
    return %arg0, %c0_i32 : i32, i32
  }
}

module attributes {stable_mosaic.version = 11 : i64} {
  func.func @_gemm_stats_kernel(%arg0: i32, %arg1: memref<32x288xbf16, #tpu.memory_space<vmem>>, %arg2: memref<288x32xbf16, #tpu.memory_space<vmem>>, %arg3: memref<32x32xf32, #tpu.memory_space<vmem>>, %arg4: memref<1x2x32xf32, #tpu.memory_space<vmem>>) attributes {dimension_semantics = [#tpu.dimension_semantics<parallel>], iteration_bounds = array<i64: 1>, scalar_prefetch = 0 : i64, scratch_operands = 0 : i64, tpu.core_type = #tpu.core_type<tc>, window_params = [{transform_indices = @transform_0, window_bounds = array<i64: 32, 288>}, {pipeline_mode = #tpu.pipeline_mode<synchronous>, transform_indices = @transform_1, window_bounds = array<i64: 288, 32>}, {transform_indices = @transform_2, window_bounds = array<i64: 32, 32>}, {transform_indices = @transform_3, window_bounds = array<i64: 1, 2, 32>}]} {
    %c0 = arith.constant 0 : index
    %c0_0 = arith.constant 0 : index
    %0 = vector.load %arg1[%c0, %c0_0] : memref<32x288xbf16, #tpu.memory_space<vmem>>, vector<32x288xbf16>
    %c0_1 = arith.constant 0 : index
    %c0_2 = arith.constant 0 : index
    %1 = vector.load %arg2[%c0_1, %c0_2] : memref<288x32xbf16, #tpu.memory_space<vmem>>, vector<288x32xbf16>
    %cst = arith.constant dense<0.000000e+00> : vector<32x32xf32>
    %2 = tpu.matmul %0, %1, %cst {dimension_numbers = #tpu.dot_dimension_numbers<[1], [0], [0], [1], [0, 0, 1, 1], [], []>} : vector<32x288xbf16>, vector<288x32xbf16>, vector<32x32xf32> -> vector<32x32xf32>
    %c0_3 = arith.constant 0 : index
    %c0_4 = arith.constant 0 : index
    %3 = vector.load %arg3[%c0_3, %c0_4] : memref<32x32xf32, #tpu.memory_space<vmem>>, vector<32x32xf32>
    tpu.vector_store %arg3[%c0_3, %c0_4], %2 {strides = array<i32>} : memref<32x32xf32, #tpu.memory_space<vmem>>, vector<32x32xf32>,
    %cst_5 = arith.constant dense<0.000000e+00> : vector<32xf32>
    %4 = vector.multi_reduction <add>, %2, %cst_5 [0] : vector<32x32xf32> to vector<32xf32>
    %5 = vector.shape_cast %4 : vector<32xf32> to vector<1x32xf32>
    %6 = arith.mulf %2, %2 : vector<32x32xf32>
    %cst_6 = arith.constant dense<0.000000e+00> : vector<32xf32>
    %7 = vector.multi_reduction <add>, %6, %cst_6 [0] : vector<32x32xf32> to vector<32xf32>
    %8 = vector.shape_cast %7 : vector<32xf32> to vector<1x32xf32>
    %9 = tpu.concatenate %5, %8 in 0 : vector<1x32xf32>, vector<1x32xf32> -> vector<2x32xf32>
    %10 = vector.shape_cast %9 : vector<2x32xf32> to vector<1x2x32xf32>
    %c0_7 = arith.constant 0 : index
    %c0_8 = arith.constant 0 : index
    %c0_9 = arith.constant 0 : index
    %11 = vector.load %arg4[%c0_7, %c0_8, %c0_9] : memref<1x2x32xf32, #tpu.memory_space<vmem>>, vector<1x2x32xf32>
    tpu.vector_store %arg4[%c0_7, %c0_8, %c0_9], %10 {strides = array<i32>} : memref<1x2x32xf32, #tpu.memory_space<vmem>>, vector<1x2x32xf32>,
    return
  }
  func.func @transform_0(%arg0: i32) -> (i32, i32) {
    %c0_i32 = arith.constant 0 : i32
    %c0_i32_0 = arith.constant 0 : i32
    return %arg0, %c0_i32 : i32, i32
  }
  func.func @transform_1(%arg0: i32) -> (i32, i32) {
    %c0_i32 = arith.constant 0 : i32
    %c0_i32_0 = arith.constant 0 : i32
    %c0_i32_1 = arith.constant 0 : i32
    return %c0_i32, %c0_i32_0 : i32, i32
  }
  func.func @transform_2(%arg0: i32) -> (i32, i32) {
    %c0_i32 = arith.constant 0 : i32
    %c0_i32_0 = arith.constant 0 : i32
    return %arg0, %c0_i32 : i32, i32
  }
  func.func @transform_3(%arg0: i32) -> (i32, i32, i32) {
    %c0_i32 = arith.constant 0 : i32
    %c0_i32_0 = arith.constant 0 : i32
    %c0_i32_1 = arith.constant 0 : i32
    return %arg0, %c0_i32, %c0_i32_0 : i32, i32, i32
  }
}

module attributes {stable_mosaic.version = 11 : i64} {
  func.func @_gemm_bias_kernel(%arg0: i32, %arg1: memref<32x32xbf16, #tpu.memory_space<vmem>>, %arg2: memref<32x64xbf16, #tpu.memory_space<vmem>>, %arg3: memref<1x64xf32, #tpu.memory_space<vmem>>, %arg4: memref<32x64xbf16, #tpu.memory_space<vmem>>) attributes {dimension_semantics = [#tpu.dimension_semantics<parallel>], iteration_bounds = array<i64: 1>, scalar_prefetch = 0 : i64, scratch_operands = 0 : i64, tpu.core_type = #tpu.core_type<tc>, window_params = [{transform_indices = @transform_0, window_bounds = array<i64: 32, 32>}, {pipeline_mode = #tpu.pipeline_mode<synchronous>, transform_indices = @transform_1, window_bounds = array<i64: 32, 64>}, {pipeline_mode = #tpu.pipeline_mode<synchronous>, transform_indices = @transform_2, window_bounds = array<i64: 1, 64>}, {transform_indices = @transform_3, window_bounds = array<i64: 32, 64>}]} {
    %c0 = arith.constant 0 : index
    %c0_0 = arith.constant 0 : index
    %0 = vector.load %arg1[%c0, %c0_0] : memref<32x32xbf16, #tpu.memory_space<vmem>>, vector<32x32xbf16>
    %c0_1 = arith.constant 0 : index
    %c0_2 = arith.constant 0 : index
    %1 = vector.load %arg2[%c0_1, %c0_2] : memref<32x64xbf16, #tpu.memory_space<vmem>>, vector<32x64xbf16>
    %cst = arith.constant dense<0.000000e+00> : vector<32x64xf32>
    %2 = tpu.matmul %0, %1, %cst {dimension_numbers = #tpu.dot_dimension_numbers<[1], [0], [0], [1], [0, 0, 1, 1], [], []>} : vector<32x32xbf16>, vector<32x64xbf16>, vector<32x64xf32> -> vector<32x64xf32>
    %c0_3 = arith.constant 0 : index
    %c0_4 = arith.constant 0 : index
    %3 = vector.load %arg3[%c0_3, %c0_4] : memref<1x64xf32, #tpu.memory_space<vmem>>, vector<1x64xf32>
    %4 = vector.broadcast %3 : vector<1x64xf32> to vector<32x64xf32>
    %5 = arith.addf %2, %4 : vector<32x64xf32>
    %6 = arith.truncf %5 : vector<32x64xf32> to vector<32x64xbf16>
    %c0_5 = arith.constant 0 : index
    %c0_6 = arith.constant 0 : index
    %7 = vector.load %arg4[%c0_5, %c0_6] : memref<32x64xbf16, #tpu.memory_space<vmem>>, vector<32x64xbf16>
    tpu.vector_store %arg4[%c0_5, %c0_6], %6 {strides = array<i32>} : memref<32x64xbf16, #tpu.memory_space<vmem>>, vector<32x64xbf16>,
    return
  }
  func.func @transform_0(%arg0: i32) -> (i32, i32) {
    %c0_i32 = arith.constant 0 : i32
    %c0_i32_0 = arith.constant 0 : i32
    return %arg0, %c0_i32 : i32, i32
  }
  func.func @transform_1(%arg0: i32) -> (i32, i32) {
    %c0_i32 = arith.constant 0 : i32
    %c0_i32_0 = arith.constant 0 : i32
    %c0_i32_1 = arith.constant 0 : i32
    return %c0_i32, %c0_i32_0 : i32, i32
  }
  func.func @transform_2(%arg0: i32) -> (i32, i32) {
    %c0_i32 = arith.constant 0 : i32
    %c0_i32_0 = arith.constant 0 : i32
    %c0_i32_1 = arith.constant 0 : i32
    return %c0_i32, %c0_i32_0 : i32, i32
  }
  func.func @transform_3(%arg0: i32) -> (i32, i32) {
    %c0_i32 = arith.constant 0 : i32
    %c0_i32_0 = arith.constant 0 : i32
    return %arg0, %c0_i32 : i32, i32
  }
}

module attributes {stable_mosaic.version = 11 : i64} {
  func.func @_gemm_stats_kernel(%arg0: i32, %arg1: memref<128x288xbf16, #tpu.memory_space<vmem>>, %arg2: memref<288x16xbf16, #tpu.memory_space<vmem>>, %arg3: memref<128x16xf32, #tpu.memory_space<vmem>>, %arg4: memref<1x2x16xf32, #tpu.memory_space<vmem>>) attributes {dimension_semantics = [#tpu.dimension_semantics<parallel>], iteration_bounds = array<i64: 1>, scalar_prefetch = 0 : i64, scratch_operands = 0 : i64, tpu.core_type = #tpu.core_type<tc>, window_params = [{transform_indices = @transform_0, window_bounds = array<i64: 128, 288>}, {pipeline_mode = #tpu.pipeline_mode<synchronous>, transform_indices = @transform_1, window_bounds = array<i64: 288, 16>}, {transform_indices = @transform_2, window_bounds = array<i64: 128, 16>}, {transform_indices = @transform_3, window_bounds = array<i64: 1, 2, 16>}]} {
    %c0 = arith.constant 0 : index
    %c0_0 = arith.constant 0 : index
    %0 = vector.load %arg1[%c0, %c0_0] : memref<128x288xbf16, #tpu.memory_space<vmem>>, vector<128x288xbf16>
    %c0_1 = arith.constant 0 : index
    %c0_2 = arith.constant 0 : index
    %1 = vector.load %arg2[%c0_1, %c0_2] : memref<288x16xbf16, #tpu.memory_space<vmem>>, vector<288x16xbf16>
    %cst = arith.constant dense<0.000000e+00> : vector<128x16xf32>
    %2 = tpu.matmul %0, %1, %cst {dimension_numbers = #tpu.dot_dimension_numbers<[1], [0], [0], [1], [0, 0, 1, 1], [], []>} : vector<128x288xbf16>, vector<288x16xbf16>, vector<128x16xf32> -> vector<128x16xf32>
    %c0_3 = arith.constant 0 : index
    %c0_4 = arith.constant 0 : index
    %3 = vector.load %arg3[%c0_3, %c0_4] : memref<128x16xf32, #tpu.memory_space<vmem>>, vector<128x16xf32>
    tpu.vector_store %arg3[%c0_3, %c0_4], %2 {strides = array<i32>} : memref<128x16xf32, #tpu.memory_space<vmem>>, vector<128x16xf32>,
    %cst_5 = arith.constant dense<0.000000e+00> : vector<16xf32>
    %4 = vector.multi_reduction <add>, %2, %cst_5 [0] : vector<128x16xf32> to vector<16xf32>
    %5 = vector.shape_cast %4 : vector<16xf32> to vector<1x16xf32>
    %6 = arith.mulf %2, %2 : vector<128x16xf32>
    %cst_6 = arith.constant dense<0.000000e+00> : vector<16xf32>
    %7 = vector.multi_reduction <add>, %6, %cst_6 [0] : vector<128x16xf32> to vector<16xf32>
    %8 = vector.shape_cast %7 : vector<16xf32> to vector<1x16xf32>
    %9 = tpu.concatenate %5, %8 in 0 : vector<1x16xf32>, vector<1x16xf32> -> vector<2x16xf32>
    %10 = vector.shape_cast %9 : vector<2x16xf32> to vector<1x2x16xf32>
    %c0_7 = arith.constant 0 : index
    %c0_8 = arith.constant 0 : index
    %c0_9 = arith.constant 0 : index
    %11 = vector.load %arg4[%c0_7, %c0_8, %c0_9] : memref<1x2x16xf32, #tpu.memory_space<vmem>>, vector<1x2x16xf32>
    tpu.vector_store %arg4[%c0_7, %c0_8, %c0_9], %10 {strides = array<i32>} : memref<1x2x16xf32, #tpu.memory_space<vmem>>, vector<1x2x16xf32>,
    return
  }
  func.func @transform_0(%arg0: i32) -> (i32, i32) {
    %c0_i32 = arith.constant 0 : i32
    %c0_i32_0 = arith.constant 0 : i32
    return %arg0, %c0_i32 : i32, i32
  }
  func.func @transform_1(%arg0: i32) -> (i32, i32) {
    %c0_i32 = arith.constant 0 : i32
    %c0_i32_0 = arith.constant 0 : i32
    %c0_i32_1 = arith.constant 0 : i32
    return %c0_i32, %c0_i32_0 : i32, i32
  }
  func.func @transform_2(%arg0: i32) -> (i32, i32) {
    %c0_i32 = arith.constant 0 : i32
    %c0_i32_0 = arith.constant 0 : i32
    return %arg0, %c0_i32 : i32, i32
  }
  func.func @transform_3(%arg0: i32) -> (i32, i32, i32) {
    %c0_i32 = arith.constant 0 : i32
    %c0_i32_0 = arith.constant 0 : i32
    %c0_i32_1 = arith.constant 0 : i32
    return %arg0, %c0_i32, %c0_i32_0 : i32, i32, i32
  }
}

module attributes {stable_mosaic.version = 11 : i64} {
  func.func @_gemm_bias_kernel(%arg0: i32, %arg1: memref<128x16xbf16, #tpu.memory_space<vmem>>, %arg2: memref<16x32xbf16, #tpu.memory_space<vmem>>, %arg3: memref<1x32xf32, #tpu.memory_space<vmem>>, %arg4: memref<128x32xbf16, #tpu.memory_space<vmem>>) attributes {dimension_semantics = [#tpu.dimension_semantics<parallel>], iteration_bounds = array<i64: 1>, scalar_prefetch = 0 : i64, scratch_operands = 0 : i64, tpu.core_type = #tpu.core_type<tc>, window_params = [{transform_indices = @transform_0, window_bounds = array<i64: 128, 16>}, {pipeline_mode = #tpu.pipeline_mode<synchronous>, transform_indices = @transform_1, window_bounds = array<i64: 16, 32>}, {pipeline_mode = #tpu.pipeline_mode<synchronous>, transform_indices = @transform_2, window_bounds = array<i64: 1, 32>}, {transform_indices = @transform_3, window_bounds = array<i64: 128, 32>}]} {
    %c0 = arith.constant 0 : index
    %c0_0 = arith.constant 0 : index
    %0 = vector.load %arg1[%c0, %c0_0] : memref<128x16xbf16, #tpu.memory_space<vmem>>, vector<128x16xbf16>
    %c0_1 = arith.constant 0 : index
    %c0_2 = arith.constant 0 : index
    %1 = vector.load %arg2[%c0_1, %c0_2] : memref<16x32xbf16, #tpu.memory_space<vmem>>, vector<16x32xbf16>
    %cst = arith.constant dense<0.000000e+00> : vector<128x32xf32>
    %2 = tpu.matmul %0, %1, %cst {dimension_numbers = #tpu.dot_dimension_numbers<[1], [0], [0], [1], [0, 0, 1, 1], [], []>} : vector<128x16xbf16>, vector<16x32xbf16>, vector<128x32xf32> -> vector<128x32xf32>
    %c0_3 = arith.constant 0 : index
    %c0_4 = arith.constant 0 : index
    %3 = vector.load %arg3[%c0_3, %c0_4] : memref<1x32xf32, #tpu.memory_space<vmem>>, vector<1x32xf32>
    %4 = vector.broadcast %3 : vector<1x32xf32> to vector<128x32xf32>
    %5 = arith.addf %2, %4 : vector<128x32xf32>
    %6 = arith.truncf %5 : vector<128x32xf32> to vector<128x32xbf16>
    %c0_5 = arith.constant 0 : index
    %c0_6 = arith.constant 0 : index
    %7 = vector.load %arg4[%c0_5, %c0_6] : memref<128x32xbf16, #tpu.memory_space<vmem>>, vector<128x32xbf16>
    tpu.vector_store %arg4[%c0_5, %c0_6], %6 {strides = array<i32>} : memref<128x32xbf16, #tpu.memory_space<vmem>>, vector<128x32xbf16>,
    return
  }
  func.func @transform_0(%arg0: i32) -> (i32, i32) {
    %c0_i32 = arith.constant 0 : i32
    %c0_i32_0 = arith.constant 0 : i32
    return %arg0, %c0_i32 : i32, i32
  }
  func.func @transform_1(%arg0: i32) -> (i32, i32) {
    %c0_i32 = arith.constant 0 : i32
    %c0_i32_0 = arith.constant 0 : i32
    %c0_i32_1 = arith.constant 0 : i32
    return %c0_i32, %c0_i32_0 : i32, i32
  }
  func.func @transform_2(%arg0: i32) -> (i32, i32) {
    %c0_i32 = arith.constant 0 : i32
    %c0_i32_0 = arith.constant 0 : i32
    %c0_i32_1 = arith.constant 0 : i32
    return %c0_i32, %c0_i32_0 : i32, i32
  }
  func.func @transform_3(%arg0: i32) -> (i32, i32) {
    %c0_i32 = arith.constant 0 : i32
    %c0_i32_0 = arith.constant 0 : i32
    return %arg0, %c0_i32 : i32, i32
  }
}

module attributes {stable_mosaic.version = 11 : i64} {
  func.func @_gemm_stats_kernel(%arg0: i32, %arg1: memref<512x144xbf16, #tpu.memory_space<vmem>>, %arg2: memref<144x8xbf16, #tpu.memory_space<vmem>>, %arg3: memref<512x8xf32, #tpu.memory_space<vmem>>, %arg4: memref<1x2x8xf32, #tpu.memory_space<vmem>>) attributes {dimension_semantics = [#tpu.dimension_semantics<parallel>], iteration_bounds = array<i64: 1>, scalar_prefetch = 0 : i64, scratch_operands = 0 : i64, tpu.core_type = #tpu.core_type<tc>, window_params = [{transform_indices = @transform_0, window_bounds = array<i64: 512, 144>}, {pipeline_mode = #tpu.pipeline_mode<synchronous>, transform_indices = @transform_1, window_bounds = array<i64: 144, 8>}, {transform_indices = @transform_2, window_bounds = array<i64: 512, 8>}, {transform_indices = @transform_3, window_bounds = array<i64: 1, 2, 8>}]} {
    %c0 = arith.constant 0 : index
    %c0_0 = arith.constant 0 : index
    %0 = vector.load %arg1[%c0, %c0_0] : memref<512x144xbf16, #tpu.memory_space<vmem>>, vector<512x144xbf16>
    %c0_1 = arith.constant 0 : index
    %c0_2 = arith.constant 0 : index
    %1 = vector.load %arg2[%c0_1, %c0_2] : memref<144x8xbf16, #tpu.memory_space<vmem>>, vector<144x8xbf16>
    %cst = arith.constant dense<0.000000e+00> : vector<512x8xf32>
    %2 = tpu.matmul %0, %1, %cst {dimension_numbers = #tpu.dot_dimension_numbers<[1], [0], [0], [1], [0, 0, 1, 1], [], []>} : vector<512x144xbf16>, vector<144x8xbf16>, vector<512x8xf32> -> vector<512x8xf32>
    %c0_3 = arith.constant 0 : index
    %c0_4 = arith.constant 0 : index
    %3 = vector.load %arg3[%c0_3, %c0_4] : memref<512x8xf32, #tpu.memory_space<vmem>>, vector<512x8xf32>
    tpu.vector_store %arg3[%c0_3, %c0_4], %2 {strides = array<i32>} : memref<512x8xf32, #tpu.memory_space<vmem>>, vector<512x8xf32>,
    %cst_5 = arith.constant dense<0.000000e+00> : vector<8xf32>
    %4 = vector.multi_reduction <add>, %2, %cst_5 [0] : vector<512x8xf32> to vector<8xf32>
    %5 = vector.shape_cast %4 : vector<8xf32> to vector<1x8xf32>
    %6 = arith.mulf %2, %2 : vector<512x8xf32>
    %cst_6 = arith.constant dense<0.000000e+00> : vector<8xf32>
    %7 = vector.multi_reduction <add>, %6, %cst_6 [0] : vector<512x8xf32> to vector<8xf32>
    %8 = vector.shape_cast %7 : vector<8xf32> to vector<1x8xf32>
    %9 = tpu.concatenate %5, %8 in 0 : vector<1x8xf32>, vector<1x8xf32> -> vector<2x8xf32>
    %10 = vector.shape_cast %9 : vector<2x8xf32> to vector<1x2x8xf32>
    %c0_7 = arith.constant 0 : index
    %c0_8 = arith.constant 0 : index
    %c0_9 = arith.constant 0 : index
    %11 = vector.load %arg4[%c0_7, %c0_8, %c0_9] : memref<1x2x8xf32, #tpu.memory_space<vmem>>, vector<1x2x8xf32>
    tpu.vector_store %arg4[%c0_7, %c0_8, %c0_9], %10 {strides = array<i32>} : memref<1x2x8xf32, #tpu.memory_space<vmem>>, vector<1x2x8xf32>,
    return
  }
  func.func @transform_0(%arg0: i32) -> (i32, i32) {
    %c0_i32 = arith.constant 0 : i32
    %c0_i32_0 = arith.constant 0 : i32
    return %arg0, %c0_i32 : i32, i32
  }
  func.func @transform_1(%arg0: i32) -> (i32, i32) {
    %c0_i32 = arith.constant 0 : i32
    %c0_i32_0 = arith.constant 0 : i32
    %c0_i32_1 = arith.constant 0 : i32
    return %c0_i32, %c0_i32_0 : i32, i32
  }
  func.func @transform_2(%arg0: i32) -> (i32, i32) {
    %c0_i32 = arith.constant 0 : i32
    %c0_i32_0 = arith.constant 0 : i32
    return %arg0, %c0_i32 : i32, i32
  }
  func.func @transform_3(%arg0: i32) -> (i32, i32, i32) {
    %c0_i32 = arith.constant 0 : i32
    %c0_i32_0 = arith.constant 0 : i32
    %c0_i32_1 = arith.constant 0 : i32
    return %arg0, %c0_i32, %c0_i32_0 : i32, i32, i32
  }
}

module attributes {stable_mosaic.version = 11 : i64} {
  func.func @_bn_relu_proj_kernel(%arg0: i32, %arg1: memref<512x8xf32, #tpu.memory_space<vmem>>, %arg2: memref<1x8xf32, #tpu.memory_space<vmem>>, %arg3: memref<1x8xf32, #tpu.memory_space<vmem>>, %arg4: memref<8x1xf32, #tpu.memory_space<vmem>>, %arg5: memref<1x1xf32, #tpu.memory_space<vmem>>, %arg6: memref<512x1xf32, #tpu.memory_space<vmem>>) attributes {dimension_semantics = [#tpu.dimension_semantics<parallel>], iteration_bounds = array<i64: 1>, scalar_prefetch = 0 : i64, scratch_operands = 0 : i64, tpu.core_type = #tpu.core_type<tc>, window_params = [{transform_indices = @transform_0, window_bounds = array<i64: 512, 8>}, {pipeline_mode = #tpu.pipeline_mode<synchronous>, transform_indices = @transform_1, window_bounds = array<i64: 1, 8>}, {pipeline_mode = #tpu.pipeline_mode<synchronous>, transform_indices = @transform_2, window_bounds = array<i64: 1, 8>}, {pipeline_mode = #tpu.pipeline_mode<synchronous>, transform_indices = @transform_3, window_bounds = array<i64: 8, 1>}, {pipeline_mode = #tpu.pipeline_mode<synchronous>, transform_indices = @transform_4, window_bounds = array<i64: 1, 1>}, {transform_indices = @transform_5, window_bounds = array<i64: 512, 1>}]} {
    %c0 = arith.constant 0 : index
    %c0_0 = arith.constant 0 : index
    %0 = vector.load %arg1[%c0, %c0_0] : memref<512x8xf32, #tpu.memory_space<vmem>>, vector<512x8xf32>
    %c0_1 = arith.constant 0 : index
    %c0_2 = arith.constant 0 : index
    %1 = vector.load %arg2[%c0_1, %c0_2] : memref<1x8xf32, #tpu.memory_space<vmem>>, vector<1x8xf32>
    %2 = vector.broadcast %1 : vector<1x8xf32> to vector<512x8xf32>
    %3 = arith.mulf %0, %2 : vector<512x8xf32>
    %c0_3 = arith.constant 0 : index
    %c0_4 = arith.constant 0 : index
    %4 = vector.load %arg3[%c0_3, %c0_4] : memref<1x8xf32, #tpu.memory_space<vmem>>, vector<1x8xf32>
    %5 = vector.broadcast %4 : vector<1x8xf32> to vector<512x8xf32>
    %6 = arith.addf %3, %5 : vector<512x8xf32>
    %cst = arith.constant 0.000000e+00 : f32
    %7 = vector.broadcast %cst : f32 to vector<512x8xf32>
    %8 = arith.maximumf %6, %7 : vector<512x8xf32>
    %c0_5 = arith.constant 0 : index
    %c0_6 = arith.constant 0 : index
    %9 = vector.load %arg4[%c0_5, %c0_6] : memref<8x1xf32, #tpu.memory_space<vmem>>, vector<8x1xf32>
    %cst_7 = arith.constant dense<0.000000e+00> : vector<512x1xf32>
    %10 = tpu.matmul %8, %9, %cst_7 {dimension_numbers = #tpu.dot_dimension_numbers<[1], [0], [0], [1], [0, 0, 1, 1], [], []>} : vector<512x8xf32>, vector<8x1xf32>, vector<512x1xf32> -> vector<512x1xf32>
    %c0_8 = arith.constant 0 : index
    %c0_9 = arith.constant 0 : index
    %11 = vector.load %arg5[%c0_8, %c0_9] : memref<1x1xf32, #tpu.memory_space<vmem>>, vector<1x1xf32>
    %12 = vector.broadcast %11 : vector<1x1xf32> to vector<512x1xf32>
    %13 = arith.addf %10, %12 : vector<512x1xf32>
    %c0_10 = arith.constant 0 : index
    %c0_11 = arith.constant 0 : index
    %14 = vector.load %arg6[%c0_10, %c0_11] : memref<512x1xf32, #tpu.memory_space<vmem>>, vector<512x1xf32>
    tpu.vector_store %arg6[%c0_10, %c0_11], %13 {strides = array<i32>} : memref<512x1xf32, #tpu.memory_space<vmem>>, vector<512x1xf32>,
    return
  }
  func.func @transform_0(%arg0: i32) -> (i32, i32) {
    %c0_i32 = arith.constant 0 : i32
    %c0_i32_0 = arith.constant 0 : i32
    return %arg0, %c0_i32 : i32, i32
  }
  func.func @transform_1(%arg0: i32) -> (i32, i32) {
    %c0_i32 = arith.constant 0 : i32
    %c0_i32_0 = arith.constant 0 : i32
    %c0_i32_1 = arith.constant 0 : i32
    return %c0_i32, %c0_i32_0 : i32, i32
  }
  func.func @transform_2(%arg0: i32) -> (i32, i32) {
    %c0_i32 = arith.constant 0 : i32
    %c0_i32_0 = arith.constant 0 : i32
    %c0_i32_1 = arith.constant 0 : i32
    return %c0_i32, %c0_i32_0 : i32, i32
  }
  func.func @transform_3(%arg0: i32) -> (i32, i32) {
    %c0_i32 = arith.constant 0 : i32
    %c0_i32_0 = arith.constant 0 : i32
    %c0_i32_1 = arith.constant 0 : i32
    return %c0_i32, %c0_i32_0 : i32, i32
  }
  func.func @transform_4(%arg0: i32) -> (i32, i32) {
    %c0_i32 = arith.constant 0 : i32
    %c0_i32_0 = arith.constant 0 : i32
    %c0_i32_1 = arith.constant 0 : i32
    return %c0_i32, %c0_i32_0 : i32, i32
  }
  func.func @transform_5(%arg0: i32) -> (i32, i32) {
    %c0_i32 = arith.constant 0 : i32
    %c0_i32_0 = arith.constant 0 : i32
    return %arg0, %c0_i32 : i32, i32
  }
}

</mosaic_0001>

<llo_original>
// kernel: unet_forward.25
$region0: #{unet_forward.25}
  #allocation0 [shape = 'u32[]', space=smem, size = 0x4, offset = 0x4, fixed_abs, tag = 'smem constant byte address 0x4 - core index']
  #allocation1 [shape = 'u32[144,128]{1,0:T(1,128)}', space=vmem, size = 0x12000, scoped, tag = 'internal scratch']
  %s0 = inlined_call_operand.vmem [shape: f32[512,8], index: 0, kind: input, shape index: {}]
  %s1 = inlined_call_operand.vmem [shape: f32[1,8], index: 1, kind: input, shape index: {}]
  %s2 = inlined_call_operand.vmem [shape: f32[1,8], index: 2, kind: input, shape index: {}]
  %s3 = inlined_call_operand.vmem [shape: bf16[512,8], index: 3, kind: output, shape index: {}]
  %s4 = sld [smem:[#allocation0]]
  $region22: #{unet_forward.25} parent=0
    _
  %s6 = ssub.s32 1, %s4
  %s7 = scalar_select 0, %s6, %s4
  // Predicated region
  $region2: #{unet_forward.25} parent=0 // pred_check
    _
  $region3: #{unet_forward.25} parent=0 // pred_check_branch
    %9 = sbr.rel (0) target = $region5
  $region4: #{unet_forward.25} parent=0 // pred_region
    _
  $region5: #{unet_forward.25} parent=0 // pred_fallthru
    _
  // Predicated region
  $region6: #{unet_forward.25} parent=0 // pred_check
    _
  $region7: #{unet_forward.25} parent=0 // pred_check_branch
    %11 = sbr.rel (0) target = $region9
  $region8: #{unet_forward.25} parent=0 // pred_region
    _
  $region9: #{unet_forward.25} parent=0 // pred_fallthru
    _
  // Predicated region
  $region10: #{unet_forward.25} parent=0 // pred_check
    _
  $region11: #{unet_forward.25} parent=0 // pred_check_branch
    %13 = sbr.rel (0) target = $region13
  $region12: #{unet_forward.25} parent=0 // pred_region
    _
  $region13: #{unet_forward.25} parent=0 // pred_fallthru
    _
  %v14 = vld [vmem:[%s0] sm:$0xff]
  %v15 = vld [vmem:[%s0 + $0x8] sm:$0xff]
  %v16 = vld [vmem:[%s0 + $0x10] sm:$0xff]
  %v17 = vld [vmem:[%s0 + $0x18] sm:$0xff]
  %v18 = vld [vmem:[%s0 + $0x20] sm:$0xff]
  %v19 = vld [vmem:[%s0 + $0x28] sm:$0xff]
  %v20 = vld [vmem:[%s0 + $0x30] sm:$0xff]
  %v21 = vld [vmem:[%s0 + $0x38] sm:$0xff]
  %v22 = vld [vmem:[%s0 + $0x40] sm:$0xff]
  %v23 = vld [vmem:[%s0 + $0x48] sm:$0xff]
  %v24 = vld [vmem:[%s0 + $0x50] sm:$0xff]
  %v25 = vld [vmem:[%s0 + $0x58] sm:$0xff]
  %v26 = vld [vmem:[%s0 + $0x60] sm:$0xff]
  %v27 = vld [vmem:[%s0 + $0x68] sm:$0xff]
  %v28 = vld [vmem:[%s0 + $0x70] sm:$0xff]
  %v29 = vld [vmem:[%s0 + $0x78] sm:$0xff]
  %v30 = vld [vmem:[%s0 + $0x80] sm:$0xff]
  %v31 = vld [vmem:[%s0 + $0x88] sm:$0xff]
  %v32 = vld [vmem:[%s0 + $0x90] sm:$0xff]
  %v33 = vld [vmem:[%s0 + $0x98] sm:$0xff]
  %v34 = vld [vmem:[%s0 + $0xa0] sm:$0xff]
  %v35 = vld [vmem:[%s0 + $0xa8] sm:$0xff]
  %v36 = vld [vmem:[%s0 + $0xb0] sm:$0xff]
  %v37 = vld [vmem:[%s0 + $0xb8] sm:$0xff]
  %v38 = vld [vmem:[%s0 + $0xc0] sm:$0xff]
  %v39 = vld [vmem:[%s0 + $0xc8] sm:$0xff]
  %v40 = vld [vmem:[%s0 + $0xd0] sm:$0xff]
  %v41 = vld [vmem:[%s0 + $0xd8] sm:$0xff]
  %v42 = vld [vmem:[%s0 + $0xe0] sm:$0xff]
  %v43 = vld [vmem:[%s0 + $0xe8] sm:$0xff]
  %v44 = vld [vmem:[%s0 + $0xf0] sm:$0xff]
  %v45 = vld [vmem:[%s0 + $0xf8] sm:$0xff]
  %v46 = vld [vmem:[%s0 + $0x100] sm:$0xff]
  %v47 = vld [vmem:[%s0 + $0x108] sm:$0xff]
  %v48 = vld [vmem:[%s0 + $0x110] sm:$0xff]
  %v49 = vld [vmem:[%s0 + $0x118] sm:$0xff]
  %v50 = vld [vmem:[%s0 + $0x120] sm:$0xff]
  %v51 = vld [vmem:[%s0 + $0x128] sm:$0xff]
  %v52 = vld [vmem:[%s0 + $0x130] sm:$0xff]
  %v53 = vld [vmem:[%s0 + $0x138] sm:$0xff]
  %v54 = vld [vmem:[%s0 + $0x140] sm:$0xff]
  %v55 = vld [vmem:[%s0 + $0x148] sm:$0xff]
  %v56 = vld [vmem:[%s0 + $0x150] sm:$0xff]
  %v57 = vld [vmem:[%s0 + $0x158] sm:$0xff]
  %v58 = vld [vmem:[%s0 + $0x160] sm:$0xff]
  %v59 = vld [vmem:[%s0 + $0x168] sm:$0xff]
  %v60 = vld [vmem:[%s0 + $0x170] sm:$0xff]
  %v61 = vld [vmem:[%s0 + $0x178] sm:$0xff]
  %v62 = vld [vmem:[%s0 + $0x180] sm:$0xff]
  %v63 = vld [vmem:[%s0 + $0x188] sm:$0xff]
  %v64 = vld [vmem:[%s0 + $0x190] sm:$0xff]
  %v65 = vld [vmem:[%s0 + $0x198] sm:$0xff]
  %v66 = vld [vmem:[%s0 + $0x1a0] sm:$0xff]
  %v67 = vld [vmem:[%s0 + $0x1a8] sm:$0xff]
  %v68 = vld [vmem:[%s0 + $0x1b0] sm:$0xff]
  %v69 = vld [vmem:[%s0 + $0x1b8] sm:$0xff]
  %v70 = vld [vmem:[%s0 + $0x1c0] sm:$0xff]
  %v71 = vld [vmem:[%s0 + $0x1c8] sm:$0xff]
  %v72 = vld [vmem:[%s0 + $0x1d0] sm:$0xff]
  %v73 = vld [vmem:[%s0 + $0x1d8] sm:$0xff]
  %v74 = vld [vmem:[%s0 + $0x1e0] sm:$0xff]
  %v75 = vld [vmem:[%s0 + $0x1e8] sm:$0xff]
  %v76 = vld [vmem:[%s0 + $0x1f0] sm:$0xff]
  %v77 = vld [vmem:[%s0 + $0x1f8] sm:$0xff]
  %v78 = vld [vmem:[%s1] sm:$0x1]
  %v80 = vlaneseq
  %v81 = vshrl.u32 %v80, 7
  %v82 = vsub.s32 0, %v81
  %v83 = vrot.slane %v78, %v82
  %v85 = vmul.f32 %v14, %v83
  %v86 = vmul.f32 %v15, %v83
  %v87 = vmul.f32 %v16, %v83
  %v88 = vmul.f32 %v17, %v83
  %v89 = vmul.f32 %v18, %v83
  %v90 = vmul.f32 %v19, %v83
  %v91 = vmul.f32 %v20, %v83
  %v92 = vmul.f32 %v21, %v83
  %v93 = vmul.f32 %v22, %v83
  %v94 = vmul.f32 %v23, %v83
  %v95 = vmul.f32 %v24, %v83
  %v96 = vmul.f32 %v25, %v83
  %v97 = vmul.f32 %v26, %v83
  %v98 = vmul.f32 %v27, %v83
  %v99 = vmul.f32 %v28, %v83
  %v100 = vmul.f32 %v29, %v83
  %v101 = vmul.f32 %v30, %v83
  %v102 = vmul.f32 %v31, %v83
  %v103 = vmul.f32 %v32, %v83
  %v104 = vmul.f32 %v33, %v83
  %v105 = vmul.f32 %v34, %v83
  %v106 = vmul.f32 %v35, %v83
  %v107 = vmul.f32 %v36, %v83
  %v108 = vmul.f32 %v37, %v83
  %v109 = vmul.f32 %v38, %v83
  %v110 = vmul.f32 %v39, %v83
  %v111 = vmul.f32 %v40, %v83
  %v112 = vmul.f32 %v41, %v83
  %v113 = vmul.f32 %v42, %v83
  %v114 = vmul.f32 %v43, %v83
  %v115 = vmul.f32 %v44, %v83
  %v116 = vmul.f32 %v45, %v83
  %v117 = vmul.f32 %v46, %v83
  %v118 = vmul.f32 %v47, %v83
  %v119 = vmul.f32 %v48, %v83
  %v120 = vmul.f32 %v49, %v83
  %v121 = vmul.f32 %v50, %v83
  %v122 = vmul.f32 %v51, %v83
  %v123 = vmul.f32 %v52, %v83
  %v124 = vmul.f32 %v53, %v83
  %v125 = vmul.f32 %v54, %v83
  %v126 = vmul.f32 %v55, %v83
  %v127 = vmul.f32 %v56, %v83
  %v128 = vmul.f32 %v57, %v83
  %v129 = vmul.f32 %v58, %v83
  %v130 = vmul.f32 %v59, %v83
  %v131 = vmul.f32 %v60, %v83
  %v132 = vmul.f32 %v61, %v83
  %v133 = vmul.f32 %v62, %v83
  %v134 = vmul.f32 %v63, %v83
  %v135 = vmul.f32 %v64, %v83
  %v136 = vmul.f32 %v65, %v83
  %v137 = vmul.f32 %v66, %v83
  %v138 = vmul.f32 %v67, %v83
  %v139 = vmul.f32 %v68, %v83
  %v140 = vmul.f32 %v69, %v83
  %v141 = vmul.f32 %v70, %v83
  %v142 = vmul.f32 %v71, %v83
  %v143 = vmul.f32 %v72, %v83
  %v144 = vmul.f32 %v73, %v83
  %v145 = vmul.f32 %v74, %v83
  %v146 = vmul.f32 %v75, %v83
  %v147 = vmul.f32 %v76, %v83
  %v148 = vmul.f32 %v77, %v83
  %v149 = vld [vmem:[%s2] sm:$0x1]
  %v151 = vlaneseq
  %v152 = vshrl.u32 %v151, 7
  %v153 = vsub.s32 0, %v152
  %v154 = vrot.slane %v149, %v153
  %v156 = vadd.f32 %v85, %v154
  %v157 = vadd.f32 %v86, %v154
  %v158 = vadd.f32 %v87, %v154
  %v159 = vadd.f32 %v88, %v154
  %v160 = vadd.f32 %v89, %v154
  %v161 = vadd.f32 %v90, %v154
  %v162 = vadd.f32 %v91, %v154
  %v163 = vadd.f32 %v92, %v154
  %v164 = vadd.f32 %v93, %v154
  %v165 = vadd.f32 %v94, %v154
  %v166 = vadd.f32 %v95, %v154
  %v167 = vadd.f32 %v96, %v154
  %v168 = vadd.f32 %v97, %v154
  %v169 = vadd.f32 %v98, %v154
  %v170 = vadd.f32 %v99, %v154
  %v171 = vadd.f32 %v100, %v154
  %v172 = vadd.f32 %v101, %v154
  %v173 = vadd.f32 %v102, %v154
  %v174 = vadd.f32 %v103, %v154
  %v175 = vadd.f32 %v104, %v154
  %v176 = vadd.f32 %v105, %v154
  %v177 = vadd.f32 %v106, %v154
  %v178 = vadd.f32 %v107, %v154
  %v179 = vadd.f32 %v108, %v154
  %v180 = vadd.f32 %v109, %v154
  %v181 = vadd.f32 %v110, %v154
  %v182 = vadd.f32 %v111, %v154
  %v183 = vadd.f32 %v112, %v154
  %v184 = vadd.f32 %v113, %v154
  %v185 = vadd.f32 %v114, %v154
  %v186 = vadd.f32 %v115, %v154
  %v187 = vadd.f32 %v116, %v154
  %v188 = vadd.f32 %v117, %v154
  %v189 = vadd.f32 %v118, %v154
  %v190 = vadd.f32 %v119, %v154
  %v191 = vadd.f32 %v120, %v154
  %v192 = vadd.f32 %v121, %v154
  %v193 = vadd.f32 %v122, %v154
  %v194 = vadd.f32 %v123, %v154
  %v195 = vadd.f32 %v124, %v154
  %v196 = vadd.f32 %v125, %v154
  %v197 = vadd.f32 %v126, %v154
  %v198 = vadd.f32 %v127, %v154
  %v199 = vadd.f32 %v128, %v154
  %v200 = vadd.f32 %v129, %v154
  %v201 = vadd.f32 %v130, %v154
  %v202 = vadd.f32 %v131, %v154
  %v203 = vadd.f32 %v132, %v154
  %v204 = vadd.f32 %v133, %v154
  %v205 = vadd.f32 %v134, %v154
  %v206 = vadd.f32 %v135, %v154
  %v207 = vadd.f32 %v136, %v154
  %v208 = vadd.f32 %v137, %v154
  %v209 = vadd.f32 %v138, %v154
  %v210 = vadd.f32 %v139, %v154
  %v211 = vadd.f32 %v140, %v154
  %v212 = vadd.f32 %v141, %v154
  %v213 = vadd.f32 %v142, %v154
  %v214 = vadd.f32 %v143, %v154
  %v215 = vadd.f32 %v144, %v154
  %v216 = vadd.f32 %v145, %v154
  %v217 = vadd.f32 %v146, %v154
  %v218 = vadd.f32 %v147, %v154
  %v219 = vadd.f32 %v148, %v154
  %v220 = vmax.f32 %v156, 0.0
  %v221 = vmax.f32 %v157, 0.0
  %v222 = vmax.f32 %v158, 0.0
  %v223 = vmax.f32 %v159, 0.0
  %v224 = vmax.f32 %v160, 0.0
  %v225 = vmax.f32 %v161, 0.0
  %v226 = vmax.f32 %v162, 0.0
  %v227 = vmax.f32 %v163, 0.0
  %v228 = vmax.f32 %v164, 0.0
  %v229 = vmax.f32 %v165, 0.0
  %v230 = vmax.f32 %v166, 0.0
  %v231 = vmax.f32 %v167, 0.0
  %v232 = vmax.f32 %v168, 0.0
  %v233 = vmax.f32 %v169, 0.0
  %v234 = vmax.f32 %v170, 0.0
  %v235 = vmax.f32 %v171, 0.0
  %v236 = vmax.f32 %v172, 0.0
  %v237 = vmax.f32 %v173, 0.0
  %v238 = vmax.f32 %v174, 0.0
  %v239 = vmax.f32 %v175, 0.0
  %v240 = vmax.f32 %v176, 0.0
  %v241 = vmax.f32 %v177, 0.0
  %v242 = vmax.f32 %v178, 0.0
  %v243 = vmax.f32 %v179, 0.0
  %v244 = vmax.f32 %v180, 0.0
  %v245 = vmax.f32 %v181, 0.0
  %v246 = vmax.f32 %v182, 0.0
  %v247 = vmax.f32 %v183, 0.0
  %v248 = vmax.f32 %v184, 0.0
  %v249 = vmax.f32 %v185, 0.0
  %v250 = vmax.f32 %v186, 0.0
  %v251 = vmax.f32 %v187, 0.0
  %v252 = vmax.f32 %v188, 0.0
  %v253 = vmax.f32 %v189, 0.0
  %v254 = vmax.f32 %v190, 0.0
  %v255 = vmax.f32 %v191, 0.0
  %v256 = vmax.f32 %v192, 0.0
  %v257 = vmax.f32 %v193, 0.0
  %v258 = vmax.f32 %v194, 0.0
  %v259 = vmax.f32 %v195, 0.0
  %v260 = vmax.f32 %v196, 0.0
  %v261 = vmax.f32 %v197, 0.0
  %v262 = vmax.f32 %v198, 0.0
  %v263 = vmax.f32 %v199, 0.0
  %v264 = vmax.f32 %v200, 0.0
  %v265 = vmax.f32 %v201, 0.0
  %v266 = vmax.f32 %v202, 0.0
  %v267 = vmax.f32 %v203, 0.0
  %v268 = vmax.f32 %v204, 0.0
  %v269 = vmax.f32 %v205, 0.0
  %v270 = vmax.f32 %v206, 0.0
  %v271 = vmax.f32 %v207, 0.0
  %v272 = vmax.f32 %v208, 0.0
  %v273 = vmax.f32 %v209, 0.0
  %v274 = vmax.f32 %v210, 0.0
  %v275 = vmax.f32 %v211, 0.0
  %v276 = vmax.f32 %v212, 0.0
  %v277 = vmax.f32 %v213, 0.0
  %v278 = vmax.f32 %v214, 0.0
  %v279 = vmax.f32 %v215, 0.0
  %v280 = vmax.f32 %v216, 0.0
  %v281 = vmax.f32 %v217, 0.0
  %v282 = vmax.f32 %v218, 0.0
  %v283 = vmax.f32 %v219, 0.0
  %v284 = vpack.c.bf16 %v221, %v220
  %v285 = vpack.c.bf16 %v223, %v222
  %v286 = vpack.c.bf16 %v225, %v224
  %v287 = vpack.c.bf16 %v227, %v226
  %v288 = vpack.c.bf16 %v229, %v228
  %v289 = vpack.c.bf16 %v231, %v230
  %v290 = vpack.c.bf16 %v233, %v232
  %v291 = vpack.c.bf16 %v235, %v234
  %v292 = vpack.c.bf16 %v237, %v236
  %v293 = vpack.c.bf16 %v239, %v238
  %v294 = vpack.c.bf16 %v241, %v240
  %v295 = vpack.c.bf16 %v243, %v242
  %v296 = vpack.c.bf16 %v245, %v244
  %v297 = vpack.c.bf16 %v247, %v246
  %v298 = vpack.c.bf16 %v249, %v248
  %v299 = vpack.c.bf16 %v251, %v250
  %v300 = vpack.c.bf16 %v253, %v252
  %v301 = vpack.c.bf16 %v255, %v254
  %v302 = vpack.c.bf16 %v257, %v256
  %v303 = vpack.c.bf16 %v259, %v258
  %v304 = vpack.c.bf16 %v261, %v260
  %v305 = vpack.c.bf16 %v263, %v262
  %v306 = vpack.c.bf16 %v265, %v264
  %v307 = vpack.c.bf16 %v267, %v266
  %v308 = vpack.c.bf16 %v269, %v268
  %v309 = vpack.c.bf16 %v271, %v270
  %v310 = vpack.c.bf16 %v273, %v272
  %v311 = vpack.c.bf16 %v275, %v274
  %v312 = vpack.c.bf16 %v277, %v276
  %v313 = vpack.c.bf16 %v279, %v278
  %v314 = vpack.c.bf16 %v281, %v280
  %v315 = vpack.c.bf16 %v283, %v282
  %v348 = vunpack.c.l.b16 %v284
  %v349 = vunpack.c.h.b16 %v284
  %v350 = vunpack.c.l.b16 %v285
  %v351 = vunpack.c.h.b16 %v285
  %v352 = vunpack.c.l.b16 %v286
  %v353 = vunpack.c.h.b16 %v286
  %v354 = vunpack.c.l.b16 %v287
  %v355 = vunpack.c.h.b16 %v287
  %v356 = vunpack.c.l.b16 %v288
  %v357 = vunpack.c.h.b16 %v288
  %v358 = vunpack.c.l.b16 %v289
  %v359 = vunpack.c.h.b16 %v289
  %v360 = vunpack.c.l.b16 %v290
  %v361 = vunpack.c.h.b16 %v290
  %v362 = vunpack.c.l.b16 %v291
  %v363 = vunpack.c.h.b16 %v291
  %v364 = vunpack.c.l.b16 %v292
  %v365 = vunpack.c.h.b16 %v292
  %v366 = vunpack.c.l.b16 %v293
  %v367 = vunpack.c.h.b16 %v293
  %v368 = vunpack.c.l.b16 %v294
  %v369 = vunpack.c.h.b16 %v294
  %v370 = vunpack.c.l.b16 %v295
  %v371 = vunpack.c.h.b16 %v295
  %v372 = vunpack.c.l.b16 %v296
  %v373 = vunpack.c.h.b16 %v296
  %v374 = vunpack.c.l.b16 %v297
  %v375 = vunpack.c.h.b16 %v297
  %v376 = vunpack.c.l.b16 %v298
  %v377 = vunpack.c.h.b16 %v298
  %v378 = vunpack.c.l.b16 %v299
  %v379 = vunpack.c.h.b16 %v299
  %v380 = vunpack.c.l.b16 %v300
  %v381 = vunpack.c.h.b16 %v300
  %v382 = vunpack.c.l.b16 %v301
  %v383 = vunpack.c.h.b16 %v301
  %v384 = vunpack.c.l.b16 %v302
  %v385 = vunpack.c.h.b16 %v302
  %v386 = vunpack.c.l.b16 %v303
  %v387 = vunpack.c.h.b16 %v303
  %v388 = vunpack.c.l.b16 %v304
  %v389 = vunpack.c.h.b16 %v304
  %v390 = vunpack.c.l.b16 %v305
  %v391 = vunpack.c.h.b16 %v305
  %v392 = vunpack.c.l.b16 %v306
  %v393 = vunpack.c.h.b16 %v306
  %v394 = vunpack.c.l.b16 %v307
  %v395 = vunpack.c.h.b16 %v307
  %v396 = vunpack.c.l.b16 %v308
  %v397 = vunpack.c.h.b16 %v308
  %v398 = vunpack.c.l.b16 %v309
  %v399 = vunpack.c.h.b16 %v309
  %v400 = vunpack.c.l.b16 %v310
  %v401 = vunpack.c.h.b16 %v310
  %v402 = vunpack.c.l.b16 %v311
  %v403 = vunpack.c.h.b16 %v311
  %v404 = vunpack.c.l.b16 %v312
  %v405 = vunpack.c.h.b16 %v312
  %v406 = vunpack.c.l.b16 %v313
  %v407 = vunpack.c.h.b16 %v313
  %v408 = vunpack.c.l.b16 %v314
  %v409 = vunpack.c.h.b16 %v314
  %v410 = vunpack.c.l.b16 %v315
  %v411 = vunpack.c.h.b16 %v315
  %v412 = vpack.c.b16 %v348, %v348
  %v413 = vpack.c.b16 %v349, %v349
  %v414 = vpack.c.b16 %v350, %v350
  %v415 = vpack.c.b16 %v351, %v351
  %v416 = vpack.c.b16 %v352, %v352
  %v417 = vpack.c.b16 %v353, %v353
  %v418 = vpack.c.b16 %v354, %v354
  %v419 = vpack.c.b16 %v355, %v355
  %v420 = vpack.c.b16 %v356, %v356
  %v421 = vpack.c.b16 %v357, %v357
  %v422 = vpack.c.b16 %v358, %v358
  %v423 = vpack.c.b16 %v359, %v359
  %v424 = vpack.c.b16 %v360, %v360
  %v425 = vpack.c.b16 %v361, %v361
  %v426 = vpack.c.b16 %v362, %v362
  %v427 = vpack.c.b16 %v363, %v363
  %v428 = vpack.c.b16 %v364, %v364
  %v429 = vpack.c.b16 %v365, %v365
  %v430 = vpack.c.b16 %v366, %v366
  %v431 = vpack.c.b16 %v367, %v367
  %v432 = vpack.c.b16 %v368, %v368
  %v433 = vpack.c.b16 %v369, %v369
  %v434 = vpack.c.b16 %v370, %v370
  %v435 = vpack.c.b16 %v371, %v371
  %v436 = vpack.c.b16 %v372, %v372
  %v437 = vpack.c.b16 %v373, %v373
  %v438 = vpack.c.b16 %v374, %v374
  %v439 = vpack.c.b16 %v375, %v375
  %v440 = vpack.c.b16 %v376, %v376
  %v441 = vpack.c.b16 %v377, %v377
  %v442 = vpack.c.b16 %v378, %v378
  %v443 = vpack.c.b16 %v379, %v379
  %v444 = vpack.c.b16 %v380, %v380
  %v445 = vpack.c.b16 %v381, %v381
  %v446 = vpack.c.b16 %v382, %v382
  %v447 = vpack.c.b16 %v383, %v383
  %v448 = vpack.c.b16 %v384, %v384
  %v449 = vpack.c.b16 %v385, %v385
  %v450 = vpack.c.b16 %v386, %v386
  %v451 = vpack.c.b16 %v387, %v387
  %v452 = vpack.c.b16 %v388, %v388
  %v453 = vpack.c.b16 %v389, %v389
  %v454 = vpack.c.b16 %v390, %v390
  %v455 = vpack.c.b16 %v391, %v391
  %v456 = vpack.c.b16 %v392, %v392
  %v457 = vpack.c.b16 %v393, %v393
  %v458 = vpack.c.b16 %v394, %v394
  %v459 = vpack.c.b16 %v395, %v395
  %v460 = vpack.c.b16 %v396, %v396
  %v461 = vpack.c.b16 %v397, %v397
  %v462 = vpack.c.b16 %v398, %v398
  %v463 = vpack.c.b16 %v399, %v399
  %v464 = vpack.c.b16 %v400, %v400
  %v465 = vpack.c.b16 %v401, %v401
  %v466 = vpack.c.b16 %v402, %v402
  %v467 = vpack.c.b16 %v403, %v403
  %v468 = vpack.c.b16 %v404, %v404
  %v469 = vpack.c.b16 %v405, %v405
  %v470 = vpack.c.b16 %v406, %v406
  %v471 = vpack.c.b16 %v407, %v407
  %v472 = vpack.c.b16 %v408, %v408
  %v473 = vpack.c.b16 %v409, %v409
  %v474 = vpack.c.b16 %v410, %v410
  %v475 = vpack.c.b16 %v411, %v411
  %vm540 = vcmask 60416
  %541 = vst.msk [vmem:[%s3] sm:$0xf] %vm540, %v412
  %542 = vst.msk [vmem:[%s3 + $0x4] sm:$0xf] %vm540, %v413
  %543 = vst.msk [vmem:[%s3 + $0x8] sm:$0xf] %vm540, %v414
  %544 = vst.msk [vmem:[%s3 + $0xc] sm:$0xf] %vm540, %v415
  %545 = vst.msk [vmem:[%s3 + $0x10] sm:$0xf] %vm540, %v416
  %546 = vst.msk [vmem:[%s3 + $0x14] sm:$0xf] %vm540, %v417
  %547 = vst.msk [vmem:[%s3 + $0x18] sm:$0xf] %vm540, %v418
  %548 = vst.msk [vmem:[%s3 + $0x1c] sm:$0xf] %vm540, %v419
  %549 = vst.msk [vmem:[%s3 + $0x20] sm:$0xf] %vm540, %v420
  %550 = vst.msk [vmem:[%s3 + $0x24] sm:$0xf] %vm540, %v421
  %551 = vst.msk [vmem:[%s3 + $0x28] sm:$0xf] %vm540, %v422
  %552 = vst.msk [vmem:[%s3 + $0x2c] sm:$0xf] %vm540, %v423
  %553 = vst.msk [vmem:[%s3 + $0x30] sm:$0xf] %vm540, %v424
  %554 = vst.msk [vmem:[%s3 + $0x34] sm:$0xf] %vm540, %v425
  %555 = vst.msk [vmem:[%s3 + $0x38] sm:$0xf] %vm540, %v426
  %556 = vst.msk [vmem:[%s3 + $0x3c] sm:$0xf] %vm540, %v427
  %557 = vst.msk [vmem:[%s3 + $0x40] sm:$0xf] %vm540, %v428
  %558 = vst.msk [vmem:[%s3 + $0x44] sm:$0xf] %vm540, %v429
  %559 = vst.msk [vmem:[%s3 + $0x48] sm:$0xf] %vm540, %v430
  %560 = vst.msk [vmem:[%s3 + $0x4c] sm:$0xf] %vm540, %v431
  %561 = vst.msk [vmem:[%s3 + $0x50] sm:$0xf] %vm540, %v432
  %562 = vst.msk [vmem:[%s3 + $0x54] sm:$0xf] %vm540, %v433
  %563 = vst.msk [vmem:[%s3 + $0x58] sm:$0xf] %vm540, %v434
  %564 = vst.msk [vmem:[%s3 + $0x5c] sm:$0xf] %vm540, %v435
  %565 = vst.msk [vmem:[%s3 + $0x60] sm:$0xf] %vm540, %v436
  %566 = vst.msk [vmem:[%s3 + $0x64] sm:$0xf] %vm540, %v437
  %567 = vst.msk [vmem:[%s3 + $0x68] sm:$0xf] %vm540, %v438
  %568 = vst.msk [vmem:[%s3 + $0x6c] sm:$0xf] %vm540, %v439
  %569 = vst.msk [vmem:[%s3 + $0x70] sm:$0xf] %vm540, %v440
  %570 = vst.msk [vmem:[%s3 + $0x74] sm:$0xf] %vm540, %v441
  %571 = vst.msk [vmem:[%s3 + $0x78] sm:$0xf] %vm540, %v442
  %572 = vst.msk [vmem:[%s3 + $0x7c] sm:$0xf] %vm540, %v443
  %573 = vst.msk [vmem:[%s3 + $0x80] sm:$0xf] %vm540, %v444
  %574 = vst.msk [vmem:[%s3 + $0x84] sm:$0xf] %vm540, %v445
  %575 = vst.msk [vmem:[%s3 + $0x88] sm:$0xf] %vm540, %v446
  %576 = vst.msk [vmem:[%s3 + $0x8c] sm:$0xf] %vm540, %v447
  %577 = vst.msk [vmem:[%s3 + $0x90] sm:$0xf] %vm540, %v448
  %578 = vst.msk [vmem:[%s3 + $0x94] sm:$0xf] %vm540, %v449
  %579 = vst.msk [vmem:[%s3 + $0x98] sm:$0xf] %vm540, %v450
  %580 = vst.msk [vmem:[%s3 + $0x9c] sm:$0xf] %vm540, %v451
  %581 = vst.msk [vmem:[%s3 + $0xa0] sm:$0xf] %vm540, %v452
  %582 = vst.msk [vmem:[%s3 + $0xa4] sm:$0xf] %vm540, %v453
  %583 = vst.msk [vmem:[%s3 + $0xa8] sm:$0xf] %vm540, %v454
  %584 = vst.msk [vmem:[%s3 + $0xac] sm:$0xf] %vm540, %v455
  %585 = vst.msk [vmem:[%s3 + $0xb0] sm:$0xf] %vm540, %v456
  %586 = vst.msk [vmem:[%s3 + $0xb4] sm:$0xf] %vm540, %v457
  %587 = vst.msk [vmem:[%s3 + $0xb8] sm:$0xf] %vm540, %v458
  %588 = vst.msk [vmem:[%s3 + $0xbc] sm:$0xf] %vm540, %v459
  %589 = vst.msk [vmem:[%s3 + $0xc0] sm:$0xf] %vm540, %v460
  %590 = vst.msk [vmem:[%s3 + $0xc4] sm:$0xf] %vm540, %v461
  %591 = vst.msk [vmem:[%s3 + $0xc8] sm:$0xf] %vm540, %v462
  %592 = vst.msk [vmem:[%s3 + $0xcc] sm:$0xf] %vm540, %v463
  %593 = vst.msk [vmem:[%s3 + $0xd0] sm:$0xf] %vm540, %v464
  %594 = vst.msk [vmem:[%s3 + $0xd4] sm:$0xf] %vm540, %v465
  %595 = vst.msk [vmem:[%s3 + $0xd8] sm:$0xf] %vm540, %v466
  %596 = vst.msk [vmem:[%s3 + $0xdc] sm:$0xf] %vm540, %v467
  %597 = vst.msk [vmem:[%s3 + $0xe0] sm:$0xf] %vm540, %v468
  %598 = vst.msk [vmem:[%s3 + $0xe4] sm:$0xf] %vm540, %v469
  %599 = vst.msk [vmem:[%s3 + $0xe8] sm:$0xf] %vm540, %v470
  %600 = vst.msk [vmem:[%s3 + $0xec] sm:$0xf] %vm540, %v471
  %601 = vst.msk [vmem:[%s3 + $0xf0] sm:$0xf] %vm540, %v472
  %602 = vst.msk [vmem:[%s3 + $0xf4] sm:$0xf] %vm540, %v473
  %603 = vst.msk [vmem:[%s3 + $0xf8] sm:$0xf] %vm540, %v474
  %604 = vst.msk [vmem:[%s3 + $0xfc] sm:$0xf] %vm540, %v475
  // Predicated region
  $region14: #{unet_forward.25} parent=0 // pred_check
    _
  $region15: #{unet_forward.25} parent=0 // pred_check_branch
    %606 = sbr.rel (0) target = $region17
  $region16: #{unet_forward.25} parent=0 // pred_region
    _
  $region17: #{unet_forward.25} parent=0 // pred_fallthru
    _
  // Predicated region
  $region18: #{unet_forward.25} parent=0 // pred_check
    _
  $region19: #{unet_forward.25} parent=0 // pred_check_branch
    %608 = sbr.rel (0) target = $region21
  $region20: #{unet_forward.25} parent=0 // pred_region
    _
  $region21: #{unet_forward.25} parent=0 // pred_fallthru
    _

// kernel: unet_forward.24
$region0: #{unet_forward.24}
  #allocation0 [shape = 'u32[]', space=smem, size = 0x4, offset = 0x4, fixed_abs, tag = 'smem constant byte address 0x4 - core index']
  #allocation1 [shape = 'u32[144,128]{1,0:T(1,128)}', space=vmem, size = 0x12000, scoped, tag = 'internal scratch']
  %s0 = inlined_call_operand.vmem [shape: bf16[512,27], index: 0, kind: input, shape index: {}]
  %s1 = inlined_call_operand.vmem [shape: bf16[27,8], index: 1, kind: input, shape index: {}]
  %s2 = inlined_call_operand.vmem [shape: f32[512,8], index: 2, kind: output, shape index: {0}]
  %s3 = inlined_call_operand.vmem [shape: f32[1,2,8], index: 3, kind: output, shape index: {1}]
  %4 = xla_tuple %s2, %s3
  %s5 = sld [smem:[#allocation0]]
  $region26: #{unet_forward.24} parent=0
    _
  %s7 = ssub.s32 1, %s5
  %s8 = scalar_select 0, %s7, %s5
  // Predicated region
  $region2: #{unet_forward.24} parent=0 // pred_check
    _
  $region3: #{unet_forward.24} parent=0 // pred_check_branch
    %10 = sbr.rel (0) target = $region5
  $region4: #{unet_forward.24} parent=0 // pred_region
    _
  $region5: #{unet_forward.24} parent=0 // pred_fallthru
    _
  // Predicated region
  $region6: #{unet_forward.24} parent=0 // pred_check
    _
  $region7: #{unet_forward.24} parent=0 // pred_check_branch
    %12 = sbr.rel (0) target = $region9
  $region8: #{unet_forward.24} parent=0 // pred_region
    _
  $region9: #{unet_forward.24} parent=0 // pred_fallthru
    _
  %v14 = vld [vmem:[%s0] sm:$0xf]
  %v15 = vld [vmem:[%s0 + $0x4] sm:$0xf]
  %v16 = vld [vmem:[%s0 + $0x8] sm:$0xf]
  %v17 = vld [vmem:[%s0 + $0xc] sm:$0xf]
  %v18 = vld [vmem:[%s0 + $0x10] sm:$0xf]
  %v19 = vld [vmem:[%s0 + $0x14] sm:$0xf]
  %v20 = vld [vmem:[%s0 + $0x18] sm:$0xf]
  %v21 = vld [vmem:[%s0 + $0x1c] sm:$0xf]
  %v22 = vld [vmem:[%s0 + $0x20] sm:$0xf]
  %v23 = vld [vmem:[%s0 + $0x24] sm:$0xf]
  %v24 = vld [vmem:[%s0 + $0x28] sm:$0xf]
  %v25 = vld [vmem:[%s0 + $0x2c] sm:$0xf]
  %v26 = vld [vmem:[%s0 + $0x30] sm:$0xf]
  %v27 = vld [vmem:[%s0 + $0x34] sm:$0xf]
  %v28 = vld [vmem:[%s0 + $0x38] sm:$0xf]
  %v29 = vld [vmem:[%s0 + $0x3c] sm:$0xf]
  %v30 = vld [vmem:[%s0 + $0x40] sm:$0xf]
  %v31 = vld [vmem:[%s0 + $0x44] sm:$0xf]
  %v32 = vld [vmem:[%s0 + $0x48] sm:$0xf]
  %v33 = vld [vmem:[%s0 + $0x4c] sm:$0xf]
  %v34 = vld [vmem:[%s0 + $0x50] sm:$0xf]
  %v35 = vld [vmem:[%s0 + $0x54] sm:$0xf]
  %v36 = vld [vmem:[%s0 + $0x58] sm:$0xf]
  %v37 = vld [vmem:[%s0 + $0x5c] sm:$0xf]
  %v38 = vld [vmem:[%s0 + $0x60] sm:$0xf]
  %v39 = vld [vmem:[%s0 + $0x64] sm:$0xf]
  %v40 = vld [vmem:[%s0 + $0x68] sm:$0xf]
  %v41 = vld [vmem:[%s0 + $0x6c] sm:$0xf]
  %v42 = vld [vmem:[%s0 + $0x70] sm:$0xf]
  %v43 = vld [vmem:[%s0 + $0x74] sm:$0xf]
  %v44 = vld [vmem:[%s0 + $0x78] sm:$0xf]
  %v45 = vld [vmem:[%s0 + $0x7c] sm:$0xf]
  %v46 = vld [vmem:[%s0 + $0x80] sm:$0xf]
  %v47 = vld [vmem:[%s0 + $0x84] sm:$0xf]
  %v48 = vld [vmem:[%s0 + $0x88] sm:$0xf]
  %v49 = vld [vmem:[%s0 + $0x8c] sm:$0xf]
  %v50 = vld [vmem:[%s0 + $0x90] sm:$0xf]
  %v51 = vld [vmem:[%s0 + $0x94] sm:$0xf]
  %v52 = vld [vmem:[%s0 + $0x98] sm:$0xf]
  %v53 = vld [vmem:[%s0 + $0x9c] sm:$0xf]
  %v54 = vld [vmem:[%s0 + $0xa0] sm:$0xf]
  %v55 = vld [vmem:[%s0 + $0xa4] sm:$0xf]
  %v56 = vld [vmem:[%s0 + $0xa8] sm:$0xf]
  %v57 = vld [vmem:[%s0 + $0xac] sm:$0xf]
  %v58 = vld [vmem:[%s0 + $0xb0] sm:$0xf]
  %v59 = vld [vmem:[%s0 + $0xb4] sm:$0xf]
  %v60 = vld [vmem:[%s0 + $0xb8] sm:$0xf]
  %v61 = vld [vmem:[%s0 + $0xbc] sm:$0xf]
  %v62 = vld [vmem:[%s0 + $0xc0] sm:$0xf]
  %v63 = vld [vmem:[%s0 + $0xc4] sm:$0xf]
  %v64 = vld [vmem:[%s0 + $0xc8] sm:$0xf]
  %v65 = vld [vmem:[%s0 + $0xcc] sm:$0xf]
  %v66 = vld [vmem:[%s0 + $0xd0] sm:$0xf]
  %v67 = vld [vmem:[%s0 + $0xd4] sm:$0xf]
  %v68 = vld [vmem:[%s0 + $0xd8] sm:$0xf]
  %v69 = vld [vmem:[%s0 + $0xdc] sm:$0xf]
  %v70 = vld [vmem:[%s0 + $0xe0] sm:$0xf]
  %v71 = vld [vmem:[%s0 + $0xe4] sm:$0xf]
  %v72 = vld [vmem:[%s0 + $0xe8] sm:$0xf]
  %v73 = vld [vmem:[%s0 + $0xec] sm:$0xf]
  %v74 = vld [vmem:[%s0 + $0xf0] sm:$0xf]
  %v75 = vld [vmem:[%s0 + $0xf4] sm:$0xf]
  %v76 = vld [vmem:[%s0 + $0xf8] sm:$0xf]
  %v77 = vld [vmem:[%s0 + $0xfc] sm:$0xf]
  %v78 = vld [vmem:[%s1] sm:$0xf]
  %v79 = vld [vmem:[%s1 + $0x4] sm:$0xf]
  %v80 = vld [vmem:[%s1 + $0x8] sm:$0xf]
  %v81 = vld [vmem:[%s1 + $0xc] sm:$0x3]
  %v146 = vunpack.c.l.b16 %v14
  %v147 = vunpack.c.l.b16 %v15
  %v148 = vunpack.c.l.b16 %v16
  %v149 = vunpack.c.l.b16 %v17
  %v150 = vunpack.c.l.b16 %v18
  %v151 = vunpack.c.l.b16 %v19
  %v152 = vunpack.c.l.b16 %v20
  %v153 = vunpack.c.l.b16 %v21
  %v154 = vunpack.c.l.b16 %v22
  %v155 = vunpack.c.l.b16 %v23
  %v156 = vunpack.c.l.b16 %v24
  %v157 = vunpack.c.l.b16 %v25
  %v158 = vunpack.c.l.b16 %v26
  %v159 = vunpack.c.l.b16 %v27
  %v160 = vunpack.c.l.b16 %v28
  %v161 = vunpack.c.l.b16 %v29
  %v162 = vunpack.c.l.b16 %v30
  %v163 = vunpack.c.l.b16 %v31
  %v164 = vunpack.c.l.b16 %v32
  %v165 = vunpack.c.l.b16 %v33
  %v166 = vunpack.c.l.b16 %v34
  %v167 = vunpack.c.l.b16 %v35
  %v168 = vunpack.c.l.b16 %v36
  %v169 = vunpack.c.l.b16 %v37
  %v170 = vunpack.c.l.b16 %v38
  %v171 = vunpack.c.l.b16 %v39
  %v172 = vunpack.c.l.b16 %v40
  %v173 = vunpack.c.l.b16 %v41
  %v174 = vunpack.c.l.b16 %v42
  %v175 = vunpack.c.l.b16 %v43
  %v176 = vunpack.c.l.b16 %v44
  %v177 = vunpack.c.l.b16 %v45
  %v178 = vunpack.c.l.b16 %v46
  %v179 = vunpack.c.l.b16 %v47
  %v180 = vunpack.c.l.b16 %v48
  %v181 = vunpack.c.l.b16 %v49
  %v182 = vunpack.c.l.b16 %v50
  %v183 = vunpack.c.l.b16 %v51
  %v184 = vunpack.c.l.b16 %v52
  %v185 = vunpack.c.l.b16 %v53
  %v186 = vunpack.c.l.b16 %v54
  %v187 = vunpack.c.l.b16 %v55
  %v188 = vunpack.c.l.b16 %v56
  %v189 = vunpack.c.l.b16 %v57
  %v190 = vunpack.c.l.b16 %v58
  %v191 = vunpack.c.l.b16 %v59
  %v192 = vunpack.c.l.b16 %v60
  %v193 = vunpack.c.l.b16 %v61
  %v194 = vunpack.c.l.b16 %v62
  %v195 = vunpack.c.l.b16 %v63
  %v196 = vunpack.c.l.b16 %v64
  %v197 = vunpack.c.l.b16 %v65
  %v198 = vunpack.c.l.b16 %v66
  %v199 = vunpack.c.l.b16 %v67
  %v200 = vunpack.c.l.b16 %v68
  %v201 = vunpack.c.l.b16 %v69
  %v202 = vunpack.c.l.b16 %v70
  %v203 = vunpack.c.l.b16 %v71
  %v204 = vunpack.c.l.b16 %v72
  %v205 = vunpack.c.l.b16 %v73
  %v206 = vunpack.c.l.b16 %v74
  %v207 = vunpack.c.l.b16 %v75
  %v208 = vunpack.c.l.b16 %v76
  %v209 = vunpack.c.l.b16 %v77
  %v210 = vpack.c.b16 %v147, %v146
  %v211 = vpack.c.b16 %v149, %v148
  %v212 = vpack.c.b16 %v151, %v150
  %v213 = vpack.c.b16 %v153, %v152
  %v214 = vpack.c.b16 %v155, %v154
  %v215 = vpack.c.b16 %v157, %v156
  %v216 = vpack.c.b16 %v159, %v158
  %v217 = vpack.c.b16 %v161, %v160
  %v218 = vpack.c.b16 %v163, %v162
  %v219 = vpack.c.b16 %v165, %v164
  %v220 = vpack.c.b16 %v167, %v166
  %v221 = vpack.c.b16 %v169, %v168
  %v222 = vpack.c.b16 %v171, %v170
  %v223 = vpack.c.b16 %v173, %v172
  %v224 = vpack.c.b16 %v175, %v174
  %v225 = vpack.c.b16 %v177, %v176
  %v226 = vpack.c.b16 %v179, %v178
  %v227 = vpack.c.b16 %v181, %v180
  %v228 = vpack.c.b16 %v183, %v182
  %v229 = vpack.c.b16 %v185, %v184
  %v230 = vpack.c.b16 %v187, %v186
  %v231 = vpack.c.b16 %v189, %v188
  %v232 = vpack.c.b16 %v191, %v190
  %v233 = vpack.c.b16 %v193, %v192
  %v234 = vpack.c.b16 %v195, %v194
  %v235 = vpack.c.b16 %v197, %v196
  %v236 = vpack.c.b16 %v199, %v198
  %v237 = vpack.c.b16 %v201, %v200
  %v238 = vpack.c.b16 %v203, %v202
  %v239 = vpack.c.b16 %v205, %v204
  %v240 = vpack.c.b16 %v207, %v206
  %v241 = vpack.c.b16 %v209, %v208
  %v246 = vunpack.c.l.b16 %v78
  %v247 = vunpack.c.l.b16 %v79
  %v248 = vunpack.c.l.b16 %v80
  %v249 = vunpack.c.l.b16 %v81
  %v250 = vpack.c.b16 %v247, %v246
  %v251 = vpack.c.b16 %v249, %v248
  %vm253 = vcmask 220160
  %v255 = vsel %vm253, %v210, 0
  %v258 = vsel %vm253, %v211, 0
  %v261 = vsel %vm253, %v212, 0
  %v264 = vsel %vm253, %v213, 0
  %v267 = vsel %vm253, %v214, 0
  %v270 = vsel %vm253, %v215, 0
  %v273 = vsel %vm253, %v216, 0
  %v276 = vsel %vm253, %v217, 0
  %v279 = vsel %vm253, %v218, 0
  %v282 = vsel %vm253, %v219, 0
  %v285 = vsel %vm253, %v220, 0
  %v288 = vsel %vm253, %v221, 0
  %v291 = vsel %vm253, %v222, 0
  %v294 = vsel %vm253, %v223, 0
  %v297 = vsel %vm253, %v224, 0
  %v300 = vsel %vm253, %v225, 0
  %v303 = vsel %vm253, %v226, 0
  %v306 = vsel %vm253, %v227, 0
  %v309 = vsel %vm253, %v228, 0
  %v312 = vsel %vm253, %v229, 0
  %v315 = vsel %vm253, %v230, 0
  %v318 = vsel %vm253, %v231, 0
  %v321 = vsel %vm253, %v232, 0
  %v324 = vsel %vm253, %v233, 0
  %v327 = vsel %vm253, %v234, 0
  %v330 = vsel %vm253, %v235, 0
  %v333 = vsel %vm253, %v236, 0
  %v336 = vsel %vm253, %v237, 0
  %v339 = vsel %vm253, %v238, 0
  %v342 = vsel %vm253, %v239, 0
  %v345 = vsel %vm253, %v240, 0
  %v348 = vsel %vm253, %v241, 0
  %vm350 = vcmask 1044480
  %vm351 = vcmask 1045504
  %v352 = vsel %vm350, 4294967295, 65535
  %v353 = vsel %vm351, %v352, 0
  %v355 = vand.u32 %v251, %v353
  %357 = vmatprep.subr.bf16.mxu0 0
  %358 = vmatpush1.bf16.msra.mxu0 %v250
  %359 = vmatprep.subr.bf16.mxu0 0
  %360 = vmatpush1.bf16.msra.mxu0 %v355
  %361 = vmatprep.subr.bf16.mxu0 0
  %362 = vmatpush1.bf16.msra.mxu0 0
  %363 = vmatprep.subr.bf16.mxu0 0
  %364 = vmatpush1.bf16.msra.mxu0 0
  %365 = vmatprep.subr.bf16.mxu0 0
  %366 = vmatpush1.bf16.msra.mxu0 0
  %367 = vmatprep.subr.bf16.mxu0 0
  %368 = vmatpush1.bf16.msra.mxu0 0
  %369 = vmatprep.subr.bf16.mxu0 0
  %370 = vmatpush1.bf16.msra.mxu0 0
  %371 = vmatprep.subr.bf16.mxu0 0
  %372 = vmatpush1.bf16.msra.mxu0 0
  %373 = vmatprep.subr.bf16.mxu0 0
  %374 = vmatpush1.bf16.msra.mxu0 0
  %375 = vmatprep.subr.bf16.mxu0 0
  %376 = vmatpush1.bf16.msra.mxu0 0
  %377 = vmatprep.subr.bf16.mxu0 0
  %378 = vmatpush1.bf16.msra.mxu0 0
  %379 = vmatprep.subr.bf16.mxu0 0
  %380 = vmatpush1.bf16.msra.mxu0 0
  %381 = vmatprep.subr.bf16.mxu0 0
  %382 = vmatpush1.bf16.msra.mxu0 0
  %383 = vmatprep.subr.bf16.mxu0 0
  %384 = vmatpush1.bf16.msra.mxu0 0
  %385 = vmatprep.subr.bf16.mxu0 0
  %386 = vmatpush1.bf16.msra.mxu0 0
  %387 = vmatprep.subr.bf16.mxu0 0
  %388 = vmatpush1.bf16.msra.mxu0 0
  %389 = vmatprep.mubr.bf16.mxu0 0
  %390 = vmatmul.mubr.bf16.gmra.mrb[0].mxu0 %v255
  %v391 = vpop.f32.mrb[0].mxu0
  %v392 = vadd.f32 0.0, %v391
  %v393 = vpop.f32.mrb[0].mxu0
  %v394 = vpop.f32.mrb[0].mxu0
  %v395 = vadd.f32 0.0, %v394
  %v396 = vpop.f32.mrb[0].mxu0
  %397 = vmatprep.mubr.bf16.mxu0 0
  %398 = vmatmul.mubr.bf16.gmra.mrb[0].mxu0 %v258
  %v399 = vpop.f32.mrb[0].mxu0
  %v400 = vadd.f32 0.0, %v399
  %v401 = vpop.f32.mrb[0].mxu0
  %v402 = vpop.f32.mrb[0].mxu0
  %v403 = vadd.f32 0.0, %v402
  %v404 = vpop.f32.mrb[0].mxu0
  %405 = vmatprep.mubr.bf16.mxu0 0
  %406 = vmatmul.mubr.bf16.gmra.mrb[0].mxu0 %v261
  %v407 = vpop.f32.mrb[0].mxu0
  %v408 = vadd.f32 0.0, %v407
  %v409 = vpop.f32.mrb[0].mxu0
  %v410 = vpop.f32.mrb[0].mxu0
  %v411 = vadd.f32 0.0, %v410
  %v412 = vpop.f32.mrb[0].mxu0
  %413 = vmatprep.mubr.bf16.mxu0 0
  %414 = vmatmul.mubr.bf16.gmra.mrb[0].mxu0 %v264
  %v415 = vpop.f32.mrb[0].mxu0
  %v416 = vadd.f32 0.0, %v415
  %v417 = vpop.f32.mrb[0].mxu0
  %v418 = vpop.f32.mrb[0].mxu0
  %v419 = vadd.f32 0.0, %v418
  %v420 = vpop.f32.mrb[0].mxu0
  %421 = vmatprep.mubr.bf16.mxu0 0
  %422 = vmatmul.mubr.bf16.gmra.mrb[0].mxu0 %v267
  %v423 = vpop.f32.mrb[0].mxu0
  %v424 = vadd.f32 0.0, %v423
  %v425 = vpop.f32.mrb[0].mxu0
  %v426 = vpop.f32.mrb[0].mxu0
  %v427 = vadd.f32 0.0, %v426
  %v428 = vpop.f32.mrb[0].mxu0
  %429 = vmatprep.mubr.bf16.mxu0 0
  %430 = vmatmul.mubr.bf16.gmra.mrb[0].mxu0 %v270
  %v431 = vpop.f32.mrb[0].mxu0
  %v432 = vadd.f32 0.0, %v431
  %v433 = vpop.f32.mrb[0].mxu0
  %v434 = vpop.f32.mrb[0].mxu0
  %v435 = vadd.f32 0.0, %v434
  %v436 = vpop.f32.mrb[0].mxu0
  %437 = vmatprep.mubr.bf16.mxu0 0
  %438 = vmatmul.mubr.bf16.gmra.mrb[0].mxu0 %v273
  %v439 = vpop.f32.mrb[0].mxu0
  %v440 = vadd.f32 0.0, %v439
  %v441 = vpop.f32.mrb[0].mxu0
  %v442 = vpop.f32.mrb[0].mxu0
  %v443 = vadd.f32 0.0, %v442
  %v444 = vpop.f32.mrb[0].mxu0
  %445 = vmatprep.mubr.bf16.mxu0 0
  %446 = vmatmul.mubr.bf16.gmra.mrb[0].mxu0 %v276
  %v447 = vpop.f32.mrb[0].mxu0
  %v448 = vadd.f32 0.0, %v447
  %v449 = vpop.f32.mrb[0].mxu0
  %v450 = vpop.f32.mrb[0].mxu0
  %v451 = vadd.f32 0.0, %v450
  %v452 = vpop.f32.mrb[0].mxu0
  %453 = vmatprep.mubr.bf16.mxu0 0
  %454 = vmatmul.mubr.bf16.gmra.mrb[0].mxu0 %v279
  %v455 = vpop.f32.mrb[0].mxu0
  %v456 = vadd.f32 0.0, %v455
  %v457 = vpop.f32.mrb[0].mxu0
  %v458 = vpop.f32.mrb[0].mxu0
  %v459 = vadd.f32 0.0, %v458
  %v460 = vpop.f32.mrb[0].mxu0
  %461 = vmatprep.mubr.bf16.mxu0 0
  %462 = vmatmul.mubr.bf16.gmra.mrb[0].mxu0 %v282
  %v463 = vpop.f32.mrb[0].mxu0
  %v464 = vadd.f32 0.0, %v463
  %v465 = vpop.f32.mrb[0].mxu0
  %v466 = vpop.f32.mrb[0].mxu0
  %v467 = vadd.f32 0.0, %v466
  %v468 = vpop.f32.mrb[0].mxu0
  %469 = vmatprep.mubr.bf16.mxu0 0
  %470 = vmatmul.mubr.bf16.gmra.mrb[0].mxu0 %v285
  %v471 = vpop.f32.mrb[0].mxu0
  %v472 = vadd.f32 0.0, %v471
  %v473 = vpop.f32.mrb[0].mxu0
  %v474 = vpop.f32.mrb[0].mxu0
  %v475 = vadd.f32 0.0, %v474
  %v476 = vpop.f32.mrb[0].mxu0
  %477 = vmatprep.mubr.bf16.mxu0 0
  %478 = vmatmul.mubr.bf16.gmra.mrb[0].mxu0 %v288
  %v479 = vpop.f32.mrb[0].mxu0
  %v480 = vadd.f32 0.0, %v479
  %v481 = vpop.f32.mrb[0].mxu0
  %v482 = vpop.f32.mrb[0].mxu0
  %v483 = vadd.f32 0.0, %v482
  %v484 = vpop.f32.mrb[0].mxu0
  %485 = vmatprep.mubr.bf16.mxu0 0
  %486 = vmatmul.mubr.bf16.gmra.mrb[0].mxu0 %v291
  %v487 = vpop.f32.mrb[0].mxu0
  %v488 = vadd.f32 0.0, %v487
  %v489 = vpop.f32.mrb[0].mxu0
  %v490 = vpop.f32.mrb[0].mxu0
  %v491 = vadd.f32 0.0, %v490
  %v492 = vpop.f32.mrb[0].mxu0
  %493 = vmatprep.mubr.bf16.mxu0 0
  %494 = vmatmul.mubr.bf16.gmra.mrb[0].mxu0 %v294
  %v495 = vpop.f32.mrb[0].mxu0
  %v496 = vadd.f32 0.0, %v495
  %v497 = vpop.f32.mrb[0].mxu0
  %v498 = vpop.f32.mrb[0].mxu0
  %v499 = vadd.f32 0.0, %v498
  %v500 = vpop.f32.mrb[0].mxu0
  %501 = vmatprep.mubr.bf16.mxu0 0
  %502 = vmatmul.mubr.bf16.gmra.mrb[0].mxu0 %v297
  %v503 = vpop.f32.mrb[0].mxu0
  %v504 = vadd.f32 0.0, %v503
  %v505 = vpop.f32.mrb[0].mxu0
  %v506 = vpop.f32.mrb[0].mxu0
  %v507 = vadd.f32 0.0, %v506
  %v508 = vpop.f32.mrb[0].mxu0
  %509 = vmatprep.mubr.bf16.mxu0 0
  %510 = vmatmul.mubr.bf16.gmra.mrb[0].mxu0 %v300
  %v511 = vpop.f32.mrb[0].mxu0
  %v512 = vadd.f32 0.0, %v511
  %v513 = vpop.f32.mrb[0].mxu0
  %v514 = vpop.f32.mrb[0].mxu0
  %v515 = vadd.f32 0.0, %v514
  %v516 = vpop.f32.mrb[0].mxu0
  %517 = vmatprep.mubr.bf16.mxu0 0
  %518 = vmatmul.mubr.bf16.gmra.mrb[0].mxu0 %v303
  %v519 = vpop.f32.mrb[0].mxu0
  %v520 = vadd.f32 0.0, %v519
  %v521 = vpop.f32.mrb[0].mxu0
  %v522 = vpop.f32.mrb[0].mxu0
  %v523 = vadd.f32 0.0, %v522
  %v524 = vpop.f32.mrb[0].mxu0
  %525 = vmatprep.mubr.bf16.mxu0 0
  %526 = vmatmul.mubr.bf16.gmra.mrb[0].mxu0 %v306
  %v527 = vpop.f32.mrb[0].mxu0
  %v528 = vadd.f32 0.0, %v527
  %v529 = vpop.f32.mrb[0].mxu0
  %v530 = vpop.f32.mrb[0].mxu0
  %v531 = vadd.f32 0.0, %v530
  %v532 = vpop.f32.mrb[0].mxu0
  %533 = vmatprep.mubr.bf16.mxu0 0
  %534 = vmatmul.mubr.bf16.gmra.mrb[0].mxu0 %v309
  %v535 = vpop.f32.mrb[0].mxu0
  %v536 = vadd.f32 0.0, %v535
  %v537 = vpop.f32.mrb[0].mxu0
  %v538 = vpop.f32.mrb[0].mxu0
  %v539 = vadd.f32 0.0, %v538
  %v540 = vpop.f32.mrb[0].mxu0
  %541 = vmatprep.mubr.bf16.mxu0 0
  %542 = vmatmul.mubr.bf16.gmra.mrb[0].mxu0 %v312
  %v543 = vpop.f32.mrb[0].mxu0
  %v544 = vadd.f32 0.0, %v543
  %v545 = vpop.f32.mrb[0].mxu0
  %v546 = vpop.f32.mrb[0].mxu0
  %v547 = vadd.f32 0.0, %v546
  %v548 = vpop.f32.mrb[0].mxu0
  %549 = vmatprep.mubr.bf16.mxu0 0
  %550 = vmatmul.mubr.bf16.gmra.mrb[0].mxu0 %v315
  %v551 = vpop.f32.mrb[0].mxu0
  %v552 = vadd.f32 0.0, %v551
  %v553 = vpop.f32.mrb[0].mxu0
  %v554 = vpop.f32.mrb[0].mxu0
  %v555 = vadd.f32 0.0, %v554
  %v556 = vpop.f32.mrb[0].mxu0
  %557 = vmatprep.mubr.bf16.mxu0 0
  %558 = vmatmul.mubr.bf16.gmra.mrb[0].mxu0 %v318
  %v559 = vpop.f32.mrb[0].mxu0
  %v560 = vadd.f32 0.0, %v559
  %v561 = vpop.f32.mrb[0].mxu0
  %v562 = vpop.f32.mrb[0].mxu0
  %v563 = vadd.f32 0.0, %v562
  %v564 = vpop.f32.mrb[0].mxu0
  %565 = vmatprep.mubr.bf16.mxu0 0
  %566 = vmatmul.mubr.bf16.gmra.mrb[0].mxu0 %v321
  %v567 = vpop.f32.mrb[0].mxu0
  %v568 = vadd.f32 0.0, %v567
  %v569 = vpop.f32.mrb[0].mxu0
  %v570 = vpop.f32.mrb[0].mxu0
  %v571 = vadd.f32 0.0, %v570
  %v572 = vpop.f32.mrb[0].mxu0
  %573 = vmatprep.mubr.bf16.mxu0 0
  %574 = vmatmul.mubr.bf16.gmra.mrb[0].mxu0 %v324
  %v575 = vpop.f32.mrb[0].mxu0
  %v576 = vadd.f32 0.0, %v575
  %v577 = vpop.f32.mrb[0].mxu0
  %v578 = vpop.f32.mrb[0].mxu0
  %v579 = vadd.f32 0.0, %v578
  %v580 = vpop.f32.mrb[0].mxu0
  %581 = vmatprep.mubr.bf16.mxu0 0
  %582 = vmatmul.mubr.bf16.gmra.mrb[0].mxu0 %v327
  %v583 = vpop.f32.mrb[0].mxu0
  %v584 = vadd.f32 0.0, %v583
  %v585 = vpop.f32.mrb[0].mxu0
  %v586 = vpop.f32.mrb[0].mxu0
  %v587 = vadd.f32 0.0, %v586
  %v588 = vpop.f32.mrb[0].mxu0
  %589 = vmatprep.mubr.bf16.mxu0 0
  %590 = vmatmul.mubr.bf16.gmra.mrb[0].mxu0 %v330
  %v591 = vpop.f32.mrb[0].mxu0
  %v592 = vadd.f32 0.0, %v591
  %v593 = vpop.f32.mrb[0].mxu0
  %v594 = vpop.f32.mrb[0].mxu0
  %v595 = vadd.f32 0.0, %v594
  %v596 = vpop.f32.mrb[0].mxu0
  %597 = vmatprep.mubr.bf16.mxu0 0
  %598 = vmatmul.mubr.bf16.gmra.mrb[0].mxu0 %v333
  %v599 = vpop.f32.mrb[0].mxu0
  %v600 = vadd.f32 0.0, %v599
  %v601 = vpop.f32.mrb[0].mxu0
  %v602 = vpop.f32.mrb[0].mxu0
  %v603 = vadd.f32 0.0, %v602
  %v604 = vpop.f32.mrb[0].mxu0
  %605 = vmatprep.mubr.bf16.mxu0 0
  %606 = vmatmul.mubr.bf16.gmra.mrb[0].mxu0 %v336
  %v607 = vpop.f32.mrb[0].mxu0
  %v608 = vadd.f32 0.0, %v607
  %v609 = vpop.f32.mrb[0].mxu0
  %v610 = vpop.f32.mrb[0].mxu0
  %v611 = vadd.f32 0.0, %v610
  %v612 = vpop.f32.mrb[0].mxu0
  %613 = vmatprep.mubr.bf16.mxu0 0
  %614 = vmatmul.mubr.bf16.gmra.mrb[0].mxu0 %v339
  %v615 = vpop.f32.mrb[0].mxu0
  %v616 = vadd.f32 0.0, %v615
  %v617 = vpop.f32.mrb[0].mxu0
  %v618 = vpop.f32.mrb[0].mxu0
  %v619 = vadd.f32 0.0, %v618
  %v620 = vpop.f32.mrb[0].mxu0
  %621 = vmatprep.mubr.bf16.mxu0 0
  %622 = vmatmul.mubr.bf16.gmra.mrb[0].mxu0 %v342
  %v623 = vpop.f32.mrb[0].mxu0
  %v624 = vadd.f32 0.0, %v623
  %v625 = vpop.f32.mrb[0].mxu0
  %v626 = vpop.f32.mrb[0].mxu0
  %v627 = vadd.f32 0.0, %v626
  %v628 = vpop.f32.mrb[0].mxu0
  %629 = vmatprep.mubr.bf16.mxu0 0
  %630 = vmatmul.mubr.bf16.gmra.mrb[0].mxu0 %v345
  %v631 = vpop.f32.mrb[0].mxu0
  %v632 = vadd.f32 0.0, %v631
  %v633 = vpop.f32.mrb[0].mxu0
  %v634 = vpop.f32.mrb[0].mxu0
  %v635 = vadd.f32 0.0, %v634
  %v636 = vpop.f32.mrb[0].mxu0
  %637 = vmatprep.mubr.bf16.mxu0 0
  %638 = vmatmul.mubr.bf16.gmra.mrb[0].mxu0 %v348
  %v639 = vpop.f32.mrb[0].mxu0
  %v640 = vadd.f32 0.0, %v639
  %v641 = vpop.f32.mrb[0].mxu0
  %v642 = vpop.f32.mrb[0].mxu0
  %v643 = vadd.f32 0.0, %v642
  %v644 = vpop.f32.mrb[0].mxu0
  %645 = vdwg.mxu0
  %vm646 = vcmask 64512
  %647 = vst.msk [vmem:[%s2] sm:$0xff] %vm646, %v392
  %648 = vst.msk [vmem:[%s2 + $0x8] sm:$0xff] %vm646, %v395
  %649 = vst.msk [vmem:[%s2 + $0x10] sm:$0xff] %vm646, %v400
  %650 = vst.msk [vmem:[%s2 + $0x18] sm:$0xff] %vm646, %v403
  %651 = vst.msk [vmem:[%s2 + $0x20] sm:$0xff] %vm646, %v408
  %652 = vst.msk [vmem:[%s2 + $0x28] sm:$0xff] %vm646, %v411
  %653 = vst.msk [vmem:[%s2 + $0x30] sm:$0xff] %vm646, %v416
  %654 = vst.msk [vmem:[%s2 + $0x38] sm:$0xff] %vm646, %v419
  %655 = vst.msk [vmem:[%s2 + $0x40] sm:$0xff] %vm646, %v424
  %656 = vst.msk [vmem:[%s2 + $0x48] sm:$0xff] %vm646, %v427
  %657 = vst.msk [vmem:[%s2 + $0x50] sm:$0xff] %vm646, %v432
  %658 = vst.msk [vmem:[%s2 + $0x58] sm:$0xff] %vm646, %v435
  %659 = vst.msk [vmem:[%s2 + $0x60] sm:$0xff] %vm646, %v440
  %660 = vst.msk [vmem:[%s2 + $0x68] sm:$0xff] %vm646, %v443
  %661 = vst.msk [vmem:[%s2 + $0x70] sm:$0xff] %vm646, %v448
  %662 = vst.msk [vmem:[%s2 + $0x78] sm:$0xff] %vm646, %v451
  %663 = vst.msk [vmem:[%s2 + $0x80] sm:$0xff] %vm646, %v456
  %664 = vst.msk [vmem:[%s2 + $0x88] sm:$0xff] %vm646, %v459
  %665 = vst.msk [vmem:[%s2 + $0x90] sm:$0xff] %vm646, %v464
  %666 = vst.msk [vmem:[%s2 + $0x98] sm:$0xff] %vm646, %v467
  %667 = vst.msk [vmem:[%s2 + $0xa0] sm:$0xff] %vm646, %v472
  %668 = vst.msk [vmem:[%s2 + $0xa8] sm:$0xff] %vm646, %v475
  %669 = vst.msk [vmem:[%s2 + $0xb0] sm:$0xff] %vm646, %v480
  %670 = vst.msk [vmem:[%s2 + $0xb8] sm:$0xff] %vm646, %v483
  %671 = vst.msk [vmem:[%s2 + $0xc0] sm:$0xff] %vm646, %v488
  %672 = vst.msk [vmem:[%s2 + $0xc8] sm:$0xff] %vm646, %v491
  %673 = vst.msk [vmem:[%s2 + $0xd0] sm:$0xff] %vm646, %v496
  %674 = vst.msk [vmem:[%s2 + $0xd8] sm:$0xff] %vm646, %v499
  %675 = vst.msk [vmem:[%s2 + $0xe0] sm:$0xff] %vm646, %v504
  %676 = vst.msk [vmem:[%s2 + $0xe8] sm:$0xff] %vm646, %v507
  %677 = vst.msk [vmem:[%s2 + $0xf0] sm:$0xff] %vm646, %v512
  %678 = vst.msk [vmem:[%s2 + $0xf8] sm:$0xff] %vm646, %v515
  %679 = vst.msk [vmem:[%s2 + $0x100] sm:$0xff] %vm646, %v520
  %680 = vst.msk [vmem:[%s2 + $0x108] sm:$0xff] %vm646, %v523
  %681 = vst.msk [vmem:[%s2 + $0x110] sm:$0xff] %vm646, %v528
  %682 = vst.msk [vmem:[%s2 + $0x118] sm:$0xff] %vm646, %v531
  %683 = vst.msk [vmem:[%s2 + $0x120] sm:$0xff] %vm646, %v536
  %684 = vst.msk [vmem:[%s2 + $0x128] sm:$0xff] %vm646, %v539
  %685 = vst.msk [vmem:[%s2 + $0x130] sm:$0xff] %vm646, %v544
  %686 = vst.msk [vmem:[%s2 + $0x138] sm:$0xff] %vm646, %v547
  %687 = vst.msk [vmem:[%s2 + $0x140] sm:$0xff] %vm646, %v552
  %688 = vst.msk [vmem:[%s2 + $0x148] sm:$0xff] %vm646, %v555
  %689 = vst.msk [vmem:[%s2 + $0x150] sm:$0xff] %vm646, %v560
  %690 = vst.msk [vmem:[%s2 + $0x158] sm:$0xff] %vm646, %v563
  %691 = vst.msk [vmem:[%s2 + $0x160] sm:$0xff] %vm646, %v568
  %692 = vst.msk [vmem:[%s2 + $0x168] sm:$0xff] %vm646, %v571
  %693 = vst.msk [vmem:[%s2 + $0x170] sm:$0xff] %vm646, %v576
  %694 = vst.msk [vmem:[%s2 + $0x178] sm:$0xff] %vm646, %v579
  %695 = vst.msk [vmem:[%s2 + $0x180] sm:$0xff] %vm646, %v584
  %696 = vst.msk [vmem:[%s2 + $0x188] sm:$0xff] %vm646, %v587
  %697 = vst.msk [vmem:[%s2 + $0x190] sm:$0xff] %vm646, %v592
  %698 = vst.msk [vmem:[%s2 + $0x198] sm:$0xff] %vm646, %v595
  %699 = vst.msk [vmem:[%s2 + $0x1a0] sm:$0xff] %vm646, %v600
  %700 = vst.msk [vmem:[%s2 + $0x1a8] sm:$0xff] %vm646, %v603
  %701 = vst.msk [vmem:[%s2 + $0x1b0] sm:$0xff] %vm646, %v608
  %702 = vst.msk [vmem:[%s2 + $0x1b8] sm:$0xff] %vm646, %v611
  %703 = vst.msk [vmem:[%s2 + $0x1c0] sm:$0xff] %vm646, %v616
  %704 = vst.msk [vmem:[%s2 + $0x1c8] sm:$0xff] %vm646, %v619
  %705 = vst.msk [vmem:[%s2 + $0x1d0] sm:$0xff] %vm646, %v624
  %706 = vst.msk [vmem:[%s2 + $0x1d8] sm:$0xff] %vm646, %v627
  %707 = vst.msk [vmem:[%s2 + $0x1e0] sm:$0xff] %vm646, %v632
  %708 = vst.msk [vmem:[%s2 + $0x1e8] sm:$0xff] %vm646, %v635
  %709 = vst.msk [vmem:[%s2 + $0x1f0] sm:$0xff] %vm646, %v640
  %710 = vst.msk [vmem:[%s2 + $0x1f8] sm:$0xff] %vm646, %v643
  %v711 = vsel %vm646, %v392, 0.0
  %v712 = vsel %vm646, %v395, 0.0
  %v713 = vadd.f32 %v711, %v712
  %v714 = vsel %vm646, %v400, 0.0
  %v715 = vadd.f32 %v713, %v714
  %v716 = vsel %vm646, %v403, 0.0
  %v717 = vadd.f32 %v715, %v716
  %v718 = vsel %vm646, %v408, 0.0
  %v719 = vadd.f32 %v717, %v718
  %v720 = vsel %vm646, %v411, 0.0
  %v721 = vadd.f32 %v719, %v720
  %v722 = vsel %vm646, %v416, 0.0
  %v723 = vadd.f32 %v721, %v722
  %v724 = vsel %vm646, %v419, 0.0
  %v725 = vadd.f32 %v723, %v724
  %v726 = vsel %vm646, %v424, 0.0
  %v727 = vadd.f32 %v725, %v726
  %v728 = vsel %vm646, %v427, 0.0
  %v729 = vadd.f32 %v727, %v728
  %v730 = vsel %vm646, %v432, 0.0
  %v731 = vadd.f32 %v729, %v730
  %v732 = vsel %vm646, %v435, 0.0
  %v733 = vadd.f32 %v731, %v732
  %v734 = vsel %vm646, %v440, 0.0
  %v735 = vadd.f32 %v733, %v734
  %v736 = vsel %vm646, %v443, 0.0
  %v737 = vadd.f32 %v735, %v736
  %v738 = vsel %vm646, %v448, 0.0
  %v739 = vadd.f32 %v737, %v738
  %v740 = vsel %vm646, %v451, 0.0
  %v741 = vadd.f32 %v739, %v740
  %v742 = vsel %vm646, %v456, 0.0
  %v743 = vadd.f32 %v741, %v742
  %v744 = vsel %vm646, %v459, 0.0
  %v745 = vadd.f32 %v743, %v744
  %v746 = vsel %vm646, %v464, 0.0
  %v747 = vadd.f32 %v745, %v746
  %v748 = vsel %vm646, %v467, 0.0
  %v749 = vadd.f32 %v747, %v748
  %v750 = vsel %vm646, %v472, 0.0
  %v751 = vadd.f32 %v749, %v750
  %v752 = vsel %vm646, %v475, 0.0
  %v753 = vadd.f32 %v751, %v752
  %v754 = vsel %vm646, %v480, 0.0
  %v755 = vadd.f32 %v753, %v754
  %v756 = vsel %vm646, %v483, 0.0
  %v757 = vadd.f32 %v755, %v756
  %v758 = vsel %vm646, %v488, 0.0
  %v759 = vadd.f32 %v757, %v758
  %v760 = vsel %vm646, %v491, 0.0
  %v761 = vadd.f32 %v759, %v760
  %v762 = vsel %vm646, %v496, 0.0
  %v763 = vadd.f32 %v761, %v762
  %v764 = vsel %vm646, %v499, 0.0
  %v765 = vadd.f32 %v763, %v764
  %v766 = vsel %vm646, %v504, 0.0
  %v767 = vadd.f32 %v765, %v766
  %v768 = vsel %vm646, %v507, 0.0
  %v769 = vadd.f32 %v767, %v768
  %v770 = vsel %vm646, %v512, 0.0
  %v771 = vadd.f32 %v769, %v770
  %v772 = vsel %vm646, %v515, 0.0
  %v773 = vadd.f32 %v771, %v772
  %v774 = vsel %vm646, %v520, 0.0
  %v775 = vadd.f32 %v773, %v774
  %v776 = vsel %vm646, %v523, 0.0
  %v777 = vadd.f32 %v775, %v776
  %v778 = vsel %vm646, %v528, 0.0
  %v779 = vadd.f32 %v777, %v778
  %v780 = vsel %vm646, %v531, 0.0
  %v781 = vadd.f32 %v779, %v780
  %v782 = vsel %vm646, %v536, 0.0
  %v783 = vadd.f32 %v781, %v782
  %v784 = vsel %vm646, %v539, 0.0
  %v785 = vadd.f32 %v783, %v784
  %v786 = vsel %vm646, %v544, 0.0
  %v787 = vadd.f32 %v785, %v786
  %v788 = vsel %vm646, %v547, 0.0
  %v789 = vadd.f32 %v787, %v788
  %v790 = vsel %vm646, %v552, 0.0
  %v791 = vadd.f32 %v789, %v790
  %v792 = vsel %vm646, %v555, 0.0
  %v793 = vadd.f32 %v791, %v792
  %v794 = vsel %vm646, %v560, 0.0
  %v795 = vadd.f32 %v793, %v794
  %v796 = vsel %vm646, %v563, 0.0
  %v797 = vadd.f32 %v795, %v796
  %v798 = vsel %vm646, %v568, 0.0
  %v799 = vadd.f32 %v797, %v798
  %v800 = vsel %vm646, %v571, 0.0
  %v801 = vadd.f32 %v799, %v800
  %v802 = vsel %vm646, %v576, 0.0
  %v803 = vadd.f32 %v801, %v802
  %v804 = vsel %vm646, %v579, 0.0
  %v805 = vadd.f32 %v803, %v804
  %v806 = vsel %vm646, %v584, 0.0
  %v807 = vadd.f32 %v805, %v806
  %v808 = vsel %vm646, %v587, 0.0
  %v809 = vadd.f32 %v807, %v808
  %v810 = vsel %vm646, %v592, 0.0
  %v811 = vadd.f32 %v809, %v810
  %v812 = vsel %vm646, %v595, 0.0
  %v813 = vadd.f32 %v811, %v812
  %v814 = vsel %vm646, %v600, 0.0
  %v815 = vadd.f32 %v813, %v814
  %v816 = vsel %vm646, %v603, 0.0
  %v817 = vadd.f32 %v815, %v816
  %v818 = vsel %vm646, %v608, 0.0
  %v819 = vadd.f32 %v817, %v818
  %v820 = vsel %vm646, %v611, 0.0
  %v821 = vadd.f32 %v819, %v820
  %v822 = vsel %vm646, %v616, 0.0
  %v823 = vadd.f32 %v821, %v822
  %v824 = vsel %vm646, %v619, 0.0
  %v825 = vadd.f32 %v823, %v824
  %v826 = vsel %vm646, %v624, 0.0
  %v827 = vadd.f32 %v825, %v826
  %v828 = vsel %vm646, %v627, 0.0
  %v829 = vadd.f32 %v827, %v828
  %v830 = vsel %vm646, %v632, 0.0
  %v831 = vadd.f32 %v829, %v830
  %v832 = vsel %vm646, %v635, 0.0
  %v833 = vadd.f32 %v831, %v832
  %v834 = vsel %vm646, %v640, 0.0
  %v835 = vadd.f32 %v833, %v834
  %v836 = vsel %vm646, %v643, 0.0
  %v837 = vadd.f32 %v835, %v836
  %v838 = vrot.slane %v837, 4
  %v839 = vadd.f32 %v837, %v838
  %v840 = vrot.slane %v839, 2
  %v841 = vadd.f32 %v839, %v840
  %v842 = vrot.slane %v841, 1
  %v843 = vadd.f32 %v841, %v842
  %v844 = vmul.f32 %v392, %v392
  %v845 = vmul.f32 %v395, %v395
  %v846 = vmul.f32 %v400, %v400
  %v847 = vmul.f32 %v403, %v403
  %v848 = vmul.f32 %v408, %v408
  %v849 = vmul.f32 %v411, %v411
  %v850 = vmul.f32 %v416, %v416
  %v851 = vmul.f32 %v419, %v419
  %v852 = vmul.f32 %v424, %v424
  %v853 = vmul.f32 %v427, %v427
  %v854 = vmul.f32 %v432, %v432
  %v855 = vmul.f32 %v435, %v435
  %v856 = vmul.f32 %v440, %v440
  %v857 = vmul.f32 %v443, %v443
  %v858 = vmul.f32 %v448, %v448
  %v859 = vmul.f32 %v451, %v451
  %v860 = vmul.f32 %v456, %v456
  %v861 = vmul.f32 %v459, %v459
  %v862 = vmul.f32 %v464, %v464
  %v863 = vmul.f32 %v467, %v467
  %v864 = vmul.f32 %v472, %v472
  %v865 = vmul.f32 %v475, %v475
  %v866 = vmul.f32 %v480, %v480
  %v867 = vmul.f32 %v483, %v483
  %v868 = vmul.f32 %v488, %v488
  %v869 = vmul.f32 %v491, %v491
  %v870 = vmul.f32 %v496, %v496
  %v871 = vmul.f32 %v499, %v499
  %v872 = vmul.f32 %v504, %v504
  %v873 = vmul.f32 %v507, %v507
  %v874 = vmul.f32 %v512, %v512
  %v875 = vmul.f32 %v515, %v515
  %v876 = vmul.f32 %v520, %v520
  %v877 = vmul.f32 %v523, %v523
  %v878 = vmul.f32 %v528, %v528
  %v879 = vmul.f32 %v531, %v531
  %v880 = vmul.f32 %v536, %v536
  %v881 = vmul.f32 %v539, %v539
  %v882 = vmul.f32 %v544, %v544
  %v883 = vmul.f32 %v547, %v547
  %v884 = vmul.f32 %v552, %v552
  %v885 = vmul.f32 %v555, %v555
  %v886 = vmul.f32 %v560, %v560
  %v887 = vmul.f32 %v563, %v563
  %v888 = vmul.f32 %v568, %v568
  %v889 = vmul.f32 %v571, %v571
  %v890 = vmul.f32 %v576, %v576
  %v891 = vmul.f32 %v579, %v579
  %v892 = vmul.f32 %v584, %v584
  %v893 = vmul.f32 %v587, %v587
  %v894 = vmul.f32 %v592, %v592
  %v895 = vmul.f32 %v595, %v595
  %v896 = vmul.f32 %v600, %v600
  %v897 = vmul.f32 %v603, %v603
  %v898 = vmul.f32 %v608, %v608
  %v899 = vmul.f32 %v611, %v611
  %v900 = vmul.f32 %v616, %v616
  %v901 = vmul.f32 %v619, %v619
  %v902 = vmul.f32 %v624, %v624
  %v903 = vmul.f32 %v627, %v627
  %v904 = vmul.f32 %v632, %v632
  %v905 = vmul.f32 %v635, %v635
  %v906 = vmul.f32 %v640, %v640
  %v907 = vmul.f32 %v643, %v643
  %v908 = vsel %vm646, %v844, 0.0
  %v909 = vsel %vm646, %v845, 0.0
  %v910 = vadd.f32 %v908, %v909
  %v911 = vsel %vm646, %v846, 0.0
  %v912 = vadd.f32 %v910, %v911
  %v913 = vsel %vm646, %v847, 0.0
  %v914 = vadd.f32 %v912, %v913
  %v915 = vsel %vm646, %v848, 0.0
  %v916 = vadd.f32 %v914, %v915
  %v917 = vsel %vm646, %v849, 0.0
  %v918 = vadd.f32 %v916, %v917
  %v919 = vsel %vm646, %v850, 0.0
  %v920 = vadd.f32 %v918, %v919
  %v921 = vsel %vm646, %v851, 0.0
  %v922 = vadd.f32 %v920, %v921
  %v923 = vsel %vm646, %v852, 0.0
  %v924 = vadd.f32 %v922, %v923
  %v925 = vsel %vm646, %v853, 0.0
  %v926 = vadd.f32 %v924, %v925
  %v927 = vsel %vm646, %v854, 0.0
  %v928 = vadd.f32 %v926, %v927
  %v929 = vsel %vm646, %v855, 0.0
  %v930 = vadd.f32 %v928, %v929
  %v931 = vsel %vm646, %v856, 0.0
  %v932 = vadd.f32 %v930, %v931
  %v933 = vsel %vm646, %v857, 0.0
  %v934 = vadd.f32 %v932, %v933
  %v935 = vsel %vm646, %v858, 0.0
  %v936 = vadd.f32 %v934, %v935
  %v937 = vsel %vm646, %v859, 0.0
  %v938 = vadd.f32 %v936, %v937
  %v939 = vsel %vm646, %v860, 0.0
  %v940 = vadd.f32 %v938, %v939
  %v941 = vsel %vm646, %v861, 0.0
  %v942 = vadd.f32 %v940, %v941
  %v943 = vsel %vm646, %v862, 0.0
  %v944 = vadd.f32 %v942, %v943
  %v945 = vsel %vm646, %v863, 0.0
  %v946 = vadd.f32 %v944, %v945
  %v947 = vsel %vm646, %v864, 0.0
  %v948 = vadd.f32 %v946, %v947
  %v949 = vsel %vm646, %v865, 0.0
  %v950 = vadd.f32 %v948, %v949
  %v951 = vsel %vm646, %v866, 0.0
  %v952 = vadd.f32 %v950, %v951
  %v953 = vsel %vm646, %v867, 0.0
  %v954 = vadd.f32 %v952, %v953
  %v955 = vsel %vm646, %v868, 0.0
  %v956 = vadd.f32 %v954, %v955
  %v957 = vsel %vm646, %v869, 0.0
  %v958 = vadd.f32 %v956, %v957
  %v959 = vsel %vm646, %v870, 0.0
  %v960 = vadd.f32 %v958, %v959
  %v961 = vsel %vm646, %v871, 0.0
  %v962 = vadd.f32 %v960, %v961
  %v963 = vsel %vm646, %v872, 0.0
  %v964 = vadd.f32 %v962, %v963
  %v965 = vsel %vm646, %v873, 0.0
  %v966 = vadd.f32 %v964, %v965
  %v967 = vsel %vm646, %v874, 0.0
  %v968 = vadd.f32 %v966, %v967
  %v969 = vsel %vm646, %v875, 0.0
  %v970 = vadd.f32 %v968, %v969
  %v971 = vsel %vm646, %v876, 0.0
  %v972 = vadd.f32 %v970, %v971
  %v973 = vsel %vm646, %v877, 0.0
  %v974 = vadd.f32 %v972, %v973
  %v975 = vsel %vm646, %v878, 0.0
  %v976 = vadd.f32 %v974, %v975
  %v977 = vsel %vm646, %v879, 0.0
  %v978 = vadd.f32 %v976, %v977
  %v979 = vsel %vm646, %v880, 0.0
  %v980 = vadd.f32 %v978, %v979
  %v981 = vsel %vm646, %v881, 0.0
  %v982 = vadd.f32 %v980, %v981
  %v983 = vsel %vm646, %v882, 0.0
  %v984 = vadd.f32 %v982, %v983
  %v985 = vsel %vm646, %v883, 0.0
  %v986 = vadd.f32 %v984, %v985
  %v987 = vsel %vm646, %v884, 0.0
  %v988 = vadd.f32 %v986, %v987
  %v989 = vsel %vm646, %v885, 0.0
  %v990 = vadd.f32 %v988, %v989
  %v991 = vsel %vm646, %v886, 0.0
  %v992 = vadd.f32 %v990, %v991
  %v993 = vsel %vm646, %v887, 0.0
  %v994 = vadd.f32 %v992, %v993
  %v995 = vsel %vm646, %v888, 0.0
  %v996 = vadd.f32 %v994, %v995
  %v997 = vsel %vm646, %v889, 0.0
  %v998 = vadd.f32 %v996, %v997
  %v999 = vsel %vm646, %v890, 0.0
  %v1000 = vadd.f32 %v998, %v999
  %v1001 = vsel %vm646, %v891, 0.0
  %v1002 = vadd.f32 %v1000, %v1001
  %v1003 = vsel %vm646, %v892, 0.0
  %v1004 = vadd.f32 %v1002, %v1003
  %v1005 = vsel %vm646, %v893, 0.0
  %v1006 = vadd.f32 %v1004, %v1005
  %v1007 = vsel %vm646, %v894, 0.0
  %v1008 = vadd.f32 %v1006, %v1007
  %v1009 = vsel %vm646, %v895, 0.0
  %v1010 = vadd.f32 %v1008, %v1009
  %v1011 = vsel %vm646, %v896, 0.0
  %v1012 = vadd.f32 %v1010, %v1011
  %v1013 = vsel %vm646, %v897, 0.0
  %v1014 = vadd.f32 %v1012, %v1013
  %v1015 = vsel %vm646, %v898, 0.0
  %v1016 = vadd.f32 %v1014, %v1015
  %v1017 = vsel %vm646, %v899, 0.0
  %v1018 = vadd.f32 %v1016, %v1017
  %v1019 = vsel %vm646, %v900, 0.0
  %v1020 = vadd.f32 %v1018, %v1019
  %v1021 = vsel %vm646, %v901, 0.0
  %v1022 = vadd.f32 %v1020, %v1021
  %v1023 = vsel %vm646, %v902, 0.0
  %v1024 = vadd.f32 %v1022, %v1023
  %v1025 = vsel %vm646, %v903, 0.0
  %v1026 = vadd.f32 %v1024, %v1025
  %v1027 = vsel %vm646, %v904, 0.0
  %v1028 = vadd.f32 %v1026, %v1027
  %v1029 = vsel %vm646, %v905, 0.0
  %v1030 = vadd.f32 %v1028, %v1029
  %v1031 = vsel %vm646, %v906, 0.0
  %v1032 = vadd.f32 %v1030, %v1031
  %v1033 = vsel %vm646, %v907, 0.0
  %v1034 = vadd.f32 %v1032, %v1033
  %v1035 = vrot.slane %v1034, 4
  %v1036 = vadd.f32 %v1034, %v1035
  %v1037 = vrot.slane %v1036, 2
  %v1038 = vadd.f32 %v1036, %v1037
  %v1039 = vrot.slane %v1038, 1
  %v1040 = vadd.f32 %v1038, %v1039
  %vm1041 = vcmask 1040384
  %v1042 = vsel %vm1041, %v843, %v1040
  %vm1043 = vcmask 58368
  %1044 = vst.msk [vmem:[%s3] sm:$0x3] %vm1043, %v1042
  // Predicated region
  $region10: #{unet_forward.24} parent=0 // pred_check
    _
  $region11: #{unet_forward.24} parent=0 // pred_check_branch
    %1046 = sbr.rel (0) target = $region13
  $region12: #{unet_forward.24} parent=0 // pred_region
    _
  $region13: #{unet_forward.24} parent=0 // pred_fallthru
    _
  // Predicated region
  $region14: #{unet_forward.24} parent=0 // pred_check
    _
  $region15: #{unet_forward.24} parent=0 // pred_check_branch
    %1048 = sbr.rel (0) target = $region17
  $region16: #{unet_forward.24} parent=0 // pred_region
    _
  $region17: #{unet_forward.24} parent=0 // pred_fallthru
    _
  // Predicated region
  $region18: #{unet_forward.24} parent=0 // pred_check
    _
  $region19: #{unet_forward.24} parent=0 // pred_check_branch
    %1050 = sbr.rel (0) target = $region21
  $region20: #{unet_forward.24} parent=0 // pred_region
    _
  $region21: #{unet_forward.24} parent=0 // pred_fallthru
    _
  // Predicated region
  $region22: #{unet_forward.24} parent=0 // pred_check
    _
  $region23: #{unet_forward.24} parent=0 // pred_check_branch
    %1052 = sbr.rel (0) target = $region25
  $region24: #{unet_forward.24} parent=0 // pred_region
    _
  $region25: #{unet_forward.24} parent=0 // pred_fallthru
    _

// kernel: unet_forward.26
$region0: #{unet_forward.26}
  #allocation0 [shape = 'u32[]', space=smem, size = 0x4, offset = 0x4, fixed_abs, tag = 'smem constant byte address 0x4 - core index']
  #allocation1 [shape = 'u32[144,128]{1,0:T(1,128)}', space=vmem, size = 0x12000, scoped, tag = 'internal scratch']
  %s0 = inlined_call_operand.vmem [shape: bf16[512,72], index: 0, kind: input, shape index: {}]
  %s1 = inlined_call_operand.vmem [shape: bf16[72,8], index: 1, kind: input, shape index: {}]
  %s2 = inlined_call_operand.vmem [shape: f32[512,8], index: 2, kind: output, shape index: {0}]
  %s3 = inlined_call_operand.vmem [shape: f32[1,2,8], index: 3, kind: output, shape index: {1}]
  %4 = xla_tuple %s2, %s3
  %s5 = sld [smem:[#allocation0]]
  $region26: #{unet_forward.26} parent=0
    _
  %s7 = ssub.s32 1, %s5
  %s8 = scalar_select 0, %s7, %s5
  // Predicated region
  $region2: #{unet_forward.26} parent=0 // pred_check
    _
  $region3: #{unet_forward.26} parent=0 // pred_check_branch
    %10 = sbr.rel (0) target = $region5
  $region4: #{unet_forward.26} parent=0 // pred_region
    _
  $region5: #{unet_forward.26} parent=0 // pred_fallthru
    _
  // Predicated region
  $region6: #{unet_forward.26} parent=0 // pred_check
    _
  $region7: #{unet_forward.26} parent=0 // pred_check_branch
    %12 = sbr.rel (0) target = $region9
  $region8: #{unet_forward.26} parent=0 // pred_region
    _
  $region9: #{unet_forward.26} parent=0 // pred_fallthru
    _
  %v14 = vld [vmem:[%s0] sm:$0xf]
  %v15 = vld [vmem:[%s0 + $0x4] sm:$0xf]
  %v16 = vld [vmem:[%s0 + $0x8] sm:$0xf]
  %v17 = vld [vmem:[%s0 + $0xc] sm:$0xf]
  %v18 = vld [vmem:[%s0 + $0x10] sm:$0xf]
  %v19 = vld [vmem:[%s0 + $0x14] sm:$0xf]
  %v20 = vld [vmem:[%s0 + $0x18] sm:$0xf]
  %v21 = vld [vmem:[%s0 + $0x1c] sm:$0xf]
  %v22 = vld [vmem:[%s0 + $0x20] sm:$0xf]
  %v23 = vld [vmem:[%s0 + $0x24] sm:$0xf]
  %v24 = vld [vmem:[%s0 + $0x28] sm:$0xf]
  %v25 = vld [vmem:[%s0 + $0x2c] sm:$0xf]
  %v26 = vld [vmem:[%s0 + $0x30] sm:$0xf]
  %v27 = vld [vmem:[%s0 + $0x34] sm:$0xf]
  %v28 = vld [vmem:[%s0 + $0x38] sm:$0xf]
  %v29 = vld [vmem:[%s0 + $0x3c] sm:$0xf]
  %v30 = vld [vmem:[%s0 + $0x40] sm:$0xf]
  %v31 = vld [vmem:[%s0 + $0x44] sm:$0xf]
  %v32 = vld [vmem:[%s0 + $0x48] sm:$0xf]
  %v33 = vld [vmem:[%s0 + $0x4c] sm:$0xf]
  %v34 = vld [vmem:[%s0 + $0x50] sm:$0xf]
  %v35 = vld [vmem:[%s0 + $0x54] sm:$0xf]
  %v36 = vld [vmem:[%s0 + $0x58] sm:$0xf]
  %v37 = vld [vmem:[%s0 + $0x5c] sm:$0xf]
  %v38 = vld [vmem:[%s0 + $0x60] sm:$0xf]
  %v39 = vld [vmem:[%s0 + $0x64] sm:$0xf]
  %v40 = vld [vmem:[%s0 + $0x68] sm:$0xf]
  %v41 = vld [vmem:[%s0 + $0x6c] sm:$0xf]
  %v42 = vld [vmem:[%s0 + $0x70] sm:$0xf]
  %v43 = vld [vmem:[%s0 + $0x74] sm:$0xf]
  %v44 = vld [vmem:[%s0 + $0x78] sm:$0xf]
  %v45 = vld [vmem:[%s0 + $0x7c] sm:$0xf]
  %v46 = vld [vmem:[%s0 + $0x80] sm:$0xf]
  %v47 = vld [vmem:[%s0 + $0x84] sm:$0xf]
  %v48 = vld [vmem:[%s0 + $0x88] sm:$0xf]
  %v49 = vld [vmem:[%s0 + $0x8c] sm:$0xf]
  %v50 = vld [vmem:[%s0 + $0x90] sm:$0xf]
  %v51 = vld [vmem:[%s0 + $0x94] sm:$0xf]
  %v52 = vld [vmem:[%s0 + $0x98] sm:$0xf]
  %v53 = vld [vmem:[%s0 + $0x9c] sm:$0xf]
  %v54 = vld [vmem:[%s0 + $0xa0] sm:$0xf]
  %v55 = vld [vmem:[%s0 + $0xa4] sm:$0xf]
  %v56 = vld [vmem:[%s0 + $0xa8] sm:$0xf]
  %v57 = vld [vmem:[%s0 + $0xac] sm:$0xf]
  %v58 = vld [vmem:[%s0 + $0xb0] sm:$0xf]
  %v59 = vld [vmem:[%s0 + $0xb4] sm:$0xf]
  %v60 = vld [vmem:[%s0 + $0xb8] sm:$0xf]
  %v61 = vld [vmem:[%s0 + $0xbc] sm:$0xf]
  %v62 = vld [vmem:[%s0 + $0xc0] sm:$0xf]
  %v63 = vld [vmem:[%s0 + $0xc4] sm:$0xf]
  %v64 = vld [vmem:[%s0 + $0xc8] sm:$0xf]
  %v65 = vld [vmem:[%s0 + $0xcc] sm:$0xf]
  %v66 = vld [vmem:[%s0 + $0xd0] sm:$0xf]
  %v67 = vld [vmem:[%s0 + $0xd4] sm:$0xf]
  %v68 = vld [vmem:[%s0 + $0xd8] sm:$0xf]
  %v69 = vld [vmem:[%s0 + $0xdc] sm:$0xf]
  %v70 = vld [vmem:[%s0 + $0xe0] sm:$0xf]
  %v71 = vld [vmem:[%s0 + $0xe4] sm:$0xf]
  %v72 = vld [vmem:[%s0 + $0xe8] sm:$0xf]
  %v73 = vld [vmem:[%s0 + $0xec] sm:$0xf]
  %v74 = vld [vmem:[%s0 + $0xf0] sm:$0xf]
  %v75 = vld [vmem:[%s0 + $0xf4] sm:$0xf]
  %v76 = vld [vmem:[%s0 + $0xf8] sm:$0xf]
  %v77 = vld [vmem:[%s0 + $0xfc] sm:$0xf]
  %v78 = vld [vmem:[%s1] sm:$0xf]
  %v79 = vld [vmem:[%s1 + $0x4] sm:$0xf]
  %v80 = vld [vmem:[%s1 + $0x8] sm:$0xf]
  %v81 = vld [vmem:[%s1 + $0xc] sm:$0xf]
  %v82 = vld [vmem:[%s1 + $0x10] sm:$0xf]
  %v83 = vld [vmem:[%s1 + $0x14] sm:$0xf]
  %v84 = vld [vmem:[%s1 + $0x18] sm:$0xf]
  %v85 = vld [vmem:[%s1 + $0x1c] sm:$0xf]
  %v86 = vld [vmem:[%s1 + $0x20] sm:$0xf]
  %v151 = vunpack.c.l.b16 %v14
  %v152 = vunpack.c.l.b16 %v15
  %v153 = vunpack.c.l.b16 %v16
  %v154 = vunpack.c.l.b16 %v17
  %v155 = vunpack.c.l.b16 %v18
  %v156 = vunpack.c.l.b16 %v19
  %v157 = vunpack.c.l.b16 %v20
  %v158 = vunpack.c.l.b16 %v21
  %v159 = vunpack.c.l.b16 %v22
  %v160 = vunpack.c.l.b16 %v23
  %v161 = vunpack.c.l.b16 %v24
  %v162 = vunpack.c.l.b16 %v25
  %v163 = vunpack.c.l.b16 %v26
  %v164 = vunpack.c.l.b16 %v27
  %v165 = vunpack.c.l.b16 %v28
  %v166 = vunpack.c.l.b16 %v29
  %v167 = vunpack.c.l.b16 %v30
  %v168 = vunpack.c.l.b16 %v31
  %v169 = vunpack.c.l.b16 %v32
  %v170 = vunpack.c.l.b16 %v33
  %v171 = vunpack.c.l.b16 %v34
  %v172 = vunpack.c.l.b16 %v35
  %v173 = vunpack.c.l.b16 %v36
  %v174 = vunpack.c.l.b16 %v37
  %v175 = vunpack.c.l.b16 %v38
  %v176 = vunpack.c.l.b16 %v39
  %v177 = vunpack.c.l.b16 %v40
  %v178 = vunpack.c.l.b16 %v41
  %v179 = vunpack.c.l.b16 %v42
  %v180 = vunpack.c.l.b16 %v43
  %v181 = vunpack.c.l.b16 %v44
  %v182 = vunpack.c.l.b16 %v45
  %v183 = vunpack.c.l.b16 %v46
  %v184 = vunpack.c.l.b16 %v47
  %v185 = vunpack.c.l.b16 %v48
  %v186 = vunpack.c.l.b16 %v49
  %v187 = vunpack.c.l.b16 %v50
  %v188 = vunpack.c.l.b16 %v51
  %v189 = vunpack.c.l.b16 %v52
  %v190 = vunpack.c.l.b16 %v53
  %v191 = vunpack.c.l.b16 %v54
  %v192 = vunpack.c.l.b16 %v55
  %v193 = vunpack.c.l.b16 %v56
  %v194 = vunpack.c.l.b16 %v57
  %v195 = vunpack.c.l.b16 %v58
  %v196 = vunpack.c.l.b16 %v59
  %v197 = vunpack.c.l.b16 %v60
  %v198 = vunpack.c.l.b16 %v61
  %v199 = vunpack.c.l.b16 %v62
  %v200 = vunpack.c.l.b16 %v63
  %v201 = vunpack.c.l.b16 %v64
  %v202 = vunpack.c.l.b16 %v65
  %v203 = vunpack.c.l.b16 %v66
  %v204 = vunpack.c.l.b16 %v67
  %v205 = vunpack.c.l.b16 %v68
  %v206 = vunpack.c.l.b16 %v69
  %v207 = vunpack.c.l.b16 %v70
  %v208 = vunpack.c.l.b16 %v71
  %v209 = vunpack.c.l.b16 %v72
  %v210 = vunpack.c.l.b16 %v73
  %v211 = vunpack.c.l.b16 %v74
  %v212 = vunpack.c.l.b16 %v75
  %v213 = vunpack.c.l.b16 %v76
  %v214 = vunpack.c.l.b16 %v77
  %v215 = vpack.c.b16 %v152, %v151
  %v216 = vpack.c.b16 %v154, %v153
  %v217 = vpack.c.b16 %v156, %v155
  %v218 = vpack.c.b16 %v158, %v157
  %v219 = vpack.c.b16 %v160, %v159
  %v220 = vpack.c.b16 %v162, %v161
  %v221 = vpack.c.b16 %v164, %v163
  %v222 = vpack.c.b16 %v166, %v165
  %v223 = vpack.c.b16 %v168, %v167
  %v224 = vpack.c.b16 %v170, %v169
  %v225 = vpack.c.b16 %v172, %v171
  %v226 = vpack.c.b16 %v174, %v173
  %v227 = vpack.c.b16 %v176, %v175
  %v228 = vpack.c.b16 %v178, %v177
  %v229 = vpack.c.b16 %v180, %v179
  %v230 = vpack.c.b16 %v182, %v181
  %v231 = vpack.c.b16 %v184, %v183
  %v232 = vpack.c.b16 %v186, %v185
  %v233 = vpack.c.b16 %v188, %v187
  %v234 = vpack.c.b16 %v190, %v189
  %v235 = vpack.c.b16 %v192, %v191
  %v236 = vpack.c.b16 %v194, %v193
  %v237 = vpack.c.b16 %v196, %v195
  %v238 = vpack.c.b16 %v198, %v197
  %v239 = vpack.c.b16 %v200, %v199
  %v240 = vpack.c.b16 %v202, %v201
  %v241 = vpack.c.b16 %v204, %v203
  %v242 = vpack.c.b16 %v206, %v205
  %v243 = vpack.c.b16 %v208, %v207
  %v244 = vpack.c.b16 %v210, %v209
  %v245 = vpack.c.b16 %v212, %v211
  %v246 = vpack.c.b16 %v214, %v213
  %v256 = vunpack.c.l.b16 %v78
  %v257 = vunpack.c.l.b16 %v79
  %v258 = vunpack.c.l.b16 %v80
  %v259 = vunpack.c.l.b16 %v81
  %v260 = vunpack.c.l.b16 %v82
  %v261 = vunpack.c.l.b16 %v83
  %v262 = vunpack.c.l.b16 %v84
  %v263 = vunpack.c.l.b16 %v85
  %v264 = vunpack.c.l.b16 %v86
  %v265 = vpack.c.b16 %v257, %v256
  %v266 = vpack.c.b16 %v259, %v258
  %v267 = vpack.c.b16 %v261, %v260
  %v268 = vpack.c.b16 %v263, %v262
  %v269 = vpack.c.b16 %v264, %v264
  %vm274 = vcmask 588800
  %v276 = vsel %vm274, %v215, 0
  %v279 = vsel %vm274, %v216, 0
  %v282 = vsel %vm274, %v217, 0
  %v285 = vsel %vm274, %v218, 0
  %v288 = vsel %vm274, %v219, 0
  %v291 = vsel %vm274, %v220, 0
  %v294 = vsel %vm274, %v221, 0
  %v297 = vsel %vm274, %v222, 0
  %v300 = vsel %vm274, %v223, 0
  %v303 = vsel %vm274, %v224, 0
  %v306 = vsel %vm274, %v225, 0
  %v309 = vsel %vm274, %v226, 0
  %v312 = vsel %vm274, %v227, 0
  %v315 = vsel %vm274, %v228, 0
  %v318 = vsel %vm274, %v229, 0
  %v321 = vsel %vm274, %v230, 0
  %v324 = vsel %vm274, %v231, 0
  %v327 = vsel %vm274, %v232, 0
  %v330 = vsel %vm274, %v233, 0
  %v333 = vsel %vm274, %v234, 0
  %v336 = vsel %vm274, %v235, 0
  %v339 = vsel %vm274, %v236, 0
  %v342 = vsel %vm274, %v237, 0
  %v345 = vsel %vm274, %v238, 0
  %v348 = vsel %vm274, %v239, 0
  %v351 = vsel %vm274, %v240, 0
  %v354 = vsel %vm274, %v241, 0
  %v357 = vsel %vm274, %v242, 0
  %v360 = vsel %vm274, %v243, 0
  %v363 = vsel %vm274, %v244, 0
  %v366 = vsel %vm274, %v245, 0
  %v369 = vsel %vm274, %v246, 0
  %vm371 = vcmask 1043456
  %v373 = vsel %vm371, %v269, 0
  %375 = vmatprep.subr.bf16.mxu0 0
  %376 = vmatpush1.bf16.msra.mxu0 %v265
  %377 = vmatprep.subr.bf16.mxu0 0
  %378 = vmatpush1.bf16.msra.mxu0 %v266
  %379 = vmatprep.subr.bf16.mxu0 0
  %380 = vmatpush1.bf16.msra.mxu0 %v267
  %381 = vmatprep.subr.bf16.mxu0 0
  %382 = vmatpush1.bf16.msra.mxu0 %v268
  %383 = vmatprep.subr.bf16.mxu0 0
  %384 = vmatpush1.bf16.msra.mxu0 %v373
  %385 = vmatprep.subr.bf16.mxu0 0
  %386 = vmatpush1.bf16.msra.mxu0 0
  %387 = vmatprep.subr.bf16.mxu0 0
  %388 = vmatpush1.bf16.msra.mxu0 0
  %389 = vmatprep.subr.bf16.mxu0 0
  %390 = vmatpush1.bf16.msra.mxu0 0
  %391 = vmatprep.subr.bf16.mxu0 0
  %392 = vmatpush1.bf16.msra.mxu0 0
  %393 = vmatprep.subr.bf16.mxu0 0
  %394 = vmatpush1.bf16.msra.mxu0 0
  %395 = vmatprep.subr.bf16.mxu0 0
  %396 = vmatpush1.bf16.msra.mxu0 0
  %397 = vmatprep.subr.bf16.mxu0 0
  %398 = vmatpush1.bf16.msra.mxu0 0
  %399 = vmatprep.subr.bf16.mxu0 0
  %400 = vmatpush1.bf16.msra.mxu0 0
  %401 = vmatprep.subr.bf16.mxu0 0
  %402 = vmatpush1.bf16.msra.mxu0 0
  %403 = vmatprep.subr.bf16.mxu0 0
  %404 = vmatpush1.bf16.msra.mxu0 0
  %405 = vmatprep.subr.bf16.mxu0 0
  %406 = vmatpush1.bf16.msra.mxu0 0
  %407 = vmatprep.mubr.bf16.mxu0 0
  %408 = vmatmul.mubr.bf16.gmra.mrb[0].mxu0 %v276
  %v409 = vpop.f32.mrb[0].mxu0
  %v410 = vadd.f32 0.0, %v409
  %v411 = vpop.f32.mrb[0].mxu0
  %v412 = vpop.f32.mrb[0].mxu0
  %v413 = vadd.f32 0.0, %v412
  %v414 = vpop.f32.mrb[0].mxu0
  %415 = vmatprep.mubr.bf16.mxu0 0
  %416 = vmatmul.mubr.bf16.gmra.mrb[0].mxu0 %v279
  %v417 = vpop.f32.mrb[0].mxu0
  %v418 = vadd.f32 0.0, %v417
  %v419 = vpop.f32.mrb[0].mxu0
  %v420 = vpop.f32.mrb[0].mxu0
  %v421 = vadd.f32 0.0, %v420
  %v422 = vpop.f32.mrb[0].mxu0
  %423 = vmatprep.mubr.bf16.mxu0 0
  %424 = vmatmul.mubr.bf16.gmra.mrb[0].mxu0 %v282
  %v425 = vpop.f32.mrb[0].mxu0
  %v426 = vadd.f32 0.0, %v425
  %v427 = vpop.f32.mrb[0].mxu0
  %v428 = vpop.f32.mrb[0].mxu0
  %v429 = vadd.f32 0.0, %v428
  %v430 = vpop.f32.mrb[0].mxu0
  %431 = vmatprep.mubr.bf16.mxu0 0
  %432 = vmatmul.mubr.bf16.gmra.mrb[0].mxu0 %v285
  %v433 = vpop.f32.mrb[0].mxu0
  %v434 = vadd.f32 0.0, %v433
  %v435 = vpop.f32.mrb[0].mxu0
  %v436 = vpop.f32.mrb[0].mxu0
  %v437 = vadd.f32 0.0, %v436
  %v438 = vpop.f32.mrb[0].mxu0
  %439 = vmatprep.mubr.bf16.mxu0 0
  %440 = vmatmul.mubr.bf16.gmra.mrb[0].mxu0 %v288
  %v441 = vpop.f32.mrb[0].mxu0
  %v442 = vadd.f32 0.0, %v441
  %v443 = vpop.f32.mrb[0].mxu0
  %v444 = vpop.f32.mrb[0].mxu0
  %v445 = vadd.f32 0.0, %v444
  %v446 = vpop.f32.mrb[0].mxu0
  %447 = vmatprep.mubr.bf16.mxu0 0
  %448 = vmatmul.mubr.bf16.gmra.mrb[0].mxu0 %v291
  %v449 = vpop.f32.mrb[0].mxu0
  %v450 = vadd.f32 0.0, %v449
  %v451 = vpop.f32.mrb[0].mxu0
  %v452 = vpop.f32.mrb[0].mxu0
  %v453 = vadd.f32 0.0, %v452
  %v454 = vpop.f32.mrb[0].mxu0
  %455 = vmatprep.mubr.bf16.mxu0 0
  %456 = vmatmul.mubr.bf16.gmra.mrb[0].mxu0 %v294
  %v457 = vpop.f32.mrb[0].mxu0
  %v458 = vadd.f32 0.0, %v457
  %v459 = vpop.f32.mrb[0].mxu0
  %v460 = vpop.f32.mrb[0].mxu0
  %v461 = vadd.f32 0.0, %v460
  %v462 = vpop.f32.mrb[0].mxu0
  %463 = vmatprep.mubr.bf16.mxu0 0
  %464 = vmatmul.mubr.bf16.gmra.mrb[0].mxu0 %v297
  %v465 = vpop.f32.mrb[0].mxu0
  %v466 = vadd.f32 0.0, %v465
  %v467 = vpop.f32.mrb[0].mxu0
  %v468 = vpop.f32.mrb[0].mxu0
  %v469 = vadd.f32 0.0, %v468
  %v470 = vpop.f32.mrb[0].mxu0
  %471 = vmatprep.mubr.bf16.mxu0 0
  %472 = vmatmul.mubr.bf16.gmra.mrb[0].mxu0 %v300
  %v473 = vpop.f32.mrb[0].mxu0
  %v474 = vadd.f32 0.0, %v473
  %v475 = vpop.f32.mrb[0].mxu0
  %v476 = vpop.f32.mrb[0].mxu0
  %v477 = vadd.f32 0.0, %v476
  %v478 = vpop.f32.mrb[0].mxu0
  %479 = vmatprep.mubr.bf16.mxu0 0
  %480 = vmatmul.mubr.bf16.gmra.mrb[0].mxu0 %v303
  %v481 = vpop.f32.mrb[0].mxu0
  %v482 = vadd.f32 0.0, %v481
  %v483 = vpop.f32.mrb[0].mxu0
  %v484 = vpop.f32.mrb[0].mxu0
  %v485 = vadd.f32 0.0, %v484
  %v486 = vpop.f32.mrb[0].mxu0
  %487 = vmatprep.mubr.bf16.mxu0 0
  %488 = vmatmul.mubr.bf16.gmra.mrb[0].mxu0 %v306
  %v489 = vpop.f32.mrb[0].mxu0
  %v490 = vadd.f32 0.0, %v489
  %v491 = vpop.f32.mrb[0].mxu0
  %v492 = vpop.f32.mrb[0].mxu0
  %v493 = vadd.f32 0.0, %v492
  %v494 = vpop.f32.mrb[0].mxu0
  %495 = vmatprep.mubr.bf16.mxu0 0
  %496 = vmatmul.mubr.bf16.gmra.mrb[0].mxu0 %v309
  %v497 = vpop.f32.mrb[0].mxu0
  %v498 = vadd.f32 0.0, %v497
  %v499 = vpop.f32.mrb[0].mxu0
  %v500 = vpop.f32.mrb[0].mxu0
  %v501 = vadd.f32 0.0, %v500
  %v502 = vpop.f32.mrb[0].mxu0
  %503 = vmatprep.mubr.bf16.mxu0 0
  %504 = vmatmul.mubr.bf16.gmra.mrb[0].mxu0 %v312
  %v505 = vpop.f32.mrb[0].mxu0
  %v506 = vadd.f32 0.0, %v505
  %v507 = vpop.f32.mrb[0].mxu0
  %v508 = vpop.f32.mrb[0].mxu0
  %v509 = vadd.f32 0.0, %v508
  %v510 = vpop.f32.mrb[0].mxu0
  %511 = vmatprep.mubr.bf16.mxu0 0
  %512 = vmatmul.mubr.bf16.gmra.mrb[0].mxu0 %v315
  %v513 = vpop.f32.mrb[0].mxu0
  %v514 = vadd.f32 0.0, %v513
  %v515 = vpop.f32.mrb[0].mxu0
  %v516 = vpop.f32.mrb[0].mxu0
  %v517 = vadd.f32 0.0, %v516
  %v518 = vpop.f32.mrb[0].mxu0
  %519 = vmatprep.mubr.bf16.mxu0 0
  %520 = vmatmul.mubr.bf16.gmra.mrb[0].mxu0 %v318
  %v521 = vpop.f32.mrb[0].mxu0
  %v522 = vadd.f32 0.0, %v521
  %v523 = vpop.f32.mrb[0].mxu0
  %v524 = vpop.f32.mrb[0].mxu0
  %v525 = vadd.f32 0.0, %v524
  %v526 = vpop.f32.mrb[0].mxu0
  %527 = vmatprep.mubr.bf16.mxu0 0
  %528 = vmatmul.mubr.bf16.gmra.mrb[0].mxu0 %v321
  %v529 = vpop.f32.mrb[0].mxu0
  %v530 = vadd.f32 0.0, %v529
  %v531 = vpop.f32.mrb[0].mxu0
  %v532 = vpop.f32.mrb[0].mxu0
  %v533 = vadd.f32 0.0, %v532
  %v534 = vpop.f32.mrb[0].mxu0
  %535 = vmatprep.mubr.bf16.mxu0 0
  %536 = vmatmul.mubr.bf16.gmra.mrb[0].mxu0 %v324
  %v537 = vpop.f32.mrb[0].mxu0
  %v538 = vadd.f32 0.0, %v537
  %v539 = vpop.f32.mrb[0].mxu0
  %v540 = vpop.f32.mrb[0].mxu0
  %v541 = vadd.f32 0.0, %v540
  %v542 = vpop.f32.mrb[0].mxu0
  %543 = vmatprep.mubr.bf16.mxu0 0
  %544 = vmatmul.mubr.bf16.gmra.mrb[0].mxu0 %v327
  %v545 = vpop.f32.mrb[0].mxu0
  %v546 = vadd.f32 0.0, %v545
  %v547 = vpop.f32.mrb[0].mxu0
  %v548 = vpop.f32.mrb[0].mxu0
  %v549 = vadd.f32 0.0, %v548
  %v550 = vpop.f32.mrb[0].mxu0
  %551 = vmatprep.mubr.bf16.mxu0 0
  %552 = vmatmul.mubr.bf16.gmra.mrb[0].mxu0 %v330
  %v553 = vpop.f32.mrb[0].mxu0
  %v554 = vadd.f32 0.0, %v553
  %v555 = vpop.f32.mrb[0].mxu0
  %v556 = vpop.f32.mrb[0].mxu0
  %v557 = vadd.f32 0.0, %v556
  %v558 = vpop.f32.mrb[0].mxu0
  %559 = vmatprep.mubr.bf16.mxu0 0
  %560 = vmatmul.mubr.bf16.gmra.mrb[0].mxu0 %v333
  %v561 = vpop.f32.mrb[0].mxu0
  %v562 = vadd.f32 0.0, %v561
  %v563 = vpop.f32.mrb[0].mxu0
  %v564 = vpop.f32.mrb[0].mxu0
  %v565 = vadd.f32 0.0, %v564
  %v566 = vpop.f32.mrb[0].mxu0
  %567 = vmatprep.mubr.bf16.mxu0 0
  %568 = vmatmul.mubr.bf16.gmra.mrb[0].mxu0 %v336
  %v569 = vpop.f32.mrb[0].mxu0
  %v570 = vadd.f32 0.0, %v569
  %v571 = vpop.f32.mrb[0].mxu0
  %v572 = vpop.f32.mrb[0].mxu0
  %v573 = vadd.f32 0.0, %v572
  %v574 = vpop.f32.mrb[0].mxu0
  %575 = vmatprep.mubr.bf16.mxu0 0
  %576 = vmatmul.mubr.bf16.gmra.mrb[0].mxu0 %v339
  %v577 = vpop.f32.mrb[0].mxu0
  %v578 = vadd.f32 0.0, %v577
  %v579 = vpop.f32.mrb[0].mxu0
  %v580 = vpop.f32.mrb[0].mxu0
  %v581 = vadd.f32 0.0, %v580
  %v582 = vpop.f32.mrb[0].mxu0
  %583 = vmatprep.mubr.bf16.mxu0 0
  %584 = vmatmul.mubr.bf16.gmra.mrb[0].mxu0 %v342
  %v585 = vpop.f32.mrb[0].mxu0
  %v586 = vadd.f32 0.0, %v585
  %v587 = vpop.f32.mrb[0].mxu0
  %v588 = vpop.f32.mrb[0].mxu0
  %v589 = vadd.f32 0.0, %v588
  %v590 = vpop.f32.mrb[0].mxu0
  %591 = vmatprep.mubr.bf16.mxu0 0
  %592 = vmatmul.mubr.bf16.gmra.mrb[0].mxu0 %v345
  %v593 = vpop.f32.mrb[0].mxu0
  %v594 = vadd.f32 0.0, %v593
  %v595 = vpop.f32.mrb[0].mxu0
  %v596 = vpop.f32.mrb[0].mxu0
  %v597 = vadd.f32 0.0, %v596
  %v598 = vpop.f32.mrb[0].mxu0
  %599 = vmatprep.mubr.bf16.mxu0 0
  %600 = vmatmul.mubr.bf16.gmra.mrb[0].mxu0 %v348
  %v601 = vpop.f32.mrb[0].mxu0
  %v602 = vadd.f32 0.0, %v601
  %v603 = vpop.f32.mrb[0].mxu0
  %v604 = vpop.f32.mrb[0].mxu0
  %v605 = vadd.f32 0.0, %v604
  %v606 = vpop.f32.mrb[0].mxu0
  %607 = vmatprep.mubr.bf16.mxu0 0
  %608 = vmatmul.mubr.bf16.gmra.mrb[0].mxu0 %v351
  %v609 = vpop.f32.mrb[0].mxu0
  %v610 = vadd.f32 0.0, %v609
  %v611 = vpop.f32.mrb[0].mxu0
  %v612 = vpop.f32.mrb[0].mxu0
  %v613 = vadd.f32 0.0, %v612
  %v614 = vpop.f32.mrb[0].mxu0
  %615 = vmatprep.mubr.bf16.mxu0 0
  %616 = vmatmul.mubr.bf16.gmra.mrb[0].mxu0 %v354
  %v617 = vpop.f32.mrb[0].mxu0
  %v618 = vadd.f32 0.0, %v617
  %v619 = vpop.f32.mrb[0].mxu0
  %v620 = vpop.f32.mrb[0].mxu0
  %v621 = vadd.f32 0.0, %v620
  %v622 = vpop.f32.mrb[0].mxu0
  %623 = vmatprep.mubr.bf16.mxu0 0
  %624 = vmatmul.mubr.bf16.gmra.mrb[0].mxu0 %v357
  %v625 = vpop.f32.mrb[0].mxu0
  %v626 = vadd.f32 0.0, %v625
  %v627 = vpop.f32.mrb[0].mxu0
  %v628 = vpop.f32.mrb[0].mxu0
  %v629 = vadd.f32 0.0, %v628
  %v630 = vpop.f32.mrb[0].mxu0
  %631 = vmatprep.mubr.bf16.mxu0 0
  %632 = vmatmul.mubr.bf16.gmra.mrb[0].mxu0 %v360
  %v633 = vpop.f32.mrb[0].mxu0
  %v634 = vadd.f32 0.0, %v633
  %v635 = vpop.f32.mrb[0].mxu0
  %v636 = vpop.f32.mrb[0].mxu0
  %v637 = vadd.f32 0.0, %v636
  %v638 = vpop.f32.mrb[0].mxu0
  %639 = vmatprep.mubr.bf16.mxu0 0
  %640 = vmatmul.mubr.bf16.gmra.mrb[0].mxu0 %v363
  %v641 = vpop.f32.mrb[0].mxu0
  %v642 = vadd.f32 0.0, %v641
  %v643 = vpop.f32.mrb[0].mxu0
  %v644 = vpop.f32.mrb[0].mxu0
  %v645 = vadd.f32 0.0, %v644
  %v646 = vpop.f32.mrb[0].mxu0
  %647 = vmatprep.mubr.bf16.mxu0 0
  %648 = vmatmul.mubr.bf16.gmra.mrb[0].mxu0 %v366
  %v649 = vpop.f32.mrb[0].mxu0
  %v650 = vadd.f32 0.0, %v649
  %v651 = vpop.f32.mrb[0].mxu0
  %v652 = vpop.f32.mrb[0].mxu0
  %v653 = vadd.f32 0.0, %v652
  %v654 = vpop.f32.mrb[0].mxu0
  %655 = vmatprep.mubr.bf16.mxu0 0
  %656 = vmatmul.mubr.bf16.gmra.mrb[0].mxu0 %v369
  %v657 = vpop.f32.mrb[0].mxu0
  %v658 = vadd.f32 0.0, %v657
  %v659 = vpop.f32.mrb[0].mxu0
  %v660 = vpop.f32.mrb[0].mxu0
  %v661 = vadd.f32 0.0, %v660
  %v662 = vpop.f32.mrb[0].mxu0
  %663 = vdwg.mxu0
  %vm664 = vcmask 64512
  %665 = vst.msk [vmem:[%s2] sm:$0xff] %vm664, %v410
  %666 = vst.msk [vmem:[%s2 + $0x8] sm:$0xff] %vm664, %v413
  %667 = vst.msk [vmem:[%s2 + $0x10] sm:$0xff] %vm664, %v418
  %668 = vst.msk [vmem:[%s2 + $0x18] sm:$0xff] %vm664, %v421
  %669 = vst.msk [vmem:[%s2 + $0x20] sm:$0xff] %vm664, %v426
  %670 = vst.msk [vmem:[%s2 + $0x28] sm:$0xff] %vm664, %v429
  %671 = vst.msk [vmem:[%s2 + $0x30] sm:$0xff] %vm664, %v434
  %672 = vst.msk [vmem:[%s2 + $0x38] sm:$0xff] %vm664, %v437
  %673 = vst.msk [vmem:[%s2 + $0x40] sm:$0xff] %vm664, %v442
  %674 = vst.msk [vmem:[%s2 + $0x48] sm:$0xff] %vm664, %v445
  %675 = vst.msk [vmem:[%s2 + $0x50] sm:$0xff] %vm664, %v450
  %676 = vst.msk [vmem:[%s2 + $0x58] sm:$0xff] %vm664, %v453
  %677 = vst.msk [vmem:[%s2 + $0x60] sm:$0xff] %vm664, %v458
  %678 = vst.msk [vmem:[%s2 + $0x68] sm:$0xff] %vm664, %v461
  %679 = vst.msk [vmem:[%s2 + $0x70] sm:$0xff] %vm664, %v466
  %680 = vst.msk [vmem:[%s2 + $0x78] sm:$0xff] %vm664, %v469
  %681 = vst.msk [vmem:[%s2 + $0x80] sm:$0xff] %vm664, %v474
  %682 = vst.msk [vmem:[%s2 + $0x88] sm:$0xff] %vm664, %v477
  %683 = vst.msk [vmem:[%s2 + $0x90] sm:$0xff] %vm664, %v482
  %684 = vst.msk [vmem:[%s2 + $0x98] sm:$0xff] %vm664, %v485
  %685 = vst.msk [vmem:[%s2 + $0xa0] sm:$0xff] %vm664, %v490
  %686 = vst.msk [vmem:[%s2 + $0xa8] sm:$0xff] %vm664, %v493
  %687 = vst.msk [vmem:[%s2 + $0xb0] sm:$0xff] %vm664, %v498
  %688 = vst.msk [vmem:[%s2 + $0xb8] sm:$0xff] %vm664, %v501
  %689 = vst.msk [vmem:[%s2 + $0xc0] sm:$0xff] %vm664, %v506
  %690 = vst.msk [vmem:[%s2 + $0xc8] sm:$0xff] %vm664, %v509
  %691 = vst.msk [vmem:[%s2 + $0xd0] sm:$0xff] %vm664, %v514
  %692 = vst.msk [vmem:[%s2 + $0xd8] sm:$0xff] %vm664, %v517
  %693 = vst.msk [vmem:[%s2 + $0xe0] sm:$0xff] %vm664, %v522
  %694 = vst.msk [vmem:[%s2 + $0xe8] sm:$0xff] %vm664, %v525
  %695 = vst.msk [vmem:[%s2 + $0xf0] sm:$0xff] %vm664, %v530
  %696 = vst.msk [vmem:[%s2 + $0xf8] sm:$0xff] %vm664, %v533
  %697 = vst.msk [vmem:[%s2 + $0x100] sm:$0xff] %vm664, %v538
  %698 = vst.msk [vmem:[%s2 + $0x108] sm:$0xff] %vm664, %v541
  %699 = vst.msk [vmem:[%s2 + $0x110] sm:$0xff] %vm664, %v546
  %700 = vst.msk [vmem:[%s2 + $0x118] sm:$0xff] %vm664, %v549
  %701 = vst.msk [vmem:[%s2 + $0x120] sm:$0xff] %vm664, %v554
  %702 = vst.msk [vmem:[%s2 + $0x128] sm:$0xff] %vm664, %v557
  %703 = vst.msk [vmem:[%s2 + $0x130] sm:$0xff] %vm664, %v562
  %704 = vst.msk [vmem:[%s2 + $0x138] sm:$0xff] %vm664, %v565
  %705 = vst.msk [vmem:[%s2 + $0x140] sm:$0xff] %vm664, %v570
  %706 = vst.msk [vmem:[%s2 + $0x148] sm:$0xff] %vm664, %v573
  %707 = vst.msk [vmem:[%s2 + $0x150] sm:$0xff] %vm664, %v578
  %708 = vst.msk [vmem:[%s2 + $0x158] sm:$0xff] %vm664, %v581
  %709 = vst.msk [vmem:[%s2 + $0x160] sm:$0xff] %vm664, %v586
  %710 = vst.msk [vmem:[%s2 + $0x168] sm:$0xff] %vm664, %v589
  %711 = vst.msk [vmem:[%s2 + $0x170] sm:$0xff] %vm664, %v594
  %712 = vst.msk [vmem:[%s2 + $0x178] sm:$0xff] %vm664, %v597
  %713 = vst.msk [vmem:[%s2 + $0x180] sm:$0xff] %vm664, %v602
  %714 = vst.msk [vmem:[%s2 + $0x188] sm:$0xff] %vm664, %v605
  %715 = vst.msk [vmem:[%s2 + $0x190] sm:$0xff] %vm664, %v610
  %716 = vst.msk [vmem:[%s2 + $0x198] sm:$0xff] %vm664, %v613
  %717 = vst.msk [vmem:[%s2 + $0x1a0] sm:$0xff] %vm664, %v618
  %718 = vst.msk [vmem:[%s2 + $0x1a8] sm:$0xff] %vm664, %v621
  %719 = vst.msk [vmem:[%s2 + $0x1b0] sm:$0xff] %vm664, %v626
  %720 = vst.msk [vmem:[%s2 + $0x1b8] sm:$0xff] %vm664, %v629
  %721 = vst.msk [vmem:[%s2 + $0x1c0] sm:$0xff] %vm664, %v634
  %722 = vst.msk [vmem:[%s2 + $0x1c8] sm:$0xff] %vm664, %v637
  %723 = vst.msk [vmem:[%s2 + $0x1d0] sm:$0xff] %vm664, %v642
  %724 = vst.msk [vmem:[%s2 + $0x1d8] sm:$0xff] %vm664, %v645
  %725 = vst.msk [vmem:[%s2 + $0x1e0] sm:$0xff] %vm664, %v650
  %726 = vst.msk [vmem:[%s2 + $0x1e8] sm:$0xff] %vm664, %v653
  %727 = vst.msk [vmem:[%s2 + $0x1f0] sm:$0xff] %vm664, %v658
  %728 = vst.msk [vmem:[%s2 + $0x1f8] sm:$0xff] %vm664, %v661
  %v729 = vsel %vm664, %v410, 0.0
  %v730 = vsel %vm664, %v413, 0.0
  %v731 = vadd.f32 %v729, %v730
  %v732 = vsel %vm664, %v418, 0.0
  %v733 = vadd.f32 %v731, %v732
  %v734 = vsel %vm664, %v421, 0.0
  %v735 = vadd.f32 %v733, %v734
  %v736 = vsel %vm664, %v426, 0.0
  %v737 = vadd.f32 %v735, %v736
  %v738 = vsel %vm664, %v429, 0.0
  %v739 = vadd.f32 %v737, %v738
  %v740 = vsel %vm664, %v434, 0.0
  %v741 = vadd.f32 %v739, %v740
  %v742 = vsel %vm664, %v437, 0.0
  %v743 = vadd.f32 %v741, %v742
  %v744 = vsel %vm664, %v442, 0.0
  %v745 = vadd.f32 %v743, %v744
  %v746 = vsel %vm664, %v445, 0.0
  %v747 = vadd.f32 %v745, %v746
  %v748 = vsel %vm664, %v450, 0.0
  %v749 = vadd.f32 %v747, %v748
  %v750 = vsel %vm664, %v453, 0.0
  %v751 = vadd.f32 %v749, %v750
  %v752 = vsel %vm664, %v458, 0.0
  %v753 = vadd.f32 %v751, %v752
  %v754 = vsel %vm664, %v461, 0.0
  %v755 = vadd.f32 %v753, %v754
  %v756 = vsel %vm664, %v466, 0.0
  %v757 = vadd.f32 %v755, %v756
  %v758 = vsel %vm664, %v469, 0.0
  %v759 = vadd.f32 %v757, %v758
  %v760 = vsel %vm664, %v474, 0.0
  %v761 = vadd.f32 %v759, %v760
  %v762 = vsel %vm664, %v477, 0.0
  %v763 = vadd.f32 %v761, %v762
  %v764 = vsel %vm664, %v482, 0.0
  %v765 = vadd.f32 %v763, %v764
  %v766 = vsel %vm664, %v485, 0.0
  %v767 = vadd.f32 %v765, %v766
  %v768 = vsel %vm664, %v490, 0.0
  %v769 = vadd.f32 %v767, %v768
  %v770 = vsel %vm664, %v493, 0.0
  %v771 = vadd.f32 %v769, %v770
  %v772 = vsel %vm664, %v498, 0.0
  %v773 = vadd.f32 %v771, %v772
  %v774 = vsel %vm664, %v501, 0.0
  %v775 = vadd.f32 %v773, %v774
  %v776 = vsel %vm664, %v506, 0.0
  %v777 = vadd.f32 %v775, %v776
  %v778 = vsel %vm664, %v509, 0.0
  %v779 = vadd.f32 %v777, %v778
  %v780 = vsel %vm664, %v514, 0.0
  %v781 = vadd.f32 %v779, %v780
  %v782 = vsel %vm664, %v517, 0.0
  %v783 = vadd.f32 %v781, %v782
  %v784 = vsel %vm664, %v522, 0.0
  %v785 = vadd.f32 %v783, %v784
  %v786 = vsel %vm664, %v525, 0.0
  %v787 = vadd.f32 %v785, %v786
  %v788 = vsel %vm664, %v530, 0.0
  %v789 = vadd.f32 %v787, %v788
  %v790 = vsel %vm664, %v533, 0.0
  %v791 = vadd.f32 %v789, %v790
  %v792 = vsel %vm664, %v538, 0.0
  %v793 = vadd.f32 %v791, %v792
  %v794 = vsel %vm664, %v541, 0.0
  %v795 = vadd.f32 %v793, %v794
  %v796 = vsel %vm664, %v546, 0.0
  %v797 = vadd.f32 %v795, %v796
  %v798 = vsel %vm664, %v549, 0.0
  %v799 = vadd.f32 %v797, %v798
  %v800 = vsel %vm664, %v554, 0.0
  %v801 = vadd.f32 %v799, %v800
  %v802 = vsel %vm664, %v557, 0.0
  %v803 = vadd.f32 %v801, %v802
  %v804 = vsel %vm664, %v562, 0.0
  %v805 = vadd.f32 %v803, %v804
  %v806 = vsel %vm664, %v565, 0.0
  %v807 = vadd.f32 %v805, %v806
  %v808 = vsel %vm664, %v570, 0.0
  %v809 = vadd.f32 %v807, %v808
  %v810 = vsel %vm664, %v573, 0.0
  %v811 = vadd.f32 %v809, %v810
  %v812 = vsel %vm664, %v578, 0.0
  %v813 = vadd.f32 %v811, %v812
  %v814 = vsel %vm664, %v581, 0.0
  %v815 = vadd.f32 %v813, %v814
  %v816 = vsel %vm664, %v586, 0.0
  %v817 = vadd.f32 %v815, %v816
  %v818 = vsel %vm664, %v589, 0.0
  %v819 = vadd.f32 %v817, %v818
  %v820 = vsel %vm664, %v594, 0.0
  %v821 = vadd.f32 %v819, %v820
  %v822 = vsel %vm664, %v597, 0.0
  %v823 = vadd.f32 %v821, %v822
  %v824 = vsel %vm664, %v602, 0.0
  %v825 = vadd.f32 %v823, %v824
  %v826 = vsel %vm664, %v605, 0.0
  %v827 = vadd.f32 %v825, %v826
  %v828 = vsel %vm664, %v610, 0.0
  %v829 = vadd.f32 %v827, %v828
  %v830 = vsel %vm664, %v613, 0.0
  %v831 = vadd.f32 %v829, %v830
  %v832 = vsel %vm664, %v618, 0.0
  %v833 = vadd.f32 %v831, %v832
  %v834 = vsel %vm664, %v621, 0.0
  %v835 = vadd.f32 %v833, %v834
  %v836 = vsel %vm664, %v626, 0.0
  %v837 = vadd.f32 %v835, %v836
  %v838 = vsel %vm664, %v629, 0.0
  %v839 = vadd.f32 %v837, %v838
  %v840 = vsel %vm664, %v634, 0.0
  %v841 = vadd.f32 %v839, %v840
  %v842 = vsel %vm664, %v637, 0.0
  %v843 = vadd.f32 %v841, %v842
  %v844 = vsel %vm664, %v642, 0.0
  %v845 = vadd.f32 %v843, %v844
  %v846 = vsel %vm664, %v645, 0.0
  %v847 = vadd.f32 %v845, %v846
  %v848 = vsel %vm664, %v650, 0.0
  %v849 = vadd.f32 %v847, %v848
  %v850 = vsel %vm664, %v653, 0.0
  %v851 = vadd.f32 %v849, %v850
  %v852 = vsel %vm664, %v658, 0.0
  %v853 = vadd.f32 %v851, %v852
  %v854 = vsel %vm664, %v661, 0.0
  %v855 = vadd.f32 %v853, %v854
  %v856 = vrot.slane %v855, 4
  %v857 = vadd.f32 %v855, %v856
  %v858 = vrot.slane %v857, 2
  %v859 = vadd.f32 %v857, %v858
  %v860 = vrot.slane %v859, 1
  %v861 = vadd.f32 %v859, %v860
  %v862 = vmul.f32 %v410, %v410
  %v863 = vmul.f32 %v413, %v413
  %v864 = vmul.f32 %v418, %v418
  %v865 = vmul.f32 %v421, %v421
  %v866 = vmul.f32 %v426, %v426
  %v867 = vmul.f32 %v429, %v429
  %v868 = vmul.f32 %v434, %v434
  %v869 = vmul.f32 %v437, %v437
  %v870 = vmul.f32 %v442, %v442
  %v871 = vmul.f32 %v445, %v445
  %v872 = vmul.f32 %v450, %v450
  %v873 = vmul.f32 %v453, %v453
  %v874 = vmul.f32 %v458, %v458
  %v875 = vmul.f32 %v461, %v461
  %v876 = vmul.f32 %v466, %v466
  %v877 = vmul.f32 %v469, %v469
  %v878 = vmul.f32 %v474, %v474
  %v879 = vmul.f32 %v477, %v477
  %v880 = vmul.f32 %v482, %v482
  %v881 = vmul.f32 %v485, %v485
  %v882 = vmul.f32 %v490, %v490
  %v883 = vmul.f32 %v493, %v493
  %v884 = vmul.f32 %v498, %v498
  %v885 = vmul.f32 %v501, %v501
  %v886 = vmul.f32 %v506, %v506
  %v887 = vmul.f32 %v509, %v509
  %v888 = vmul.f32 %v514, %v514
  %v889 = vmul.f32 %v517, %v517
  %v890 = vmul.f32 %v522, %v522
  %v891 = vmul.f32 %v525, %v525
  %v892 = vmul.f32 %v530, %v530
  %v893 = vmul.f32 %v533, %v533
  %v894 = vmul.f32 %v538, %v538
  %v895 = vmul.f32 %v541, %v541
  %v896 = vmul.f32 %v546, %v546
  %v897 = vmul.f32 %v549, %v549
  %v898 = vmul.f32 %v554, %v554
  %v899 = vmul.f32 %v557, %v557
  %v900 = vmul.f32 %v562, %v562
  %v901 = vmul.f32 %v565, %v565
  %v902 = vmul.f32 %v570, %v570
  %v903 = vmul.f32 %v573, %v573
  %v904 = vmul.f32 %v578, %v578
  %v905 = vmul.f32 %v581, %v581
  %v906 = vmul.f32 %v586, %v586
  %v907 = vmul.f32 %v589, %v589
  %v908 = vmul.f32 %v594, %v594
  %v909 = vmul.f32 %v597, %v597
  %v910 = vmul.f32 %v602, %v602
  %v911 = vmul.f32 %v605, %v605
  %v912 = vmul.f32 %v610, %v610
  %v913 = vmul.f32 %v613, %v613
  %v914 = vmul.f32 %v618, %v618
  %v915 = vmul.f32 %v621, %v621
  %v916 = vmul.f32 %v626, %v626
  %v917 = vmul.f32 %v629, %v629
  %v918 = vmul.f32 %v634, %v634
  %v919 = vmul.f32 %v637, %v637
  %v920 = vmul.f32 %v642, %v642
  %v921 = vmul.f32 %v645, %v645
  %v922 = vmul.f32 %v650, %v650
  %v923 = vmul.f32 %v653, %v653
  %v924 = vmul.f32 %v658, %v658
  %v925 = vmul.f32 %v661, %v661
  %v926 = vsel %vm664, %v862, 0.0
  %v927 = vsel %vm664, %v863, 0.0
  %v928 = vadd.f32 %v926, %v927
  %v929 = vsel %vm664, %v864, 0.0
  %v930 = vadd.f32 %v928, %v929
  %v931 = vsel %vm664, %v865, 0.0
  %v932 = vadd.f32 %v930, %v931
  %v933 = vsel %vm664, %v866, 0.0
  %v934 = vadd.f32 %v932, %v933
  %v935 = vsel %vm664, %v867, 0.0
  %v936 = vadd.f32 %v934, %v935
  %v937 = vsel %vm664, %v868, 0.0
  %v938 = vadd.f32 %v936, %v937
  %v939 = vsel %vm664, %v869, 0.0
  %v940 = vadd.f32 %v938, %v939
  %v941 = vsel %vm664, %v870, 0.0
  %v942 = vadd.f32 %v940, %v941
  %v943 = vsel %vm664, %v871, 0.0
  %v944 = vadd.f32 %v942, %v943
  %v945 = vsel %vm664, %v872, 0.0
  %v946 = vadd.f32 %v944, %v945
  %v947 = vsel %vm664, %v873, 0.0
  %v948 = vadd.f32 %v946, %v947
  %v949 = vsel %vm664, %v874, 0.0
  %v950 = vadd.f32 %v948, %v949
  %v951 = vsel %vm664, %v875, 0.0
  %v952 = vadd.f32 %v950, %v951
  %v953 = vsel %vm664, %v876, 0.0
  %v954 = vadd.f32 %v952, %v953
  %v955 = vsel %vm664, %v877, 0.0
  %v956 = vadd.f32 %v954, %v955
  %v957 = vsel %vm664, %v878, 0.0
  %v958 = vadd.f32 %v956, %v957
  %v959 = vsel %vm664, %v879, 0.0
  %v960 = vadd.f32 %v958, %v959
  %v961 = vsel %vm664, %v880, 0.0
  %v962 = vadd.f32 %v960, %v961
  %v963 = vsel %vm664, %v881, 0.0
  %v964 = vadd.f32 %v962, %v963
  %v965 = vsel %vm664, %v882, 0.0
  %v966 = vadd.f32 %v964, %v965
  %v967 = vsel %vm664, %v883, 0.0
  %v968 = vadd.f32 %v966, %v967
  %v969 = vsel %vm664, %v884, 0.0
  %v970 = vadd.f32 %v968, %v969
  %v971 = vsel %vm664, %v885, 0.0
  %v972 = vadd.f32 %v970, %v971
  %v973 = vsel %vm664, %v886, 0.0
  %v974 = vadd.f32 %v972, %v973
  %v975 = vsel %vm664, %v887, 0.0
  %v976 = vadd.f32 %v974, %v975
  %v977 = vsel %vm664, %v888, 0.0
  %v978 = vadd.f32 %v976, %v977
  %v979 = vsel %vm664, %v889, 0.0
  %v980 = vadd.f32 %v978, %v979
  %v981 = vsel %vm664, %v890, 0.0
  %v982 = vadd.f32 %v980, %v981
  %v983 = vsel %vm664, %v891, 0.0
  %v984 = vadd.f32 %v982, %v983
  %v985 = vsel %vm664, %v892, 0.0
  %v986 = vadd.f32 %v984, %v985
  %v987 = vsel %vm664, %v893, 0.0
  %v988 = vadd.f32 %v986, %v987
  %v989 = vsel %vm664, %v894, 0.0
  %v990 = vadd.f32 %v988, %v989
  %v991 = vsel %vm664, %v895, 0.0
  %v992 = vadd.f32 %v990, %v991
  %v993 = vsel %vm664, %v896, 0.0
  %v994 = vadd.f32 %v992, %v993
  %v995 = vsel %vm664, %v897, 0.0
  %v996 = vadd.f32 %v994, %v995
  %v997 = vsel %vm664, %v898, 0.0
  %v998 = vadd.f32 %v996, %v997
  %v999 = vsel %vm664, %v899, 0.0
  %v1000 = vadd.f32 %v998, %v999
  %v1001 = vsel %vm664, %v900, 0.0
  %v1002 = vadd.f32 %v1000, %v1001
  %v1003 = vsel %vm664, %v901, 0.0
  %v1004 = vadd.f32 %v1002, %v1003
  %v1005 = vsel %vm664, %v902, 0.0
  %v1006 = vadd.f32 %v1004, %v1005
  %v1007 = vsel %vm664, %v903, 0.0
  %v1008 = vadd.f32 %v1006, %v1007
  %v1009 = vsel %vm664, %v904, 0.0
  %v1010 = vadd.f32 %v1008, %v1009
  %v1011 = vsel %vm664, %v905, 0.0
  %v1012 = vadd.f32 %v1010, %v1011
  %v1013 = vsel %vm664, %v906, 0.0
  %v1014 = vadd.f32 %v1012, %v1013
  %v1015 = vsel %vm664, %v907, 0.0
  %v1016 = vadd.f32 %v1014, %v1015
  %v1017 = vsel %vm664, %v908, 0.0
  %v1018 = vadd.f32 %v1016, %v1017
  %v1019 = vsel %vm664, %v909, 0.0
  %v1020 = vadd.f32 %v1018, %v1019
  %v1021 = vsel %vm664, %v910, 0.0
  %v1022 = vadd.f32 %v1020, %v1021
  %v1023 = vsel %vm664, %v911, 0.0
  %v1024 = vadd.f32 %v1022, %v1023
  %v1025 = vsel %vm664, %v912, 0.0
  %v1026 = vadd.f32 %v1024, %v1025
  %v1027 = vsel %vm664, %v913, 0.0
  %v1028 = vadd.f32 %v1026, %v1027
  %v1029 = vsel %vm664, %v914, 0.0
  %v1030 = vadd.f32 %v1028, %v1029
  %v1031 = vsel %vm664, %v915, 0.0
  %v1032 = vadd.f32 %v1030, %v1031
  %v1033 = vsel %vm664, %v916, 0.0
  %v1034 = vadd.f32 %v1032, %v1033
  %v1035 = vsel %vm664, %v917, 0.0
  %v1036 = vadd.f32 %v1034, %v1035
  %v1037 = vsel %vm664, %v918, 0.0
  %v1038 = vadd.f32 %v1036, %v1037
  %v1039 = vsel %vm664, %v919, 0.0
  %v1040 = vadd.f32 %v1038, %v1039
  %v1041 = vsel %vm664, %v920, 0.0
  %v1042 = vadd.f32 %v1040, %v1041
  %v1043 = vsel %vm664, %v921, 0.0
  %v1044 = vadd.f32 %v1042, %v1043
  %v1045 = vsel %vm664, %v922, 0.0
  %v1046 = vadd.f32 %v1044, %v1045
  %v1047 = vsel %vm664, %v923, 0.0
  %v1048 = vadd.f32 %v1046, %v1047
  %v1049 = vsel %vm664, %v924, 0.0
  %v1050 = vadd.f32 %v1048, %v1049
  %v1051 = vsel %vm664, %v925, 0.0
  %v1052 = vadd.f32 %v1050, %v1051
  %v1053 = vrot.slane %v1052, 4
  %v1054 = vadd.f32 %v1052, %v1053
  %v1055 = vrot.slane %v1054, 2
  %v1056 = vadd.f32 %v1054, %v1055
  %v1057 = vrot.slane %v1056, 1
  %v1058 = vadd.f32 %v1056, %v1057
  %vm1059 = vcmask 1040384
  %v1060 = vsel %vm1059, %v861, %v1058
  %vm1061 = vcmask 58368
  %1062 = vst.msk [vmem:[%s3] sm:$0x3] %vm1061, %v1060
  // Predicated region
  $region10: #{unet_forward.26} parent=0 // pred_check
    _
  $region11: #{unet_forward.26} parent=0 // pred_check_branch
    %1064 = sbr.rel (0) target = $region13
  $region12: #{unet_forward.26} parent=0 // pred_region
    _
  $region13: #{unet_forward.26} parent=0 // pred_fallthru
    _
  // Predicated region
  $region14: #{unet_forward.26} parent=0 // pred_check
    _
  $region15: #{unet_forward.26} parent=0 // pred_check_branch
    %1066 = sbr.rel (0) target = $region17
  $region16: #{unet_forward.26} parent=0 // pred_region
    _
  $region17: #{unet_forward.26} parent=0 // pred_fallthru
    _
  // Predicated region
  $region18: #{unet_forward.26} parent=0 // pred_check
    _
  $region19: #{unet_forward.26} parent=0 // pred_check_branch
    %1068 = sbr.rel (0) target = $region21
  $region20: #{unet_forward.26} parent=0 // pred_region
    _
  $region21: #{unet_forward.26} parent=0 // pred_fallthru
    _
  // Predicated region
  $region22: #{unet_forward.26} parent=0 // pred_check
    _
  $region23: #{unet_forward.26} parent=0 // pred_check_branch
    %1070 = sbr.rel (0) target = $region25
  $region24: #{unet_forward.26} parent=0 // pred_region
    _
  $region25: #{unet_forward.26} parent=0 // pred_fallthru
    _

// kernel: unet_forward.28
$region0: #{unet_forward.28}
  #allocation0 [shape = 'u32[]', space=smem, size = 0x4, offset = 0x4, fixed_abs, tag = 'smem constant byte address 0x4 - core index']
  #allocation1 [shape = 'u32[144,128]{1,0:T(1,128)}', space=vmem, size = 0x12000, scoped, tag = 'internal scratch']
  %s0 = inlined_call_operand.vmem [shape: bf16[2,8,2,8,2,8], index: 0, kind: input, shape index: {}]
  %s1 = inlined_call_operand.vmem [shape: bf16[2,8,8,8], index: 1, kind: output, shape index: {}]
  %s2 = sld [smem:[#allocation0]]
  $region37: #{unet_forward.28} parent=0
    _
  %s4 = ssub.s32 1, %s2
  %s5 = scalar_select 0, %s4, %s2
  loop: start=0, step=1, limit=4
  $region2: #{unet_forward.28} parent=0 // loop_pre_header
    _
  $region3: #{unet_forward.28} parent=0 // loop_header
    %s7 = sphi 0, %s11
    %p8 = scmp.ge.s32.totalorder %s7, 4
    %s14 = sphi 0, %s26
    %s15 = sphi 0, %s22
    %s16 = sphi 0, %s14
    %s17 = sphi 0, %s15
    %s18 = sphi 0, %s16
    %s19 = sphi 0, %s17
    %s31 = sphi 0, %s33
    %s34 = sphi 0, %s31
    %s35 = sphi 0, %s34
    %s51 = sphi 0, %s35
    %s59 = sphi 0, %s61
    %s62 = sphi 0, %s59
    %s63 = sphi 0, %s62
    %s79 = sphi 0, %s63
  $region4: #{unet_forward.28} parent=0 // loop_header_branch
    %10 = sbr.rel (%p8) target = $region8
  $region5: #{unet_forward.28} parent=0 // loop_body
    %s12 = ssub.s32 %s7, 1
    %s13 = ssub.s32 %s7, 2
    %s20 = sadd.s32 1, %s15
    %p21 = scmp.ge.s32.totalorder %s20, 1
    %s22 = scalar_select %p21, 0, %s20
    %s23 = sadd.s32 1, %s14
    %s24 = scalar_select %p21, %s23, %s14
    %p25 = scmp.ge.s32.totalorder %s24, 2
    %s26 = scalar_select %p25, 0, %s24
    %s27 = ssub.s32 %s14, %s26
    %s28 = ssub.s32 %s15, %s22
    %s29 = sor.u32 %s27, %s28
    %p30 = scmp.eq.s32.totalorder %s29, 0
    %s32 = sadd.s32 %s31, 1
    %s33 = scalar_select %p30, %s31, %s32
    %p36 = pneg %p30
    %p37 = scmp.eq.s32.totalorder %s7, 1
    %p38 = por %p36, %p37
    %p39 = scmp.ne.s32.totalorder %s31, %s34
    %p40 = scmp.eq.s32.totalorder %s7, 0
    %p41 = por %p39, %p40
    %p42 = scmp.ne.s32.totalorder %s31, %s34
    %p43 = scmp.eq.s32.totalorder %s12, 1
    %p44 = por %p42, %p43
    %p45 = scmp.ne.s32.totalorder %s34, %s35
    %p46 = scmp.eq.s32.totalorder %s12, 0
    %p47 = por %p45, %p46
    %p48 = scmp.ne.s32.totalorder %s34, %s35
    %p49 = scmp.eq.s32.totalorder %s13, 1
    %p50 = por %p48, %p49
    %p52 = scmp.ne.s32.totalorder %s35, %s51
    %p53 = scmp.eq.s32.totalorder %s13, 0
    %p54 = por %p52, %p53
    %s55 = ssub.s32 %s14, %s26
    %s56 = ssub.s32 %s15, %s22
    %s57 = sor.u32 %s55, %s56
    %p58 = scmp.eq.s32.totalorder %s57, 0
    %s60 = sadd.s32 %s59, 1
    %s61 = scalar_select %p58, %s59, %s60
    %p64 = pneg %p58
    %p65 = scmp.eq.s32.totalorder %s7, 1
    %p66 = por %p64, %p65
    %p67 = scmp.ne.s32.totalorder %s59, %s62
    %p68 = scmp.eq.s32.totalorder %s7, 0
    %p69 = por %p67, %p68
    %p70 = scmp.ne.s32.totalorder %s59, %s62
    %p71 = scmp.eq.s32.totalorder %s12, 1
    %p72 = por %p70, %p71
    %p73 = scmp.ne.s32.totalorder %s62, %s63
    %p74 = scmp.eq.s32.totalorder %s12, 0
    %p75 = por %p73, %p74
    %p76 = scmp.ne.s32.totalorder %s62, %s63
    %p77 = scmp.eq.s32.totalorder %s13, 1
    %p78 = por %p76, %p77
    %p80 = scmp.ne.s32.totalorder %s63, %s79
    %p81 = scmp.eq.s32.totalorder %s13, 0
    %p82 = por %p80, %p81
    %p83 = scmp.le.s32.totalorder 1, %s7
    %p84 = scmp.lt.s32.totalorder %s7, 3
    %p85 = pnand %p83, %p84
    %p86 = pneg %p85
    // Predicated region
    $region9: #{unet_forward.28} parent=5 // pred_check
      _
    $region10: #{unet_forward.28} parent=5 // pred_check_branch
      %88 = sbr.rel (%p85) target = $region12
    $region11: #{unet_forward.28} parent=5 // pred_region
      %s89 = ssub.s32 %s7, 1
    $region12: #{unet_forward.28} parent=5 // pred_fallthru
      _
    %p90 = scmp.lt.s32.totalorder %s7, 2
    // Predicated region
    $region13: #{unet_forward.28} parent=5 // pred_check
      %p91 = pneg %p90
    $region14: #{unet_forward.28} parent=5 // pred_check_branch
      %93 = sbr.rel (%p91) target = $region16
    $region15: #{unet_forward.28} parent=5 // pred_region
      // Predicated region
      $region17: #{unet_forward.28} parent=15 // pred_check
        %p94 = pneg %p41
      $region18: #{unet_forward.28} parent=15 // pred_check_branch
        %96 = sbr.rel (%p94) target = $region20
      $region19: #{unet_forward.28} parent=15 // pred_region
        %s97 = smul.u32 8, %s15
        %p98 = scmp.lt.s32.totalorder %s14, 1
        %s99 = scalar_select %p98, %s14, 1
        %p100 = scmp.lt.s32.totalorder %s97, 7
        %s101 = scalar_select %p100, %s97, 7
        %s102 = smul.addr %s101, 16
        %s103 = smul.addr %s99, 128
        %s104 = sadd.s32 %s102, %s103
        %s105 = scalar_lea.vmem %s0, %s104
        %s106 = smul.u32 8, %s15
      $region20: #{unet_forward.28} parent=15 // pred_fallthru
        _
    $region16: #{unet_forward.28} parent=5 // pred_fallthru
      _
    %p107 = scmp.le.s32.totalorder 1, %s7
    %p108 = scmp.lt.s32.totalorder %s7, 3
    %p109 = pnand %p107, %p108
    %p110 = pneg %p109
    // Predicated region
    $region21: #{unet_forward.28} parent=5 // pred_check
      _
    $region22: #{unet_forward.28} parent=5 // pred_check_branch
      %112 = sbr.rel (%p109) target = $region24
    $region23: #{unet_forward.28} parent=5 // pred_region
      %s113 = ssub.s32 %s7, 1
      %s114 = smul.u32 8, %s17
      %p115 = scmp.lt.s32.totalorder %s16, 1
      %s116 = scalar_select %p115, %s16, 1
      %p117 = scmp.lt.s32.totalorder %s114, 7
      %s118 = scalar_select %p117, %s114, 7
      %s119 = smul.addr %s118, 16
      %s120 = smul.addr %s116, 128
      %s121 = sadd.s32 %s119, %s120
      %s122 = scalar_lea.vmem %s0, %s121
      %p123 = pneg %p47
      %p124 = pneg %p44
      %p125 = pneg %p75
      %p126 = pneg %p72
      %s127 = smul.u32 8, %s17
      %p128 = scmp.lt.s32.totalorder %s16, 1
      %s129 = scalar_select %p128, %s16, 1
      %p130 = scmp.lt.s32.totalorder %s127, 7
      %s131 = scalar_select %p130, %s127, 7
      %s132 = smul.addr %s129, 8
      %s133 = sadd.s32 %s131, %s132
      %s134 = smul.addr %s133, 4
      %s135 = scalar_lea.vmem %s1, %s134
      %s136 = smul.u32 8, %s17
      %p137 = scmp.lt.s32.totalorder %s16, 1
      %s138 = scalar_select %p137, %s16, 1
      %p139 = scmp.lt.s32.totalorder %s136, 7
      %s140 = scalar_select %p139, %s136, 7
      %s141 = smul.addr %s140, 16
      %s142 = smul.addr %s138, 128
      %s143 = sadd.s32 %s141, %s142
      %s144 = scalar_lea.vmem %s0, %s143
      %s145 = smul.u32 8, %s17
      %s146 = smul.u32 8, %s17
      %p147 = scmp.lt.s32.totalorder %s16, 1
      %s148 = scalar_select %p147, %s16, 1
      %p149 = scmp.lt.s32.totalorder %s146, 7
      %s150 = scalar_select %p149, %s146, 7
      %s151 = smul.addr %s148, 8
      %s152 = sadd.s32 %s150, %s151
      %s153 = smul.addr %s152, 4
      %s154 = scalar_lea.vmem %s1, %s153
      %s155 = smul.u32 8, %s17
      %v157 = vld [vmem:[%s144] sm:$0x1]
      %v158 = vld [vmem:[%s144 + $0x1] sm:$0x1]
      %v159 = vld [vmem:[%s144 + $0x2] sm:$0x1]
      %v160 = vld [vmem:[%s144 + $0x3] sm:$0x1]
      %v161 = vld [vmem:[%s144 + $0x4] sm:$0x1]
      %v162 = vld [vmem:[%s144 + $0x5] sm:$0x1]
      %v163 = vld [vmem:[%s144 + $0x6] sm:$0x1]
      %v164 = vld [vmem:[%s144 + $0x7] sm:$0x1]
      %v165 = vld [vmem:[%s144 + $0x8] sm:$0x1]
      %v166 = vld [vmem:[%s144 + $0x9] sm:$0x1]
      %v167 = vld [vmem:[%s144 + $0xa] sm:$0x1]
      %v168 = vld [vmem:[%s144 + $0xb] sm:$0x1]
      %v169 = vld [vmem:[%s144 + $0xc] sm:$0x1]
      %v170 = vld [vmem:[%s144 + $0xd] sm:$0x1]
      %v171 = vld [vmem:[%s144 + $0xe] sm:$0x1]
      %v172 = vld [vmem:[%s144 + $0xf] sm:$0x1]
      %v173 = vld [vmem:[%s144 + $0x10] sm:$0x1]
      %v174 = vld [vmem:[%s144 + $0x11] sm:$0x1]
      %v175 = vld [vmem:[%s144 + $0x12] sm:$0x1]
      %v176 = vld [vmem:[%s144 + $0x13] sm:$0x1]
      %v177 = vld [vmem:[%s144 + $0x14] sm:$0x1]
      %v178 = vld [vmem:[%s144 + $0x15] sm:$0x1]
      %v179 = vld [vmem:[%s144 + $0x16] sm:$0x1]
      %v180 = vld [vmem:[%s144 + $0x17] sm:$0x1]
      %v181 = vld [vmem:[%s144 + $0x18] sm:$0x1]
      %v182 = vld [vmem:[%s144 + $0x19] sm:$0x1]
      %v183 = vld [vmem:[%s144 + $0x1a] sm:$0x1]
      %v184 = vld [vmem:[%s144 + $0x1b] sm:$0x1]
      %v185 = vld [vmem:[%s144 + $0x1c] sm:$0x1]
      %v186 = vld [vmem:[%s144 + $0x1d] sm:$0x1]
      %v187 = vld [vmem:[%s144 + $0x1e] sm:$0x1]
      %v188 = vld [vmem:[%s144 + $0x1f] sm:$0x1]
      %v189 = vld [vmem:[%s144 + $0x20] sm:$0x1]
      %v190 = vld [vmem:[%s144 + $0x21] sm:$0x1]
      %v191 = vld [vmem:[%s144 + $0x22] sm:$0x1]
      %v192 = vld [vmem:[%s144 + $0x23] sm:$0x1]
      %v193 = vld [vmem:[%s144 + $0x24] sm:$0x1]
      %v194 = vld [vmem:[%s144 + $0x25] sm:$0x1]
      %v195 = vld [vmem:[%s144 + $0x26] sm:$0x1]
      %v196 = vld [vmem:[%s144 + $0x27] sm:$0x1]
      %v197 = vld [vmem:[%s144 + $0x28] sm:$0x1]
      %v198 = vld [vmem:[%s144 + $0x29] sm:$0x1]
      %v199 = vld [vmem:[%s144 + $0x2a] sm:$0x1]
      %v200 = vld [vmem:[%s144 + $0x2b] sm:$0x1]
      %v201 = vld [vmem:[%s144 + $0x2c] sm:$0x1]
      %v202 = vld [vmem:[%s144 + $0x2d] sm:$0x1]
      %v203 = vld [vmem:[%s144 + $0x2e] sm:$0x1]
      %v204 = vld [vmem:[%s144 + $0x2f] sm:$0x1]
      %v205 = vld [vmem:[%s144 + $0x30] sm:$0x1]
      %v206 = vld [vmem:[%s144 + $0x31] sm:$0x1]
      %v207 = vld [vmem:[%s144 + $0x32] sm:$0x1]
      %v208 = vld [vmem:[%s144 + $0x33] sm:$0x1]
      %v209 = vld [vmem:[%s144 + $0x34] sm:$0x1]
      %v210 = vld [vmem:[%s144 + $0x35] sm:$0x1]
      %v211 = vld [vmem:[%s144 + $0x36] sm:$0x1]
      %v212 = vld [vmem:[%s144 + $0x37] sm:$0x1]
      %v213 = vld [vmem:[%s144 + $0x38] sm:$0x1]
      %v214 = vld [vmem:[%s144 + $0x39] sm:$0x1]
      %v215 = vld [vmem:[%s144 + $0x3a] sm:$0x1]
      %v216 = vld [vmem:[%s144 + $0x3b] sm:$0x1]
      %v217 = vld [vmem:[%s144 + $0x3c] sm:$0x1]
      %v218 = vld [vmem:[%s144 + $0x3d] sm:$0x1]
      %v219 = vld [vmem:[%s144 + $0x3e] sm:$0x1]
      %v220 = vld [vmem:[%s144 + $0x3f] sm:$0x1]
      %v221 = vld [vmem:[%s144 + $0x40] sm:$0x1]
      %v222 = vld [vmem:[%s144 + $0x41] sm:$0x1]
      %v223 = vld [vmem:[%s144 + $0x42] sm:$0x1]
      %v224 = vld [vmem:[%s144 + $0x43] sm:$0x1]
      %v225 = vld [vmem:[%s144 + $0x44] sm:$0x1]
      %v226 = vld [vmem:[%s144 + $0x45] sm:$0x1]
      %v227 = vld [vmem:[%s144 + $0x46] sm:$0x1]
      %v228 = vld [vmem:[%s144 + $0x47] sm:$0x1]
      %v229 = vld [vmem:[%s144 + $0x48] sm:$0x1]
      %v230 = vld [vmem:[%s144 + $0x49] sm:$0x1]
      %v231 = vld [vmem:[%s144 + $0x4a] sm:$0x1]
      %v232 = vld [vmem:[%s144 + $0x4b] sm:$0x1]
      %v233 = vld [vmem:[%s144 + $0x4c] sm:$0x1]
      %v234 = vld [vmem:[%s144 + $0x4d] sm:$0x1]
      %v235 = vld [vmem:[%s144 + $0x4e] sm:$0x1]
      %v236 = vld [vmem:[%s144 + $0x4f] sm:$0x1]
      %v237 = vld [vmem:[%s144 + $0x50] sm:$0x1]
      %v238 = vld [vmem:[%s144 + $0x51] sm:$0x1]
      %v239 = vld [vmem:[%s144 + $0x52] sm:$0x1]
      %v240 = vld [vmem:[%s144 + $0x53] sm:$0x1]
      %v241 = vld [vmem:[%s144 + $0x54] sm:$0x1]
      %v242 = vld [vmem:[%s144 + $0x55] sm:$0x1]
      %v243 = vld [vmem:[%s144 + $0x56] sm:$0x1]
      %v244 = vld [vmem:[%s144 + $0x57] sm:$0x1]
      %v245 = vld [vmem:[%s144 + $0x58] sm:$0x1]
      %v246 = vld [vmem:[%s144 + $0x59] sm:$0x1]
      %v247 = vld [vmem:[%s144 + $0x5a] sm:$0x1]
      %v248 = vld [vmem:[%s144 + $0x5b] sm:$0x1]
      %v249 = vld [vmem:[%s144 + $0x5c] sm:$0x1]
      %v250 = vld [vmem:[%s144 + $0x5d] sm:$0x1]
      %v251 = vld [vmem:[%s144 + $0x5e] sm:$0x1]
      %v252 = vld [vmem:[%s144 + $0x5f] sm:$0x1]
      %v253 = vld [vmem:[%s144 + $0x60] sm:$0x1]
      %v254 = vld [vmem:[%s144 + $0x61] sm:$0x1]
      %v255 = vld [vmem:[%s144 + $0x62] sm:$0x1]
      %v256 = vld [vmem:[%s144 + $0x63] sm:$0x1]
      %v257 = vld [vmem:[%s144 + $0x64] sm:$0x1]
      %v258 = vld [vmem:[%s144 + $0x65] sm:$0x1]
      %v259 = vld [vmem:[%s144 + $0x66] sm:$0x1]
      %v260 = vld [vmem:[%s144 + $0x67] sm:$0x1]
      %v261 = vld [vmem:[%s144 + $0x68] sm:$0x1]
      %v262 = vld [vmem:[%s144 + $0x69] sm:$0x1]
      %v263 = vld [vmem:[%s144 + $0x6a] sm:$0x1]
      %v264 = vld [vmem:[%s144 + $0x6b] sm:$0x1]
      %v265 = vld [vmem:[%s144 + $0x6c] sm:$0x1]
      %v266 = vld [vmem:[%s144 + $0x6d] sm:$0x1]
      %v267 = vld [vmem:[%s144 + $0x6e] sm:$0x1]
      %v268 = vld [vmem:[%s144 + $0x6f] sm:$0x1]
      %v269 = vld [vmem:[%s144 + $0x70] sm:$0x1]
      %v270 = vld [vmem:[%s144 + $0x71] sm:$0x1]
      %v271 = vld [vmem:[%s144 + $0x72] sm:$0x1]
      %v272 = vld [vmem:[%s144 + $0x73] sm:$0x1]
      %v273 = vld [vmem:[%s144 + $0x74] sm:$0x1]
      %v274 = vld [vmem:[%s144 + $0x75] sm:$0x1]
      %v275 = vld [vmem:[%s144 + $0x76] sm:$0x1]
      %v276 = vld [vmem:[%s144 + $0x77] sm:$0x1]
      %v277 = vld [vmem:[%s144 + $0x78] sm:$0x1]
      %v278 = vld [vmem:[%s144 + $0x79] sm:$0x1]
      %v279 = vld [vmem:[%s144 + $0x7a] sm:$0x1]
      %v280 = vld [vmem:[%s144 + $0x7b] sm:$0x1]
      %v281 = vld [vmem:[%s144 + $0x7c] sm:$0x1]
      %v282 = vld [vmem:[%s144 + $0x7d] sm:$0x1]
      %v283 = vld [vmem:[%s144 + $0x7e] sm:$0x1]
      %v284 = vld [vmem:[%s144 + $0x7f] sm:$0x1]
      %v285 = vmax.bf16 %v157, %v165
      %v286 = vmax.bf16 %v158, %v166
      %v287 = vmax.bf16 %v159, %v167
      %v288 = vmax.bf16 %v160, %v168
      %v289 = vmax.bf16 %v161, %v169
      %v290 = vmax.bf16 %v162, %v170
      %v291 = vmax.bf16 %v163, %v171
      %v292 = vmax.bf16 %v164, %v172
      %v293 = vmax.bf16 %v173, %v181
      %v294 = vmax.bf16 %v174, %v182
      %v295 = vmax.bf16 %v175, %v183
      %v296 = vmax.bf16 %v176, %v184
      %v297 = vmax.bf16 %v177, %v185
      %v298 = vmax.bf16 %v178, %v186
      %v299 = vmax.bf16 %v179, %v187
      %v300 = vmax.bf16 %v180, %v188
      %v301 = vmax.bf16 %v189, %v197
      %v302 = vmax.bf16 %v190, %v198
      %v303 = vmax.bf16 %v191, %v199
      %v304 = vmax.bf16 %v192, %v200
      %v305 = vmax.bf16 %v193, %v201
      %v306 = vmax.bf16 %v194, %v202
      %v307 = vmax.bf16 %v195, %v203
      %v308 = vmax.bf16 %v196, %v204
      %v309 = vmax.bf16 %v205, %v213
      %v310 = vmax.bf16 %v206, %v214
      %v311 = vmax.bf16 %v207, %v215
      %v312 = vmax.bf16 %v208, %v216
      %v313 = vmax.bf16 %v209, %v217
      %v314 = vmax.bf16 %v210, %v218
      %v315 = vmax.bf16 %v211, %v219
      %v316 = vmax.bf16 %v212, %v220
      %v317 = vmax.bf16 %v221, %v229
      %v318 = vmax.bf16 %v222, %v230
      %v319 = vmax.bf16 %v223, %v231
      %v320 = vmax.bf16 %v224, %v232
      %v321 = vmax.bf16 %v225, %v233
      %v322 = vmax.bf16 %v226, %v234
      %v323 = vmax.bf16 %v227, %v235
      %v324 = vmax.bf16 %v228, %v236
      %v325 = vmax.bf16 %v237, %v245
      %v326 = vmax.bf16 %v238, %v246
      %v327 = vmax.bf16 %v239, %v247
      %v328 = vmax.bf16 %v240, %v248
      %v329 = vmax.bf16 %v241, %v249
      %v330 = vmax.bf16 %v242, %v250
      %v331 = vmax.bf16 %v243, %v251
      %v332 = vmax.bf16 %v244, %v252
      %v333 = vmax.bf16 %v253, %v261
      %v334 = vmax.bf16 %v254, %v262
      %v335 = vmax.bf16 %v255, %v263
      %v336 = vmax.bf16 %v256, %v264
      %v337 = vmax.bf16 %v257, %v265
      %v338 = vmax.bf16 %v258, %v266
      %v339 = vmax.bf16 %v259, %v267
      %v340 = vmax.bf16 %v260, %v268
      %v341 = vmax.bf16 %v269, %v277
      %v342 = vmax.bf16 %v270, %v278
      %v343 = vmax.bf16 %v271, %v279
      %v344 = vmax.bf16 %v272, %v280
      %v345 = vmax.bf16 %v273, %v281
      %v346 = vmax.bf16 %v274, %v282
      %v347 = vmax.bf16 %v275, %v283
      %v348 = vmax.bf16 %v276, %v284
      %vm349 = vcmask 57344
      %v352 = vsel %vm349, %v285, 4286644096
      %v354 = vunpack.i.l.bf16 %v352
      %v355 = vunpack.i.h.bf16 %v352
      %v356 = vmax.f32 %v354, %v355
      %v357 = vrot.slane %v356, 4
      %v358 = vmax.f32 %v356, %v357
      %v359 = vrot.slane %v358, 2
      %v360 = vmax.f32 %v358, %v359
      %v361 = vrot.slane %v360, 1
      %v362 = vmax.f32 %v360, %v361
      %v363 = vpack.i.bf16 %v362, %v362
      %v365 = vsel %vm349, %v286, 4286644096
      %v367 = vunpack.i.l.bf16 %v365
      %v368 = vunpack.i.h.bf16 %v365
      %v369 = vmax.f32 %v367, %v368
      %v370 = vrot.slane %v369, 4
      %v371 = vmax.f32 %v369, %v370
      %v372 = vrot.slane %v371, 2
      %v373 = vmax.f32 %v371, %v372
      %v374 = vrot.slane %v373, 1
      %v375 = vmax.f32 %v373, %v374
      %v376 = vpack.i.bf16 %v375, %v375
      %v378 = vsel %vm349, %v287, 4286644096
      %v380 = vunpack.i.l.bf16 %v378
      %v381 = vunpack.i.h.bf16 %v378
      %v382 = vmax.f32 %v380, %v381
      %v383 = vrot.slane %v382, 4
      %v384 = vmax.f32 %v382, %v383
      %v385 = vrot.slane %v384, 2
      %v386 = vmax.f32 %v384, %v385
      %v387 = vrot.slane %v386, 1
      %v388 = vmax.f32 %v386, %v387
      %v389 = vpack.i.bf16 %v388, %v388
      %v391 = vsel %vm349, %v288, 4286644096
      %v393 = vunpack.i.l.bf16 %v391
      %v394 = vunpack.i.h.bf16 %v391
      %v395 = vmax.f32 %v393, %v394
      %v396 = vrot.slane %v395, 4
      %v397 = vmax.f32 %v395, %v396
      %v398 = vrot.slane %v397, 2
      %v399 = vmax.f32 %v397, %v398
      %v400 = vrot.slane %v399, 1
      %v401 = vmax.f32 %v399, %v400
      %v402 = vpack.i.bf16 %v401, %v401
      %v404 = vsel %vm349, %v289, 4286644096
      %v406 = vunpack.i.l.bf16 %v404
      %v407 = vunpack.i.h.bf16 %v404
      %v408 = vmax.f32 %v406, %v407
      %v409 = vrot.slane %v408, 4
      %v410 = vmax.f32 %v408, %v409
      %v411 = vrot.slane %v410, 2
      %v412 = vmax.f32 %v410, %v411
      %v413 = vrot.slane %v412, 1
      %v414 = vmax.f32 %v412, %v413
      %v415 = vpack.i.bf16 %v414, %v414
      %v417 = vsel %vm349, %v290, 4286644096
      %v419 = vunpack.i.l.bf16 %v417
      %v420 = vunpack.i.h.bf16 %v417
      %v421 = vmax.f32 %v419, %v420
      %v422 = vrot.slane %v421, 4
      %v423 = vmax.f32 %v421, %v422
      %v424 = vrot.slane %v423, 2
      %v425 = vmax.f32 %v423, %v424
      %v426 = vrot.slane %v425, 1
      %v427 = vmax.f32 %v425, %v426
      %v428 = vpack.i.bf16 %v427, %v427
      %v430 = vsel %vm349, %v291, 4286644096
      %v432 = vunpack.i.l.bf16 %v430
      %v433 = vunpack.i.h.bf16 %v430
      %v434 = vmax.f32 %v432, %v433
      %v435 = vrot.slane %v434, 4
      %v436 = vmax.f32 %v434, %v435
      %v437 = vrot.slane %v436, 2
      %v438 = vmax.f32 %v436, %v437
      %v439 = vrot.slane %v438, 1
      %v440 = vmax.f32 %v438, %v439
      %v441 = vpack.i.bf16 %v440, %v440
      %v443 = vsel %vm349, %v292, 4286644096
      %v445 = vunpack.i.l.bf16 %v443
      %v446 = vunpack.i.h.bf16 %v443
      %v447 = vmax.f32 %v445, %v446
      %v448 = vrot.slane %v447, 4
      %v449 = vmax.f32 %v447, %v448
      %v450 = vrot.slane %v449, 2
      %v451 = vmax.f32 %v449, %v450
      %v452 = vrot.slane %v451, 1
      %v453 = vmax.f32 %v451, %v452
      %v454 = vpack.i.bf16 %v453, %v453
      %v456 = vsel %vm349, %v293, 4286644096
      %v458 = vunpack.i.l.bf16 %v456
      %v459 = vunpack.i.h.bf16 %v456
      %v460 = vmax.f32 %v458, %v459
      %v461 = vrot.slane %v460, 4
      %v462 = vmax.f32 %v460, %v461
      %v463 = vrot.slane %v462, 2
      %v464 = vmax.f32 %v462, %v463
      %v465 = vrot.slane %v464, 1
      %v466 = vmax.f32 %v464, %v465
      %v467 = vpack.i.bf16 %v466, %v466
      %v469 = vsel %vm349, %v294, 4286644096
      %v471 = vunpack.i.l.bf16 %v469
      %v472 = vunpack.i.h.bf16 %v469
      %v473 = vmax.f32 %v471, %v472
      %v474 = vrot.slane %v473, 4
      %v475 = vmax.f32 %v473, %v474
      %v476 = vrot.slane %v475, 2
      %v477 = vmax.f32 %v475, %v476
      %v478 = vrot.slane %v477, 1
      %v479 = vmax.f32 %v477, %v478
      %v480 = vpack.i.bf16 %v479, %v479
      %v482 = vsel %vm349, %v295, 4286644096
      %v484 = vunpack.i.l.bf16 %v482
      %v485 = vunpack.i.h.bf16 %v482
      %v486 = vmax.f32 %v484, %v485
      %v487 = vrot.slane %v486, 4
      %v488 = vmax.f32 %v486, %v487
      %v489 = vrot.slane %v488, 2
      %v490 = vmax.f32 %v488, %v489
      %v491 = vrot.slane %v490, 1
      %v492 = vmax.f32 %v490, %v491
      %v493 = vpack.i.bf16 %v492, %v492
      %v495 = vsel %vm349, %v296, 4286644096
      %v497 = vunpack.i.l.bf16 %v495
      %v498 = vunpack.i.h.bf16 %v495
      %v499 = vmax.f32 %v497, %v498
      %v500 = vrot.slane %v499, 4
      %v501 = vmax.f32 %v499, %v500
      %v502 = vrot.slane %v501, 2
      %v503 = vmax.f32 %v501, %v502
      %v504 = vrot.slane %v503, 1
      %v505 = vmax.f32 %v503, %v504
      %v506 = vpack.i.bf16 %v505, %v505
      %v508 = vsel %vm349, %v297, 4286644096
      %v510 = vunpack.i.l.bf16 %v508
      %v511 = vunpack.i.h.bf16 %v508
      %v512 = vmax.f32 %v510, %v511
      %v513 = vrot.slane %v512, 4
      %v514 = vmax.f32 %v512, %v513
      %v515 = vrot.slane %v514, 2
      %v516 = vmax.f32 %v514, %v515
      %v517 = vrot.slane %v516, 1
      %v518 = vmax.f32 %v516, %v517
      %v519 = vpack.i.bf16 %v518, %v518
      %v521 = vsel %vm349, %v298, 4286644096
      %v523 = vunpack.i.l.bf16 %v521
      %v524 = vunpack.i.h.bf16 %v521
      %v525 = vmax.f32 %v523, %v524
      %v526 = vrot.slane %v525, 4
      %v527 = vmax.f32 %v525, %v526
      %v528 = vrot.slane %v527, 2
      %v529 = vmax.f32 %v527, %v528
      %v530 = vrot.slane %v529, 1
      %v531 = vmax.f32 %v529, %v530
      %v532 = vpack.i.bf16 %v531, %v531
      %v534 = vsel %vm349, %v299, 4286644096
      %v536 = vunpack.i.l.bf16 %v534
      %v537 = vunpack.i.h.bf16 %v534
      %v538 = vmax.f32 %v536, %v537
      %v539 = vrot.slane %v538, 4
      %v540 = vmax.f32 %v538, %v539
      %v541 = vrot.slane %v540, 2
      %v542 = vmax.f32 %v540, %v541
      %v543 = vrot.slane %v542, 1
      %v544 = vmax.f32 %v542, %v543
      %v545 = vpack.i.bf16 %v544, %v544
      %v547 = vsel %vm349, %v300, 4286644096
      %v549 = vunpack.i.l.bf16 %v547
      %v550 = vunpack.i.h.bf16 %v547
      %v551 = vmax.f32 %v549, %v550
      %v552 = vrot.slane %v551, 4
      %v553 = vmax.f32 %v551, %v552
      %v554 = vrot.slane %v553, 2
      %v555 = vmax.f32 %v553, %v554
      %v556 = vrot.slane %v555, 1
      %v557 = vmax.f32 %v555, %v556
      %v558 = vpack.i.bf16 %v557, %v557
      %v560 = vsel %vm349, %v301, 4286644096
      %v562 = vunpack.i.l.bf16 %v560
      %v563 = vunpack.i.h.bf16 %v560
      %v564 = vmax.f32 %v562, %v563
      %v565 = vrot.slane %v564, 4
      %v566 = vmax.f32 %v564, %v565
      %v567 = vrot.slane %v566, 2
      %v568 = vmax.f32 %v566, %v567
      %v569 = vrot.slane %v568, 1
      %v570 = vmax.f32 %v568, %v569
      %v571 = vpack.i.bf16 %v570, %v570
      %v573 = vsel %vm349, %v302, 4286644096
      %v575 = vunpack.i.l.bf16 %v573
      %v576 = vunpack.i.h.bf16 %v573
      %v577 = vmax.f32 %v575, %v576
      %v578 = vrot.slane %v577, 4
      %v579 = vmax.f32 %v577, %v578
      %v580 = vrot.slane %v579, 2
      %v581 = vmax.f32 %v579, %v580
      %v582 = vrot.slane %v581, 1
      %v583 = vmax.f32 %v581, %v582
      %v584 = vpack.i.bf16 %v583, %v583
      %v586 = vsel %vm349, %v303, 4286644096
      %v588 = vunpack.i.l.bf16 %v586
      %v589 = vunpack.i.h.bf16 %v586
      %v590 = vmax.f32 %v588, %v589
      %v591 = vrot.slane %v590, 4
      %v592 = vmax.f32 %v590, %v591
      %v593 = vrot.slane %v592, 2
      %v594 = vmax.f32 %v592, %v593
      %v595 = vrot.slane %v594, 1
      %v596 = vmax.f32 %v594, %v595
      %v597 = vpack.i.bf16 %v596, %v596
      %v599 = vsel %vm349, %v304, 4286644096
      %v601 = vunpack.i.l.bf16 %v599
      %v602 = vunpack.i.h.bf16 %v599
      %v603 = vmax.f32 %v601, %v602
      %v604 = vrot.slane %v603, 4
      %v605 = vmax.f32 %v603, %v604
      %v606 = vrot.slane %v605, 2
      %v607 = vmax.f32 %v605, %v606
      %v608 = vrot.slane %v607, 1
      %v609 = vmax.f32 %v607, %v608
      %v610 = vpack.i.bf16 %v609, %v609
      %v612 = vsel %vm349, %v305, 4286644096
      %v614 = vunpack.i.l.bf16 %v612
      %v615 = vunpack.i.h.bf16 %v612
      %v616 = vmax.f32 %v614, %v615
      %v617 = vrot.slane %v616, 4
      %v618 = vmax.f32 %v616, %v617
      %v619 = vrot.slane %v618, 2
      %v620 = vmax.f32 %v618, %v619
      %v621 = vrot.slane %v620, 1
      %v622 = vmax.f32 %v620, %v621
      %v623 = vpack.i.bf16 %v622, %v622
      %v625 = vsel %vm349, %v306, 4286644096
      %v627 = vunpack.i.l.bf16 %v625
      %v628 = vunpack.i.h.bf16 %v625
      %v629 = vmax.f32 %v627, %v628
      %v630 = vrot.slane %v629, 4
      %v631 = vmax.f32 %v629, %v630
      %v632 = vrot.slane %v631, 2
      %v633 = vmax.f32 %v631, %v632
      %v634 = vrot.slane %v633, 1
      %v635 = vmax.f32 %v633, %v634
      %v636 = vpack.i.bf16 %v635, %v635
      %v638 = vsel %vm349, %v307, 4286644096
      %v640 = vunpack.i.l.bf16 %v638
      %v641 = vunpack.i.h.bf16 %v638
      %v642 = vmax.f32 %v640, %v641
      %v643 = vrot.slane %v642, 4
      %v644 = vmax.f32 %v642, %v643
      %v645 = vrot.slane %v644, 2
      %v646 = vmax.f32 %v644, %v645
      %v647 = vrot.slane %v646, 1
      %v648 = vmax.f32 %v646, %v647
      %v649 = vpack.i.bf16 %v648, %v648
      %v651 = vsel %vm349, %v308, 4286644096
      %v653 = vunpack.i.l.bf16 %v651
      %v654 = vunpack.i.h.bf16 %v651
      %v655 = vmax.f32 %v653, %v654
      %v656 = vrot.slane %v655, 4
      %v657 = vmax.f32 %v655, %v656
      %v658 = vrot.slane %v657, 2
      %v659 = vmax.f32 %v657, %v658
      %v660 = vrot.slane %v659, 1
      %v661 = vmax.f32 %v659, %v660
      %v662 = vpack.i.bf16 %v661, %v661
      %v664 = vsel %vm349, %v309, 4286644096
      %v666 = vunpack.i.l.bf16 %v664
      %v667 = vunpack.i.h.bf16 %v664
      %v668 = vmax.f32 %v666, %v667
      %v669 = vrot.slane %v668, 4
      %v670 = vmax.f32 %v668, %v669
      %v671 = vrot.slane %v670, 2
      %v672 = vmax.f32 %v670, %v671
      %v673 = vrot.slane %v672, 1
      %v674 = vmax.f32 %v672, %v673
      %v675 = vpack.i.bf16 %v674, %v674
      %v677 = vsel %vm349, %v310, 4286644096
      %v679 = vunpack.i.l.bf16 %v677
      %v680 = vunpack.i.h.bf16 %v677
      %v681 = vmax.f32 %v679, %v680
      %v682 = vrot.slane %v681, 4
      %v683 = vmax.f32 %v681, %v682
      %v684 = vrot.slane %v683, 2
      %v685 = vmax.f32 %v683, %v684
      %v686 = vrot.slane %v685, 1
      %v687 = vmax.f32 %v685, %v686
      %v688 = vpack.i.bf16 %v687, %v687
      %v690 = vsel %vm349, %v311, 4286644096
      %v692 = vunpack.i.l.bf16 %v690
      %v693 = vunpack.i.h.bf16 %v690
      %v694 = vmax.f32 %v692, %v693
      %v695 = vrot.slane %v694, 4
      %v696 = vmax.f32 %v694, %v695
      %v697 = vrot.slane %v696, 2
      %v698 = vmax.f32 %v696, %v697
      %v699 = vrot.slane %v698, 1
      %v700 = vmax.f32 %v698, %v699
      %v701 = vpack.i.bf16 %v700, %v700
      %v703 = vsel %vm349, %v312, 4286644096
      %v705 = vunpack.i.l.bf16 %v703
      %v706 = vunpack.i.h.bf16 %v703
      %v707 = vmax.f32 %v705, %v706
      %v708 = vrot.slane %v707, 4
      %v709 = vmax.f32 %v707, %v708
      %v710 = vrot.slane %v709, 2
      %v711 = vmax.f32 %v709, %v710
      %v712 = vrot.slane %v711, 1
      %v713 = vmax.f32 %v711, %v712
      %v714 = vpack.i.bf16 %v713, %v713
      %v716 = vsel %vm349, %v313, 4286644096
      %v718 = vunpack.i.l.bf16 %v716
      %v719 = vunpack.i.h.bf16 %v716
      %v720 = vmax.f32 %v718, %v719
      %v721 = vrot.slane %v720, 4
      %v722 = vmax.f32 %v720, %v721
      %v723 = vrot.slane %v722, 2
      %v724 = vmax.f32 %v722, %v723
      %v725 = vrot.slane %v724, 1
      %v726 = vmax.f32 %v724, %v725
      %v727 = vpack.i.bf16 %v726, %v726
      %v729 = vsel %vm349, %v314, 4286644096
      %v731 = vunpack.i.l.bf16 %v729
      %v732 = vunpack.i.h.bf16 %v729
      %v733 = vmax.f32 %v731, %v732
      %v734 = vrot.slane %v733, 4
      %v735 = vmax.f32 %v733, %v734
      %v736 = vrot.slane %v735, 2
      %v737 = vmax.f32 %v735, %v736
      %v738 = vrot.slane %v737, 1
      %v739 = vmax.f32 %v737, %v738
      %v740 = vpack.i.bf16 %v739, %v739
      %v742 = vsel %vm349, %v315, 4286644096
      %v744 = vunpack.i.l.bf16 %v742
      %v745 = vunpack.i.h.bf16 %v742
      %v746 = vmax.f32 %v744, %v745
      %v747 = vrot.slane %v746, 4
      %v748 = vmax.f32 %v746, %v747
      %v749 = vrot.slane %v748, 2
      %v750 = vmax.f32 %v748, %v749
      %v751 = vrot.slane %v750, 1
      %v752 = vmax.f32 %v750, %v751
      %v753 = vpack.i.bf16 %v752, %v752
      %v755 = vsel %vm349, %v316, 4286644096
      %v757 = vunpack.i.l.bf16 %v755
      %v758 = vunpack.i.h.bf16 %v755
      %v759 = vmax.f32 %v757, %v758
      %v760 = vrot.slane %v759, 4
      %v761 = vmax.f32 %v759, %v760
      %v762 = vrot.slane %v761, 2
      %v763 = vmax.f32 %v761, %v762
      %v764 = vrot.slane %v763, 1
      %v765 = vmax.f32 %v763, %v764
      %v766 = vpack.i.bf16 %v765, %v765
      %v768 = vsel %vm349, %v317, 4286644096
      %v770 = vunpack.i.l.bf16 %v768
      %v771 = vunpack.i.h.bf16 %v768
      %v772 = vmax.f32 %v770, %v771
      %v773 = vrot.slane %v772, 4
      %v774 = vmax.f32 %v772, %v773
      %v775 = vrot.slane %v774, 2
      %v776 = vmax.f32 %v774, %v775
      %v777 = vrot.slane %v776, 1
      %v778 = vmax.f32 %v776, %v777
      %v779 = vpack.i.bf16 %v778, %v778
      %v781 = vsel %vm349, %v318, 4286644096
      %v783 = vunpack.i.l.bf16 %v781
      %v784 = vunpack.i.h.bf16 %v781
      %v785 = vmax.f32 %v783, %v784
      %v786 = vrot.slane %v785, 4
      %v787 = vmax.f32 %v785, %v786
      %v788 = vrot.slane %v787, 2
      %v789 = vmax.f32 %v787, %v788
      %v790 = vrot.slane %v789, 1
      %v791 = vmax.f32 %v789, %v790
      %v792 = vpack.i.bf16 %v791, %v791
      %v794 = vsel %vm349, %v319, 4286644096
      %v796 = vunpack.i.l.bf16 %v794
      %v797 = vunpack.i.h.bf16 %v794
      %v798 = vmax.f32 %v796, %v797
      %v799 = vrot.slane %v798, 4
      %v800 = vmax.f32 %v798, %v799
      %v801 = vrot.slane %v800, 2
      %v802 = vmax.f32 %v800, %v801
      %v803 = vrot.slane %v802, 1
      %v804 = vmax.f32 %v802, %v803
      %v805 = vpack.i.bf16 %v804, %v804
      %v807 = vsel %vm349, %v320, 4286644096
      %v809 = vunpack.i.l.bf16 %v807
      %v810 = vunpack.i.h.bf16 %v807
      %v811 = vmax.f32 %v809, %v810
      %v812 = vrot.slane %v811, 4
      %v813 = vmax.f32 %v811, %v812
      %v814 = vrot.slane %v813, 2
      %v815 = vmax.f32 %v813, %v814
      %v816 = vrot.slane %v815, 1
      %v817 = vmax.f32 %v815, %v816
      %v818 = vpack.i.bf16 %v817, %v817
      %v820 = vsel %vm349, %v321, 4286644096
      %v822 = vunpack.i.l.bf16 %v820
      %v823 = vunpack.i.h.bf16 %v820
      %v824 = vmax.f32 %v822, %v823
      %v825 = vrot.slane %v824, 4
      %v826 = vmax.f32 %v824, %v825
      %v827 = vrot.slane %v826, 2
      %v828 = vmax.f32 %v826, %v827
      %v829 = vrot.slane %v828, 1
      %v830 = vmax.f32 %v828, %v829
      %v831 = vpack.i.bf16 %v830, %v830
      %v833 = vsel %vm349, %v322, 4286644096
      %v835 = vunpack.i.l.bf16 %v833
      %v836 = vunpack.i.h.bf16 %v833
      %v837 = vmax.f32 %v835, %v836
      %v838 = vrot.slane %v837, 4
      %v839 = vmax.f32 %v837, %v838
      %v840 = vrot.slane %v839, 2
      %v841 = vmax.f32 %v839, %v840
      %v842 = vrot.slane %v841, 1
      %v843 = vmax.f32 %v841, %v842
      %v844 = vpack.i.bf16 %v843, %v843
      %v846 = vsel %vm349, %v323, 4286644096
      %v848 = vunpack.i.l.bf16 %v846
      %v849 = vunpack.i.h.bf16 %v846
      %v850 = vmax.f32 %v848, %v849
      %v851 = vrot.slane %v850, 4
      %v852 = vmax.f32 %v850, %v851
      %v853 = vrot.slane %v852, 2
      %v854 = vmax.f32 %v852, %v853
      %v855 = vrot.slane %v854, 1
      %v856 = vmax.f32 %v854, %v855
      %v857 = vpack.i.bf16 %v856, %v856
      %v859 = vsel %vm349, %v324, 4286644096
      %v861 = vunpack.i.l.bf16 %v859
      %v862 = vunpack.i.h.bf16 %v859
      %v863 = vmax.f32 %v861, %v862
      %v864 = vrot.slane %v863, 4
      %v865 = vmax.f32 %v863, %v864
      %v866 = vrot.slane %v865, 2
      %v867 = vmax.f32 %v865, %v866
      %v868 = vrot.slane %v867, 1
      %v869 = vmax.f32 %v867, %v868
      %v870 = vpack.i.bf16 %v869, %v869
      %v872 = vsel %vm349, %v325, 4286644096
      %v874 = vunpack.i.l.bf16 %v872
      %v875 = vunpack.i.h.bf16 %v872
      %v876 = vmax.f32 %v874, %v875
      %v877 = vrot.slane %v876, 4
      %v878 = vmax.f32 %v876, %v877
      %v879 = vrot.slane %v878, 2
      %v880 = vmax.f32 %v878, %v879
      %v881 = vrot.slane %v880, 1
      %v882 = vmax.f32 %v880, %v881
      %v883 = vpack.i.bf16 %v882, %v882
      %v885 = vsel %vm349, %v326, 4286644096
      %v887 = vunpack.i.l.bf16 %v885
      %v888 = vunpack.i.h.bf16 %v885
      %v889 = vmax.f32 %v887, %v888
      %v890 = vrot.slane %v889, 4
      %v891 = vmax.f32 %v889, %v890
      %v892 = vrot.slane %v891, 2
      %v893 = vmax.f32 %v891, %v892
      %v894 = vrot.slane %v893, 1
      %v895 = vmax.f32 %v893, %v894
      %v896 = vpack.i.bf16 %v895, %v895
      %v898 = vsel %vm349, %v327, 4286644096
      %v900 = vunpack.i.l.bf16 %v898
      %v901 = vunpack.i.h.bf16 %v898
      %v902 = vmax.f32 %v900, %v901
      %v903 = vrot.slane %v902, 4
      %v904 = vmax.f32 %v902, %v903
      %v905 = vrot.slane %v904, 2
      %v906 = vmax.f32 %v904, %v905
      %v907 = vrot.slane %v906, 1
      %v908 = vmax.f32 %v906, %v907
      %v909 = vpack.i.bf16 %v908, %v908
      %v911 = vsel %vm349, %v328, 4286644096
      %v913 = vunpack.i.l.bf16 %v911
      %v914 = vunpack.i.h.bf16 %v911
      %v915 = vmax.f32 %v913, %v914
      %v916 = vrot.slane %v915, 4
      %v917 = vmax.f32 %v915, %v916
      %v918 = vrot.slane %v917, 2
      %v919 = vmax.f32 %v917, %v918
      %v920 = vrot.slane %v919, 1
      %v921 = vmax.f32 %v919, %v920
      %v922 = vpack.i.bf16 %v921, %v921
      %v924 = vsel %vm349, %v329, 4286644096
      %v926 = vunpack.i.l.bf16 %v924
      %v927 = vunpack.i.h.bf16 %v924
      %v928 = vmax.f32 %v926, %v927
      %v929 = vrot.slane %v928, 4
      %v930 = vmax.f32 %v928, %v929
      %v931 = vrot.slane %v930, 2
      %v932 = vmax.f32 %v930, %v931
      %v933 = vrot.slane %v932, 1
      %v934 = vmax.f32 %v932, %v933
      %v935 = vpack.i.bf16 %v934, %v934
      %v937 = vsel %vm349, %v330, 4286644096
      %v939 = vunpack.i.l.bf16 %v937
      %v940 = vunpack.i.h.bf16 %v937
      %v941 = vmax.f32 %v939, %v940
      %v942 = vrot.slane %v941, 4
      %v943 = vmax.f32 %v941, %v942
      %v944 = vrot.slane %v943, 2
      %v945 = vmax.f32 %v943, %v944
      %v946 = vrot.slane %v945, 1
      %v947 = vmax.f32 %v945, %v946
      %v948 = vpack.i.bf16 %v947, %v947
      %v950 = vsel %vm349, %v331, 4286644096
      %v952 = vunpack.i.l.bf16 %v950
      %v953 = vunpack.i.h.bf16 %v950
      %v954 = vmax.f32 %v952, %v953
      %v955 = vrot.slane %v954, 4
      %v956 = vmax.f32 %v954, %v955
      %v957 = vrot.slane %v956, 2
      %v958 = vmax.f32 %v956, %v957
      %v959 = vrot.slane %v958, 1
      %v960 = vmax.f32 %v958, %v959
      %v961 = vpack.i.bf16 %v960, %v960
      %v963 = vsel %vm349, %v332, 4286644096
      %v965 = vunpack.i.l.bf16 %v963
      %v966 = vunpack.i.h.bf16 %v963
      %v967 = vmax.f32 %v965, %v966
      %v968 = vrot.slane %v967, 4
      %v969 = vmax.f32 %v967, %v968
      %v970 = vrot.slane %v969, 2
      %v971 = vmax.f32 %v969, %v970
      %v972 = vrot.slane %v971, 1
      %v973 = vmax.f32 %v971, %v972
      %v974 = vpack.i.bf16 %v973, %v973
      %v976 = vsel %vm349, %v333, 4286644096
      %v978 = vunpack.i.l.bf16 %v976
      %v979 = vunpack.i.h.bf16 %v976
      %v980 = vmax.f32 %v978, %v979
      %v981 = vrot.slane %v980, 4
      %v982 = vmax.f32 %v980, %v981
      %v983 = vrot.slane %v982, 2
      %v984 = vmax.f32 %v982, %v983
      %v985 = vrot.slane %v984, 1
      %v986 = vmax.f32 %v984, %v985
      %v987 = vpack.i.bf16 %v986, %v986
      %v989 = vsel %vm349, %v334, 4286644096
      %v991 = vunpack.i.l.bf16 %v989
      %v992 = vunpack.i.h.bf16 %v989
      %v993 = vmax.f32 %v991, %v992
      %v994 = vrot.slane %v993, 4
      %v995 = vmax.f32 %v993, %v994
      %v996 = vrot.slane %v995, 2
      %v997 = vmax.f32 %v995, %v996
      %v998 = vrot.slane %v997, 1
      %v999 = vmax.f32 %v997, %v998
      %v1000 = vpack.i.bf16 %v999, %v999
      %v1002 = vsel %vm349, %v335, 4286644096
      %v1004 = vunpack.i.l.bf16 %v1002
      %v1005 = vunpack.i.h.bf16 %v1002
      %v1006 = vmax.f32 %v1004, %v1005
      %v1007 = vrot.slane %v1006, 4
      %v1008 = vmax.f32 %v1006, %v1007
      %v1009 = vrot.slane %v1008, 2
      %v1010 = vmax.f32 %v1008, %v1009
      %v1011 = vrot.slane %v1010, 1
      %v1012 = vmax.f32 %v1010, %v1011
      %v1013 = vpack.i.bf16 %v1012, %v1012
      %v1015 = vsel %vm349, %v336, 4286644096
      %v1017 = vunpack.i.l.bf16 %v1015
      %v1018 = vunpack.i.h.bf16 %v1015
      %v1019 = vmax.f32 %v1017, %v1018
      %v1020 = vrot.slane %v1019, 4
      %v1021 = vmax.f32 %v1019, %v1020
      %v1022 = vrot.slane %v1021, 2
      %v1023 = vmax.f32 %v1021, %v1022
      %v1024 = vrot.slane %v1023, 1
      %v1025 = vmax.f32 %v1023, %v1024
      %v1026 = vpack.i.bf16 %v1025, %v1025
      %v1028 = vsel %vm349, %v337, 4286644096
      %v1030 = vunpack.i.l.bf16 %v1028
      %v1031 = vunpack.i.h.bf16 %v1028
      %v1032 = vmax.f32 %v1030, %v1031
      %v1033 = vrot.slane %v1032, 4
      %v1034 = vmax.f32 %v1032, %v1033
      %v1035 = vrot.slane %v1034, 2
      %v1036 = vmax.f32 %v1034, %v1035
      %v1037 = vrot.slane %v1036, 1
      %v1038 = vmax.f32 %v1036, %v1037
      %v1039 = vpack.i.bf16 %v1038, %v1038
      %v1041 = vsel %vm349, %v338, 4286644096
      %v1043 = vunpack.i.l.bf16 %v1041
      %v1044 = vunpack.i.h.bf16 %v1041
      %v1045 = vmax.f32 %v1043, %v1044
      %v1046 = vrot.slane %v1045, 4
      %v1047 = vmax.f32 %v1045, %v1046
      %v1048 = vrot.slane %v1047, 2
      %v1049 = vmax.f32 %v1047, %v1048
      %v1050 = vrot.slane %v1049, 1
      %v1051 = vmax.f32 %v1049, %v1050
      %v1052 = vpack.i.bf16 %v1051, %v1051
      %v1054 = vsel %vm349, %v339, 4286644096
      %v1056 = vunpack.i.l.bf16 %v1054
      %v1057 = vunpack.i.h.bf16 %v1054
      %v1058 = vmax.f32 %v1056, %v1057
      %v1059 = vrot.slane %v1058, 4
      %v1060 = vmax.f32 %v1058, %v1059
      %v1061 = vrot.slane %v1060, 2
      %v1062 = vmax.f32 %v1060, %v1061
      %v1063 = vrot.slane %v1062, 1
      %v1064 = vmax.f32 %v1062, %v1063
      %v1065 = vpack.i.bf16 %v1064, %v1064
      %v1067 = vsel %vm349, %v340, 4286644096
      %v1069 = vunpack.i.l.bf16 %v1067
      %v1070 = vunpack.i.h.bf16 %v1067
      %v1071 = vmax.f32 %v1069, %v1070
      %v1072 = vrot.slane %v1071, 4
      %v1073 = vmax.f32 %v1071, %v1072
      %v1074 = vrot.slane %v1073, 2
      %v1075 = vmax.f32 %v1073, %v1074
      %v1076 = vrot.slane %v1075, 1
      %v1077 = vmax.f32 %v1075, %v1076
      %v1078 = vpack.i.bf16 %v1077, %v1077
      %v1080 = vsel %vm349, %v341, 4286644096
      %v1082 = vunpack.i.l.bf16 %v1080
      %v1083 = vunpack.i.h.bf16 %v1080
      %v1084 = vmax.f32 %v1082, %v1083
      %v1085 = vrot.slane %v1084, 4
      %v1086 = vmax.f32 %v1084, %v1085
      %v1087 = vrot.slane %v1086, 2
      %v1088 = vmax.f32 %v1086, %v1087
      %v1089 = vrot.slane %v1088, 1
      %v1090 = vmax.f32 %v1088, %v1089
      %v1091 = vpack.i.bf16 %v1090, %v1090
      %v1093 = vsel %vm349, %v342, 4286644096
      %v1095 = vunpack.i.l.bf16 %v1093
      %v1096 = vunpack.i.h.bf16 %v1093
      %v1097 = vmax.f32 %v1095, %v1096
      %v1098 = vrot.slane %v1097, 4
      %v1099 = vmax.f32 %v1097, %v1098
      %v1100 = vrot.slane %v1099, 2
      %v1101 = vmax.f32 %v1099, %v1100
      %v1102 = vrot.slane %v1101, 1
      %v1103 = vmax.f32 %v1101, %v1102
      %v1104 = vpack.i.bf16 %v1103, %v1103
      %v1106 = vsel %vm349, %v343, 4286644096
      %v1108 = vunpack.i.l.bf16 %v1106
      %v1109 = vunpack.i.h.bf16 %v1106
      %v1110 = vmax.f32 %v1108, %v1109
      %v1111 = vrot.slane %v1110, 4
      %v1112 = vmax.f32 %v1110, %v1111
      %v1113 = vrot.slane %v1112, 2
      %v1114 = vmax.f32 %v1112, %v1113
      %v1115 = vrot.slane %v1114, 1
      %v1116 = vmax.f32 %v1114, %v1115
      %v1117 = vpack.i.bf16 %v1116, %v1116
      %v1119 = vsel %vm349, %v344, 4286644096
      %v1121 = vunpack.i.l.bf16 %v1119
      %v1122 = vunpack.i.h.bf16 %v1119
      %v1123 = vmax.f32 %v1121, %v1122
      %v1124 = vrot.slane %v1123, 4
      %v1125 = vmax.f32 %v1123, %v1124
      %v1126 = vrot.slane %v1125, 2
      %v1127 = vmax.f32 %v1125, %v1126
      %v1128 = vrot.slane %v1127, 1
      %v1129 = vmax.f32 %v1127, %v1128
      %v1130 = vpack.i.bf16 %v1129, %v1129
      %v1132 = vsel %vm349, %v345, 4286644096
      %v1134 = vunpack.i.l.bf16 %v1132
      %v1135 = vunpack.i.h.bf16 %v1132
      %v1136 = vmax.f32 %v1134, %v1135
      %v1137 = vrot.slane %v1136, 4
      %v1138 = vmax.f32 %v1136, %v1137
      %v1139 = vrot.slane %v1138, 2
      %v1140 = vmax.f32 %v1138, %v1139
      %v1141 = vrot.slane %v1140, 1
      %v1142 = vmax.f32 %v1140, %v1141
      %v1143 = vpack.i.bf16 %v1142, %v1142
      %v1145 = vsel %vm349, %v346, 4286644096
      %v1147 = vunpack.i.l.bf16 %v1145
      %v1148 = vunpack.i.h.bf16 %v1145
      %v1149 = vmax.f32 %v1147, %v1148
      %v1150 = vrot.slane %v1149, 4
      %v1151 = vmax.f32 %v1149, %v1150
      %v1152 = vrot.slane %v1151, 2
      %v1153 = vmax.f32 %v1151, %v1152
      %v1154 = vrot.slane %v1153, 1
      %v1155 = vmax.f32 %v1153, %v1154
      %v1156 = vpack.i.bf16 %v1155, %v1155
      %v1158 = vsel %vm349, %v347, 4286644096
      %v1160 = vunpack.i.l.bf16 %v1158
      %v1161 = vunpack.i.h.bf16 %v1158
      %v1162 = vmax.f32 %v1160, %v1161
      %v1163 = vrot.slane %v1162, 4
      %v1164 = vmax.f32 %v1162, %v1163
      %v1165 = vrot.slane %v1164, 2
      %v1166 = vmax.f32 %v1164, %v1165
      %v1167 = vrot.slane %v1166, 1
      %v1168 = vmax.f32 %v1166, %v1167
      %v1169 = vpack.i.bf16 %v1168, %v1168
      %v1171 = vsel %vm349, %v348, 4286644096
      %v1173 = vunpack.i.l.bf16 %v1171
      %v1174 = vunpack.i.h.bf16 %v1171
      %v1175 = vmax.f32 %v1173, %v1174
      %v1176 = vrot.slane %v1175, 4
      %v1177 = vmax.f32 %v1175, %v1176
      %v1178 = vrot.slane %v1177, 2
      %v1179 = vmax.f32 %v1177, %v1178
      %v1180 = vrot.slane %v1179, 1
      %v1181 = vmax.f32 %v1179, %v1180
      %v1182 = vpack.i.bf16 %v1181, %v1181
      %v1247 = vunpack.c.l.b16 %v363
      %v1248 = vunpack.c.l.b16 %v376
      %v1249 = vunpack.c.l.b16 %v389
      %v1250 = vunpack.c.l.b16 %v402
      %v1251 = vunpack.c.l.b16 %v415
      %v1252 = vunpack.c.l.b16 %v428
      %v1253 = vunpack.c.l.b16 %v441
      %v1254 = vunpack.c.l.b16 %v454
      %v1255 = vunpack.c.l.b16 %v467
      %v1256 = vunpack.c.l.b16 %v480
      %v1257 = vunpack.c.l.b16 %v493
      %v1258 = vunpack.c.l.b16 %v506
      %v1259 = vunpack.c.l.b16 %v519
      %v1260 = vunpack.c.l.b16 %v532
      %v1261 = vunpack.c.l.b16 %v545
      %v1262 = vunpack.c.l.b16 %v558
      %v1263 = vunpack.c.l.b16 %v571
      %v1264 = vunpack.c.l.b16 %v584
      %v1265 = vunpack.c.l.b16 %v597
      %v1266 = vunpack.c.l.b16 %v610
      %v1267 = vunpack.c.l.b16 %v623
      %v1268 = vunpack.c.l.b16 %v636
      %v1269 = vunpack.c.l.b16 %v649
      %v1270 = vunpack.c.l.b16 %v662
      %v1271 = vunpack.c.l.b16 %v675
      %v1272 = vunpack.c.l.b16 %v688
      %v1273 = vunpack.c.l.b16 %v701
      %v1274 = vunpack.c.l.b16 %v714
      %v1275 = vunpack.c.l.b16 %v727
      %v1276 = vunpack.c.l.b16 %v740
      %v1277 = vunpack.c.l.b16 %v753
      %v1278 = vunpack.c.l.b16 %v766
      %v1279 = vunpack.c.l.b16 %v779
      %v1280 = vunpack.c.l.b16 %v792
      %v1281 = vunpack.c.l.b16 %v805
      %v1282 = vunpack.c.l.b16 %v818
      %v1283 = vunpack.c.l.b16 %v831
      %v1284 = vunpack.c.l.b16 %v844
      %v1285 = vunpack.c.l.b16 %v857
      %v1286 = vunpack.c.l.b16 %v870
      %v1287 = vunpack.c.l.b16 %v883
      %v1288 = vunpack.c.l.b16 %v896
      %v1289 = vunpack.c.l.b16 %v909
      %v1290 = vunpack.c.l.b16 %v922
      %v1291 = vunpack.c.l.b16 %v935
      %v1292 = vunpack.c.l.b16 %v948
      %v1293 = vunpack.c.l.b16 %v961
      %v1294 = vunpack.c.l.b16 %v974
      %v1295 = vunpack.c.l.b16 %v987
      %v1296 = vunpack.c.l.b16 %v1000
      %v1297 = vunpack.c.l.b16 %v1013
      %v1298 = vunpack.c.l.b16 %v1026
      %v1299 = vunpack.c.l.b16 %v1039
      %v1300 = vunpack.c.l.b16 %v1052
      %v1301 = vunpack.c.l.b16 %v1065
      %v1302 = vunpack.c.l.b16 %v1078
      %v1303 = vunpack.c.l.b16 %v1091
      %v1304 = vunpack.c.l.b16 %v1104
      %v1305 = vunpack.c.l.b16 %v1117
      %v1306 = vunpack.c.l.b16 %v1130
      %v1307 = vunpack.c.l.b16 %v1143
      %v1308 = vunpack.c.l.b16 %v1156
      %v1309 = vunpack.c.l.b16 %v1169
      %v1310 = vunpack.c.l.b16 %v1182
      %v1311 = vpack.c.b16 %v1247, %v1247
      %v1312 = vpack.c.b16 %v1248, %v1248
      %v1313 = vpack.c.b16 %v1249, %v1249
      %v1314 = vpack.c.b16 %v1250, %v1250
      %v1315 = vpack.c.b16 %v1251, %v1251
      %v1316 = vpack.c.b16 %v1252, %v1252
      %v1317 = vpack.c.b16 %v1253, %v1253
      %v1318 = vpack.c.b16 %v1254, %v1254
      %v1319 = vpack.c.b16 %v1255, %v1255
      %v1320 = vpack.c.b16 %v1256, %v1256
      %v1321 = vpack.c.b16 %v1257, %v1257
      %v1322 = vpack.c.b16 %v1258, %v1258
      %v1323 = vpack.c.b16 %v1259, %v1259
      %v1324 = vpack.c.b16 %v1260, %v1260
      %v1325 = vpack.c.b16 %v1261, %v1261
      %v1326 = vpack.c.b16 %v1262, %v1262
      %v1327 = vpack.c.b16 %v1263, %v1263
      %v1328 = vpack.c.b16 %v1264, %v1264
      %v1329 = vpack.c.b16 %v1265, %v1265
      %v1330 = vpack.c.b16 %v1266, %v1266
      %v1331 = vpack.c.b16 %v1267, %v1267
      %v1332 = vpack.c.b16 %v1268, %v1268
      %v1333 = vpack.c.b16 %v1269, %v1269
      %v1334 = vpack.c.b16 %v1270, %v1270
      %v1335 = vpack.c.b16 %v1271, %v1271
      %v1336 = vpack.c.b16 %v1272, %v1272
      %v1337 = vpack.c.b16 %v1273, %v1273
      %v1338 = vpack.c.b16 %v1274, %v1274
      %v1339 = vpack.c.b16 %v1275, %v1275
      %v1340 = vpack.c.b16 %v1276, %v1276
      %v1341 = vpack.c.b16 %v1277, %v1277
      %v1342 = vpack.c.b16 %v1278, %v1278
      %v1343 = vpack.c.b16 %v1279, %v1279
      %v1344 = vpack.c.b16 %v1280, %v1280
      %v1345 = vpack.c.b16 %v1281, %v1281
      %v1346 = vpack.c.b16 %v1282, %v1282
      %v1347 = vpack.c.b16 %v1283, %v1283
      %v1348 = vpack.c.b16 %v1284, %v1284
      %v1349 = vpack.c.b16 %v1285, %v1285
      %v1350 = vpack.c.b16 %v1286, %v1286
      %v1351 = vpack.c.b16 %v1287, %v1287
      %v1352 = vpack.c.b16 %v1288, %v1288
      %v1353 = vpack.c.b16 %v1289, %v1289
      %v1354 = vpack.c.b16 %v1290, %v1290
      %v1355 = vpack.c.b16 %v1291, %v1291
      %v1356 = vpack.c.b16 %v1292, %v1292
      %v1357 = vpack.c.b16 %v1293, %v1293
      %v1358 = vpack.c.b16 %v1294, %v1294
      %v1359 = vpack.c.b16 %v1295, %v1295
      %v1360 = vpack.c.b16 %v1296, %v1296
      %v1361 = vpack.c.b16 %v1297, %v1297
      %v1362 = vpack.c.b16 %v1298, %v1298
      %v1363 = vpack.c.b16 %v1299, %v1299
      %v1364 = vpack.c.b16 %v1300, %v1300
      %v1365 = vpack.c.b16 %v1301, %v1301
      %v1366 = vpack.c.b16 %v1302, %v1302
      %v1367 = vpack.c.b16 %v1303, %v1303
      %v1368 = vpack.c.b16 %v1304, %v1304
      %v1369 = vpack.c.b16 %v1305, %v1305
      %v1370 = vpack.c.b16 %v1306, %v1306
      %v1371 = vpack.c.b16 %v1307, %v1307
      %v1372 = vpack.c.b16 %v1308, %v1308
      %v1373 = vpack.c.b16 %v1309, %v1309
      %v1374 = vpack.c.b16 %v1310, %v1310
      %v1375 = vunpack.c.l.b16 %v1311
      %v1376 = vunpack.c.l.b16 %v1312
      %v1377 = vunpack.c.l.b16 %v1313
      %v1378 = vunpack.c.l.b16 %v1314
      %v1379 = vunpack.c.l.b16 %v1315
      %v1380 = vunpack.c.l.b16 %v1316
      %v1381 = vunpack.c.l.b16 %v1317
      %v1382 = vunpack.c.l.b16 %v1318
      %v1383 = vunpack.c.l.b16 %v1319
      %v1384 = vunpack.c.l.b16 %v1320
      %v1385 = vunpack.c.l.b16 %v1321
      %v1386 = vunpack.c.l.b16 %v1322
      %v1387 = vunpack.c.l.b16 %v1323
      %v1388 = vunpack.c.l.b16 %v1324
      %v1389 = vunpack.c.l.b16 %v1325
      %v1390 = vunpack.c.l.b16 %v1326
      %v1391 = vunpack.c.l.b16 %v1327
      %v1392 = vunpack.c.l.b16 %v1328
      %v1393 = vunpack.c.l.b16 %v1329
      %v1394 = vunpack.c.l.b16 %v1330
      %v1395 = vunpack.c.l.b16 %v1331
      %v1396 = vunpack.c.l.b16 %v1332
      %v1397 = vunpack.c.l.b16 %v1333
      %v1398 = vunpack.c.l.b16 %v1334
      %v1399 = vunpack.c.l.b16 %v1335
      %v1400 = vunpack.c.l.b16 %v1336
      %v1401 = vunpack.c.l.b16 %v1337
      %v1402 = vunpack.c.l.b16 %v1338
      %v1403 = vunpack.c.l.b16 %v1339
      %v1404 = vunpack.c.l.b16 %v1340
      %v1405 = vunpack.c.l.b16 %v1341
      %v1406 = vunpack.c.l.b16 %v1342
      %v1407 = vunpack.c.l.b16 %v1343
      %v1408 = vunpack.c.l.b16 %v1344
      %v1409 = vunpack.c.l.b16 %v1345
      %v1410 = vunpack.c.l.b16 %v1346
      %v1411 = vunpack.c.l.b16 %v1347
      %v1412 = vunpack.c.l.b16 %v1348
      %v1413 = vunpack.c.l.b16 %v1349
      %v1414 = vunpack.c.l.b16 %v1350
      %v1415 = vunpack.c.l.b16 %v1351
      %v1416 = vunpack.c.l.b16 %v1352
      %v1417 = vunpack.c.l.b16 %v1353
      %v1418 = vunpack.c.l.b16 %v1354
      %v1419 = vunpack.c.l.b16 %v1355
      %v1420 = vunpack.c.l.b16 %v1356
      %v1421 = vunpack.c.l.b16 %v1357
      %v1422 = vunpack.c.l.b16 %v1358
      %v1423 = vunpack.c.l.b16 %v1359
      %v1424 = vunpack.c.l.b16 %v1360
      %v1425 = vunpack.c.l.b16 %v1361
      %v1426 = vunpack.c.l.b16 %v1362
      %v1427 = vunpack.c.l.b16 %v1363
      %v1428 = vunpack.c.l.b16 %v1364
      %v1429 = vunpack.c.l.b16 %v1365
      %v1430 = vunpack.c.l.b16 %v1366
      %v1431 = vunpack.c.l.b16 %v1367
      %v1432 = vunpack.c.l.b16 %v1368
      %v1433 = vunpack.c.l.b16 %v1369
      %v1434 = vunpack.c.l.b16 %v1370
      %v1435 = vunpack.c.l.b16 %v1371
      %v1436 = vunpack.c.l.b16 %v1372
      %v1437 = vunpack.c.l.b16 %v1373
      %v1438 = vunpack.c.l.b16 %v1374
      %vm1439 = vcmask 1041409
      %v1440 = vsel %vm1439, %v1376, %v1375
      %vm1441 = vcmask 1042434
      %v1442 = vsel %vm1441, %v1377, %v1440
      %vm1443 = vcmask 1043459
      %v1444 = vsel %vm1443, %v1378, %v1442
      %vm1445 = vcmask 1044484
      %v1446 = vsel %vm1445, %v1379, %v1444
      %vm1447 = vcmask 1045509
      %v1448 = vsel %vm1447, %v1380, %v1446
      %vm1449 = vcmask 1046534
      %v1450 = vsel %vm1449, %v1381, %v1448
      %vm1451 = vcmask 1047559
      %v1452 = vsel %vm1451, %v1382, %v1450
      %v1453 = vsel %vm1439, %v1384, %v1383
      %v1454 = vsel %vm1441, %v1385, %v1453
      %v1455 = vsel %vm1443, %v1386, %v1454
      %v1456 = vsel %vm1445, %v1387, %v1455
      %v1457 = vsel %vm1447, %v1388, %v1456
      %v1458 = vsel %vm1449, %v1389, %v1457
      %v1459 = vsel %vm1451, %v1390, %v1458
      %v1460 = vsel %vm1439, %v1392, %v1391
      %v1461 = vsel %vm1441, %v1393, %v1460
      %v1462 = vsel %vm1443, %v1394, %v1461
      %v1463 = vsel %vm1445, %v1395, %v1462
      %v1464 = vsel %vm1447, %v1396, %v1463
      %v1465 = vsel %vm1449, %v1397, %v1464
      %v1466 = vsel %vm1451, %v1398, %v1465
      %v1467 = vsel %vm1439, %v1400, %v1399
      %v1468 = vsel %vm1441, %v1401, %v1467
      %v1469 = vsel %vm1443, %v1402, %v1468
      %v1470 = vsel %vm1445, %v1403, %v1469
      %v1471 = vsel %vm1447, %v1404, %v1470
      %v1472 = vsel %vm1449, %v1405, %v1471
      %v1473 = vsel %vm1451, %v1406, %v1472
      %v1474 = vsel %vm1439, %v1408, %v1407
      %v1475 = vsel %vm1441, %v1409, %v1474
      %v1476 = vsel %vm1443, %v1410, %v1475
      %v1477 = vsel %vm1445, %v1411, %v1476
      %v1478 = vsel %vm1447, %v1412, %v1477
      %v1479 = vsel %vm1449, %v1413, %v1478
      %v1480 = vsel %vm1451, %v1414, %v1479
      %v1481 = vsel %vm1439, %v1416, %v1415
      %v1482 = vsel %vm1441, %v1417, %v1481
      %v1483 = vsel %vm1443, %v1418, %v1482
      %v1484 = vsel %vm1445, %v1419, %v1483
      %v1485 = vsel %vm1447, %v1420, %v1484
      %v1486 = vsel %vm1449, %v1421, %v1485
      %v1487 = vsel %vm1451, %v1422, %v1486
      %v1488 = vsel %vm1439, %v1424, %v1423
      %v1489 = vsel %vm1441, %v1425, %v1488
      %v1490 = vsel %vm1443, %v1426, %v1489
      %v1491 = vsel %vm1445, %v1427, %v1490
      %v1492 = vsel %vm1447, %v1428, %v1491
      %v1493 = vsel %vm1449, %v1429, %v1492
      %v1494 = vsel %vm1451, %v1430, %v1493
      %v1495 = vsel %vm1439, %v1432, %v1431
      %v1496 = vsel %vm1441, %v1433, %v1495
      %v1497 = vsel %vm1443, %v1434, %v1496
      %v1498 = vsel %vm1445, %v1435, %v1497
      %v1499 = vsel %vm1447, %v1436, %v1498
      %v1500 = vsel %vm1449, %v1437, %v1499
      %v1501 = vsel %vm1451, %v1438, %v1500
      %v1502 = vpack.c.b16 %v1452, %v1452
      %v1503 = vpack.c.b16 %v1459, %v1459
      %v1504 = vpack.c.b16 %v1466, %v1466
      %v1505 = vpack.c.b16 %v1473, %v1473
      %v1506 = vpack.c.b16 %v1480, %v1480
      %v1507 = vpack.c.b16 %v1487, %v1487
      %v1508 = vpack.c.b16 %v1494, %v1494
      %v1509 = vpack.c.b16 %v1501, %v1501
      %vm1518 = vcmask 60416
      %1519 = vst.msk [vmem:[%s154] sm:$0xf] %vm1518, %v1502
      %1520 = vst.msk [vmem:[%s154 + $0x4] sm:$0xf] %vm1518, %v1503
      %1521 = vst.msk [vmem:[%s154 + $0x8] sm:$0xf] %vm1518, %v1504
      %1522 = vst.msk [vmem:[%s154 + $0xc] sm:$0xf] %vm1518, %v1505
      %1523 = vst.msk [vmem:[%s154 + $0x10] sm:$0xf] %vm1518, %v1506
      %1524 = vst.msk [vmem:[%s154 + $0x14] sm:$0xf] %vm1518, %v1507
      %1525 = vst.msk [vmem:[%s154 + $0x18] sm:$0xf] %vm1518, %v1508
      %1526 = vst.msk [vmem:[%s154 + $0x1c] sm:$0xf] %vm1518, %v1509
      %s1527 = smul.u32 8, %s17
      %p1528 = scmp.lt.s32.totalorder %s16, 1
      %s1529 = scalar_select %p1528, %s16, 1
      %p1530 = scmp.lt.s32.totalorder %s1527, 7
      %s1531 = scalar_select %p1530, %s1527, 7
      %s1532 = smul.addr %s1529, 8
      %s1533 = sadd.s32 %s1531, %s1532
      %s1534 = smul.addr %s1533, 4
      %s1535 = scalar_lea.vmem %s1, %s1534
      // Predicated region
      $region25: #{unet_forward.28} parent=23 // pred_check
        %p1536 = pneg %p72
      $region26: #{unet_forward.28} parent=23 // pred_check_branch
        %1538 = sbr.rel (%p1536) target = $region28
      $region27: #{unet_forward.28} parent=23 // pred_region
        %s1539 = smul.u32 8, %s17
      $region28: #{unet_forward.28} parent=23 // pred_fallthru
        _
    $region24: #{unet_forward.28} parent=5 // pred_fallthru
      _
    %p1540 = scmp.le.s32.totalorder 2, %s7
    // Predicated region
    $region29: #{unet_forward.28} parent=5 // pred_check
      %p1541 = pneg %p1540
    $region30: #{unet_forward.28} parent=5 // pred_check_branch
      %1543 = sbr.rel (%p1541) target = $region32
    $region31: #{unet_forward.28} parent=5 // pred_region
      %s1544 = ssub.s32 %s7, 2
      // Predicated region
      $region33: #{unet_forward.28} parent=31 // pred_check
        %p1545 = pneg %p78
      $region34: #{unet_forward.28} parent=31 // pred_check_branch
        %1547 = sbr.rel (%p1545) target = $region36
      $region35: #{unet_forward.28} parent=31 // pred_region
        %s1548 = smul.u32 8, %s19
        %p1549 = scmp.lt.s32.totalorder %s18, 1
        %s1550 = scalar_select %p1549, %s18, 1
        %p1551 = scmp.lt.s32.totalorder %s1548, 7
        %s1552 = scalar_select %p1551, %s1548, 7
        %s1553 = smul.addr %s1550, 8
        %s1554 = sadd.s32 %s1552, %s1553
        %s1555 = smul.addr %s1554, 4
        %s1556 = scalar_lea.vmem %s1, %s1555
      $region36: #{unet_forward.28} parent=31 // pred_fallthru
        _
    $region32: #{unet_forward.28} parent=5 // pred_fallthru
      _
  $region6: #{unet_forward.28} parent=0 // loop_footer
    %s11 = sadd.s32 1, %s7
  $region7: #{unet_forward.28} parent=0 // loop_footer_branch
    %6 = sbr.rel target = $region3
  $region8: #{unet_forward.28} parent=0 // loop_exit
    _

// kernel: unet_forward.29
$region0: #{unet_forward.29}
  #allocation0 [shape = 'u32[]', space=smem, size = 0x4, offset = 0x4, fixed_abs, tag = 'smem constant byte address 0x4 - core index']
  #allocation1 [shape = 'u32[144,128]{1,0:T(1,128)}', space=vmem, size = 0x12000, scoped, tag = 'internal scratch']
  %s0 = inlined_call_operand.vmem [shape: bf16[128,72], index: 0, kind: input, shape index: {}]
  %s1 = inlined_call_operand.vmem [shape: bf16[72,16], index: 1, kind: input, shape index: {}]
  %s2 = inlined_call_operand.vmem [shape: f32[128,16], index: 2, kind: output, shape index: {0}]
  %s3 = inlined_call_operand.vmem [shape: f32[1,2,16], index: 3, kind: output, shape index: {1}]
  %4 = xla_tuple %s2, %s3
  %s5 = sld [smem:[#allocation0]]
  $region26: #{unet_forward.29} parent=0
    _
  %s7 = ssub.s32 1, %s5
  %s8 = scalar_select 0, %s7, %s5
  // Predicated region
  $region2: #{unet_forward.29} parent=0 // pred_check
    _
  $region3: #{unet_forward.29} parent=0 // pred_check_branch
    %10 = sbr.rel (0) target = $region5
  $region4: #{unet_forward.29} parent=0 // pred_region
    _
  $region5: #{unet_forward.29} parent=0 // pred_fallthru
    _
  // Predicated region
  $region6: #{unet_forward.29} parent=0 // pred_check
    _
  $region7: #{unet_forward.29} parent=0 // pred_check_branch
    %12 = sbr.rel (0) target = $region9
  $region8: #{unet_forward.29} parent=0 // pred_region
    _
  $region9: #{unet_forward.29} parent=0 // pred_fallthru
    _
  %v14 = vld [vmem:[%s0] sm:$0xf]
  %v15 = vld [vmem:[%s0 + $0x4] sm:$0xf]
  %v16 = vld [vmem:[%s0 + $0x8] sm:$0xf]
  %v17 = vld [vmem:[%s0 + $0xc] sm:$0xf]
  %v18 = vld [vmem:[%s0 + $0x10] sm:$0xf]
  %v19 = vld [vmem:[%s0 + $0x14] sm:$0xf]
  %v20 = vld [vmem:[%s0 + $0x18] sm:$0xf]
  %v21 = vld [vmem:[%s0 + $0x1c] sm:$0xf]
  %v22 = vld [vmem:[%s0 + $0x20] sm:$0xf]
  %v23 = vld [vmem:[%s0 + $0x24] sm:$0xf]
  %v24 = vld [vmem:[%s0 + $0x28] sm:$0xf]
  %v25 = vld [vmem:[%s0 + $0x2c] sm:$0xf]
  %v26 = vld [vmem:[%s0 + $0x30] sm:$0xf]
  %v27 = vld [vmem:[%s0 + $0x34] sm:$0xf]
  %v28 = vld [vmem:[%s0 + $0x38] sm:$0xf]
  %v29 = vld [vmem:[%s0 + $0x3c] sm:$0xf]
  %v30 = vld [vmem:[%s1] sm:$0xf]
  %v31 = vld [vmem:[%s1 + $0x4] sm:$0xf]
  %v32 = vld [vmem:[%s1 + $0x8] sm:$0xf]
  %v33 = vld [vmem:[%s1 + $0xc] sm:$0xf]
  %v34 = vld [vmem:[%s1 + $0x10] sm:$0xf]
  %v35 = vld [vmem:[%s1 + $0x14] sm:$0xf]
  %v36 = vld [vmem:[%s1 + $0x18] sm:$0xf]
  %v37 = vld [vmem:[%s1 + $0x1c] sm:$0xf]
  %v38 = vld [vmem:[%s1 + $0x20] sm:$0xf]
  %v55 = vunpack.c.l.b16 %v14
  %v56 = vunpack.c.l.b16 %v15
  %v57 = vunpack.c.l.b16 %v16
  %v58 = vunpack.c.l.b16 %v17
  %v59 = vunpack.c.l.b16 %v18
  %v60 = vunpack.c.l.b16 %v19
  %v61 = vunpack.c.l.b16 %v20
  %v62 = vunpack.c.l.b16 %v21
  %v63 = vunpack.c.l.b16 %v22
  %v64 = vunpack.c.l.b16 %v23
  %v65 = vunpack.c.l.b16 %v24
  %v66 = vunpack.c.l.b16 %v25
  %v67 = vunpack.c.l.b16 %v26
  %v68 = vunpack.c.l.b16 %v27
  %v69 = vunpack.c.l.b16 %v28
  %v70 = vunpack.c.l.b16 %v29
  %v71 = vpack.c.b16 %v56, %v55
  %v72 = vpack.c.b16 %v58, %v57
  %v73 = vpack.c.b16 %v60, %v59
  %v74 = vpack.c.b16 %v62, %v61
  %v75 = vpack.c.b16 %v64, %v63
  %v76 = vpack.c.b16 %v66, %v65
  %v77 = vpack.c.b16 %v68, %v67
  %v78 = vpack.c.b16 %v70, %v69
  %v88 = vunpack.c.l.b16 %v30
  %v89 = vunpack.c.l.b16 %v31
  %v90 = vunpack.c.l.b16 %v32
  %v91 = vunpack.c.l.b16 %v33
  %v92 = vunpack.c.l.b16 %v34
  %v93 = vunpack.c.l.b16 %v35
  %v94 = vunpack.c.l.b16 %v36
  %v95 = vunpack.c.l.b16 %v37
  %v96 = vunpack.c.l.b16 %v38
  %v97 = vpack.c.b16 %v89, %v88
  %v98 = vpack.c.b16 %v91, %v90
  %v99 = vpack.c.b16 %v93, %v92
  %v100 = vpack.c.b16 %v95, %v94
  %v101 = vpack.c.b16 %v96, %v96
  %vm106 = vcmask 588800
  %v108 = vsel %vm106, %v71, 0
  %v111 = vsel %vm106, %v72, 0
  %v114 = vsel %vm106, %v73, 0
  %v117 = vsel %vm106, %v74, 0
  %v120 = vsel %vm106, %v75, 0
  %v123 = vsel %vm106, %v76, 0
  %v126 = vsel %vm106, %v77, 0
  %v129 = vsel %vm106, %v78, 0
  %vm131 = vcmask 1043456
  %v133 = vsel %vm131, %v101, 0
  %135 = vmatprep.subr.bf16.mxu0 0
  %136 = vmatpush1.bf16.msra.mxu0 %v97
  %137 = vmatprep.subr.bf16.mxu0 0
  %138 = vmatpush1.bf16.msra.mxu0 %v98
  %139 = vmatprep.subr.bf16.mxu0 0
  %140 = vmatpush1.bf16.msra.mxu0 %v99
  %141 = vmatprep.subr.bf16.mxu0 0
  %142 = vmatpush1.bf16.msra.mxu0 %v100
  %143 = vmatprep.subr.bf16.mxu0 0
  %144 = vmatpush1.bf16.msra.mxu0 %v133
  %145 = vmatprep.subr.bf16.mxu0 0
  %146 = vmatpush1.bf16.msra.mxu0 0
  %147 = vmatprep.subr.bf16.mxu0 0
  %148 = vmatpush1.bf16.msra.mxu0 0
  %149 = vmatprep.subr.bf16.mxu0 0
  %150 = vmatpush1.bf16.msra.mxu0 0
  %151 = vmatprep.subr.bf16.mxu0 0
  %152 = vmatpush1.bf16.msra.mxu0 0
  %153 = vmatprep.subr.bf16.mxu0 0
  %154 = vmatpush1.bf16.msra.mxu0 0
  %155 = vmatprep.subr.bf16.mxu0 0
  %156 = vmatpush1.bf16.msra.mxu0 0
  %157 = vmatprep.subr.bf16.mxu0 0
  %158 = vmatpush1.bf16.msra.mxu0 0
  %159 = vmatprep.subr.bf16.mxu0 0
  %160 = vmatpush1.bf16.msra.mxu0 0
  %161 = vmatprep.subr.bf16.mxu0 0
  %162 = vmatpush1.bf16.msra.mxu0 0
  %163 = vmatprep.subr.bf16.mxu0 0
  %164 = vmatpush1.bf16.msra.mxu0 0
  %165 = vmatprep.subr.bf16.mxu0 0
  %166 = vmatpush1.bf16.msra.mxu0 0
  %167 = vmatprep.mubr.bf16.mxu0 0
  %168 = vmatmul.mubr.bf16.gmra.mrb[0].mxu0 %v108
  %v169 = vpop.f32.mrb[0].mxu0
  %v170 = vadd.f32 0.0, %v169
  %v171 = vpop.f32.mrb[0].mxu0
  %v172 = vpop.f32.mrb[0].mxu0
  %v173 = vadd.f32 0.0, %v172
  %v174 = vpop.f32.mrb[0].mxu0
  %175 = vmatprep.mubr.bf16.mxu0 0
  %176 = vmatmul.mubr.bf16.gmra.mrb[0].mxu0 %v111
  %v177 = vpop.f32.mrb[0].mxu0
  %v178 = vadd.f32 0.0, %v177
  %v179 = vpop.f32.mrb[0].mxu0
  %v180 = vpop.f32.mrb[0].mxu0
  %v181 = vadd.f32 0.0, %v180
  %v182 = vpop.f32.mrb[0].mxu0
  %183 = vmatprep.mubr.bf16.mxu0 0
  %184 = vmatmul.mubr.bf16.gmra.mrb[0].mxu0 %v114
  %v185 = vpop.f32.mrb[0].mxu0
  %v186 = vadd.f32 0.0, %v185
  %v187 = vpop.f32.mrb[0].mxu0
  %v188 = vpop.f32.mrb[0].mxu0
  %v189 = vadd.f32 0.0, %v188
  %v190 = vpop.f32.mrb[0].mxu0
  %191 = vmatprep.mubr.bf16.mxu0 0
  %192 = vmatmul.mubr.bf16.gmra.mrb[0].mxu0 %v117
  %v193 = vpop.f32.mrb[0].mxu0
  %v194 = vadd.f32 0.0, %v193
  %v195 = vpop.f32.mrb[0].mxu0
  %v196 = vpop.f32.mrb[0].mxu0
  %v197 = vadd.f32 0.0, %v196
  %v198 = vpop.f32.mrb[0].mxu0
  %199 = vmatprep.mubr.bf16.mxu0 0
  %200 = vmatmul.mubr.bf16.gmra.mrb[0].mxu0 %v120
  %v201 = vpop.f32.mrb[0].mxu0
  %v202 = vadd.f32 0.0, %v201
  %v203 = vpop.f32.mrb[0].mxu0
  %v204 = vpop.f32.mrb[0].mxu0
  %v205 = vadd.f32 0.0, %v204
  %v206 = vpop.f32.mrb[0].mxu0
  %207 = vmatprep.mubr.bf16.mxu0 0
  %208 = vmatmul.mubr.bf16.gmra.mrb[0].mxu0 %v123
  %v209 = vpop.f32.mrb[0].mxu0
  %v210 = vadd.f32 0.0, %v209
  %v211 = vpop.f32.mrb[0].mxu0
  %v212 = vpop.f32.mrb[0].mxu0
  %v213 = vadd.f32 0.0, %v212
  %v214 = vpop.f32.mrb[0].mxu0
  %215 = vmatprep.mubr.bf16.mxu0 0
  %216 = vmatmul.mubr.bf16.gmra.mrb[0].mxu0 %v126
  %v217 = vpop.f32.mrb[0].mxu0
  %v218 = vadd.f32 0.0, %v217
  %v219 = vpop.f32.mrb[0].mxu0
  %v220 = vpop.f32.mrb[0].mxu0
  %v221 = vadd.f32 0.0, %v220
  %v222 = vpop.f32.mrb[0].mxu0
  %223 = vmatprep.mubr.bf16.mxu0 0
  %224 = vmatmul.mubr.bf16.gmra.mrb[0].mxu0 %v129
  %v225 = vpop.f32.mrb[0].mxu0
  %v226 = vadd.f32 0.0, %v225
  %v227 = vpop.f32.mrb[0].mxu0
  %v228 = vpop.f32.mrb[0].mxu0
  %v229 = vadd.f32 0.0, %v228
  %v230 = vpop.f32.mrb[0].mxu0
  %231 = vdwg.mxu0
  %vm232 = vcmask 130048
  %233 = vst.msk [vmem:[%s2] sm:$0xff] %vm232, %v170
  %234 = vst.msk [vmem:[%s2 + $0x8] sm:$0xff] %vm232, %v173
  %235 = vst.msk [vmem:[%s2 + $0x10] sm:$0xff] %vm232, %v178
  %236 = vst.msk [vmem:[%s2 + $0x18] sm:$0xff] %vm232, %v181
  %237 = vst.msk [vmem:[%s2 + $0x20] sm:$0xff] %vm232, %v186
  %238 = vst.msk [vmem:[%s2 + $0x28] sm:$0xff] %vm232, %v189
  %239 = vst.msk [vmem:[%s2 + $0x30] sm:$0xff] %vm232, %v194
  %240 = vst.msk [vmem:[%s2 + $0x38] sm:$0xff] %vm232, %v197
  %241 = vst.msk [vmem:[%s2 + $0x40] sm:$0xff] %vm232, %v202
  %242 = vst.msk [vmem:[%s2 + $0x48] sm:$0xff] %vm232, %v205
  %243 = vst.msk [vmem:[%s2 + $0x50] sm:$0xff] %vm232, %v210
  %244 = vst.msk [vmem:[%s2 + $0x58] sm:$0xff] %vm232, %v213
  %245 = vst.msk [vmem:[%s2 + $0x60] sm:$0xff] %vm232, %v218
  %246 = vst.msk [vmem:[%s2 + $0x68] sm:$0xff] %vm232, %v221
  %247 = vst.msk [vmem:[%s2 + $0x70] sm:$0xff] %vm232, %v226
  %248 = vst.msk [vmem:[%s2 + $0x78] sm:$0xff] %vm232, %v229
  %v249 = vsel %vm232, %v170, 0.0
  %v250 = vsel %vm232, %v173, 0.0
  %v251 = vadd.f32 %v249, %v250
  %v252 = vsel %vm232, %v178, 0.0
  %v253 = vadd.f32 %v251, %v252
  %v254 = vsel %vm232, %v181, 0.0
  %v255 = vadd.f32 %v253, %v254
  %v256 = vsel %vm232, %v186, 0.0
  %v257 = vadd.f32 %v255, %v256
  %v258 = vsel %vm232, %v189, 0.0
  %v259 = vadd.f32 %v257, %v258
  %v260 = vsel %vm232, %v194, 0.0
  %v261 = vadd.f32 %v259, %v260
  %v262 = vsel %vm232, %v197, 0.0
  %v263 = vadd.f32 %v261, %v262
  %v264 = vsel %vm232, %v202, 0.0
  %v265 = vadd.f32 %v263, %v264
  %v266 = vsel %vm232, %v205, 0.0
  %v267 = vadd.f32 %v265, %v266
  %v268 = vsel %vm232, %v210, 0.0
  %v269 = vadd.f32 %v267, %v268
  %v270 = vsel %vm232, %v213, 0.0
  %v271 = vadd.f32 %v269, %v270
  %v272 = vsel %vm232, %v218, 0.0
  %v273 = vadd.f32 %v271, %v272
  %v274 = vsel %vm232, %v221, 0.0
  %v275 = vadd.f32 %v273, %v274
  %v276 = vsel %vm232, %v226, 0.0
  %v277 = vadd.f32 %v275, %v276
  %v278 = vsel %vm232, %v229, 0.0
  %v279 = vadd.f32 %v277, %v278
  %v280 = vrot.slane %v279, 4
  %v281 = vadd.f32 %v279, %v280
  %v282 = vrot.slane %v281, 2
  %v283 = vadd.f32 %v281, %v282
  %v284 = vrot.slane %v283, 1
  %v285 = vadd.f32 %v283, %v284
  %v286 = vmul.f32 %v170, %v170
  %v287 = vmul.f32 %v173, %v173
  %v288 = vmul.f32 %v178, %v178
  %v289 = vmul.f32 %v181, %v181
  %v290 = vmul.f32 %v186, %v186
  %v291 = vmul.f32 %v189, %v189
  %v292 = vmul.f32 %v194, %v194
  %v293 = vmul.f32 %v197, %v197
  %v294 = vmul.f32 %v202, %v202
  %v295 = vmul.f32 %v205, %v205
  %v296 = vmul.f32 %v210, %v210
  %v297 = vmul.f32 %v213, %v213
  %v298 = vmul.f32 %v218, %v218
  %v299 = vmul.f32 %v221, %v221
  %v300 = vmul.f32 %v226, %v226
  %v301 = vmul.f32 %v229, %v229
  %v302 = vsel %vm232, %v286, 0.0
  %v303 = vsel %vm232, %v287, 0.0
  %v304 = vadd.f32 %v302, %v303
  %v305 = vsel %vm232, %v288, 0.0
  %v306 = vadd.f32 %v304, %v305
  %v307 = vsel %vm232, %v289, 0.0
  %v308 = vadd.f32 %v306, %v307
  %v309 = vsel %vm232, %v290, 0.0
  %v310 = vadd.f32 %v308, %v309
  %v311 = vsel %vm232, %v291, 0.0
  %v312 = vadd.f32 %v310, %v311
  %v313 = vsel %vm232, %v292, 0.0
  %v314 = vadd.f32 %v312, %v313
  %v315 = vsel %vm232, %v293, 0.0
  %v316 = vadd.f32 %v314, %v315
  %v317 = vsel %vm232, %v294, 0.0
  %v318 = vadd.f32 %v316, %v317
  %v319 = vsel %vm232, %v295, 0.0
  %v320 = vadd.f32 %v318, %v319
  %v321 = vsel %vm232, %v296, 0.0
  %v322 = vadd.f32 %v320, %v321
  %v323 = vsel %vm232, %v297, 0.0
  %v324 = vadd.f32 %v322, %v323
  %v325 = vsel %vm232, %v298, 0.0
  %v326 = vadd.f32 %v324, %v325
  %v327 = vsel %vm232, %v299, 0.0
  %v328 = vadd.f32 %v326, %v327
  %v329 = vsel %vm232, %v300, 0.0
  %v330 = vadd.f32 %v328, %v329
  %v331 = vsel %vm232, %v301, 0.0
  %v332 = vadd.f32 %v330, %v331
  %v333 = vrot.slane %v332, 4
  %v334 = vadd.f32 %v332, %v333
  %v335 = vrot.slane %v334, 2
  %v336 = vadd.f32 %v334, %v335
  %v337 = vrot.slane %v336, 1
  %v338 = vadd.f32 %v336, %v337
  %vm339 = vcmask 1040384
  %v340 = vsel %vm339, %v285, %v338
  %vm341 = vcmask 123904
  %342 = vst.msk [vmem:[%s3] sm:$0x3] %vm341, %v340
  // Predicated region
  $region10: #{unet_forward.29} parent=0 // pred_check
    _
  $region11: #{unet_forward.29} parent=0 // pred_check_branch
    %344 = sbr.rel (0) target = $region13
  $region12: #{unet_forward.29} parent=0 // pred_region
    _
  $region13: #{unet_forward.29} parent=0 // pred_fallthru
    _
  // Predicated region
  $region14: #{unet_forward.29} parent=0 // pred_check
    _
  $region15: #{unet_forward.29} parent=0 // pred_check_branch
    %346 = sbr.rel (0) target = $region17
  $region16: #{unet_forward.29} parent=0 // pred_region
    _
  $region17: #{unet_forward.29} parent=0 // pred_fallthru
    _
  // Predicated region
  $region18: #{unet_forward.29} parent=0 // pred_check
    _
  $region19: #{unet_forward.29} parent=0 // pred_check_branch
    %348 = sbr.rel (0) target = $region21
  $region20: #{unet_forward.29} parent=0 // pred_region
    _
  $region21: #{unet_forward.29} parent=0 // pred_fallthru
    _
  // Predicated region
  $region22: #{unet_forward.29} parent=0 // pred_check
    _
  $region23: #{unet_forward.29} parent=0 // pred_check_branch
    %350 = sbr.rel (0) target = $region25
  $region24: #{unet_forward.29} parent=0 // pred_region
    _
  $region25: #{unet_forward.29} parent=0 // pred_fallthru
    _

// kernel: unet_forward.30
$region0: #{unet_forward.30}
  #allocation0 [shape = 'u32[]', space=smem, size = 0x4, offset = 0x4, fixed_abs, tag = 'smem constant byte address 0x4 - core index']
  #allocation1 [shape = 'u32[144,128]{1,0:T(1,128)}', space=vmem, size = 0x12000, scoped, tag = 'internal scratch']
  %s0 = inlined_call_operand.vmem [shape: f32[128,16], index: 0, kind: input, shape index: {}]
  %s1 = inlined_call_operand.vmem [shape: f32[1,16], index: 1, kind: input, shape index: {}]
  %s2 = inlined_call_operand.vmem [shape: f32[1,16], index: 2, kind: input, shape index: {}]
  %s3 = inlined_call_operand.vmem [shape: bf16[128,16], index: 3, kind: output, shape index: {}]
  %s4 = sld [smem:[#allocation0]]
  $region22: #{unet_forward.30} parent=0
    _
  %s6 = ssub.s32 1, %s4
  %s7 = scalar_select 0, %s6, %s4
  // Predicated region
  $region2: #{unet_forward.30} parent=0 // pred_check
    _
  $region3: #{unet_forward.30} parent=0 // pred_check_branch
    %9 = sbr.rel (0) target = $region5
  $region4: #{unet_forward.30} parent=0 // pred_region
    _
  $region5: #{unet_forward.30} parent=0 // pred_fallthru
    _
  // Predicated region
  $region6: #{unet_forward.30} parent=0 // pred_check
    _
  $region7: #{unet_forward.30} parent=0 // pred_check_branch
    %11 = sbr.rel (0) target = $region9
  $region8: #{unet_forward.30} parent=0 // pred_region
    _
  $region9: #{unet_forward.30} parent=0 // pred_fallthru
    _
  // Predicated region
  $region10: #{unet_forward.30} parent=0 // pred_check
    _
  $region11: #{unet_forward.30} parent=0 // pred_check_branch
    %13 = sbr.rel (0) target = $region13
  $region12: #{unet_forward.30} parent=0 // pred_region
    _
  $region13: #{unet_forward.30} parent=0 // pred_fallthru
    _
  %v14 = vld [vmem:[%s0] sm:$0xff]
  %v15 = vld [vmem:[%s0 + $0x8] sm:$0xff]
  %v16 = vld [vmem:[%s0 + $0x10] sm:$0xff]
  %v17 = vld [vmem:[%s0 + $0x18] sm:$0xff]
  %v18 = vld [vmem:[%s0 + $0x20] sm:$0xff]
  %v19 = vld [vmem:[%s0 + $0x28] sm:$0xff]
  %v20 = vld [vmem:[%s0 + $0x30] sm:$0xff]
  %v21 = vld [vmem:[%s0 + $0x38] sm:$0xff]
  %v22 = vld [vmem:[%s0 + $0x40] sm:$0xff]
  %v23 = vld [vmem:[%s0 + $0x48] sm:$0xff]
  %v24 = vld [vmem:[%s0 + $0x50] sm:$0xff]
  %v25 = vld [vmem:[%s0 + $0x58] sm:$0xff]
  %v26 = vld [vmem:[%s0 + $0x60] sm:$0xff]
  %v27 = vld [vmem:[%s0 + $0x68] sm:$0xff]
  %v28 = vld [vmem:[%s0 + $0x70] sm:$0xff]
  %v29 = vld [vmem:[%s0 + $0x78] sm:$0xff]
  %v30 = vld [vmem:[%s1] sm:$0x1]
  %v32 = vlaneseq
  %v33 = vshrl.u32 %v32, 7
  %v34 = vsub.s32 0, %v33
  %v35 = vrot.slane %v30, %v34
  %v37 = vmul.f32 %v14, %v35
  %v38 = vmul.f32 %v15, %v35
  %v39 = vmul.f32 %v16, %v35
  %v40 = vmul.f32 %v17, %v35
  %v41 = vmul.f32 %v18, %v35
  %v42 = vmul.f32 %v19, %v35
  %v43 = vmul.f32 %v20, %v35
  %v44 = vmul.f32 %v21, %v35
  %v45 = vmul.f32 %v22, %v35
  %v46 = vmul.f32 %v23, %v35
  %v47 = vmul.f32 %v24, %v35
  %v48 = vmul.f32 %v25, %v35
  %v49 = vmul.f32 %v26, %v35
  %v50 = vmul.f32 %v27, %v35
  %v51 = vmul.f32 %v28, %v35
  %v52 = vmul.f32 %v29, %v35
  %v53 = vld [vmem:[%s2] sm:$0x1]
  %v55 = vlaneseq
  %v56 = vshrl.u32 %v55, 7
  %v57 = vsub.s32 0, %v56
  %v58 = vrot.slane %v53, %v57
  %v60 = vadd.f32 %v37, %v58
  %v61 = vadd.f32 %v38, %v58
  %v62 = vadd.f32 %v39, %v58
  %v63 = vadd.f32 %v40, %v58
  %v64 = vadd.f32 %v41, %v58
  %v65 = vadd.f32 %v42, %v58
  %v66 = vadd.f32 %v43, %v58
  %v67 = vadd.f32 %v44, %v58
  %v68 = vadd.f32 %v45, %v58
  %v69 = vadd.f32 %v46, %v58
  %v70 = vadd.f32 %v47, %v58
  %v71 = vadd.f32 %v48, %v58
  %v72 = vadd.f32 %v49, %v58
  %v73 = vadd.f32 %v50, %v58
  %v74 = vadd.f32 %v51, %v58
  %v75 = vadd.f32 %v52, %v58
  %v76 = vmax.f32 %v60, 0.0
  %v77 = vmax.f32 %v61, 0.0
  %v78 = vmax.f32 %v62, 0.0
  %v79 = vmax.f32 %v63, 0.0
  %v80 = vmax.f32 %v64, 0.0
  %v81 = vmax.f32 %v65, 0.0
  %v82 = vmax.f32 %v66, 0.0
  %v83 = vmax.f32 %v67, 0.0
  %v84 = vmax.f32 %v68, 0.0
  %v85 = vmax.f32 %v69, 0.0
  %v86 = vmax.f32 %v70, 0.0
  %v87 = vmax.f32 %v71, 0.0
  %v88 = vmax.f32 %v72, 0.0
  %v89 = vmax.f32 %v73, 0.0
  %v90 = vmax.f32 %v74, 0.0
  %v91 = vmax.f32 %v75, 0.0
  %v92 = vpack.c.bf16 %v77, %v76
  %v93 = vpack.c.bf16 %v79, %v78
  %v94 = vpack.c.bf16 %v81, %v80
  %v95 = vpack.c.bf16 %v83, %v82
  %v96 = vpack.c.bf16 %v85, %v84
  %v97 = vpack.c.bf16 %v87, %v86
  %v98 = vpack.c.bf16 %v89, %v88
  %v99 = vpack.c.bf16 %v91, %v90
  %v108 = vunpack.c.l.b16 %v92
  %v109 = vunpack.c.h.b16 %v92
  %v110 = vunpack.c.l.b16 %v93
  %v111 = vunpack.c.h.b16 %v93
  %v112 = vunpack.c.l.b16 %v94
  %v113 = vunpack.c.h.b16 %v94
  %v114 = vunpack.c.l.b16 %v95
  %v115 = vunpack.c.h.b16 %v95
  %v116 = vunpack.c.l.b16 %v96
  %v117 = vunpack.c.h.b16 %v96
  %v118 = vunpack.c.l.b16 %v97
  %v119 = vunpack.c.h.b16 %v97
  %v120 = vunpack.c.l.b16 %v98
  %v121 = vunpack.c.h.b16 %v98
  %v122 = vunpack.c.l.b16 %v99
  %v123 = vunpack.c.h.b16 %v99
  %v124 = vpack.c.b16 %v108, %v108
  %v125 = vpack.c.b16 %v109, %v109
  %v126 = vpack.c.b16 %v110, %v110
  %v127 = vpack.c.b16 %v111, %v111
  %v128 = vpack.c.b16 %v112, %v112
  %v129 = vpack.c.b16 %v113, %v113
  %v130 = vpack.c.b16 %v114, %v114
  %v131 = vpack.c.b16 %v115, %v115
  %v132 = vpack.c.b16 %v116, %v116
  %v133 = vpack.c.b16 %v117, %v117
  %v134 = vpack.c.b16 %v118, %v118
  %v135 = vpack.c.b16 %v119, %v119
  %v136 = vpack.c.b16 %v120, %v120
  %v137 = vpack.c.b16 %v121, %v121
  %v138 = vpack.c.b16 %v122, %v122
  %v139 = vpack.c.b16 %v123, %v123
  %vm156 = vcmask 125952
  %157 = vst.msk [vmem:[%s3] sm:$0xf] %vm156, %v124
  %158 = vst.msk [vmem:[%s3 + $0x4] sm:$0xf] %vm156, %v125
  %159 = vst.msk [vmem:[%s3 + $0x8] sm:$0xf] %vm156, %v126
  %160 = vst.msk [vmem:[%s3 + $0xc] sm:$0xf] %vm156, %v127
  %161 = vst.msk [vmem:[%s3 + $0x10] sm:$0xf] %vm156, %v128
  %162 = vst.msk [vmem:[%s3 + $0x14] sm:$0xf] %vm156, %v129
  %163 = vst.msk [vmem:[%s3 + $0x18] sm:$0xf] %vm156, %v130
  %164 = vst.msk [vmem:[%s3 + $0x1c] sm:$0xf] %vm156, %v131
  %165 = vst.msk [vmem:[%s3 + $0x20] sm:$0xf] %vm156, %v132
  %166 = vst.msk [vmem:[%s3 + $0x24] sm:$0xf] %vm156, %v133
  %167 = vst.msk [vmem:[%s3 + $0x28] sm:$0xf] %vm156, %v134
  %168 = vst.msk [vmem:[%s3 + $0x2c] sm:$0xf] %vm156, %v135
  %169 = vst.msk [vmem:[%s3 + $0x30] sm:$0xf] %vm156, %v136
  %170 = vst.msk [vmem:[%s3 + $0x34] sm:$0xf] %vm156, %v137
  %171 = vst.msk [vmem:[%s3 + $0x38] sm:$0xf] %vm156, %v138
  %172 = vst.msk [vmem:[%s3 + $0x3c] sm:$0xf] %vm156, %v139
  // Predicated region
  $region14: #{unet_forward.30} parent=0 // pred_check
    _
  $region15: #{unet_forward.30} parent=0 // pred_check_branch
    %174 = sbr.rel (0) target = $region17
  $region16: #{unet_forward.30} parent=0 // pred_region
    _
  $region17: #{unet_forward.30} parent=0 // pred_fallthru
    _
  // Predicated region
  $region18: #{unet_forward.30} parent=0 // pred_check
    _
  $region19: #{unet_forward.30} parent=0 // pred_check_branch
    %176 = sbr.rel (0) target = $region21
  $region20: #{unet_forward.30} parent=0 // pred_region
    _
  $region21: #{unet_forward.30} parent=0 // pred_fallthru
    _

// kernel: unet_forward.33
$region0: #{unet_forward.33}
  #allocation0 [shape = 'u32[]', space=smem, size = 0x4, offset = 0x4, fixed_abs, tag = 'smem constant byte address 0x4 - core index']
  #allocation1 [shape = 'u32[144,128]{1,0:T(1,128)}', space=vmem, size = 0x12000, scoped, tag = 'internal scratch']
  %s0 = inlined_call_operand.vmem [shape: bf16[2,4,2,4,2,16], index: 0, kind: input, shape index: {}]
  %s1 = inlined_call_operand.vmem [shape: bf16[2,4,4,16], index: 1, kind: output, shape index: {}]
  %s2 = sld [smem:[#allocation0]]
  $region37: #{unet_forward.33} parent=0
    _
  %s4 = ssub.s32 1, %s2
  %s5 = scalar_select 0, %s4, %s2
  loop: start=0, step=1, limit=4
  $region2: #{unet_forward.33} parent=0 // loop_pre_header
    _
  $region3: #{unet_forward.33} parent=0 // loop_header
    %s7 = sphi 0, %s11
    %p8 = scmp.ge.s32.totalorder %s7, 4
    %s14 = sphi 0, %s26
    %s15 = sphi 0, %s22
    %s16 = sphi 0, %s14
    %s17 = sphi 0, %s15
    %s18 = sphi 0, %s16
    %s19 = sphi 0, %s17
    %s31 = sphi 0, %s33
    %s34 = sphi 0, %s31
    %s35 = sphi 0, %s34
    %s51 = sphi 0, %s35
    %s59 = sphi 0, %s61
    %s62 = sphi 0, %s59
    %s63 = sphi 0, %s62
    %s79 = sphi 0, %s63
  $region4: #{unet_forward.33} parent=0 // loop_header_branch
    %10 = sbr.rel (%p8) target = $region8
  $region5: #{unet_forward.33} parent=0 // loop_body
    %s12 = ssub.s32 %s7, 1
    %s13 = ssub.s32 %s7, 2
    %s20 = sadd.s32 1, %s15
    %p21 = scmp.ge.s32.totalorder %s20, 1
    %s22 = scalar_select %p21, 0, %s20
    %s23 = sadd.s32 1, %s14
    %s24 = scalar_select %p21, %s23, %s14
    %p25 = scmp.ge.s32.totalorder %s24, 2
    %s26 = scalar_select %p25, 0, %s24
    %s27 = ssub.s32 %s14, %s26
    %s28 = ssub.s32 %s15, %s22
    %s29 = sor.u32 %s27, %s28
    %p30 = scmp.eq.s32.totalorder %s29, 0
    %s32 = sadd.s32 %s31, 1
    %s33 = scalar_select %p30, %s31, %s32
    %p36 = pneg %p30
    %p37 = scmp.eq.s32.totalorder %s7, 1
    %p38 = por %p36, %p37
    %p39 = scmp.ne.s32.totalorder %s31, %s34
    %p40 = scmp.eq.s32.totalorder %s7, 0
    %p41 = por %p39, %p40
    %p42 = scmp.ne.s32.totalorder %s31, %s34
    %p43 = scmp.eq.s32.totalorder %s12, 1
    %p44 = por %p42, %p43
    %p45 = scmp.ne.s32.totalorder %s34, %s35
    %p46 = scmp.eq.s32.totalorder %s12, 0
    %p47 = por %p45, %p46
    %p48 = scmp.ne.s32.totalorder %s34, %s35
    %p49 = scmp.eq.s32.totalorder %s13, 1
    %p50 = por %p48, %p49
    %p52 = scmp.ne.s32.totalorder %s35, %s51
    %p53 = scmp.eq.s32.totalorder %s13, 0
    %p54 = por %p52, %p53
    %s55 = ssub.s32 %s14, %s26
    %s56 = ssub.s32 %s15, %s22
    %s57 = sor.u32 %s55, %s56
    %p58 = scmp.eq.s32.totalorder %s57, 0
    %s60 = sadd.s32 %s59, 1
    %s61 = scalar_select %p58, %s59, %s60
    %p64 = pneg %p58
    %p65 = scmp.eq.s32.totalorder %s7, 1
    %p66 = por %p64, %p65
    %p67 = scmp.ne.s32.totalorder %s59, %s62
    %p68 = scmp.eq.s32.totalorder %s7, 0
    %p69 = por %p67, %p68
    %p70 = scmp.ne.s32.totalorder %s59, %s62
    %p71 = scmp.eq.s32.totalorder %s12, 1
    %p72 = por %p70, %p71
    %p73 = scmp.ne.s32.totalorder %s62, %s63
    %p74 = scmp.eq.s32.totalorder %s12, 0
    %p75 = por %p73, %p74
    %p76 = scmp.ne.s32.totalorder %s62, %s63
    %p77 = scmp.eq.s32.totalorder %s13, 1
    %p78 = por %p76, %p77
    %p80 = scmp.ne.s32.totalorder %s63, %s79
    %p81 = scmp.eq.s32.totalorder %s13, 0
    %p82 = por %p80, %p81
    %p83 = scmp.le.s32.totalorder 1, %s7
    %p84 = scmp.lt.s32.totalorder %s7, 3
    %p85 = pnand %p83, %p84
    %p86 = pneg %p85
    // Predicated region
    $region9: #{unet_forward.33} parent=5 // pred_check
      _
    $region10: #{unet_forward.33} parent=5 // pred_check_branch
      %88 = sbr.rel (%p85) target = $region12
    $region11: #{unet_forward.33} parent=5 // pred_region
      %s89 = ssub.s32 %s7, 1
    $region12: #{unet_forward.33} parent=5 // pred_fallthru
      _
    %p90 = scmp.lt.s32.totalorder %s7, 2
    // Predicated region
    $region13: #{unet_forward.33} parent=5 // pred_check
      %p91 = pneg %p90
    $region14: #{unet_forward.33} parent=5 // pred_check_branch
      %93 = sbr.rel (%p91) target = $region16
    $region15: #{unet_forward.33} parent=5 // pred_region
      // Predicated region
      $region17: #{unet_forward.33} parent=15 // pred_check
        %p94 = pneg %p41
      $region18: #{unet_forward.33} parent=15 // pred_check_branch
        %96 = sbr.rel (%p94) target = $region20
      $region19: #{unet_forward.33} parent=15 // pred_region
        %s97 = smul.u32 4, %s15
        %p98 = scmp.lt.s32.totalorder %s14, 1
        %s99 = scalar_select %p98, %s14, 1
        %p100 = scmp.lt.s32.totalorder %s97, 3
        %s101 = scalar_select %p100, %s97, 3
        %s102 = smul.addr %s101, 8
        %s103 = smul.addr %s99, 32
        %s104 = sadd.s32 %s102, %s103
        %s105 = scalar_lea.vmem %s0, %s104
        %s106 = smul.u32 4, %s15
      $region20: #{unet_forward.33} parent=15 // pred_fallthru
        _
    $region16: #{unet_forward.33} parent=5 // pred_fallthru
      _
    %p107 = scmp.le.s32.totalorder 1, %s7
    %p108 = scmp.lt.s32.totalorder %s7, 3
    %p109 = pnand %p107, %p108
    %p110 = pneg %p109
    // Predicated region
    $region21: #{unet_forward.33} parent=5 // pred_check
      _
    $region22: #{unet_forward.33} parent=5 // pred_check_branch
      %112 = sbr.rel (%p109) target = $region24
    $region23: #{unet_forward.33} parent=5 // pred_region
      %s113 = ssub.s32 %s7, 1
      %s114 = smul.u32 4, %s17
      %p115 = scmp.lt.s32.totalorder %s16, 1
      %s116 = scalar_select %p115, %s16, 1
      %p117 = scmp.lt.s32.totalorder %s114, 3
      %s118 = scalar_select %p117, %s114, 3
      %s119 = smul.addr %s118, 8
      %s120 = smul.addr %s116, 32
      %s121 = sadd.s32 %s119, %s120
      %s122 = scalar_lea.vmem %s0, %s121
      %p123 = pneg %p47
      %p124 = pneg %p44
      %p125 = pneg %p75
      %p126 = pneg %p72
      %s127 = smul.u32 4, %s17
      %p128 = scmp.lt.s32.totalorder %s16, 1
      %s129 = scalar_select %p128, %s16, 1
      %p130 = scmp.lt.s32.totalorder %s127, 3
      %s131 = scalar_select %p130, %s127, 3
      %s132 = smul.addr %s129, 4
      %s133 = sadd.s32 %s131, %s132
      %s134 = smul.addr %s133, 2
      %s135 = scalar_lea.vmem %s1, %s134
      %s136 = smul.u32 4, %s17
      %p137 = scmp.lt.s32.totalorder %s16, 1
      %s138 = scalar_select %p137, %s16, 1
      %p139 = scmp.lt.s32.totalorder %s136, 3
      %s140 = scalar_select %p139, %s136, 3
      %s141 = smul.addr %s140, 8
      %s142 = smul.addr %s138, 32
      %s143 = sadd.s32 %s141, %s142
      %s144 = scalar_lea.vmem %s0, %s143
      %s145 = smul.u32 4, %s17
      %s146 = smul.u32 4, %s17
      %p147 = scmp.lt.s32.totalorder %s16, 1
      %s148 = scalar_select %p147, %s16, 1
      %p149 = scmp.lt.s32.totalorder %s146, 3
      %s150 = scalar_select %p149, %s146, 3
      %s151 = smul.addr %s148, 4
      %s152 = sadd.s32 %s150, %s151
      %s153 = smul.addr %s152, 2
      %s154 = scalar_lea.vmem %s1, %s153
      %s155 = smul.u32 4, %s17
      %v157 = vld [vmem:[%s144] sm:$0x1]
      %v158 = vld [vmem:[%s144 + $0x1] sm:$0x1]
      %v159 = vld [vmem:[%s144 + $0x2] sm:$0x1]
      %v160 = vld [vmem:[%s144 + $0x3] sm:$0x1]
      %v161 = vld [vmem:[%s144 + $0x4] sm:$0x1]
      %v162 = vld [vmem:[%s144 + $0x5] sm:$0x1]
      %v163 = vld [vmem:[%s144 + $0x6] sm:$0x1]
      %v164 = vld [vmem:[%s144 + $0x7] sm:$0x1]
      %v165 = vld [vmem:[%s144 + $0x8] sm:$0x1]
      %v166 = vld [vmem:[%s144 + $0x9] sm:$0x1]
      %v167 = vld [vmem:[%s144 + $0xa] sm:$0x1]
      %v168 = vld [vmem:[%s144 + $0xb] sm:$0x1]
      %v169 = vld [vmem:[%s144 + $0xc] sm:$0x1]
      %v170 = vld [vmem:[%s144 + $0xd] sm:$0x1]
      %v171 = vld [vmem:[%s144 + $0xe] sm:$0x1]
      %v172 = vld [vmem:[%s144 + $0xf] sm:$0x1]
      %v173 = vld [vmem:[%s144 + $0x10] sm:$0x1]
      %v174 = vld [vmem:[%s144 + $0x11] sm:$0x1]
      %v175 = vld [vmem:[%s144 + $0x12] sm:$0x1]
      %v176 = vld [vmem:[%s144 + $0x13] sm:$0x1]
      %v177 = vld [vmem:[%s144 + $0x14] sm:$0x1]
      %v178 = vld [vmem:[%s144 + $0x15] sm:$0x1]
      %v179 = vld [vmem:[%s144 + $0x16] sm:$0x1]
      %v180 = vld [vmem:[%s144 + $0x17] sm:$0x1]
      %v181 = vld [vmem:[%s144 + $0x18] sm:$0x1]
      %v182 = vld [vmem:[%s144 + $0x19] sm:$0x1]
      %v183 = vld [vmem:[%s144 + $0x1a] sm:$0x1]
      %v184 = vld [vmem:[%s144 + $0x1b] sm:$0x1]
      %v185 = vld [vmem:[%s144 + $0x1c] sm:$0x1]
      %v186 = vld [vmem:[%s144 + $0x1d] sm:$0x1]
      %v187 = vld [vmem:[%s144 + $0x1e] sm:$0x1]
      %v188 = vld [vmem:[%s144 + $0x1f] sm:$0x1]
      %v189 = vmax.bf16 %v157, %v161
      %v190 = vmax.bf16 %v158, %v162
      %v191 = vmax.bf16 %v159, %v163
      %v192 = vmax.bf16 %v160, %v164
      %v193 = vmax.bf16 %v165, %v169
      %v194 = vmax.bf16 %v166, %v170
      %v195 = vmax.bf16 %v167, %v171
      %v196 = vmax.bf16 %v168, %v172
      %v197 = vmax.bf16 %v173, %v177
      %v198 = vmax.bf16 %v174, %v178
      %v199 = vmax.bf16 %v175, %v179
      %v200 = vmax.bf16 %v176, %v180
      %v201 = vmax.bf16 %v181, %v185
      %v202 = vmax.bf16 %v182, %v186
      %v203 = vmax.bf16 %v183, %v187
      %v204 = vmax.bf16 %v184, %v188
      %vm205 = vcmask 122880
      %v208 = vsel %vm205, %v189, 4286644096
      %v210 = vunpack.i.l.bf16 %v208
      %v211 = vunpack.i.h.bf16 %v208
      %v212 = vmax.f32 %v210, %v211
      %v213 = vrot.slane %v212, 4
      %v214 = vmax.f32 %v212, %v213
      %v215 = vrot.slane %v214, 2
      %v216 = vmax.f32 %v214, %v215
      %v217 = vrot.slane %v216, 1
      %v218 = vmax.f32 %v216, %v217
      %v219 = vpack.i.bf16 %v218, %v218
      %v221 = vsel %vm205, %v190, 4286644096
      %v223 = vunpack.i.l.bf16 %v221
      %v224 = vunpack.i.h.bf16 %v221
      %v225 = vmax.f32 %v223, %v224
      %v226 = vrot.slane %v225, 4
      %v227 = vmax.f32 %v225, %v226
      %v228 = vrot.slane %v227, 2
      %v229 = vmax.f32 %v227, %v228
      %v230 = vrot.slane %v229, 1
      %v231 = vmax.f32 %v229, %v230
      %v232 = vpack.i.bf16 %v231, %v231
      %v234 = vsel %vm205, %v191, 4286644096
      %v236 = vunpack.i.l.bf16 %v234
      %v237 = vunpack.i.h.bf16 %v234
      %v238 = vmax.f32 %v236, %v237
      %v239 = vrot.slane %v238, 4
      %v240 = vmax.f32 %v238, %v239
      %v241 = vrot.slane %v240, 2
      %v242 = vmax.f32 %v240, %v241
      %v243 = vrot.slane %v242, 1
      %v244 = vmax.f32 %v242, %v243
      %v245 = vpack.i.bf16 %v244, %v244
      %v247 = vsel %vm205, %v192, 4286644096
      %v249 = vunpack.i.l.bf16 %v247
      %v250 = vunpack.i.h.bf16 %v247
      %v251 = vmax.f32 %v249, %v250
      %v252 = vrot.slane %v251, 4
      %v253 = vmax.f32 %v251, %v252
      %v254 = vrot.slane %v253, 2
      %v255 = vmax.f32 %v253, %v254
      %v256 = vrot.slane %v255, 1
      %v257 = vmax.f32 %v255, %v256
      %v258 = vpack.i.bf16 %v257, %v257
      %v260 = vsel %vm205, %v193, 4286644096
      %v262 = vunpack.i.l.bf16 %v260
      %v263 = vunpack.i.h.bf16 %v260
      %v264 = vmax.f32 %v262, %v263
      %v265 = vrot.slane %v264, 4
      %v266 = vmax.f32 %v264, %v265
      %v267 = vrot.slane %v266, 2
      %v268 = vmax.f32 %v266, %v267
      %v269 = vrot.slane %v268, 1
      %v270 = vmax.f32 %v268, %v269
      %v271 = vpack.i.bf16 %v270, %v270
      %v273 = vsel %vm205, %v194, 4286644096
      %v275 = vunpack.i.l.bf16 %v273
      %v276 = vunpack.i.h.bf16 %v273
      %v277 = vmax.f32 %v275, %v276
      %v278 = vrot.slane %v277, 4
      %v279 = vmax.f32 %v277, %v278
      %v280 = vrot.slane %v279, 2
      %v281 = vmax.f32 %v279, %v280
      %v282 = vrot.slane %v281, 1
      %v283 = vmax.f32 %v281, %v282
      %v284 = vpack.i.bf16 %v283, %v283
      %v286 = vsel %vm205, %v195, 4286644096
      %v288 = vunpack.i.l.bf16 %v286
      %v289 = vunpack.i.h.bf16 %v286
      %v290 = vmax.f32 %v288, %v289
      %v291 = vrot.slane %v290, 4
      %v292 = vmax.f32 %v290, %v291
      %v293 = vrot.slane %v292, 2
      %v294 = vmax.f32 %v292, %v293
      %v295 = vrot.slane %v294, 1
      %v296 = vmax.f32 %v294, %v295
      %v297 = vpack.i.bf16 %v296, %v296
      %v299 = vsel %vm205, %v196, 4286644096
      %v301 = vunpack.i.l.bf16 %v299
      %v302 = vunpack.i.h.bf16 %v299
      %v303 = vmax.f32 %v301, %v302
      %v304 = vrot.slane %v303, 4
      %v305 = vmax.f32 %v303, %v304
      %v306 = vrot.slane %v305, 2
      %v307 = vmax.f32 %v305, %v306
      %v308 = vrot.slane %v307, 1
      %v309 = vmax.f32 %v307, %v308
      %v310 = vpack.i.bf16 %v309, %v309
      %v312 = vsel %vm205, %v197, 4286644096
      %v314 = vunpack.i.l.bf16 %v312
      %v315 = vunpack.i.h.bf16 %v312
      %v316 = vmax.f32 %v314, %v315
      %v317 = vrot.slane %v316, 4
      %v318 = vmax.f32 %v316, %v317
      %v319 = vrot.slane %v318, 2
      %v320 = vmax.f32 %v318, %v319
      %v321 = vrot.slane %v320, 1
      %v322 = vmax.f32 %v320, %v321
      %v323 = vpack.i.bf16 %v322, %v322
      %v325 = vsel %vm205, %v198, 4286644096
      %v327 = vunpack.i.l.bf16 %v325
      %v328 = vunpack.i.h.bf16 %v325
      %v329 = vmax.f32 %v327, %v328
      %v330 = vrot.slane %v329, 4
      %v331 = vmax.f32 %v329, %v330
      %v332 = vrot.slane %v331, 2
      %v333 = vmax.f32 %v331, %v332
      %v334 = vrot.slane %v333, 1
      %v335 = vmax.f32 %v333, %v334
      %v336 = vpack.i.bf16 %v335, %v335
      %v338 = vsel %vm205, %v199, 4286644096
      %v340 = vunpack.i.l.bf16 %v338
      %v341 = vunpack.i.h.bf16 %v338
      %v342 = vmax.f32 %v340, %v341
      %v343 = vrot.slane %v342, 4
      %v344 = vmax.f32 %v342, %v343
      %v345 = vrot.slane %v344, 2
      %v346 = vmax.f32 %v344, %v345
      %v347 = vrot.slane %v346, 1
      %v348 = vmax.f32 %v346, %v347
      %v349 = vpack.i.bf16 %v348, %v348
      %v351 = vsel %vm205, %v200, 4286644096
      %v353 = vunpack.i.l.bf16 %v351
      %v354 = vunpack.i.h.bf16 %v351
      %v355 = vmax.f32 %v353, %v354
      %v356 = vrot.slane %v355, 4
      %v357 = vmax.f32 %v355, %v356
      %v358 = vrot.slane %v357, 2
      %v359 = vmax.f32 %v357, %v358
      %v360 = vrot.slane %v359, 1
      %v361 = vmax.f32 %v359, %v360
      %v362 = vpack.i.bf16 %v361, %v361
      %v364 = vsel %vm205, %v201, 4286644096
      %v366 = vunpack.i.l.bf16 %v364
      %v367 = vunpack.i.h.bf16 %v364
      %v368 = vmax.f32 %v366, %v367
      %v369 = vrot.slane %v368, 4
      %v370 = vmax.f32 %v368, %v369
      %v371 = vrot.slane %v370, 2
      %v372 = vmax.f32 %v370, %v371
      %v373 = vrot.slane %v372, 1
      %v374 = vmax.f32 %v372, %v373
      %v375 = vpack.i.bf16 %v374, %v374
      %v377 = vsel %vm205, %v202, 4286644096
      %v379 = vunpack.i.l.bf16 %v377
      %v380 = vunpack.i.h.bf16 %v377
      %v381 = vmax.f32 %v379, %v380
      %v382 = vrot.slane %v381, 4
      %v383 = vmax.f32 %v381, %v382
      %v384 = vrot.slane %v383, 2
      %v385 = vmax.f32 %v383, %v384
      %v386 = vrot.slane %v385, 1
      %v387 = vmax.f32 %v385, %v386
      %v388 = vpack.i.bf16 %v387, %v387
      %v390 = vsel %vm205, %v203, 4286644096
      %v392 = vunpack.i.l.bf16 %v390
      %v393 = vunpack.i.h.bf16 %v390
      %v394 = vmax.f32 %v392, %v393
      %v395 = vrot.slane %v394, 4
      %v396 = vmax.f32 %v394, %v395
      %v397 = vrot.slane %v396, 2
      %v398 = vmax.f32 %v396, %v397
      %v399 = vrot.slane %v398, 1
      %v400 = vmax.f32 %v398, %v399
      %v401 = vpack.i.bf16 %v400, %v400
      %v403 = vsel %vm205, %v204, 4286644096
      %v405 = vunpack.i.l.bf16 %v403
      %v406 = vunpack.i.h.bf16 %v403
      %v407 = vmax.f32 %v405, %v406
      %v408 = vrot.slane %v407, 4
      %v409 = vmax.f32 %v407, %v408
      %v410 = vrot.slane %v409, 2
      %v411 = vmax.f32 %v409, %v410
      %v412 = vrot.slane %v411, 1
      %v413 = vmax.f32 %v411, %v412
      %v414 = vpack.i.bf16 %v413, %v413
      %v432 = vunpack.c.l.s4 1983009808
      %v433 = vunpack.c.0.s8 %v432
      %v434 = vlaneseq
      %v435 = vshrl.u32 %v434, 7
      %v436 = vsub.s32 %v433, %v435
      %v437 = vrot.slane %v219, %v436
      %v439 = vunpack.c.l.s4 1983009808
      %v440 = vunpack.c.0.s8 %v439
      %v441 = vlaneseq
      %v442 = vshrl.u32 %v441, 7
      %v443 = vsub.s32 %v440, %v442
      %v444 = vrot.slane %v232, %v443
      %v446 = vunpack.c.l.s4 1983009808
      %v447 = vunpack.c.0.s8 %v446
      %v448 = vlaneseq
      %v449 = vshrl.u32 %v448, 7
      %v450 = vsub.s32 %v447, %v449
      %v451 = vrot.slane %v245, %v450
      %v453 = vunpack.c.l.s4 1983009808
      %v454 = vunpack.c.0.s8 %v453
      %v455 = vlaneseq
      %v456 = vshrl.u32 %v455, 7
      %v457 = vsub.s32 %v454, %v456
      %v458 = vrot.slane %v258, %v457
      %v460 = vunpack.c.l.s4 1983009808
      %v461 = vunpack.c.0.s8 %v460
      %v462 = vlaneseq
      %v463 = vshrl.u32 %v462, 7
      %v464 = vsub.s32 %v461, %v463
      %v465 = vrot.slane %v271, %v464
      %v467 = vunpack.c.l.s4 1983009808
      %v468 = vunpack.c.0.s8 %v467
      %v469 = vlaneseq
      %v470 = vshrl.u32 %v469, 7
      %v471 = vsub.s32 %v468, %v470
      %v472 = vrot.slane %v284, %v471
      %v474 = vunpack.c.l.s4 1983009808
      %v475 = vunpack.c.0.s8 %v474
      %v476 = vlaneseq
      %v477 = vshrl.u32 %v476, 7
      %v478 = vsub.s32 %v475, %v477
      %v479 = vrot.slane %v297, %v478
      %v481 = vunpack.c.l.s4 1983009808
      %v482 = vunpack.c.0.s8 %v481
      %v483 = vlaneseq
      %v484 = vshrl.u32 %v483, 7
      %v485 = vsub.s32 %v482, %v484
      %v486 = vrot.slane %v310, %v485
      %v488 = vunpack.c.l.s4 1983009808
      %v489 = vunpack.c.0.s8 %v488
      %v490 = vlaneseq
      %v491 = vshrl.u32 %v490, 7
      %v492 = vsub.s32 %v489, %v491
      %v493 = vrot.slane %v323, %v492
      %v495 = vunpack.c.l.s4 1983009808
      %v496 = vunpack.c.0.s8 %v495
      %v497 = vlaneseq
      %v498 = vshrl.u32 %v497, 7
      %v499 = vsub.s32 %v496, %v498
      %v500 = vrot.slane %v336, %v499
      %v502 = vunpack.c.l.s4 1983009808
      %v503 = vunpack.c.0.s8 %v502
      %v504 = vlaneseq
      %v505 = vshrl.u32 %v504, 7
      %v506 = vsub.s32 %v503, %v505
      %v507 = vrot.slane %v349, %v506
      %v509 = vunpack.c.l.s4 1983009808
      %v510 = vunpack.c.0.s8 %v509
      %v511 = vlaneseq
      %v512 = vshrl.u32 %v511, 7
      %v513 = vsub.s32 %v510, %v512
      %v514 = vrot.slane %v362, %v513
      %v516 = vunpack.c.l.s4 1983009808
      %v517 = vunpack.c.0.s8 %v516
      %v518 = vlaneseq
      %v519 = vshrl.u32 %v518, 7
      %v520 = vsub.s32 %v517, %v519
      %v521 = vrot.slane %v375, %v520
      %v523 = vunpack.c.l.s4 1983009808
      %v524 = vunpack.c.0.s8 %v523
      %v525 = vlaneseq
      %v526 = vshrl.u32 %v525, 7
      %v527 = vsub.s32 %v524, %v526
      %v528 = vrot.slane %v388, %v527
      %v530 = vunpack.c.l.s4 1983009808
      %v531 = vunpack.c.0.s8 %v530
      %v532 = vlaneseq
      %v533 = vshrl.u32 %v532, 7
      %v534 = vsub.s32 %v531, %v533
      %v535 = vrot.slane %v401, %v534
      %v537 = vunpack.c.l.s4 1983009808
      %v538 = vunpack.c.0.s8 %v537
      %v539 = vlaneseq
      %v540 = vshrl.u32 %v539, 7
      %v541 = vsub.s32 %v538, %v540
      %v542 = vrot.slane %v414, %v541
      %v544 = vunpack.c.l.s4 1983009808
      %v545 = vunpack.c.0.s8 %v544
      %v546 = vlaneseq
      %v547 = vshrl.u32 %v546, 7
      %v548 = vsub.s32 %v545, %v547
      %v549 = vrot.slane %v437, %v548
      %v551 = vunpack.c.l.s4 1983009808
      %v552 = vunpack.c.0.s8 %v551
      %v553 = vlaneseq
      %v554 = vshrl.u32 %v553, 7
      %v555 = vsub.s32 %v552, %v554
      %v556 = vrot.slane %v444, %v555
      %v558 = vunpack.c.l.s4 1983009808
      %v559 = vunpack.c.0.s8 %v558
      %v560 = vlaneseq
      %v561 = vshrl.u32 %v560, 7
      %v562 = vsub.s32 %v559, %v561
      %v563 = vrot.slane %v451, %v562
      %v565 = vunpack.c.l.s4 1983009808
      %v566 = vunpack.c.0.s8 %v565
      %v567 = vlaneseq
      %v568 = vshrl.u32 %v567, 7
      %v569 = vsub.s32 %v566, %v568
      %v570 = vrot.slane %v458, %v569
      %v572 = vunpack.c.l.s4 1983009808
      %v573 = vunpack.c.0.s8 %v572
      %v574 = vlaneseq
      %v575 = vshrl.u32 %v574, 7
      %v576 = vsub.s32 %v573, %v575
      %v577 = vrot.slane %v465, %v576
      %v579 = vunpack.c.l.s4 1983009808
      %v580 = vunpack.c.0.s8 %v579
      %v581 = vlaneseq
      %v582 = vshrl.u32 %v581, 7
      %v583 = vsub.s32 %v580, %v582
      %v584 = vrot.slane %v472, %v583
      %v586 = vunpack.c.l.s4 1983009808
      %v587 = vunpack.c.0.s8 %v586
      %v588 = vlaneseq
      %v589 = vshrl.u32 %v588, 7
      %v590 = vsub.s32 %v587, %v589
      %v591 = vrot.slane %v479, %v590
      %v593 = vunpack.c.l.s4 1983009808
      %v594 = vunpack.c.0.s8 %v593
      %v595 = vlaneseq
      %v596 = vshrl.u32 %v595, 7
      %v597 = vsub.s32 %v594, %v596
      %v598 = vrot.slane %v486, %v597
      %v600 = vunpack.c.l.s4 1983009808
      %v601 = vunpack.c.0.s8 %v600
      %v602 = vlaneseq
      %v603 = vshrl.u32 %v602, 7
      %v604 = vsub.s32 %v601, %v603
      %v605 = vrot.slane %v493, %v604
      %v607 = vunpack.c.l.s4 1983009808
      %v608 = vunpack.c.0.s8 %v607
      %v609 = vlaneseq
      %v610 = vshrl.u32 %v609, 7
      %v611 = vsub.s32 %v608, %v610
      %v612 = vrot.slane %v500, %v611
      %v614 = vunpack.c.l.s4 1983009808
      %v615 = vunpack.c.0.s8 %v614
      %v616 = vlaneseq
      %v617 = vshrl.u32 %v616, 7
      %v618 = vsub.s32 %v615, %v617
      %v619 = vrot.slane %v507, %v618
      %v621 = vunpack.c.l.s4 1983009808
      %v622 = vunpack.c.0.s8 %v621
      %v623 = vlaneseq
      %v624 = vshrl.u32 %v623, 7
      %v625 = vsub.s32 %v622, %v624
      %v626 = vrot.slane %v514, %v625
      %v628 = vunpack.c.l.s4 1983009808
      %v629 = vunpack.c.0.s8 %v628
      %v630 = vlaneseq
      %v631 = vshrl.u32 %v630, 7
      %v632 = vsub.s32 %v629, %v631
      %v633 = vrot.slane %v521, %v632
      %v635 = vunpack.c.l.s4 1983009808
      %v636 = vunpack.c.0.s8 %v635
      %v637 = vlaneseq
      %v638 = vshrl.u32 %v637, 7
      %v639 = vsub.s32 %v636, %v638
      %v640 = vrot.slane %v528, %v639
      %v642 = vunpack.c.l.s4 1983009808
      %v643 = vunpack.c.0.s8 %v642
      %v644 = vlaneseq
      %v645 = vshrl.u32 %v644, 7
      %v646 = vsub.s32 %v643, %v645
      %v647 = vrot.slane %v535, %v646
      %v649 = vunpack.c.l.s4 1983009808
      %v650 = vunpack.c.0.s8 %v649
      %v651 = vlaneseq
      %v652 = vshrl.u32 %v651, 7
      %v653 = vsub.s32 %v650, %v652
      %v654 = vrot.slane %v542, %v653
      %v655 = vunpack.c.l.b16 %v549
      %v656 = vunpack.c.l.b16 %v556
      %v657 = vunpack.c.l.b16 %v563
      %v658 = vunpack.c.l.b16 %v570
      %v659 = vunpack.c.l.b16 %v577
      %v660 = vunpack.c.l.b16 %v584
      %v661 = vunpack.c.l.b16 %v591
      %v662 = vunpack.c.l.b16 %v598
      %v663 = vunpack.c.l.b16 %v605
      %v664 = vunpack.c.l.b16 %v612
      %v665 = vunpack.c.l.b16 %v619
      %v666 = vunpack.c.l.b16 %v626
      %v667 = vunpack.c.l.b16 %v633
      %v668 = vunpack.c.l.b16 %v640
      %v669 = vunpack.c.l.b16 %v647
      %v670 = vunpack.c.l.b16 %v654
      %v671 = vrot.slane %v656, 7
      %vm672 = vcmask 1041409
      %v673 = vsel %vm672, %v671, %v655
      %v674 = vrot.slane %v657, 6
      %vm675 = vcmask 1042434
      %v676 = vsel %vm675, %v674, %v673
      %v677 = vrot.slane %v658, 5
      %vm678 = vcmask 1043459
      %v679 = vsel %vm678, %v677, %v676
      %v680 = vrot.slane %v660, 7
      %v681 = vsel %vm672, %v680, %v659
      %v682 = vrot.slane %v661, 6
      %v683 = vsel %vm675, %v682, %v681
      %v684 = vrot.slane %v662, 5
      %v685 = vsel %vm678, %v684, %v683
      %v686 = vrot.slane %v664, 7
      %v687 = vsel %vm672, %v686, %v663
      %v688 = vrot.slane %v665, 6
      %v689 = vsel %vm675, %v688, %v687
      %v690 = vrot.slane %v666, 5
      %v691 = vsel %vm678, %v690, %v689
      %v692 = vrot.slane %v668, 7
      %v693 = vsel %vm672, %v692, %v667
      %v694 = vrot.slane %v669, 6
      %v695 = vsel %vm675, %v694, %v693
      %v696 = vrot.slane %v670, 5
      %v697 = vsel %vm678, %v696, %v695
      %v698 = vpack.c.b16 %v679, %v679
      %v699 = vpack.c.b16 %v685, %v685
      %v700 = vpack.c.b16 %v691, %v691
      %v701 = vpack.c.b16 %v697, %v697
      %v703 = vunpack.c.l.s4 1983009808
      %v704 = vunpack.c.0.s8 %v703
      %v705 = vlaneseq
      %v706 = vshrl.u32 %v705, 7
      %v707 = vsub.s32 %v704, %v706
      %v708 = vrot.slane %v698, %v707
      %v710 = vunpack.c.l.s4 1983009808
      %v711 = vunpack.c.0.s8 %v710
      %v712 = vlaneseq
      %v713 = vshrl.u32 %v712, 7
      %v714 = vsub.s32 %v711, %v713
      %v715 = vrot.slane %v699, %v714
      %v717 = vunpack.c.l.s4 1983009808
      %v718 = vunpack.c.0.s8 %v717
      %v719 = vlaneseq
      %v720 = vshrl.u32 %v719, 7
      %v721 = vsub.s32 %v718, %v720
      %v722 = vrot.slane %v700, %v721
      %v724 = vunpack.c.l.s4 1983009808
      %v725 = vunpack.c.0.s8 %v724
      %v726 = vlaneseq
      %v727 = vshrl.u32 %v726, 7
      %v728 = vsub.s32 %v725, %v727
      %v729 = vrot.slane %v701, %v728
      %vm734 = vcmask 123904
      %735 = vst.msk [vmem:[%s154] sm:$0x3] %vm734, %v708
      %736 = vst.msk [vmem:[%s154 + $0x2] sm:$0x3] %vm734, %v715
      %737 = vst.msk [vmem:[%s154 + $0x4] sm:$0x3] %vm734, %v722
      %738 = vst.msk [vmem:[%s154 + $0x6] sm:$0x3] %vm734, %v729
      %s739 = smul.u32 4, %s17
      %p740 = scmp.lt.s32.totalorder %s16, 1
      %s741 = scalar_select %p740, %s16, 1
      %p742 = scmp.lt.s32.totalorder %s739, 3
      %s743 = scalar_select %p742, %s739, 3
      %s744 = smul.addr %s741, 4
      %s745 = sadd.s32 %s743, %s744
      %s746 = smul.addr %s745, 2
      %s747 = scalar_lea.vmem %s1, %s746
      // Predicated region
      $region25: #{unet_forward.33} parent=23 // pred_check
        %p748 = pneg %p72
      $region26: #{unet_forward.33} parent=23 // pred_check_branch
        %750 = sbr.rel (%p748) target = $region28
      $region27: #{unet_forward.33} parent=23 // pred_region
        %s751 = smul.u32 4, %s17
      $region28: #{unet_forward.33} parent=23 // pred_fallthru
        _
    $region24: #{unet_forward.33} parent=5 // pred_fallthru
      _
    %p752 = scmp.le.s32.totalorder 2, %s7
    // Predicated region
    $region29: #{unet_forward.33} parent=5 // pred_check
      %p753 = pneg %p752
    $region30: #{unet_forward.33} parent=5 // pred_check_branch
      %755 = sbr.rel (%p753) target = $region32
    $region31: #{unet_forward.33} parent=5 // pred_region
      %s756 = ssub.s32 %s7, 2
      // Predicated region
      $region33: #{unet_forward.33} parent=31 // pred_check
        %p757 = pneg %p78
      $region34: #{unet_forward.33} parent=31 // pred_check_branch
        %759 = sbr.rel (%p757) target = $region36
      $region35: #{unet_forward.33} parent=31 // pred_region
        %s760 = smul.u32 4, %s19
        %p761 = scmp.lt.s32.totalorder %s18, 1
        %s762 = scalar_select %p761, %s18, 1
        %p763 = scmp.lt.s32.totalorder %s760, 3
        %s764 = scalar_select %p763, %s760, 3
        %s765 = smul.addr %s762, 4
        %s766 = sadd.s32 %s764, %s765
        %s767 = smul.addr %s766, 2
        %s768 = scalar_lea.vmem %s1, %s767
      $region36: #{unet_forward.33} parent=31 // pred_fallthru
        _
    $region32: #{unet_forward.33} parent=5 // pred_fallthru
      _
  $region6: #{unet_forward.33} parent=0 // loop_footer
    %s11 = sadd.s32 1, %s7
  $region7: #{unet_forward.33} parent=0 // loop_footer_branch
    %6 = sbr.rel target = $region3
  $region8: #{unet_forward.33} parent=0 // loop_exit
    _

// kernel: unet_forward.31
$region0: #{unet_forward.31}
  #allocation0 [shape = 'u32[]', space=smem, size = 0x4, offset = 0x4, fixed_abs, tag = 'smem constant byte address 0x4 - core index']
  #allocation1 [shape = 'u32[144,128]{1,0:T(1,128)}', space=vmem, size = 0x12000, scoped, tag = 'internal scratch']
  %s0 = inlined_call_operand.vmem [shape: bf16[128,144], index: 0, kind: input, shape index: {}]
  %s1 = inlined_call_operand.vmem [shape: bf16[144,16], index: 1, kind: input, shape index: {}]
  %s2 = inlined_call_operand.vmem [shape: f32[128,16], index: 2, kind: output, shape index: {0}]
  %s3 = inlined_call_operand.vmem [shape: f32[1,2,16], index: 3, kind: output, shape index: {1}]
  %4 = xla_tuple %s2, %s3
  %s5 = sld [smem:[#allocation0]]
  $region26: #{unet_forward.31} parent=0
    _
  %s7 = ssub.s32 1, %s5
  %s8 = scalar_select 0, %s7, %s5
  // Predicated region
  $region2: #{unet_forward.31} parent=0 // pred_check
    _
  $region3: #{unet_forward.31} parent=0 // pred_check_branch
    %10 = sbr.rel (0) target = $region5
  $region4: #{unet_forward.31} parent=0 // pred_region
    _
  $region5: #{unet_forward.31} parent=0 // pred_fallthru
    _
  // Predicated region
  $region6: #{unet_forward.31} parent=0 // pred_check
    _
  $region7: #{unet_forward.31} parent=0 // pred_check_branch
    %12 = sbr.rel (0) target = $region9
  $region8: #{unet_forward.31} parent=0 // pred_region
    _
  $region9: #{unet_forward.31} parent=0 // pred_fallthru
    _
  %v14 = vld [vmem:[%s0] sm:$0xff]
  %v15 = vld [vmem:[%s0 + $0x8] sm:$0xff]
  %v16 = vld [vmem:[%s0 + $0x10] sm:$0xff]
  %v17 = vld [vmem:[%s0 + $0x18] sm:$0xff]
  %v18 = vld [vmem:[%s0 + $0x20] sm:$0xff]
  %v19 = vld [vmem:[%s0 + $0x28] sm:$0xff]
  %v20 = vld [vmem:[%s0 + $0x30] sm:$0xff]
  %v21 = vld [vmem:[%s0 + $0x38] sm:$0xff]
  %v22 = vld [vmem:[%s0 + $0x40] sm:$0xff]
  %v23 = vld [vmem:[%s0 + $0x48] sm:$0xff]
  %v24 = vld [vmem:[%s0 + $0x50] sm:$0xff]
  %v25 = vld [vmem:[%s0 + $0x58] sm:$0xff]
  %v26 = vld [vmem:[%s0 + $0x60] sm:$0xff]
  %v27 = vld [vmem:[%s0 + $0x68] sm:$0xff]
  %v28 = vld [vmem:[%s0 + $0x70] sm:$0xff]
  %v29 = vld [vmem:[%s0 + $0x78] sm:$0xff]
  %v30 = vld [vmem:[%s1] sm:$0xf]
  %v31 = vld [vmem:[%s1 + $0x4] sm:$0xf]
  %v32 = vld [vmem:[%s1 + $0x8] sm:$0xf]
  %v33 = vld [vmem:[%s1 + $0xc] sm:$0xf]
  %v34 = vld [vmem:[%s1 + $0x10] sm:$0xf]
  %v35 = vld [vmem:[%s1 + $0x14] sm:$0xf]
  %v36 = vld [vmem:[%s1 + $0x18] sm:$0xf]
  %v37 = vld [vmem:[%s1 + $0x1c] sm:$0xf]
  %v38 = vld [vmem:[%s1 + $0x20] sm:$0xf]
  %v39 = vld [vmem:[%s1 + $0x24] sm:$0xf]
  %v40 = vld [vmem:[%s1 + $0x28] sm:$0xf]
  %v41 = vld [vmem:[%s1 + $0x2c] sm:$0xf]
  %v42 = vld [vmem:[%s1 + $0x30] sm:$0xf]
  %v43 = vld [vmem:[%s1 + $0x34] sm:$0xf]
  %v44 = vld [vmem:[%s1 + $0x38] sm:$0xf]
  %v45 = vld [vmem:[%s1 + $0x3c] sm:$0xf]
  %v46 = vld [vmem:[%s1 + $0x40] sm:$0xf]
  %v47 = vld [vmem:[%s1 + $0x44] sm:$0xf]
  %v64 = vunpack.c.l.b16 %v14
  %v65 = vunpack.c.h.b16 %v14
  %v66 = vunpack.c.l.b16 %v15
  %v67 = vunpack.c.h.b16 %v15
  %v68 = vunpack.c.l.b16 %v16
  %v69 = vunpack.c.h.b16 %v16
  %v70 = vunpack.c.l.b16 %v17
  %v71 = vunpack.c.h.b16 %v17
  %v72 = vunpack.c.l.b16 %v18
  %v73 = vunpack.c.h.b16 %v18
  %v74 = vunpack.c.l.b16 %v19
  %v75 = vunpack.c.h.b16 %v19
  %v76 = vunpack.c.l.b16 %v20
  %v77 = vunpack.c.h.b16 %v20
  %v78 = vunpack.c.l.b16 %v21
  %v79 = vunpack.c.h.b16 %v21
  %v80 = vunpack.c.l.b16 %v22
  %v81 = vunpack.c.h.b16 %v22
  %v82 = vunpack.c.l.b16 %v23
  %v83 = vunpack.c.h.b16 %v23
  %v84 = vunpack.c.l.b16 %v24
  %v85 = vunpack.c.h.b16 %v24
  %v86 = vunpack.c.l.b16 %v25
  %v87 = vunpack.c.h.b16 %v25
  %v88 = vunpack.c.l.b16 %v26
  %v89 = vunpack.c.h.b16 %v26
  %v90 = vunpack.c.l.b16 %v27
  %v91 = vunpack.c.h.b16 %v27
  %v92 = vunpack.c.l.b16 %v28
  %v93 = vunpack.c.h.b16 %v28
  %v94 = vunpack.c.l.b16 %v29
  %v95 = vunpack.c.h.b16 %v29
  %v96 = vpack.c.b16 %v66, %v64
  %v97 = vpack.c.b16 %v67, %v65
  %v98 = vpack.c.b16 %v70, %v68
  %v99 = vpack.c.b16 %v71, %v69
  %v100 = vpack.c.b16 %v74, %v72
  %v101 = vpack.c.b16 %v75, %v73
  %v102 = vpack.c.b16 %v78, %v76
  %v103 = vpack.c.b16 %v79, %v77
  %v104 = vpack.c.b16 %v82, %v80
  %v105 = vpack.c.b16 %v83, %v81
  %v106 = vpack.c.b16 %v86, %v84
  %v107 = vpack.c.b16 %v87, %v85
  %v108 = vpack.c.b16 %v90, %v88
  %v109 = vpack.c.b16 %v91, %v89
  %v110 = vpack.c.b16 %v94, %v92
  %v111 = vpack.c.b16 %v95, %v93
  %v138 = vunpack.c.l.b16 %v30
  %v139 = vunpack.c.l.b16 %v31
  %v140 = vunpack.c.l.b16 %v32
  %v141 = vunpack.c.l.b16 %v33
  %v142 = vunpack.c.l.b16 %v34
  %v143 = vunpack.c.l.b16 %v35
  %v144 = vunpack.c.l.b16 %v36
  %v145 = vunpack.c.l.b16 %v37
  %v146 = vunpack.c.l.b16 %v38
  %v147 = vunpack.c.l.b16 %v39
  %v148 = vunpack.c.l.b16 %v40
  %v149 = vunpack.c.l.b16 %v41
  %v150 = vunpack.c.l.b16 %v42
  %v151 = vunpack.c.l.b16 %v43
  %v152 = vunpack.c.l.b16 %v44
  %v153 = vunpack.c.l.b16 %v45
  %v154 = vunpack.c.l.b16 %v46
  %v155 = vunpack.c.l.b16 %v47
  %v156 = vpack.c.b16 %v139, %v138
  %v157 = vpack.c.b16 %v141, %v140
  %v158 = vpack.c.b16 %v143, %v142
  %v159 = vpack.c.b16 %v145, %v144
  %v160 = vpack.c.b16 %v147, %v146
  %v161 = vpack.c.b16 %v149, %v148
  %v162 = vpack.c.b16 %v151, %v150
  %v163 = vpack.c.b16 %v153, %v152
  %v164 = vpack.c.b16 %v155, %v154
  %vm174 = vcmask 130048
  %v176 = vsel %vm174, %v97, 0
  %v179 = vsel %vm174, %v99, 0
  %v182 = vsel %vm174, %v101, 0
  %v185 = vsel %vm174, %v103, 0
  %v188 = vsel %vm174, %v105, 0
  %v191 = vsel %vm174, %v107, 0
  %v194 = vsel %vm174, %v109, 0
  %v197 = vsel %vm174, %v111, 0
  %199 = vmatprep.subr.bf16.mxu0 0
  %200 = vmatpush1.bf16.msra.mxu0 %v156
  %201 = vmatprep.subr.bf16.mxu0 0
  %202 = vmatpush1.bf16.msra.mxu0 %v157
  %203 = vmatprep.subr.bf16.mxu0 0
  %204 = vmatpush1.bf16.msra.mxu0 %v158
  %205 = vmatprep.subr.bf16.mxu0 0
  %206 = vmatpush1.bf16.msra.mxu0 %v159
  %207 = vmatprep.subr.bf16.mxu0 0
  %208 = vmatpush1.bf16.msra.mxu0 %v160
  %209 = vmatprep.subr.bf16.mxu0 0
  %210 = vmatpush1.bf16.msra.mxu0 %v161
  %211 = vmatprep.subr.bf16.mxu0 0
  %212 = vmatpush1.bf16.msra.mxu0 %v162
  %213 = vmatprep.subr.bf16.mxu0 0
  %214 = vmatpush1.bf16.msra.mxu0 %v163
  %215 = vmatprep.subr.bf16.mxu0 0
  %216 = vmatpush1.bf16.msra.mxu0 %v164
  %217 = vmatprep.subr.bf16.mxu0 0
  %218 = vmatpush1.bf16.msra.mxu0 0
  %219 = vmatprep.subr.bf16.mxu0 0
  %220 = vmatpush1.bf16.msra.mxu0 0
  %221 = vmatprep.subr.bf16.mxu0 0
  %222 = vmatpush1.bf16.msra.mxu0 0
  %223 = vmatprep.subr.bf16.mxu0 0
  %224 = vmatpush1.bf16.msra.mxu0 0
  %225 = vmatprep.subr.bf16.mxu0 0
  %226 = vmatpush1.bf16.msra.mxu0 0
  %227 = vmatprep.subr.bf16.mxu0 0
  %228 = vmatpush1.bf16.msra.mxu0 0
  %229 = vmatprep.subr.bf16.mxu0 0
  %230 = vmatpush1.bf16.msra.mxu0 0
  %231 = vmatprep.mubr.bf16.mxu0 %v176
  %232 = vmatmul.mubr.bf16.gmra.mrb[0].mxu0 %v96
  %v233 = vpop.f32.mrb[0].mxu0
  %v234 = vadd.f32 0.0, %v233
  %v235 = vpop.f32.mrb[0].mxu0
  %v236 = vpop.f32.mrb[0].mxu0
  %v237 = vadd.f32 0.0, %v236
  %v238 = vpop.f32.mrb[0].mxu0
  %239 = vmatprep.mubr.bf16.mxu0 %v179
  %240 = vmatmul.mubr.bf16.gmra.mrb[0].mxu0 %v98
  %v241 = vpop.f32.mrb[0].mxu0
  %v242 = vadd.f32 0.0, %v241
  %v243 = vpop.f32.mrb[0].mxu0
  %v244 = vpop.f32.mrb[0].mxu0
  %v245 = vadd.f32 0.0, %v244
  %v246 = vpop.f32.mrb[0].mxu0
  %247 = vmatprep.mubr.bf16.mxu0 %v182
  %248 = vmatmul.mubr.bf16.gmra.mrb[0].mxu0 %v100
  %v249 = vpop.f32.mrb[0].mxu0
  %v250 = vadd.f32 0.0, %v249
  %v251 = vpop.f32.mrb[0].mxu0
  %v252 = vpop.f32.mrb[0].mxu0
  %v253 = vadd.f32 0.0, %v252
  %v254 = vpop.f32.mrb[0].mxu0
  %255 = vmatprep.mubr.bf16.mxu0 %v185
  %256 = vmatmul.mubr.bf16.gmra.mrb[0].mxu0 %v102
  %v257 = vpop.f32.mrb[0].mxu0
  %v258 = vadd.f32 0.0, %v257
  %v259 = vpop.f32.mrb[0].mxu0
  %v260 = vpop.f32.mrb[0].mxu0
  %v261 = vadd.f32 0.0, %v260
  %v262 = vpop.f32.mrb[0].mxu0
  %263 = vmatprep.mubr.bf16.mxu0 %v188
  %264 = vmatmul.mubr.bf16.gmra.mrb[0].mxu0 %v104
  %v265 = vpop.f32.mrb[0].mxu0
  %v266 = vadd.f32 0.0, %v265
  %v267 = vpop.f32.mrb[0].mxu0
  %v268 = vpop.f32.mrb[0].mxu0
  %v269 = vadd.f32 0.0, %v268
  %v270 = vpop.f32.mrb[0].mxu0
  %271 = vmatprep.mubr.bf16.mxu0 %v191
  %272 = vmatmul.mubr.bf16.gmra.mrb[0].mxu0 %v106
  %v273 = vpop.f32.mrb[0].mxu0
  %v274 = vadd.f32 0.0, %v273
  %v275 = vpop.f32.mrb[0].mxu0
  %v276 = vpop.f32.mrb[0].mxu0
  %v277 = vadd.f32 0.0, %v276
  %v278 = vpop.f32.mrb[0].mxu0
  %279 = vmatprep.mubr.bf16.mxu0 %v194
  %280 = vmatmul.mubr.bf16.gmra.mrb[0].mxu0 %v108
  %v281 = vpop.f32.mrb[0].mxu0
  %v282 = vadd.f32 0.0, %v281
  %v283 = vpop.f32.mrb[0].mxu0
  %v284 = vpop.f32.mrb[0].mxu0
  %v285 = vadd.f32 0.0, %v284
  %v286 = vpop.f32.mrb[0].mxu0
  %287 = vmatprep.mubr.bf16.mxu0 %v197
  %288 = vmatmul.mubr.bf16.gmra.mrb[0].mxu0 %v110
  %v289 = vpop.f32.mrb[0].mxu0
  %v290 = vadd.f32 0.0, %v289
  %v291 = vpop.f32.mrb[0].mxu0
  %v292 = vpop.f32.mrb[0].mxu0
  %v293 = vadd.f32 0.0, %v292
  %v294 = vpop.f32.mrb[0].mxu0
  %295 = vdwg.mxu0
  %296 = vst.msk [vmem:[%s2] sm:$0xff] %vm174, %v234
  %297 = vst.msk [vmem:[%s2 + $0x8] sm:$0xff] %vm174, %v237
  %298 = vst.msk [vmem:[%s2 + $0x10] sm:$0xff] %vm174, %v242
  %299 = vst.msk [vmem:[%s2 + $0x18] sm:$0xff] %vm174, %v245
  %300 = vst.msk [vmem:[%s2 + $0x20] sm:$0xff] %vm174, %v250
  %301 = vst.msk [vmem:[%s2 + $0x28] sm:$0xff] %vm174, %v253
  %302 = vst.msk [vmem:[%s2 + $0x30] sm:$0xff] %vm174, %v258
  %303 = vst.msk [vmem:[%s2 + $0x38] sm:$0xff] %vm174, %v261
  %304 = vst.msk [vmem:[%s2 + $0x40] sm:$0xff] %vm174, %v266
  %305 = vst.msk [vmem:[%s2 + $0x48] sm:$0xff] %vm174, %v269
  %306 = vst.msk [vmem:[%s2 + $0x50] sm:$0xff] %vm174, %v274
  %307 = vst.msk [vmem:[%s2 + $0x58] sm:$0xff] %vm174, %v277
  %308 = vst.msk [vmem:[%s2 + $0x60] sm:$0xff] %vm174, %v282
  %309 = vst.msk [vmem:[%s2 + $0x68] sm:$0xff] %vm174, %v285
  %310 = vst.msk [vmem:[%s2 + $0x70] sm:$0xff] %vm174, %v290
  %311 = vst.msk [vmem:[%s2 + $0x78] sm:$0xff] %vm174, %v293
  %v312 = vsel %vm174, %v234, 0.0
  %v313 = vsel %vm174, %v237, 0.0
  %v314 = vadd.f32 %v312, %v313
  %v315 = vsel %vm174, %v242, 0.0
  %v316 = vadd.f32 %v314, %v315
  %v317 = vsel %vm174, %v245, 0.0
  %v318 = vadd.f32 %v316, %v317
  %v319 = vsel %vm174, %v250, 0.0
  %v320 = vadd.f32 %v318, %v319
  %v321 = vsel %vm174, %v253, 0.0
  %v322 = vadd.f32 %v320, %v321
  %v323 = vsel %vm174, %v258, 0.0
  %v324 = vadd.f32 %v322, %v323
  %v325 = vsel %vm174, %v261, 0.0
  %v326 = vadd.f32 %v324, %v325
  %v327 = vsel %vm174, %v266, 0.0
  %v328 = vadd.f32 %v326, %v327
  %v329 = vsel %vm174, %v269, 0.0
  %v330 = vadd.f32 %v328, %v329
  %v331 = vsel %vm174, %v274, 0.0
  %v332 = vadd.f32 %v330, %v331
  %v333 = vsel %vm174, %v277, 0.0
  %v334 = vadd.f32 %v332, %v333
  %v335 = vsel %vm174, %v282, 0.0
  %v336 = vadd.f32 %v334, %v335
  %v337 = vsel %vm174, %v285, 0.0
  %v338 = vadd.f32 %v336, %v337
  %v339 = vsel %vm174, %v290, 0.0
  %v340 = vadd.f32 %v338, %v339
  %v341 = vsel %vm174, %v293, 0.0
  %v342 = vadd.f32 %v340, %v341
  %v343 = vrot.slane %v342, 4
  %v344 = vadd.f32 %v342, %v343
  %v345 = vrot.slane %v344, 2
  %v346 = vadd.f32 %v344, %v345
  %v347 = vrot.slane %v346, 1
  %v348 = vadd.f32 %v346, %v347
  %v349 = vmul.f32 %v234, %v234
  %v350 = vmul.f32 %v237, %v237
  %v351 = vmul.f32 %v242, %v242
  %v352 = vmul.f32 %v245, %v245
  %v353 = vmul.f32 %v250, %v250
  %v354 = vmul.f32 %v253, %v253
  %v355 = vmul.f32 %v258, %v258
  %v356 = vmul.f32 %v261, %v261
  %v357 = vmul.f32 %v266, %v266
  %v358 = vmul.f32 %v269, %v269
  %v359 = vmul.f32 %v274, %v274
  %v360 = vmul.f32 %v277, %v277
  %v361 = vmul.f32 %v282, %v282
  %v362 = vmul.f32 %v285, %v285
  %v363 = vmul.f32 %v290, %v290
  %v364 = vmul.f32 %v293, %v293
  %v365 = vsel %vm174, %v349, 0.0
  %v366 = vsel %vm174, %v350, 0.0
  %v367 = vadd.f32 %v365, %v366
  %v368 = vsel %vm174, %v351, 0.0
  %v369 = vadd.f32 %v367, %v368
  %v370 = vsel %vm174, %v352, 0.0
  %v371 = vadd.f32 %v369, %v370
  %v372 = vsel %vm174, %v353, 0.0
  %v373 = vadd.f32 %v371, %v372
  %v374 = vsel %vm174, %v354, 0.0
  %v375 = vadd.f32 %v373, %v374
  %v376 = vsel %vm174, %v355, 0.0
  %v377 = vadd.f32 %v375, %v376
  %v378 = vsel %vm174, %v356, 0.0
  %v379 = vadd.f32 %v377, %v378
  %v380 = vsel %vm174, %v357, 0.0
  %v381 = vadd.f32 %v379, %v380
  %v382 = vsel %vm174, %v358, 0.0
  %v383 = vadd.f32 %v381, %v382
  %v384 = vsel %vm174, %v359, 0.0
  %v385 = vadd.f32 %v383, %v384
  %v386 = vsel %vm174, %v360, 0.0
  %v387 = vadd.f32 %v385, %v386
  %v388 = vsel %vm174, %v361, 0.0
  %v389 = vadd.f32 %v387, %v388
  %v390 = vsel %vm174, %v362, 0.0
  %v391 = vadd.f32 %v389, %v390
  %v392 = vsel %vm174, %v363, 0.0
  %v393 = vadd.f32 %v391, %v392
  %v394 = vsel %vm174, %v364, 0.0
  %v395 = vadd.f32 %v393, %v394
  %v396 = vrot.slane %v395, 4
  %v397 = vadd.f32 %v395, %v396
  %v398 = vrot.slane %v397, 2
  %v399 = vadd.f32 %v397, %v398
  %v400 = vrot.slane %v399, 1
  %v401 = vadd.f32 %v399, %v400
  %vm402 = vcmask 1040384
  %v403 = vsel %vm402, %v348, %v401
  %vm404 = vcmask 123904
  %405 = vst.msk [vmem:[%s3] sm:$0x3] %vm404, %v403
  // Predicated region
  $region10: #{unet_forward.31} parent=0 // pred_check
    _
  $region11: #{unet_forward.31} parent=0 // pred_check_branch
    %407 = sbr.rel (0) target = $region13
  $region12: #{unet_forward.31} parent=0 // pred_region
    _
  $region13: #{unet_forward.31} parent=0 // pred_fallthru
    _
  // Predicated region
  $region14: #{unet_forward.31} parent=0 // pred_check
    _
  $region15: #{unet_forward.31} parent=0 // pred_check_branch
    %409 = sbr.rel (0) target = $region17
  $region16: #{unet_forward.31} parent=0 // pred_region
    _
  $region17: #{unet_forward.31} parent=0 // pred_fallthru
    _
  // Predicated region
  $region18: #{unet_forward.31} parent=0 // pred_check
    _
  $region19: #{unet_forward.31} parent=0 // pred_check_branch
    %411 = sbr.rel (0) target = $region21
  $region20: #{unet_forward.31} parent=0 // pred_region
    _
  $region21: #{unet_forward.31} parent=0 // pred_fallthru
    _
  // Predicated region
  $region22: #{unet_forward.31} parent=0 // pred_check
    _
  $region23: #{unet_forward.31} parent=0 // pred_check_branch
    %413 = sbr.rel (0) target = $region25
  $region24: #{unet_forward.31} parent=0 // pred_region
    _
  $region25: #{unet_forward.31} parent=0 // pred_fallthru
    _

// kernel: unet_forward.35
$region0: #{unet_forward.35}
  #allocation0 [shape = 'u32[]', space=smem, size = 0x4, offset = 0x4, fixed_abs, tag = 'smem constant byte address 0x4 - core index']
  #allocation1 [shape = 'u32[144,128]{1,0:T(1,128)}', space=vmem, size = 0x12000, scoped, tag = 'internal scratch']
  %s0 = inlined_call_operand.vmem [shape: f32[32,32], index: 0, kind: input, shape index: {}]
  %s1 = inlined_call_operand.vmem [shape: f32[1,32], index: 1, kind: input, shape index: {}]
  %s2 = inlined_call_operand.vmem [shape: f32[1,32], index: 2, kind: input, shape index: {}]
  %s3 = inlined_call_operand.vmem [shape: bf16[32,32], index: 3, kind: output, shape index: {}]
  %s4 = sld [smem:[#allocation0]]
  $region22: #{unet_forward.35} parent=0
    _
  %s6 = ssub.s32 1, %s4
  %s7 = scalar_select 0, %s6, %s4
  // Predicated region
  $region2: #{unet_forward.35} parent=0 // pred_check
    _
  $region3: #{unet_forward.35} parent=0 // pred_check_branch
    %9 = sbr.rel (0) target = $region5
  $region4: #{unet_forward.35} parent=0 // pred_region
    _
  $region5: #{unet_forward.35} parent=0 // pred_fallthru
    _
  // Predicated region
  $region6: #{unet_forward.35} parent=0 // pred_check
    _
  $region7: #{unet_forward.35} parent=0 // pred_check_branch
    %11 = sbr.rel (0) target = $region9
  $region8: #{unet_forward.35} parent=0 // pred_region
    _
  $region9: #{unet_forward.35} parent=0 // pred_fallthru
    _
  // Predicated region
  $region10: #{unet_forward.35} parent=0 // pred_check
    _
  $region11: #{unet_forward.35} parent=0 // pred_check_branch
    %13 = sbr.rel (0) target = $region13
  $region12: #{unet_forward.35} parent=0 // pred_region
    _
  $region13: #{unet_forward.35} parent=0 // pred_fallthru
    _
  %v14 = vld [vmem:[%s0] sm:$0xff]
  %v15 = vld [vmem:[%s0 + $0x8] sm:$0xff]
  %v16 = vld [vmem:[%s0 + $0x10] sm:$0xff]
  %v17 = vld [vmem:[%s0 + $0x18] sm:$0xff]
  %v18 = vld [vmem:[%s1] sm:$0x1]
  %v20 = vlaneseq
  %v21 = vshrl.u32 %v20, 7
  %v22 = vsub.s32 0, %v21
  %v23 = vrot.slane %v18, %v22
  %v25 = vmul.f32 %v14, %v23
  %v26 = vmul.f32 %v15, %v23
  %v27 = vmul.f32 %v16, %v23
  %v28 = vmul.f32 %v17, %v23
  %v29 = vld [vmem:[%s2] sm:$0x1]
  %v31 = vlaneseq
  %v32 = vshrl.u32 %v31, 7
  %v33 = vsub.s32 0, %v32
  %v34 = vrot.slane %v29, %v33
  %v36 = vadd.f32 %v25, %v34
  %v37 = vadd.f32 %v26, %v34
  %v38 = vadd.f32 %v27, %v34
  %v39 = vadd.f32 %v28, %v34
  %v40 = vmax.f32 %v36, 0.0
  %v41 = vmax.f32 %v37, 0.0
  %v42 = vmax.f32 %v38, 0.0
  %v43 = vmax.f32 %v39, 0.0
  %v44 = vpack.c.bf16 %v41, %v40
  %v45 = vpack.c.bf16 %v43, %v42
  %v48 = vunpack.c.l.b16 %v44
  %v49 = vunpack.c.h.b16 %v44
  %v50 = vunpack.c.l.b16 %v45
  %v51 = vunpack.c.h.b16 %v45
  %v52 = vpack.c.b16 %v48, %v48
  %v53 = vpack.c.b16 %v49, %v49
  %v54 = vpack.c.b16 %v50, %v50
  %v55 = vpack.c.b16 %v51, %v51
  %vm60 = vcmask 257024
  %61 = vst.msk [vmem:[%s3] sm:$0xf] %vm60, %v52
  %62 = vst.msk [vmem:[%s3 + $0x4] sm:$0xf] %vm60, %v53
  %63 = vst.msk [vmem:[%s3 + $0x8] sm:$0xf] %vm60, %v54
  %64 = vst.msk [vmem:[%s3 + $0xc] sm:$0xf] %vm60, %v55
  // Predicated region
  $region14: #{unet_forward.35} parent=0 // pred_check
    _
  $region15: #{unet_forward.35} parent=0 // pred_check_branch
    %66 = sbr.rel (0) target = $region17
  $region16: #{unet_forward.35} parent=0 // pred_region
    _
  $region17: #{unet_forward.35} parent=0 // pred_fallthru
    _
  // Predicated region
  $region18: #{unet_forward.35} parent=0 // pred_check
    _
  $region19: #{unet_forward.35} parent=0 // pred_check_branch
    %68 = sbr.rel (0) target = $region21
  $region20: #{unet_forward.35} parent=0 // pred_region
    _
  $region21: #{unet_forward.35} parent=0 // pred_fallthru
    _

// kernel: tile.13
$region0: #{tile.13}
  #allocation0 [shape = 's32[1]{0}', space=sflag, size = 0x4, scoped, tag = 'scoped memory for tile.13']
  %s0 = inlined_call_operand.vmem [shape: f32[16], index: 0, kind: input, shape index: {}]
  %s1 = inlined_call_operand.vmem [shape: f32[4,16], index: 1, kind: output, shape index: {}]
  // Predicated region
  $region2: #{tile.13} parent=0 // pred_check
    _
  $region3: #{tile.13} parent=0 // pred_check_branch
    %3 = sbr.rel (0) target = $region5
  $region4: #{tile.13} parent=0 // pred_region
    _
  $region5: #{tile.13} parent=0 // pred_fallthru
    _
  %v4 = vld [vmem:[%s0] ss:$0 sm:$0xff]
  %5 = vst [vmem:[%s1] sm:$0xf] %v4

// kernel: tile.14
$region0: #{tile.14}
  %s0 = inlined_call_operand.vmem [shape: f32[4,16], index: 0, kind: input, shape index: {}]
  %s1 = inlined_call_operand.vmem [shape: f32[1,64], index: 1, kind: output, shape index: {}]
  $region1: #{tile.14} parent=0
    #allocation0 [shape = 'u8[4096]{0}', space=vmem, size = 0x1000, scoped, tag = 'scoped mem for output reshape']
    #allocation1 [shape = 'u8[4096]{0}', space=vmem, size = 0x1000, scoped, tag = 'scoped mem for input reshape']
    %s3 = sshllo.u32 0, 4
    %v4 = vld [vmem:[%s0] sm:%s3]
    %5 = vst [vmem:[#allocation1] sm:%s3] %v4
    %v6 = vld [vmem:[#allocation1] sm:$0x1]
    %vm7 = vcmask 130048
    %8 = vst.msk [vmem:[#allocation0] sm:$0x1] %vm7, %v6
    %s9 = scalar_lea.vmem [#allocation1], 3
    %v10 = vld [vmem:[%s9] sm:$0x1]
    %11 = vrot.lane.b32.xlu0 %v10, 48
    %v12 = vpop.permute.xlu0 %11
    %vm13 = vcmask 523648
    %14 = vst.msk [vmem:[#allocation0] sm:$0x1] %vm13, %v12
    %s15 = scalar_lea.vmem [#allocation1], 2
    %v16 = vld [vmem:[%s15] sm:$0x1]
    %17 = vrot.lane.b32.xlu0 %v16, 32
    %v18 = vpop.permute.xlu0 %17
    %vm19 = vcmask 392448
    %20 = vst.msk [vmem:[#allocation0] sm:$0x1] %vm19, %v18
    %s21 = scalar_lea.vmem [#allocation1], 1
    %v22 = vld [vmem:[%s21] sm:$0x1]
    %23 = vrot.lane.b32.xlu0 %v22, 16
    %v24 = vpop.permute.xlu0 %23
    %vm25 = vcmask 261248
    %26 = vst.msk [vmem:[#allocation0] sm:$0x1] %vm25, %v24
    %s28 = sshllo.u32 0, 1
    %v30 = vld [vmem:[#allocation0] sm:%s28]
    %s31 = sshllo.u32 0, 1
    %32 = vst [vmem:[%s1] sm:%s31] %v30

// kernel: unet_forward.34
$region0: #{unet_forward.34}
  #allocation0 [shape = 'u32[]', space=smem, size = 0x4, offset = 0x4, fixed_abs, tag = 'smem constant byte address 0x4 - core index']
  #allocation1 [shape = 'u32[144,128]{1,0:T(1,128)}', space=vmem, size = 0x12000, scoped, tag = 'internal scratch']
  %s0 = inlined_call_operand.vmem [shape: bf16[32,144], index: 0, kind: input, shape index: {}]
  %s1 = inlined_call_operand.vmem [shape: bf16[144,32], index: 1, kind: input, shape index: {}]
  %s2 = inlined_call_operand.vmem [shape: f32[32,32], index: 2, kind: output, shape index: {0}]
  %s3 = inlined_call_operand.vmem [shape: f32[1,2,32], index: 3, kind: output, shape index: {1}]
  %4 = xla_tuple %s2, %s3
  %s5 = sld [smem:[#allocation0]]
  $region26: #{unet_forward.34} parent=0
    _
  %s7 = ssub.s32 1, %s5
  %s8 = scalar_select 0, %s7, %s5
  // Predicated region
  $region2: #{unet_forward.34} parent=0 // pred_check
    _
  $region3: #{unet_forward.34} parent=0 // pred_check_branch
    %10 = sbr.rel (0) target = $region5
  $region4: #{unet_forward.34} parent=0 // pred_region
    _
  $region5: #{unet_forward.34} parent=0 // pred_fallthru
    _
  // Predicated region
  $region6: #{unet_forward.34} parent=0 // pred_check
    _
  $region7: #{unet_forward.34} parent=0 // pred_check_branch
    %12 = sbr.rel (0) target = $region9
  $region8: #{unet_forward.34} parent=0 // pred_region
    _
  $region9: #{unet_forward.34} parent=0 // pred_fallthru
    _
  %v14 = vld [vmem:[%s0] sm:$0xff]
  %v15 = vld [vmem:[%s0 + $0x8] sm:$0xff]
  %v16 = vld [vmem:[%s0 + $0x10] sm:$0xff]
  %v17 = vld [vmem:[%s0 + $0x18] sm:$0xff]
  %v18 = vld [vmem:[%s1] sm:$0xf]
  %v19 = vld [vmem:[%s1 + $0x4] sm:$0xf]
  %v20 = vld [vmem:[%s1 + $0x8] sm:$0xf]
  %v21 = vld [vmem:[%s1 + $0xc] sm:$0xf]
  %v22 = vld [vmem:[%s1 + $0x10] sm:$0xf]
  %v23 = vld [vmem:[%s1 + $0x14] sm:$0xf]
  %v24 = vld [vmem:[%s1 + $0x18] sm:$0xf]
  %v25 = vld [vmem:[%s1 + $0x1c] sm:$0xf]
  %v26 = vld [vmem:[%s1 + $0x20] sm:$0xf]
  %v27 = vld [vmem:[%s1 + $0x24] sm:$0xf]
  %v28 = vld [vmem:[%s1 + $0x28] sm:$0xf]
  %v29 = vld [vmem:[%s1 + $0x2c] sm:$0xf]
  %v30 = vld [vmem:[%s1 + $0x30] sm:$0xf]
  %v31 = vld [vmem:[%s1 + $0x34] sm:$0xf]
  %v32 = vld [vmem:[%s1 + $0x38] sm:$0xf]
  %v33 = vld [vmem:[%s1 + $0x3c] sm:$0xf]
  %v34 = vld [vmem:[%s1 + $0x40] sm:$0xf]
  %v35 = vld [vmem:[%s1 + $0x44] sm:$0xf]
  %v40 = vunpack.c.l.b16 %v14
  %v41 = vunpack.c.h.b16 %v14
  %v42 = vunpack.c.l.b16 %v15
  %v43 = vunpack.c.h.b16 %v15
  %v44 = vunpack.c.l.b16 %v16
  %v45 = vunpack.c.h.b16 %v16
  %v46 = vunpack.c.l.b16 %v17
  %v47 = vunpack.c.h.b16 %v17
  %v48 = vpack.c.b16 %v42, %v40
  %v49 = vpack.c.b16 %v43, %v41
  %v50 = vpack.c.b16 %v46, %v44
  %v51 = vpack.c.b16 %v47, %v45
  %v72 = vunpack.c.l.b16 %v18
  %v73 = vunpack.c.l.b16 %v19
  %v74 = vunpack.c.l.b16 %v20
  %v75 = vunpack.c.l.b16 %v21
  %v76 = vunpack.c.l.b16 %v22
  %v77 = vunpack.c.l.b16 %v23
  %v78 = vunpack.c.l.b16 %v24
  %v79 = vunpack.c.l.b16 %v25
  %v80 = vunpack.c.l.b16 %v26
  %v81 = vunpack.c.l.b16 %v27
  %v82 = vunpack.c.l.b16 %v28
  %v83 = vunpack.c.l.b16 %v29
  %v84 = vunpack.c.l.b16 %v30
  %v85 = vunpack.c.l.b16 %v31
  %v86 = vunpack.c.l.b16 %v32
  %v87 = vunpack.c.l.b16 %v33
  %v88 = vunpack.c.l.b16 %v34
  %v89 = vunpack.c.l.b16 %v35
  %v90 = vpack.c.b16 %v73, %v72
  %v91 = vpack.c.b16 %v75, %v74
  %v92 = vpack.c.b16 %v77, %v76
  %v93 = vpack.c.b16 %v79, %v78
  %v94 = vpack.c.b16 %v81, %v80
  %v95 = vpack.c.b16 %v83, %v82
  %v96 = vpack.c.b16 %v85, %v84
  %v97 = vpack.c.b16 %v87, %v86
  %v98 = vpack.c.b16 %v89, %v88
  %vm108 = vcmask 130048
  %v110 = vsel %vm108, %v49, 0
  %v113 = vsel %vm108, %v51, 0
  %115 = vmatprep.subr.bf16.mxu0 0
  %116 = vmatpush1.bf16.msra.mxu0 %v90
  %117 = vmatprep.subr.bf16.mxu0 0
  %118 = vmatpush1.bf16.msra.mxu0 %v91
  %119 = vmatprep.subr.bf16.mxu0 0
  %120 = vmatpush1.bf16.msra.mxu0 %v92
  %121 = vmatprep.subr.bf16.mxu0 0
  %122 = vmatpush1.bf16.msra.mxu0 %v93
  %123 = vmatprep.subr.bf16.mxu0 0
  %124 = vmatpush1.bf16.msra.mxu0 %v94
  %125 = vmatprep.subr.bf16.mxu0 0
  %126 = vmatpush1.bf16.msra.mxu0 %v95
  %127 = vmatprep.subr.bf16.mxu0 0
  %128 = vmatpush1.bf16.msra.mxu0 %v96
  %129 = vmatprep.subr.bf16.mxu0 0
  %130 = vmatpush1.bf16.msra.mxu0 %v97
  %131 = vmatprep.subr.bf16.mxu0 0
  %132 = vmatpush1.bf16.msra.mxu0 %v98
  %133 = vmatprep.subr.bf16.mxu0 0
  %134 = vmatpush1.bf16.msra.mxu0 0
  %135 = vmatprep.subr.bf16.mxu0 0
  %136 = vmatpush1.bf16.msra.mxu0 0
  %137 = vmatprep.subr.bf16.mxu0 0
  %138 = vmatpush1.bf16.msra.mxu0 0
  %139 = vmatprep.subr.bf16.mxu0 0
  %140 = vmatpush1.bf16.msra.mxu0 0
  %141 = vmatprep.subr.bf16.mxu0 0
  %142 = vmatpush1.bf16.msra.mxu0 0
  %143 = vmatprep.subr.bf16.mxu0 0
  %144 = vmatpush1.bf16.msra.mxu0 0
  %145 = vmatprep.subr.bf16.mxu0 0
  %146 = vmatpush1.bf16.msra.mxu0 0
  %147 = vmatprep.mubr.bf16.mxu0 %v110
  %148 = vmatmul.mubr.bf16.gmra.mrb[0].mxu0 %v48
  %v149 = vpop.f32.mrb[0].mxu0
  %v150 = vadd.f32 0.0, %v149
  %v151 = vpop.f32.mrb[0].mxu0
  %v152 = vpop.f32.mrb[0].mxu0
  %v153 = vadd.f32 0.0, %v152
  %v154 = vpop.f32.mrb[0].mxu0
  %155 = vmatprep.mubr.bf16.mxu0 %v113
  %156 = vmatmul.mubr.bf16.gmra.mrb[0].mxu0 %v50
  %v157 = vpop.f32.mrb[0].mxu0
  %v158 = vadd.f32 0.0, %v157
  %v159 = vpop.f32.mrb[0].mxu0
  %v160 = vpop.f32.mrb[0].mxu0
  %v161 = vadd.f32 0.0, %v160
  %v162 = vpop.f32.mrb[0].mxu0
  %163 = vdwg.mxu0
  %vm164 = vcmask 261120
  %165 = vst.msk [vmem:[%s2] sm:$0xff] %vm164, %v150
  %166 = vst.msk [vmem:[%s2 + $0x8] sm:$0xff] %vm164, %v153
  %167 = vst.msk [vmem:[%s2 + $0x10] sm:$0xff] %vm164, %v158
  %168 = vst.msk [vmem:[%s2 + $0x18] sm:$0xff] %vm164, %v161
  %v169 = vsel %vm164, %v150, 0.0
  %v170 = vsel %vm164, %v153, 0.0
  %v171 = vadd.f32 %v169, %v170
  %v172 = vsel %vm164, %v158, 0.0
  %v173 = vadd.f32 %v171, %v172
  %v174 = vsel %vm164, %v161, 0.0
  %v175 = vadd.f32 %v173, %v174
  %v176 = vrot.slane %v175, 4
  %v177 = vadd.f32 %v175, %v176
  %v178 = vrot.slane %v177, 2
  %v179 = vadd.f32 %v177, %v178
  %v180 = vrot.slane %v179, 1
  %v181 = vadd.f32 %v179, %v180
  %v182 = vmul.f32 %v150, %v150
  %v183 = vmul.f32 %v153, %v153
  %v184 = vmul.f32 %v158, %v158
  %v185 = vmul.f32 %v161, %v161
  %v186 = vsel %vm164, %v182, 0.0
  %v187 = vsel %vm164, %v183, 0.0
  %v188 = vadd.f32 %v186, %v187
  %v189 = vsel %vm164, %v184, 0.0
  %v190 = vadd.f32 %v188, %v189
  %v191 = vsel %vm164, %v185, 0.0
  %v192 = vadd.f32 %v190, %v191
  %v193 = vrot.slane %v192, 4
  %v194 = vadd.f32 %v192, %v193
  %v195 = vrot.slane %v194, 2
  %v196 = vadd.f32 %v194, %v195
  %v197 = vrot.slane %v196, 1
  %v198 = vadd.f32 %v196, %v197
  %vm199 = vcmask 1040384
  %v200 = vsel %vm199, %v181, %v198
  %vm201 = vcmask 254976
  %202 = vst.msk [vmem:[%s3] sm:$0x3] %vm201, %v200
  // Predicated region
  $region10: #{unet_forward.34} parent=0 // pred_check
    _
  $region11: #{unet_forward.34} parent=0 // pred_check_branch
    %204 = sbr.rel (0) target = $region13
  $region12: #{unet_forward.34} parent=0 // pred_region
    _
  $region13: #{unet_forward.34} parent=0 // pred_fallthru
    _
  // Predicated region
  $region14: #{unet_forward.34} parent=0 // pred_check
    _
  $region15: #{unet_forward.34} parent=0 // pred_check_branch
    %206 = sbr.rel (0) target = $region17
  $region16: #{unet_forward.34} parent=0 // pred_region
    _
  $region17: #{unet_forward.34} parent=0 // pred_fallthru
    _
  // Predicated region
  $region18: #{unet_forward.34} parent=0 // pred_check
    _
  $region19: #{unet_forward.34} parent=0 // pred_check_branch
    %208 = sbr.rel (0) target = $region21
  $region20: #{unet_forward.34} parent=0 // pred_region
    _
  $region21: #{unet_forward.34} parent=0 // pred_fallthru
    _
  // Predicated region
  $region22: #{unet_forward.34} parent=0 // pred_check
    _
  $region23: #{unet_forward.34} parent=0 // pred_check_branch
    %210 = sbr.rel (0) target = $region25
  $region24: #{unet_forward.34} parent=0 // pred_region
    _
  $region25: #{unet_forward.34} parent=0 // pred_fallthru
    _

// kernel: unet_forward.36
$region0: #{unet_forward.36}
  #allocation0 [shape = 'u32[]', space=smem, size = 0x4, offset = 0x4, fixed_abs, tag = 'smem constant byte address 0x4 - core index']
  #allocation1 [shape = 'u32[144,128]{1,0:T(1,128)}', space=vmem, size = 0x12000, scoped, tag = 'internal scratch']
  %s0 = inlined_call_operand.vmem [shape: bf16[32,288], index: 0, kind: input, shape index: {}]
  %s1 = inlined_call_operand.vmem [shape: bf16[288,32], index: 1, kind: input, shape index: {}]
  %s2 = inlined_call_operand.vmem [shape: f32[32,32], index: 2, kind: output, shape index: {0}]
  %s3 = inlined_call_operand.vmem [shape: f32[1,2,32], index: 3, kind: output, shape index: {1}]
  %4 = xla_tuple %s2, %s3
  %s5 = sld [smem:[#allocation0]]
  $region26: #{unet_forward.36} parent=0
    _
  %s7 = ssub.s32 1, %s5
  %s8 = scalar_select 0, %s7, %s5
  // Predicated region
  $region2: #{unet_forward.36} parent=0 // pred_check
    _
  $region3: #{unet_forward.36} parent=0 // pred_check_branch
    %10 = sbr.rel (0) target = $region5
  $region4: #{unet_forward.36} parent=0 // pred_region
    _
  $region5: #{unet_forward.36} parent=0 // pred_fallthru
    _
  // Predicated region
  $region6: #{unet_forward.36} parent=0 // pred_check
    _
  $region7: #{unet_forward.36} parent=0 // pred_check_branch
    %12 = sbr.rel (0) target = $region9
  $region8: #{unet_forward.36} parent=0 // pred_region
    _
  $region9: #{unet_forward.36} parent=0 // pred_fallthru
    _
  %v14 = vld [vmem:[%s0] sm:$0xff]
  %v15 = vld [vmem:[%s0 + $0x8] sm:$0xf]
  %v16 = vld [vmem:[%s0 + $0xc] sm:$0xff]
  %v17 = vld [vmem:[%s0 + $0x14] sm:$0xf]
  %v18 = vld [vmem:[%s0 + $0x18] sm:$0xff]
  %v19 = vld [vmem:[%s0 + $0x20] sm:$0xf]
  %v20 = vld [vmem:[%s0 + $0x24] sm:$0xff]
  %v21 = vld [vmem:[%s0 + $0x2c] sm:$0xf]
  %v22 = vld [vmem:[%s1] sm:$0xf]
  %v23 = vld [vmem:[%s1 + $0x4] sm:$0xf]
  %v24 = vld [vmem:[%s1 + $0x8] sm:$0xf]
  %v25 = vld [vmem:[%s1 + $0xc] sm:$0xf]
  %v26 = vld [vmem:[%s1 + $0x10] sm:$0xf]
  %v27 = vld [vmem:[%s1 + $0x14] sm:$0xf]
  %v28 = vld [vmem:[%s1 + $0x18] sm:$0xf]
  %v29 = vld [vmem:[%s1 + $0x1c] sm:$0xf]
  %v30 = vld [vmem:[%s1 + $0x20] sm:$0xf]
  %v31 = vld [vmem:[%s1 + $0x24] sm:$0xf]
  %v32 = vld [vmem:[%s1 + $0x28] sm:$0xf]
  %v33 = vld [vmem:[%s1 + $0x2c] sm:$0xf]
  %v34 = vld [vmem:[%s1 + $0x30] sm:$0xf]
  %v35 = vld [vmem:[%s1 + $0x34] sm:$0xf]
  %v36 = vld [vmem:[%s1 + $0x38] sm:$0xf]
  %v37 = vld [vmem:[%s1 + $0x3c] sm:$0xf]
  %v38 = vld [vmem:[%s1 + $0x40] sm:$0xf]
  %v39 = vld [vmem:[%s1 + $0x44] sm:$0xf]
  %v40 = vld [vmem:[%s1 + $0x48] sm:$0xf]
  %v41 = vld [vmem:[%s1 + $0x4c] sm:$0xf]
  %v42 = vld [vmem:[%s1 + $0x50] sm:$0xf]
  %v43 = vld [vmem:[%s1 + $0x54] sm:$0xf]
  %v44 = vld [vmem:[%s1 + $0x58] sm:$0xf]
  %v45 = vld [vmem:[%s1 + $0x5c] sm:$0xf]
  %v46 = vld [vmem:[%s1 + $0x60] sm:$0xf]
  %v47 = vld [vmem:[%s1 + $0x64] sm:$0xf]
  %v48 = vld [vmem:[%s1 + $0x68] sm:$0xf]
  %v49 = vld [vmem:[%s1 + $0x6c] sm:$0xf]
  %v50 = vld [vmem:[%s1 + $0x70] sm:$0xf]
  %v51 = vld [vmem:[%s1 + $0x74] sm:$0xf]
  %v52 = vld [vmem:[%s1 + $0x78] sm:$0xf]
  %v53 = vld [vmem:[%s1 + $0x7c] sm:$0xf]
  %v54 = vld [vmem:[%s1 + $0x80] sm:$0xf]
  %v55 = vld [vmem:[%s1 + $0x84] sm:$0xf]
  %v56 = vld [vmem:[%s1 + $0x88] sm:$0xf]
  %v57 = vld [vmem:[%s1 + $0x8c] sm:$0xf]
  %v66 = vunpack.c.l.b16 %v14
  %v67 = vunpack.c.h.b16 %v14
  %v68 = vunpack.c.l.b16 %v15
  %v69 = vunpack.c.l.b16 %v16
  %v70 = vunpack.c.h.b16 %v16
  %v71 = vunpack.c.l.b16 %v17
  %v72 = vunpack.c.l.b16 %v18
  %v73 = vunpack.c.h.b16 %v18
  %v74 = vunpack.c.l.b16 %v19
  %v75 = vunpack.c.l.b16 %v20
  %v76 = vunpack.c.h.b16 %v20
  %v77 = vunpack.c.l.b16 %v21
  %v78 = vpack.c.b16 %v69, %v66
  %v79 = vpack.c.b16 %v70, %v67
  %v80 = vpack.c.b16 %v71, %v68
  %v81 = vpack.c.b16 %v75, %v72
  %v82 = vpack.c.b16 %v76, %v73
  %v83 = vpack.c.b16 %v77, %v74
  %v124 = vunpack.c.l.b16 %v22
  %v125 = vunpack.c.l.b16 %v23
  %v126 = vunpack.c.l.b16 %v24
  %v127 = vunpack.c.l.b16 %v25
  %v128 = vunpack.c.l.b16 %v26
  %v129 = vunpack.c.l.b16 %v27
  %v130 = vunpack.c.l.b16 %v28
  %v131 = vunpack.c.l.b16 %v29
  %v132 = vunpack.c.l.b16 %v30
  %v133 = vunpack.c.l.b16 %v31
  %v134 = vunpack.c.l.b16 %v32
  %v135 = vunpack.c.l.b16 %v33
  %v136 = vunpack.c.l.b16 %v34
  %v137 = vunpack.c.l.b16 %v35
  %v138 = vunpack.c.l.b16 %v36
  %v139 = vunpack.c.l.b16 %v37
  %v140 = vunpack.c.l.b16 %v38
  %v141 = vunpack.c.l.b16 %v39
  %v142 = vunpack.c.l.b16 %v40
  %v143 = vunpack.c.l.b16 %v41
  %v144 = vunpack.c.l.b16 %v42
  %v145 = vunpack.c.l.b16 %v43
  %v146 = vunpack.c.l.b16 %v44
  %v147 = vunpack.c.l.b16 %v45
  %v148 = vunpack.c.l.b16 %v46
  %v149 = vunpack.c.l.b16 %v47
  %v150 = vunpack.c.l.b16 %v48
  %v151 = vunpack.c.l.b16 %v49
  %v152 = vunpack.c.l.b16 %v50
  %v153 = vunpack.c.l.b16 %v51
  %v154 = vunpack.c.l.b16 %v52
  %v155 = vunpack.c.l.b16 %v53
  %v156 = vunpack.c.l.b16 %v54
  %v157 = vunpack.c.l.b16 %v55
  %v158 = vunpack.c.l.b16 %v56
  %v159 = vunpack.c.l.b16 %v57
  %v160 = vpack.c.b16 %v125, %v124
  %v161 = vpack.c.b16 %v127, %v126
  %v162 = vpack.c.b16 %v129, %v128
  %v163 = vpack.c.b16 %v131, %v130
  %v164 = vpack.c.b16 %v133, %v132
  %v165 = vpack.c.b16 %v135, %v134
  %v166 = vpack.c.b16 %v137, %v136
  %v167 = vpack.c.b16 %v139, %v138
  %v168 = vpack.c.b16 %v141, %v140
  %v169 = vpack.c.b16 %v143, %v142
  %v170 = vpack.c.b16 %v145, %v144
  %v171 = vpack.c.b16 %v147, %v146
  %v172 = vpack.c.b16 %v149, %v148
  %v173 = vpack.c.b16 %v151, %v150
  %v174 = vpack.c.b16 %v153, %v152
  %v175 = vpack.c.b16 %v155, %v154
  %v176 = vpack.c.b16 %v157, %v156
  %v177 = vpack.c.b16 %v159, %v158
  %vm196 = vcmask 261120
  %v198 = vsel %vm196, %v80, 0
  %v201 = vsel %vm196, %v83, 0
  %203 = vmatprep.subr.bf16.mxu0 0
  %204 = vmatpush1.bf16.msra.mxu0 %v160
  %205 = vmatprep.subr.bf16.mxu0 0
  %206 = vmatpush1.bf16.msra.mxu0 %v161
  %207 = vmatprep.subr.bf16.mxu0 0
  %208 = vmatpush1.bf16.msra.mxu0 %v162
  %209 = vmatprep.subr.bf16.mxu0 0
  %210 = vmatpush1.bf16.msra.mxu0 %v163
  %211 = vmatprep.subr.bf16.mxu0 0
  %212 = vmatpush1.bf16.msra.mxu0 %v164
  %213 = vmatprep.subr.bf16.mxu0 0
  %214 = vmatpush1.bf16.msra.mxu0 %v165
  %215 = vmatprep.subr.bf16.mxu0 0
  %216 = vmatpush1.bf16.msra.mxu0 %v166
  %217 = vmatprep.subr.bf16.mxu0 0
  %218 = vmatpush1.bf16.msra.mxu0 %v167
  %219 = vmatprep.subr.bf16.mxu0 0
  %220 = vmatpush1.bf16.msra.mxu0 %v168
  %221 = vmatprep.subr.bf16.mxu0 0
  %222 = vmatpush1.bf16.msra.mxu0 %v169
  %223 = vmatprep.subr.bf16.mxu0 0
  %224 = vmatpush1.bf16.msra.mxu0 %v170
  %225 = vmatprep.subr.bf16.mxu0 0
  %226 = vmatpush1.bf16.msra.mxu0 %v171
  %227 = vmatprep.subr.bf16.mxu0 0
  %228 = vmatpush1.bf16.msra.mxu0 %v172
  %229 = vmatprep.subr.bf16.mxu0 0
  %230 = vmatpush1.bf16.msra.mxu0 %v173
  %231 = vmatprep.subr.bf16.mxu0 0
  %232 = vmatpush1.bf16.msra.mxu0 %v174
  %233 = vmatprep.subr.bf16.mxu0 0
  %234 = vmatpush1.bf16.msra.mxu0 %v175
  %235 = vmatprep.mubr.bf16.mxu0 %v79
  %236 = vmatmul.mubr.bf16.gmra.mrb[0].mxu0 %v78
  %v237 = vpop.f32.mrb[0].mxu0
  %v238 = vadd.f32 0.0, %v237
  %v239 = vpop.f32.mrb[0].mxu0
  %v240 = vpop.f32.mrb[0].mxu0
  %v241 = vadd.f32 0.0, %v240
  %v242 = vpop.f32.mrb[0].mxu0
  %243 = vmatprep.mubr.bf16.mxu0 %v82
  %244 = vmatmul.mubr.bf16.gmra.mrb[0].mxu0 %v81
  %v245 = vpop.f32.mrb[0].mxu0
  %v246 = vadd.f32 0.0, %v245
  %v247 = vpop.f32.mrb[0].mxu0
  %v248 = vpop.f32.mrb[0].mxu0
  %v249 = vadd.f32 0.0, %v248
  %v250 = vpop.f32.mrb[0].mxu0
  %251 = vdwg.mxu0
  %252 = vmatprep.subr.bf16.mxu0 0
  %253 = vmatpush1.bf16.msra.mxu0 %v176
  %254 = vmatprep.subr.bf16.mxu0 0
  %255 = vmatpush1.bf16.msra.mxu0 %v177
  %256 = vmatprep.subr.bf16.mxu0 0
  %257 = vmatpush1.bf16.msra.mxu0 0
  %258 = vmatprep.subr.bf16.mxu0 0
  %259 = vmatpush1.bf16.msra.mxu0 0
  %260 = vmatprep.subr.bf16.mxu0 0
  %261 = vmatpush1.bf16.msra.mxu0 0
  %262 = vmatprep.subr.bf16.mxu0 0
  %263 = vmatpush1.bf16.msra.mxu0 0
  %264 = vmatprep.subr.bf16.mxu0 0
  %265 = vmatpush1.bf16.msra.mxu0 0
  %266 = vmatprep.subr.bf16.mxu0 0
  %267 = vmatpush1.bf16.msra.mxu0 0
  %268 = vmatprep.subr.bf16.mxu0 0
  %269 = vmatpush1.bf16.msra.mxu0 0
  %270 = vmatprep.subr.bf16.mxu0 0
  %271 = vmatpush1.bf16.msra.mxu0 0
  %272 = vmatprep.subr.bf16.mxu0 0
  %273 = vmatpush1.bf16.msra.mxu0 0
  %274 = vmatprep.subr.bf16.mxu0 0
  %275 = vmatpush1.bf16.msra.mxu0 0
  %276 = vmatprep.subr.bf16.mxu0 0
  %277 = vmatpush1.bf16.msra.mxu0 0
  %278 = vmatprep.subr.bf16.mxu0 0
  %279 = vmatpush1.bf16.msra.mxu0 0
  %280 = vmatprep.subr.bf16.mxu0 0
  %281 = vmatpush1.bf16.msra.mxu0 0
  %282 = vmatprep.subr.bf16.mxu0 0
  %283 = vmatpush1.bf16.msra.mxu0 0
  %284 = vmatprep.mubr.bf16.mxu0 0
  %285 = vmatmul.mubr.bf16.gmra.mrb[0].mxu0 %v198
  %v286 = vpop.f32.mrb[0].mxu0
  %v287 = vadd.f32 %v238, %v286
  %v288 = vpop.f32.mrb[0].mxu0
  %v289 = vpop.f32.mrb[0].mxu0
  %v290 = vadd.f32 %v241, %v289
  %v291 = vpop.f32.mrb[0].mxu0
  %292 = vmatprep.mubr.bf16.mxu0 0
  %293 = vmatmul.mubr.bf16.gmra.mrb[0].mxu0 %v201
  %v294 = vpop.f32.mrb[0].mxu0
  %v295 = vadd.f32 %v246, %v294
  %v296 = vpop.f32.mrb[0].mxu0
  %v297 = vpop.f32.mrb[0].mxu0
  %v298 = vadd.f32 %v249, %v297
  %v299 = vpop.f32.mrb[0].mxu0
  %300 = vdwg.mxu0
  %301 = vst.msk [vmem:[%s2] sm:$0xff] %vm196, %v287
  %302 = vst.msk [vmem:[%s2 + $0x8] sm:$0xff] %vm196, %v290
  %303 = vst.msk [vmem:[%s2 + $0x10] sm:$0xff] %vm196, %v295
  %304 = vst.msk [vmem:[%s2 + $0x18] sm:$0xff] %vm196, %v298
  %v305 = vsel %vm196, %v287, 0.0
  %v306 = vsel %vm196, %v290, 0.0
  %v307 = vadd.f32 %v305, %v306
  %v308 = vsel %vm196, %v295, 0.0
  %v309 = vadd.f32 %v307, %v308
  %v310 = vsel %vm196, %v298, 0.0
  %v311 = vadd.f32 %v309, %v310
  %v312 = vrot.slane %v311, 4
  %v313 = vadd.f32 %v311, %v312
  %v314 = vrot.slane %v313, 2
  %v315 = vadd.f32 %v313, %v314
  %v316 = vrot.slane %v315, 1
  %v317 = vadd.f32 %v315, %v316
  %v318 = vmul.f32 %v287, %v287
  %v319 = vmul.f32 %v290, %v290
  %v320 = vmul.f32 %v295, %v295
  %v321 = vmul.f32 %v298, %v298
  %v322 = vsel %vm196, %v318, 0.0
  %v323 = vsel %vm196, %v319, 0.0
  %v324 = vadd.f32 %v322, %v323
  %v325 = vsel %vm196, %v320, 0.0
  %v326 = vadd.f32 %v324, %v325
  %v327 = vsel %vm196, %v321, 0.0
  %v328 = vadd.f32 %v326, %v327
  %v329 = vrot.slane %v328, 4
  %v330 = vadd.f32 %v328, %v329
  %v331 = vrot.slane %v330, 2
  %v332 = vadd.f32 %v330, %v331
  %v333 = vrot.slane %v332, 1
  %v334 = vadd.f32 %v332, %v333
  %vm335 = vcmask 1040384
  %v336 = vsel %vm335, %v317, %v334
  %vm337 = vcmask 254976
  %338 = vst.msk [vmem:[%s3] sm:$0x3] %vm337, %v336
  // Predicated region
  $region10: #{unet_forward.36} parent=0 // pred_check
    _
  $region11: #{unet_forward.36} parent=0 // pred_check_branch
    %340 = sbr.rel (0) target = $region13
  $region12: #{unet_forward.36} parent=0 // pred_region
    _
  $region13: #{unet_forward.36} parent=0 // pred_fallthru
    _
  // Predicated region
  $region14: #{unet_forward.36} parent=0 // pred_check
    _
  $region15: #{unet_forward.36} parent=0 // pred_check_branch
    %342 = sbr.rel (0) target = $region17
  $region16: #{unet_forward.36} parent=0 // pred_region
    _
  $region17: #{unet_forward.36} parent=0 // pred_fallthru
    _
  // Predicated region
  $region18: #{unet_forward.36} parent=0 // pred_check
    _
  $region19: #{unet_forward.36} parent=0 // pred_check_branch
    %344 = sbr.rel (0) target = $region21
  $region20: #{unet_forward.36} parent=0 // pred_region
    _
  $region21: #{unet_forward.36} parent=0 // pred_fallthru
    _
  // Predicated region
  $region22: #{unet_forward.36} parent=0 // pred_check
    _
  $region23: #{unet_forward.36} parent=0 // pred_check_branch
    %346 = sbr.rel (0) target = $region25
  $region24: #{unet_forward.36} parent=0 // pred_region
    _
  $region25: #{unet_forward.36} parent=0 // pred_fallthru
    _

// kernel: unet_forward.38
$region0: #{unet_forward.38}
  #allocation0 [shape = 'u32[]', space=smem, size = 0x4, offset = 0x4, fixed_abs, tag = 'smem constant byte address 0x4 - core index']
  #allocation1 [shape = 'u32[144,128]{1,0:T(1,128)}', space=vmem, size = 0x12000, scoped, tag = 'internal scratch']
  %s0 = inlined_call_operand.vmem [shape: bf16[32,32], index: 0, kind: input, shape index: {}]
  %s1 = inlined_call_operand.vmem [shape: bf16[32,64], index: 1, kind: input, shape index: {}]
  %s2 = inlined_call_operand.vmem [shape: f32[1,64], index: 2, kind: input, shape index: {}]
  %s3 = inlined_call_operand.vmem [shape: bf16[32,64], index: 3, kind: output, shape index: {}]
  %s4 = sld [smem:[#allocation0]]
  $region22: #{unet_forward.38} parent=0
    _
  %s6 = ssub.s32 1, %s4
  %s7 = scalar_select 0, %s6, %s4
  // Predicated region
  $region2: #{unet_forward.38} parent=0 // pred_check
    _
  $region3: #{unet_forward.38} parent=0 // pred_check_branch
    %9 = sbr.rel (0) target = $region5
  $region4: #{unet_forward.38} parent=0 // pred_region
    _
  $region5: #{unet_forward.38} parent=0 // pred_fallthru
    _
  // Predicated region
  $region6: #{unet_forward.38} parent=0 // pred_check
    _
  $region7: #{unet_forward.38} parent=0 // pred_check_branch
    %11 = sbr.rel (0) target = $region9
  $region8: #{unet_forward.38} parent=0 // pred_region
    _
  $region9: #{unet_forward.38} parent=0 // pred_fallthru
    _
  // Predicated region
  $region10: #{unet_forward.38} parent=0 // pred_check
    _
  $region11: #{unet_forward.38} parent=0 // pred_check_branch
    %13 = sbr.rel (0) target = $region13
  $region12: #{unet_forward.38} parent=0 // pred_region
    _
  $region13: #{unet_forward.38} parent=0 // pred_fallthru
    _
  %v15 = vld [vmem:[%s0] sm:$0xf]
  %v16 = vld [vmem:[%s0 + $0x4] sm:$0xf]
  %v17 = vld [vmem:[%s0 + $0x8] sm:$0xf]
  %v18 = vld [vmem:[%s0 + $0xc] sm:$0xf]
  %v19 = vld [vmem:[%s1] sm:$0xf]
  %v20 = vld [vmem:[%s1 + $0x4] sm:$0xf]
  %v21 = vld [vmem:[%s1 + $0x8] sm:$0xf]
  %v22 = vld [vmem:[%s1 + $0xc] sm:$0xf]
  %v23 = vld [vmem:[%s2] sm:$0x1]
  %v25 = vlaneseq
  %v26 = vshrl.u32 %v25, 7
  %v27 = vsub.s32 0, %v26
  %v28 = vrot.slane %v23, %v27
  %v34 = vunpack.c.l.b16 %v15
  %v35 = vunpack.c.l.b16 %v16
  %v36 = vunpack.c.l.b16 %v17
  %v37 = vunpack.c.l.b16 %v18
  %v38 = vpack.c.b16 %v35, %v34
  %v39 = vpack.c.b16 %v37, %v36
  %v44 = vunpack.c.l.b16 %v19
  %v45 = vunpack.c.l.b16 %v20
  %v46 = vunpack.c.l.b16 %v21
  %v47 = vunpack.c.l.b16 %v22
  %v48 = vpack.c.b16 %v45, %v44
  %v49 = vpack.c.b16 %v47, %v46
  %vm52 = vcmask 261120
  %v54 = vsel %vm52, %v38, 0
  %v57 = vsel %vm52, %v39, 0
  %59 = vmatprep.subr.bf16.mxu0 0
  %60 = vmatpush1.bf16.msra.mxu0 %v48
  %61 = vmatprep.subr.bf16.mxu0 0
  %62 = vmatpush1.bf16.msra.mxu0 %v49
  %63 = vmatprep.subr.bf16.mxu0 0
  %64 = vmatpush1.bf16.msra.mxu0 0
  %65 = vmatprep.subr.bf16.mxu0 0
  %66 = vmatpush1.bf16.msra.mxu0 0
  %67 = vmatprep.subr.bf16.mxu0 0
  %68 = vmatpush1.bf16.msra.mxu0 0
  %69 = vmatprep.subr.bf16.mxu0 0
  %70 = vmatpush1.bf16.msra.mxu0 0
  %71 = vmatprep.subr.bf16.mxu0 0
  %72 = vmatpush1.bf16.msra.mxu0 0
  %73 = vmatprep.subr.bf16.mxu0 0
  %74 = vmatpush1.bf16.msra.mxu0 0
  %75 = vmatprep.subr.bf16.mxu0 0
  %76 = vmatpush1.bf16.msra.mxu0 0
  %77 = vmatprep.subr.bf16.mxu0 0
  %78 = vmatpush1.bf16.msra.mxu0 0
  %79 = vmatprep.subr.bf16.mxu0 0
  %80 = vmatpush1.bf16.msra.mxu0 0
  %81 = vmatprep.subr.bf16.mxu0 0
  %82 = vmatpush1.bf16.msra.mxu0 0
  %83 = vmatprep.subr.bf16.mxu0 0
  %84 = vmatpush1.bf16.msra.mxu0 0
  %85 = vmatprep.subr.bf16.mxu0 0
  %86 = vmatpush1.bf16.msra.mxu0 0
  %87 = vmatprep.subr.bf16.mxu0 0
  %88 = vmatpush1.bf16.msra.mxu0 0
  %89 = vmatprep.subr.bf16.mxu0 0
  %90 = vmatpush1.bf16.msra.mxu0 0
  %91 = vmatprep.mubr.bf16.mxu0 0
  %92 = vmatmul.mubr.bf16.gmra.mrb[0].mxu0 %v54
  %v93 = vpop.f32.mrb[0].mxu0
  %v94 = vadd.f32 %v28, %v93
  %v95 = vpop.f32.mrb[0].mxu0
  %v96 = vpop.f32.mrb[0].mxu0
  %v97 = vadd.f32 %v28, %v96
  %v98 = vpop.f32.mrb[0].mxu0
  %99 = vmatprep.mubr.bf16.mxu0 0
  %100 = vmatmul.mubr.bf16.gmra.mrb[0].mxu0 %v57
  %v101 = vpop.f32.mrb[0].mxu0
  %v102 = vadd.f32 %v28, %v101
  %v103 = vpop.f32.mrb[0].mxu0
  %v104 = vpop.f32.mrb[0].mxu0
  %v105 = vadd.f32 %v28, %v104
  %v106 = vpop.f32.mrb[0].mxu0
  %107 = vdwg.mxu0
  %v108 = vpack.c.bf16 %v97, %v94
  %v109 = vpack.c.bf16 %v105, %v102
  %v112 = vunpack.c.l.b16 %v108
  %v113 = vunpack.c.h.b16 %v108
  %v114 = vunpack.c.l.b16 %v109
  %v115 = vunpack.c.h.b16 %v109
  %v116 = vpack.c.b16 %v112, %v112
  %v117 = vpack.c.b16 %v113, %v113
  %v118 = vpack.c.b16 %v114, %v114
  %v119 = vpack.c.b16 %v115, %v115
  %vm124 = vcmask 519168
  %125 = vst.msk [vmem:[%s3] sm:$0xf] %vm124, %v116
  %126 = vst.msk [vmem:[%s3 + $0x4] sm:$0xf] %vm124, %v117
  %127 = vst.msk [vmem:[%s3 + $0x8] sm:$0xf] %vm124, %v118
  %128 = vst.msk [vmem:[%s3 + $0xc] sm:$0xf] %vm124, %v119
  // Predicated region
  $region14: #{unet_forward.38} parent=0 // pred_check
    _
  $region15: #{unet_forward.38} parent=0 // pred_check_branch
    %130 = sbr.rel (0) target = $region17
  $region16: #{unet_forward.38} parent=0 // pred_region
    _
  $region17: #{unet_forward.38} parent=0 // pred_fallthru
    _
  // Predicated region
  $region18: #{unet_forward.38} parent=0 // pred_check
    _
  $region19: #{unet_forward.38} parent=0 // pred_check_branch
    %132 = sbr.rel (0) target = $region21
  $region20: #{unet_forward.38} parent=0 // pred_region
    _
  $region21: #{unet_forward.38} parent=0 // pred_fallthru
    _

// kernel: tile.18
$region0: #{tile.18}
  #allocation0 [shape = 's32[1]{0}', space=sflag, size = 0x4, scoped, tag = 'scoped memory for tile.18']
  %s0 = inlined_call_operand.vmem [shape: f32[8], index: 0, kind: input, shape index: {}]
  %s1 = inlined_call_operand.vmem [shape: f32[4,8], index: 1, kind: output, shape index: {}]
  // Predicated region
  $region2: #{tile.18} parent=0 // pred_check
    _
  $region3: #{tile.18} parent=0 // pred_check_branch
    %3 = sbr.rel (0) target = $region5
  $region4: #{tile.18} parent=0 // pred_region
    _
  $region5: #{tile.18} parent=0 // pred_fallthru
    _
  %v4 = vld [vmem:[%s0] ss:$0 sm:$0xff]
  %5 = vst [vmem:[%s1] sm:$0xf] %v4

// kernel: tile.19
$region0: #{tile.19}
  %s0 = inlined_call_operand.vmem [shape: f32[4,8], index: 0, kind: input, shape index: {}]
  %s1 = inlined_call_operand.vmem [shape: f32[1,32], index: 1, kind: output, shape index: {}]
  $region1: #{tile.19} parent=0
    #allocation0 [shape = 'u8[4096]{0}', space=vmem, size = 0x1000, scoped, tag = 'scoped mem for output reshape']
    #allocation1 [shape = 'u8[4096]{0}', space=vmem, size = 0x1000, scoped, tag = 'scoped mem for input reshape']
    %s3 = sshllo.u32 0, 4
    %v4 = vld [vmem:[%s0] sm:%s3]
    %5 = vst [vmem:[#allocation1] sm:%s3] %v4
    %v6 = vld [vmem:[#allocation1] sm:$0x1]
    %vm7 = vcmask 64512
    %8 = vst.msk [vmem:[#allocation0] sm:$0x1] %vm7, %v6
    %s9 = scalar_lea.vmem [#allocation1], 3
    %v10 = vld [vmem:[%s9] sm:$0x1]
    %11 = vrot.lane.b32.xlu0 %v10, 24
    %v12 = vpop.permute.xlu0 %11
    %vm13 = vcmask 261312
    %14 = vst.msk [vmem:[#allocation0] sm:$0x1] %vm13, %v12
    %s15 = scalar_lea.vmem [#allocation1], 2
    %v16 = vld [vmem:[%s15] sm:$0x1]
    %17 = vrot.lane.b32.xlu0 %v16, 16
    %v18 = vpop.permute.xlu0 %17
    %vm19 = vcmask 195712
    %20 = vst.msk [vmem:[#allocation0] sm:$0x1] %vm19, %v18
    %s21 = scalar_lea.vmem [#allocation1], 1
    %v22 = vld [vmem:[%s21] sm:$0x1]
    %23 = vrot.lane.b32.xlu0 %v22, 8
    %v24 = vpop.permute.xlu0 %23
    %vm25 = vcmask 130112
    %26 = vst.msk [vmem:[#allocation0] sm:$0x1] %vm25, %v24
    %s28 = sshllo.u32 0, 1
    %v30 = vld [vmem:[#allocation0] sm:%s28]
    %s31 = sshllo.u32 0, 1
    %32 = vst [vmem:[%s1] sm:%s31] %v30

// kernel: unet_forward.43
$region0: #{unet_forward.43}
  #allocation0 [shape = 'u32[]', space=smem, size = 0x4, offset = 0x4, fixed_abs, tag = 'smem constant byte address 0x4 - core index']
  #allocation1 [shape = 'u32[144,128]{1,0:T(1,128)}', space=vmem, size = 0x12000, scoped, tag = 'internal scratch']
  %s0 = inlined_call_operand.vmem [shape: bf16[128,16], index: 0, kind: input, shape index: {}]
  %s1 = inlined_call_operand.vmem [shape: bf16[16,32], index: 1, kind: input, shape index: {}]
  %s2 = inlined_call_operand.vmem [shape: f32[1,32], index: 2, kind: input, shape index: {}]
  %s3 = inlined_call_operand.vmem [shape: bf16[128,32], index: 3, kind: output, shape index: {}]
  %s4 = sld [smem:[#allocation0]]
  $region22: #{unet_forward.43} parent=0
    _
  %s6 = ssub.s32 1, %s4
  %s7 = scalar_select 0, %s6, %s4
  // Predicated region
  $region2: #{unet_forward.43} parent=0 // pred_check
    _
  $region3: #{unet_forward.43} parent=0 // pred_check_branch
    %9 = sbr.rel (0) target = $region5
  $region4: #{unet_forward.43} parent=0 // pred_region
    _
  $region5: #{unet_forward.43} parent=0 // pred_fallthru
    _
  // Predicated region
  $region6: #{unet_forward.43} parent=0 // pred_check
    _
  $region7: #{unet_forward.43} parent=0 // pred_check_branch
    %11 = sbr.rel (0) target = $region9
  $region8: #{unet_forward.43} parent=0 // pred_region
    _
  $region9: #{unet_forward.43} parent=0 // pred_fallthru
    _
  // Predicated region
  $region10: #{unet_forward.43} parent=0 // pred_check
    _
  $region11: #{unet_forward.43} parent=0 // pred_check_branch
    %13 = sbr.rel (0) target = $region13
  $region12: #{unet_forward.43} parent=0 // pred_region
    _
  $region13: #{unet_forward.43} parent=0 // pred_fallthru
    _
  %v15 = vld [vmem:[%s0] sm:$0xf]
  %v16 = vld [vmem:[%s0 + $0x4] sm:$0xf]
  %v17 = vld [vmem:[%s0 + $0x8] sm:$0xf]
  %v18 = vld [vmem:[%s0 + $0xc] sm:$0xf]
  %v19 = vld [vmem:[%s0 + $0x10] sm:$0xf]
  %v20 = vld [vmem:[%s0 + $0x14] sm:$0xf]
  %v21 = vld [vmem:[%s0 + $0x18] sm:$0xf]
  %v22 = vld [vmem:[%s0 + $0x1c] sm:$0xf]
  %v23 = vld [vmem:[%s0 + $0x20] sm:$0xf]
  %v24 = vld [vmem:[%s0 + $0x24] sm:$0xf]
  %v25 = vld [vmem:[%s0 + $0x28] sm:$0xf]
  %v26 = vld [vmem:[%s0 + $0x2c] sm:$0xf]
  %v27 = vld [vmem:[%s0 + $0x30] sm:$0xf]
  %v28 = vld [vmem:[%s0 + $0x34] sm:$0xf]
  %v29 = vld [vmem:[%s0 + $0x38] sm:$0xf]
  %v30 = vld [vmem:[%s0 + $0x3c] sm:$0xf]
  %v31 = vld [vmem:[%s1] sm:$0xf]
  %v32 = vld [vmem:[%s1 + $0x4] sm:$0xf]
  %v33 = vld [vmem:[%s2] sm:$0x1]
  %v35 = vlaneseq
  %v36 = vshrl.u32 %v35, 7
  %v37 = vsub.s32 0, %v36
  %v38 = vrot.slane %v33, %v37
  %v56 = vunpack.c.l.b16 %v15
  %v57 = vunpack.c.l.b16 %v16
  %v58 = vunpack.c.l.b16 %v17
  %v59 = vunpack.c.l.b16 %v18
  %v60 = vunpack.c.l.b16 %v19
  %v61 = vunpack.c.l.b16 %v20
  %v62 = vunpack.c.l.b16 %v21
  %v63 = vunpack.c.l.b16 %v22
  %v64 = vunpack.c.l.b16 %v23
  %v65 = vunpack.c.l.b16 %v24
  %v66 = vunpack.c.l.b16 %v25
  %v67 = vunpack.c.l.b16 %v26
  %v68 = vunpack.c.l.b16 %v27
  %v69 = vunpack.c.l.b16 %v28
  %v70 = vunpack.c.l.b16 %v29
  %v71 = vunpack.c.l.b16 %v30
  %v72 = vpack.c.b16 %v57, %v56
  %v73 = vpack.c.b16 %v59, %v58
  %v74 = vpack.c.b16 %v61, %v60
  %v75 = vpack.c.b16 %v63, %v62
  %v76 = vpack.c.b16 %v65, %v64
  %v77 = vpack.c.b16 %v67, %v66
  %v78 = vpack.c.b16 %v69, %v68
  %v79 = vpack.c.b16 %v71, %v70
  %v82 = vunpack.c.l.b16 %v31
  %v83 = vunpack.c.l.b16 %v32
  %v84 = vpack.c.b16 %v83, %v82
  %vm86 = vcmask 130048
  %v88 = vsel %vm86, %v72, 0
  %v91 = vsel %vm86, %v73, 0
  %v94 = vsel %vm86, %v74, 0
  %v97 = vsel %vm86, %v75, 0
  %v100 = vsel %vm86, %v76, 0
  %v103 = vsel %vm86, %v77, 0
  %v106 = vsel %vm86, %v78, 0
  %v109 = vsel %vm86, %v79, 0
  %111 = vmatprep.subr.bf16.mxu0 0
  %112 = vmatpush1.bf16.msra.mxu0 %v84
  %113 = vmatprep.subr.bf16.mxu0 0
  %114 = vmatpush1.bf16.msra.mxu0 0
  %115 = vmatprep.subr.bf16.mxu0 0
  %116 = vmatpush1.bf16.msra.mxu0 0
  %117 = vmatprep.subr.bf16.mxu0 0
  %118 = vmatpush1.bf16.msra.mxu0 0
  %119 = vmatprep.subr.bf16.mxu0 0
  %120 = vmatpush1.bf16.msra.mxu0 0
  %121 = vmatprep.subr.bf16.mxu0 0
  %122 = vmatpush1.bf16.msra.mxu0 0
  %123 = vmatprep.subr.bf16.mxu0 0
  %124 = vmatpush1.bf16.msra.mxu0 0
  %125 = vmatprep.subr.bf16.mxu0 0
  %126 = vmatpush1.bf16.msra.mxu0 0
  %127 = vmatprep.subr.bf16.mxu0 0
  %128 = vmatpush1.bf16.msra.mxu0 0
  %129 = vmatprep.subr.bf16.mxu0 0
  %130 = vmatpush1.bf16.msra.mxu0 0
  %131 = vmatprep.subr.bf16.mxu0 0
  %132 = vmatpush1.bf16.msra.mxu0 0
  %133 = vmatprep.subr.bf16.mxu0 0
  %134 = vmatpush1.bf16.msra.mxu0 0
  %135 = vmatprep.subr.bf16.mxu0 0
  %136 = vmatpush1.bf16.msra.mxu0 0
  %137 = vmatprep.subr.bf16.mxu0 0
  %138 = vmatpush1.bf16.msra.mxu0 0
  %139 = vmatprep.subr.bf16.mxu0 0
  %140 = vmatpush1.bf16.msra.mxu0 0
  %141 = vmatprep.subr.bf16.mxu0 0
  %142 = vmatpush1.bf16.msra.mxu0 0
  %143 = vmatprep.mubr.bf16.mxu0 0
  %144 = vmatmul.mubr.bf16.gmra.mrb[0].mxu0 %v88
  %v145 = vpop.f32.mrb[0].mxu0
  %v146 = vadd.f32 %v38, %v145
  %v147 = vpop.f32.mrb[0].mxu0
  %v148 = vpop.f32.mrb[0].mxu0
  %v149 = vadd.f32 %v38, %v148
  %v150 = vpop.f32.mrb[0].mxu0
  %151 = vmatprep.mubr.bf16.mxu0 0
  %152 = vmatmul.mubr.bf16.gmra.mrb[0].mxu0 %v91
  %v153 = vpop.f32.mrb[0].mxu0
  %v154 = vadd.f32 %v38, %v153
  %v155 = vpop.f32.mrb[0].mxu0
  %v156 = vpop.f32.mrb[0].mxu0
  %v157 = vadd.f32 %v38, %v156
  %v158 = vpop.f32.mrb[0].mxu0
  %159 = vmatprep.mubr.bf16.mxu0 0
  %160 = vmatmul.mubr.bf16.gmra.mrb[0].mxu0 %v94
  %v161 = vpop.f32.mrb[0].mxu0
  %v162 = vadd.f32 %v38, %v161
  %v163 = vpop.f32.mrb[0].mxu0
  %v164 = vpop.f32.mrb[0].mxu0
  %v165 = vadd.f32 %v38, %v164
  %v166 = vpop.f32.mrb[0].mxu0
  %167 = vmatprep.mubr.bf16.mxu0 0
  %168 = vmatmul.mubr.bf16.gmra.mrb[0].mxu0 %v97
  %v169 = vpop.f32.mrb[0].mxu0
  %v170 = vadd.f32 %v38, %v169
  %v171 = vpop.f32.mrb[0].mxu0
  %v172 = vpop.f32.mrb[0].mxu0
  %v173 = vadd.f32 %v38, %v172
  %v174 = vpop.f32.mrb[0].mxu0
  %175 = vmatprep.mubr.bf16.mxu0 0
  %176 = vmatmul.mubr.bf16.gmra.mrb[0].mxu0 %v100
  %v177 = vpop.f32.mrb[0].mxu0
  %v178 = vadd.f32 %v38, %v177
  %v179 = vpop.f32.mrb[0].mxu0
  %v180 = vpop.f32.mrb[0].mxu0
  %v181 = vadd.f32 %v38, %v180
  %v182 = vpop.f32.mrb[0].mxu0
  %183 = vmatprep.mubr.bf16.mxu0 0
  %184 = vmatmul.mubr.bf16.gmra.mrb[0].mxu0 %v103
  %v185 = vpop.f32.mrb[0].mxu0
  %v186 = vadd.f32 %v38, %v185
  %v187 = vpop.f32.mrb[0].mxu0
  %v188 = vpop.f32.mrb[0].mxu0
  %v189 = vadd.f32 %v38, %v188
  %v190 = vpop.f32.mrb[0].mxu0
  %191 = vmatprep.mubr.bf16.mxu0 0
  %192 = vmatmul.mubr.bf16.gmra.mrb[0].mxu0 %v106
  %v193 = vpop.f32.mrb[0].mxu0
  %v194 = vadd.f32 %v38, %v193
  %v195 = vpop.f32.mrb[0].mxu0
  %v196 = vpop.f32.mrb[0].mxu0
  %v197 = vadd.f32 %v38, %v196
  %v198 = vpop.f32.mrb[0].mxu0
  %199 = vmatprep.mubr.bf16.mxu0 0
  %200 = vmatmul.mubr.bf16.gmra.mrb[0].mxu0 %v109
  %v201 = vpop.f32.mrb[0].mxu0
  %v202 = vadd.f32 %v38, %v201
  %v203 = vpop.f32.mrb[0].mxu0
  %v204 = vpop.f32.mrb[0].mxu0
  %v205 = vadd.f32 %v38, %v204
  %v206 = vpop.f32.mrb[0].mxu0
  %207 = vdwg.mxu0
  %v208 = vpack.c.bf16 %v149, %v146
  %v209 = vpack.c.bf16 %v157, %v154
  %v210 = vpack.c.bf16 %v165, %v162
  %v211 = vpack.c.bf16 %v173, %v170
  %v212 = vpack.c.bf16 %v181, %v178
  %v213 = vpack.c.bf16 %v189, %v186
  %v214 = vpack.c.bf16 %v197, %v194
  %v215 = vpack.c.bf16 %v205, %v202
  %v224 = vunpack.c.l.b16 %v208
  %v225 = vunpack.c.h.b16 %v208
  %v226 = vunpack.c.l.b16 %v209
  %v227 = vunpack.c.h.b16 %v209
  %v228 = vunpack.c.l.b16 %v210
  %v229 = vunpack.c.h.b16 %v210
  %v230 = vunpack.c.l.b16 %v211
  %v231 = vunpack.c.h.b16 %v211
  %v232 = vunpack.c.l.b16 %v212
  %v233 = vunpack.c.h.b16 %v212
  %v234 = vunpack.c.l.b16 %v213
  %v235 = vunpack.c.h.b16 %v213
  %v236 = vunpack.c.l.b16 %v214
  %v237 = vunpack.c.h.b16 %v214
  %v238 = vunpack.c.l.b16 %v215
  %v239 = vunpack.c.h.b16 %v215
  %v240 = vpack.c.b16 %v224, %v224
  %v241 = vpack.c.b16 %v225, %v225
  %v242 = vpack.c.b16 %v226, %v226
  %v243 = vpack.c.b16 %v227, %v227
  %v244 = vpack.c.b16 %v228, %v228
  %v245 = vpack.c.b16 %v229, %v229
  %v246 = vpack.c.b16 %v230, %v230
  %v247 = vpack.c.b16 %v231, %v231
  %v248 = vpack.c.b16 %v232, %v232
  %v249 = vpack.c.b16 %v233, %v233
  %v250 = vpack.c.b16 %v234, %v234
  %v251 = vpack.c.b16 %v235, %v235
  %v252 = vpack.c.b16 %v236, %v236
  %v253 = vpack.c.b16 %v237, %v237
  %v254 = vpack.c.b16 %v238, %v238
  %v255 = vpack.c.b16 %v239, %v239
  %vm272 = vcmask 257024
  %273 = vst.msk [vmem:[%s3] sm:$0xf] %vm272, %v240
  %274 = vst.msk [vmem:[%s3 + $0x4] sm:$0xf] %vm272, %v241
  %275 = vst.msk [vmem:[%s3 + $0x8] sm:$0xf] %vm272, %v242
  %276 = vst.msk [vmem:[%s3 + $0xc] sm:$0xf] %vm272, %v243
  %277 = vst.msk [vmem:[%s3 + $0x10] sm:$0xf] %vm272, %v244
  %278 = vst.msk [vmem:[%s3 + $0x14] sm:$0xf] %vm272, %v245
  %279 = vst.msk [vmem:[%s3 + $0x18] sm:$0xf] %vm272, %v246
  %280 = vst.msk [vmem:[%s3 + $0x1c] sm:$0xf] %vm272, %v247
  %281 = vst.msk [vmem:[%s3 + $0x20] sm:$0xf] %vm272, %v248
  %282 = vst.msk [vmem:[%s3 + $0x24] sm:$0xf] %vm272, %v249
  %283 = vst.msk [vmem:[%s3 + $0x28] sm:$0xf] %vm272, %v250
  %284 = vst.msk [vmem:[%s3 + $0x2c] sm:$0xf] %vm272, %v251
  %285 = vst.msk [vmem:[%s3 + $0x30] sm:$0xf] %vm272, %v252
  %286 = vst.msk [vmem:[%s3 + $0x34] sm:$0xf] %vm272, %v253
  %287 = vst.msk [vmem:[%s3 + $0x38] sm:$0xf] %vm272, %v254
  %288 = vst.msk [vmem:[%s3 + $0x3c] sm:$0xf] %vm272, %v255
  // Predicated region
  $region14: #{unet_forward.43} parent=0 // pred_check
    _
  $region15: #{unet_forward.43} parent=0 // pred_check_branch
    %290 = sbr.rel (0) target = $region17
  $region16: #{unet_forward.43} parent=0 // pred_region
    _
  $region17: #{unet_forward.43} parent=0 // pred_fallthru
    _
  // Predicated region
  $region18: #{unet_forward.43} parent=0 // pred_check
    _
  $region19: #{unet_forward.43} parent=0 // pred_check_branch
    %292 = sbr.rel (0) target = $region21
  $region20: #{unet_forward.43} parent=0 // pred_region
    _
  $region21: #{unet_forward.43} parent=0 // pred_fallthru
    _

// kernel: unet_forward.39
$region0: #{unet_forward.39}
  #allocation0 [shape = 'u32[]', space=smem, size = 0x4, offset = 0x4, fixed_abs, tag = 'smem constant byte address 0x4 - core index']
  #allocation1 [shape = 'u32[144,128]{1,0:T(1,128)}', space=vmem, size = 0x12000, scoped, tag = 'internal scratch']
  %s0 = inlined_call_operand.vmem [shape: bf16[128,288], index: 0, kind: input, shape index: {}]
  %s1 = inlined_call_operand.vmem [shape: bf16[288,16], index: 1, kind: input, shape index: {}]
  %s2 = inlined_call_operand.vmem [shape: f32[128,16], index: 2, kind: output, shape index: {0}]
  %s3 = inlined_call_operand.vmem [shape: f32[1,2,16], index: 3, kind: output, shape index: {1}]
  %4 = xla_tuple %s2, %s3
  %s5 = sld [smem:[#allocation0]]
  $region26: #{unet_forward.39} parent=0
    _
  %s7 = ssub.s32 1, %s5
  %s8 = scalar_select 0, %s7, %s5
  // Predicated region
  $region2: #{unet_forward.39} parent=0 // pred_check
    _
  $region3: #{unet_forward.39} parent=0 // pred_check_branch
    %10 = sbr.rel (0) target = $region5
  $region4: #{unet_forward.39} parent=0 // pred_region
    _
  $region5: #{unet_forward.39} parent=0 // pred_fallthru
    _
  // Predicated region
  $region6: #{unet_forward.39} parent=0 // pred_check
    _
  $region7: #{unet_forward.39} parent=0 // pred_check_branch
    %12 = sbr.rel (0) target = $region9
  $region8: #{unet_forward.39} parent=0 // pred_region
    _
  $region9: #{unet_forward.39} parent=0 // pred_fallthru
    _
  %v14 = vld [vmem:[%s0] sm:$0xff]
  %v15 = vld [vmem:[%s0 + $0x8] sm:$0xf]
  %v16 = vld [vmem:[%s0 + $0xc] sm:$0xff]
  %v17 = vld [vmem:[%s0 + $0x14] sm:$0xf]
  %v18 = vld [vmem:[%s0 + $0x18] sm:$0xff]
  %v19 = vld [vmem:[%s0 + $0x20] sm:$0xf]
  %v20 = vld [vmem:[%s0 + $0x24] sm:$0xff]
  %v21 = vld [vmem:[%s0 + $0x2c] sm:$0xf]
  %v22 = vld [vmem:[%s0 + $0x30] sm:$0xff]
  %v23 = vld [vmem:[%s0 + $0x38] sm:$0xf]
  %v24 = vld [vmem:[%s0 + $0x3c] sm:$0xff]
  %v25 = vld [vmem:[%s0 + $0x44] sm:$0xf]
  %v26 = vld [vmem:[%s0 + $0x48] sm:$0xff]
  %v27 = vld [vmem:[%s0 + $0x50] sm:$0xf]
  %v28 = vld [vmem:[%s0 + $0x54] sm:$0xff]
  %v29 = vld [vmem:[%s0 + $0x5c] sm:$0xf]
  %v30 = vld [vmem:[%s0 + $0x60] sm:$0xff]
  %v31 = vld [vmem:[%s0 + $0x68] sm:$0xf]
  %v32 = vld [vmem:[%s0 + $0x6c] sm:$0xff]
  %v33 = vld [vmem:[%s0 + $0x74] sm:$0xf]
  %v34 = vld [vmem:[%s0 + $0x78] sm:$0xff]
  %v35 = vld [vmem:[%s0 + $0x80] sm:$0xf]
  %v36 = vld [vmem:[%s0 + $0x84] sm:$0xff]
  %v37 = vld [vmem:[%s0 + $0x8c] sm:$0xf]
  %v38 = vld [vmem:[%s0 + $0x90] sm:$0xff]
  %v39 = vld [vmem:[%s0 + $0x98] sm:$0xf]
  %v40 = vld [vmem:[%s0 + $0x9c] sm:$0xff]
  %v41 = vld [vmem:[%s0 + $0xa4] sm:$0xf]
  %v42 = vld [vmem:[%s0 + $0xa8] sm:$0xff]
  %v43 = vld [vmem:[%s0 + $0xb0] sm:$0xf]
  %v44 = vld [vmem:[%s0 + $0xb4] sm:$0xff]
  %v45 = vld [vmem:[%s0 + $0xbc] sm:$0xf]
  %v46 = vld [vmem:[%s1] sm:$0xf]
  %v47 = vld [vmem:[%s1 + $0x4] sm:$0xf]
  %v48 = vld [vmem:[%s1 + $0x8] sm:$0xf]
  %v49 = vld [vmem:[%s1 + $0xc] sm:$0xf]
  %v50 = vld [vmem:[%s1 + $0x10] sm:$0xf]
  %v51 = vld [vmem:[%s1 + $0x14] sm:$0xf]
  %v52 = vld [vmem:[%s1 + $0x18] sm:$0xf]
  %v53 = vld [vmem:[%s1 + $0x1c] sm:$0xf]
  %v54 = vld [vmem:[%s1 + $0x20] sm:$0xf]
  %v55 = vld [vmem:[%s1 + $0x24] sm:$0xf]
  %v56 = vld [vmem:[%s1 + $0x28] sm:$0xf]
  %v57 = vld [vmem:[%s1 + $0x2c] sm:$0xf]
  %v58 = vld [vmem:[%s1 + $0x30] sm:$0xf]
  %v59 = vld [vmem:[%s1 + $0x34] sm:$0xf]
  %v60 = vld [vmem:[%s1 + $0x38] sm:$0xf]
  %v61 = vld [vmem:[%s1 + $0x3c] sm:$0xf]
  %v62 = vld [vmem:[%s1 + $0x40] sm:$0xf]
  %v63 = vld [vmem:[%s1 + $0x44] sm:$0xf]
  %v64 = vld [vmem:[%s1 + $0x48] sm:$0xf]
  %v65 = vld [vmem:[%s1 + $0x4c] sm:$0xf]
  %v66 = vld [vmem:[%s1 + $0x50] sm:$0xf]
  %v67 = vld [vmem:[%s1 + $0x54] sm:$0xf]
  %v68 = vld [vmem:[%s1 + $0x58] sm:$0xf]
  %v69 = vld [vmem:[%s1 + $0x5c] sm:$0xf]
  %v70 = vld [vmem:[%s1 + $0x60] sm:$0xf]
  %v71 = vld [vmem:[%s1 + $0x64] sm:$0xf]
  %v72 = vld [vmem:[%s1 + $0x68] sm:$0xf]
  %v73 = vld [vmem:[%s1 + $0x6c] sm:$0xf]
  %v74 = vld [vmem:[%s1 + $0x70] sm:$0xf]
  %v75 = vld [vmem:[%s1 + $0x74] sm:$0xf]
  %v76 = vld [vmem:[%s1 + $0x78] sm:$0xf]
  %v77 = vld [vmem:[%s1 + $0x7c] sm:$0xf]
  %v78 = vld [vmem:[%s1 + $0x80] sm:$0xf]
  %v79 = vld [vmem:[%s1 + $0x84] sm:$0xf]
  %v80 = vld [vmem:[%s1 + $0x88] sm:$0xf]
  %v81 = vld [vmem:[%s1 + $0x8c] sm:$0xf]
  %v114 = vunpack.c.l.b16 %v14
  %v115 = vunpack.c.h.b16 %v14
  %v116 = vunpack.c.l.b16 %v15
  %v117 = vunpack.c.l.b16 %v16
  %v118 = vunpack.c.h.b16 %v16
  %v119 = vunpack.c.l.b16 %v17
  %v120 = vunpack.c.l.b16 %v18
  %v121 = vunpack.c.h.b16 %v18
  %v122 = vunpack.c.l.b16 %v19
  %v123 = vunpack.c.l.b16 %v20
  %v124 = vunpack.c.h.b16 %v20
  %v125 = vunpack.c.l.b16 %v21
  %v126 = vunpack.c.l.b16 %v22
  %v127 = vunpack.c.h.b16 %v22
  %v128 = vunpack.c.l.b16 %v23
  %v129 = vunpack.c.l.b16 %v24
  %v130 = vunpack.c.h.b16 %v24
  %v131 = vunpack.c.l.b16 %v25
  %v132 = vunpack.c.l.b16 %v26
  %v133 = vunpack.c.h.b16 %v26
  %v134 = vunpack.c.l.b16 %v27
  %v135 = vunpack.c.l.b16 %v28
  %v136 = vunpack.c.h.b16 %v28
  %v137 = vunpack.c.l.b16 %v29
  %v138 = vunpack.c.l.b16 %v30
  %v139 = vunpack.c.h.b16 %v30
  %v140 = vunpack.c.l.b16 %v31
  %v141 = vunpack.c.l.b16 %v32
  %v142 = vunpack.c.h.b16 %v32
  %v143 = vunpack.c.l.b16 %v33
  %v144 = vunpack.c.l.b16 %v34
  %v145 = vunpack.c.h.b16 %v34
  %v146 = vunpack.c.l.b16 %v35
  %v147 = vunpack.c.l.b16 %v36
  %v148 = vunpack.c.h.b16 %v36
  %v149 = vunpack.c.l.b16 %v37
  %v150 = vunpack.c.l.b16 %v38
  %v151 = vunpack.c.h.b16 %v38
  %v152 = vunpack.c.l.b16 %v39
  %v153 = vunpack.c.l.b16 %v40
  %v154 = vunpack.c.h.b16 %v40
  %v155 = vunpack.c.l.b16 %v41
  %v156 = vunpack.c.l.b16 %v42
  %v157 = vunpack.c.h.b16 %v42
  %v158 = vunpack.c.l.b16 %v43
  %v159 = vunpack.c.l.b16 %v44
  %v160 = vunpack.c.h.b16 %v44
  %v161 = vunpack.c.l.b16 %v45
  %v162 = vpack.c.b16 %v117, %v114
  %v163 = vpack.c.b16 %v118, %v115
  %v164 = vpack.c.b16 %v119, %v116
  %v165 = vpack.c.b16 %v123, %v120
  %v166 = vpack.c.b16 %v124, %v121
  %v167 = vpack.c.b16 %v125, %v122
  %v168 = vpack.c.b16 %v129, %v126
  %v169 = vpack.c.b16 %v130, %v127
  %v170 = vpack.c.b16 %v131, %v128
  %v171 = vpack.c.b16 %v135, %v132
  %v172 = vpack.c.b16 %v136, %v133
  %v173 = vpack.c.b16 %v137, %v134
  %v174 = vpack.c.b16 %v141, %v138
  %v175 = vpack.c.b16 %v142, %v139
  %v176 = vpack.c.b16 %v143, %v140
  %v177 = vpack.c.b16 %v147, %v144
  %v178 = vpack.c.b16 %v148, %v145
  %v179 = vpack.c.b16 %v149, %v146
  %v180 = vpack.c.b16 %v153, %v150
  %v181 = vpack.c.b16 %v154, %v151
  %v182 = vpack.c.b16 %v155, %v152
  %v183 = vpack.c.b16 %v159, %v156
  %v184 = vpack.c.b16 %v160, %v157
  %v185 = vpack.c.b16 %v161, %v158
  %v238 = vunpack.c.l.b16 %v46
  %v239 = vunpack.c.l.b16 %v47
  %v240 = vunpack.c.l.b16 %v48
  %v241 = vunpack.c.l.b16 %v49
  %v242 = vunpack.c.l.b16 %v50
  %v243 = vunpack.c.l.b16 %v51
  %v244 = vunpack.c.l.b16 %v52
  %v245 = vunpack.c.l.b16 %v53
  %v246 = vunpack.c.l.b16 %v54
  %v247 = vunpack.c.l.b16 %v55
  %v248 = vunpack.c.l.b16 %v56
  %v249 = vunpack.c.l.b16 %v57
  %v250 = vunpack.c.l.b16 %v58
  %v251 = vunpack.c.l.b16 %v59
  %v252 = vunpack.c.l.b16 %v60
  %v253 = vunpack.c.l.b16 %v61
  %v254 = vunpack.c.l.b16 %v62
  %v255 = vunpack.c.l.b16 %v63
  %v256 = vunpack.c.l.b16 %v64
  %v257 = vunpack.c.l.b16 %v65
  %v258 = vunpack.c.l.b16 %v66
  %v259 = vunpack.c.l.b16 %v67
  %v260 = vunpack.c.l.b16 %v68
  %v261 = vunpack.c.l.b16 %v69
  %v262 = vunpack.c.l.b16 %v70
  %v263 = vunpack.c.l.b16 %v71
  %v264 = vunpack.c.l.b16 %v72
  %v265 = vunpack.c.l.b16 %v73
  %v266 = vunpack.c.l.b16 %v74
  %v267 = vunpack.c.l.b16 %v75
  %v268 = vunpack.c.l.b16 %v76
  %v269 = vunpack.c.l.b16 %v77
  %v270 = vunpack.c.l.b16 %v78
  %v271 = vunpack.c.l.b16 %v79
  %v272 = vunpack.c.l.b16 %v80
  %v273 = vunpack.c.l.b16 %v81
  %v274 = vpack.c.b16 %v239, %v238
  %v275 = vpack.c.b16 %v241, %v240
  %v276 = vpack.c.b16 %v243, %v242
  %v277 = vpack.c.b16 %v245, %v244
  %v278 = vpack.c.b16 %v247, %v246
  %v279 = vpack.c.b16 %v249, %v248
  %v280 = vpack.c.b16 %v251, %v250
  %v281 = vpack.c.b16 %v253, %v252
  %v282 = vpack.c.b16 %v255, %v254
  %v283 = vpack.c.b16 %v257, %v256
  %v284 = vpack.c.b16 %v259, %v258
  %v285 = vpack.c.b16 %v261, %v260
  %v286 = vpack.c.b16 %v263, %v262
  %v287 = vpack.c.b16 %v265, %v264
  %v288 = vpack.c.b16 %v267, %v266
  %v289 = vpack.c.b16 %v269, %v268
  %v290 = vpack.c.b16 %v271, %v270
  %v291 = vpack.c.b16 %v273, %v272
  %vm310 = vcmask 261120
  %v312 = vsel %vm310, %v164, 0
  %v315 = vsel %vm310, %v167, 0
  %v318 = vsel %vm310, %v170, 0
  %v321 = vsel %vm310, %v173, 0
  %v324 = vsel %vm310, %v176, 0
  %v327 = vsel %vm310, %v179, 0
  %v330 = vsel %vm310, %v182, 0
  %v333 = vsel %vm310, %v185, 0
  %335 = vmatprep.subr.bf16.mxu0 0
  %336 = vmatpush1.bf16.msra.mxu0 %v274
  %337 = vmatprep.subr.bf16.mxu0 0
  %338 = vmatpush1.bf16.msra.mxu0 %v275
  %339 = vmatprep.subr.bf16.mxu0 0
  %340 = vmatpush1.bf16.msra.mxu0 %v276
  %341 = vmatprep.subr.bf16.mxu0 0
  %342 = vmatpush1.bf16.msra.mxu0 %v277
  %343 = vmatprep.subr.bf16.mxu0 0
  %344 = vmatpush1.bf16.msra.mxu0 %v278
  %345 = vmatprep.subr.bf16.mxu0 0
  %346 = vmatpush1.bf16.msra.mxu0 %v279
  %347 = vmatprep.subr.bf16.mxu0 0
  %348 = vmatpush1.bf16.msra.mxu0 %v280
  %349 = vmatprep.subr.bf16.mxu0 0
  %350 = vmatpush1.bf16.msra.mxu0 %v281
  %351 = vmatprep.subr.bf16.mxu0 0
  %352 = vmatpush1.bf16.msra.mxu0 %v282
  %353 = vmatprep.subr.bf16.mxu0 0
  %354 = vmatpush1.bf16.msra.mxu0 %v283
  %355 = vmatprep.subr.bf16.mxu0 0
  %356 = vmatpush1.bf16.msra.mxu0 %v284
  %357 = vmatprep.subr.bf16.mxu0 0
  %358 = vmatpush1.bf16.msra.mxu0 %v285
  %359 = vmatprep.subr.bf16.mxu0 0
  %360 = vmatpush1.bf16.msra.mxu0 %v286
  %361 = vmatprep.subr.bf16.mxu0 0
  %362 = vmatpush1.bf16.msra.mxu0 %v287
  %363 = vmatprep.subr.bf16.mxu0 0
  %364 = vmatpush1.bf16.msra.mxu0 %v288
  %365 = vmatprep.subr.bf16.mxu0 0
  %366 = vmatpush1.bf16.msra.mxu0 %v289
  %367 = vmatprep.mubr.bf16.mxu0 %v163
  %368 = vmatmul.mubr.bf16.gmra.mrb[0].mxu0 %v162
  %v369 = vpop.f32.mrb[0].mxu0
  %v370 = vadd.f32 0.0, %v369
  %v371 = vpop.f32.mrb[0].mxu0
  %v372 = vpop.f32.mrb[0].mxu0
  %v373 = vadd.f32 0.0, %v372
  %v374 = vpop.f32.mrb[0].mxu0
  %375 = vmatprep.mubr.bf16.mxu0 %v166
  %376 = vmatmul.mubr.bf16.gmra.mrb[0].mxu0 %v165
  %v377 = vpop.f32.mrb[0].mxu0
  %v378 = vadd.f32 0.0, %v377
  %v379 = vpop.f32.mrb[0].mxu0
  %v380 = vpop.f32.mrb[0].mxu0
  %v381 = vadd.f32 0.0, %v380
  %v382 = vpop.f32.mrb[0].mxu0
  %383 = vmatprep.mubr.bf16.mxu0 %v169
  %384 = vmatmul.mubr.bf16.gmra.mrb[0].mxu0 %v168
  %v385 = vpop.f32.mrb[0].mxu0
  %v386 = vadd.f32 0.0, %v385
  %v387 = vpop.f32.mrb[0].mxu0
  %v388 = vpop.f32.mrb[0].mxu0
  %v389 = vadd.f32 0.0, %v388
  %v390 = vpop.f32.mrb[0].mxu0
  %391 = vmatprep.mubr.bf16.mxu0 %v172
  %392 = vmatmul.mubr.bf16.gmra.mrb[0].mxu0 %v171
  %v393 = vpop.f32.mrb[0].mxu0
  %v394 = vadd.f32 0.0, %v393
  %v395 = vpop.f32.mrb[0].mxu0
  %v396 = vpop.f32.mrb[0].mxu0
  %v397 = vadd.f32 0.0, %v396
  %v398 = vpop.f32.mrb[0].mxu0
  %399 = vmatprep.mubr.bf16.mxu0 %v175
  %400 = vmatmul.mubr.bf16.gmra.mrb[0].mxu0 %v174
  %v401 = vpop.f32.mrb[0].mxu0
  %v402 = vadd.f32 0.0, %v401
  %v403 = vpop.f32.mrb[0].mxu0
  %v404 = vpop.f32.mrb[0].mxu0
  %v405 = vadd.f32 0.0, %v404
  %v406 = vpop.f32.mrb[0].mxu0
  %407 = vmatprep.mubr.bf16.mxu0 %v178
  %408 = vmatmul.mubr.bf16.gmra.mrb[0].mxu0 %v177
  %v409 = vpop.f32.mrb[0].mxu0
  %v410 = vadd.f32 0.0, %v409
  %v411 = vpop.f32.mrb[0].mxu0
  %v412 = vpop.f32.mrb[0].mxu0
  %v413 = vadd.f32 0.0, %v412
  %v414 = vpop.f32.mrb[0].mxu0
  %415 = vmatprep.mubr.bf16.mxu0 %v181
  %416 = vmatmul.mubr.bf16.gmra.mrb[0].mxu0 %v180
  %v417 = vpop.f32.mrb[0].mxu0
  %v418 = vadd.f32 0.0, %v417
  %v419 = vpop.f32.mrb[0].mxu0
  %v420 = vpop.f32.mrb[0].mxu0
  %v421 = vadd.f32 0.0, %v420
  %v422 = vpop.f32.mrb[0].mxu0
  %423 = vmatprep.mubr.bf16.mxu0 %v184
  %424 = vmatmul.mubr.bf16.gmra.mrb[0].mxu0 %v183
  %v425 = vpop.f32.mrb[0].mxu0
  %v426 = vadd.f32 0.0, %v425
  %v427 = vpop.f32.mrb[0].mxu0
  %v428 = vpop.f32.mrb[0].mxu0
  %v429 = vadd.f32 0.0, %v428
  %v430 = vpop.f32.mrb[0].mxu0
  %431 = vdwg.mxu0
  %432 = vmatprep.subr.bf16.mxu0 0
  %433 = vmatpush1.bf16.msra.mxu0 %v290
  %434 = vmatprep.subr.bf16.mxu0 0
  %435 = vmatpush1.bf16.msra.mxu0 %v291
  %436 = vmatprep.subr.bf16.mxu0 0
  %437 = vmatpush1.bf16.msra.mxu0 0
  %438 = vmatprep.subr.bf16.mxu0 0
  %439 = vmatpush1.bf16.msra.mxu0 0
  %440 = vmatprep.subr.bf16.mxu0 0
  %441 = vmatpush1.bf16.msra.mxu0 0
  %442 = vmatprep.subr.bf16.mxu0 0
  %443 = vmatpush1.bf16.msra.mxu0 0
  %444 = vmatprep.subr.bf16.mxu0 0
  %445 = vmatpush1.bf16.msra.mxu0 0
  %446 = vmatprep.subr.bf16.mxu0 0
  %447 = vmatpush1.bf16.msra.mxu0 0
  %448 = vmatprep.subr.bf16.mxu0 0
  %449 = vmatpush1.bf16.msra.mxu0 0
  %450 = vmatprep.subr.bf16.mxu0 0
  %451 = vmatpush1.bf16.msra.mxu0 0
  %452 = vmatprep.subr.bf16.mxu0 0
  %453 = vmatpush1.bf16.msra.mxu0 0
  %454 = vmatprep.subr.bf16.mxu0 0
  %455 = vmatpush1.bf16.msra.mxu0 0
  %456 = vmatprep.subr.bf16.mxu0 0
  %457 = vmatpush1.bf16.msra.mxu0 0
  %458 = vmatprep.subr.bf16.mxu0 0
  %459 = vmatpush1.bf16.msra.mxu0 0
  %460 = vmatprep.subr.bf16.mxu0 0
  %461 = vmatpush1.bf16.msra.mxu0 0
  %462 = vmatprep.subr.bf16.mxu0 0
  %463 = vmatpush1.bf16.msra.mxu0 0
  %464 = vmatprep.mubr.bf16.mxu0 0
  %465 = vmatmul.mubr.bf16.gmra.mrb[0].mxu0 %v312
  %v466 = vpop.f32.mrb[0].mxu0
  %v467 = vadd.f32 %v370, %v466
  %v468 = vpop.f32.mrb[0].mxu0
  %v469 = vpop.f32.mrb[0].mxu0
  %v470 = vadd.f32 %v373, %v469
  %v471 = vpop.f32.mrb[0].mxu0
  %472 = vmatprep.mubr.bf16.mxu0 0
  %473 = vmatmul.mubr.bf16.gmra.mrb[0].mxu0 %v315
  %v474 = vpop.f32.mrb[0].mxu0
  %v475 = vadd.f32 %v378, %v474
  %v476 = vpop.f32.mrb[0].mxu0
  %v477 = vpop.f32.mrb[0].mxu0
  %v478 = vadd.f32 %v381, %v477
  %v479 = vpop.f32.mrb[0].mxu0
  %480 = vmatprep.mubr.bf16.mxu0 0
  %481 = vmatmul.mubr.bf16.gmra.mrb[0].mxu0 %v318
  %v482 = vpop.f32.mrb[0].mxu0
  %v483 = vadd.f32 %v386, %v482
  %v484 = vpop.f32.mrb[0].mxu0
  %v485 = vpop.f32.mrb[0].mxu0
  %v486 = vadd.f32 %v389, %v485
  %v487 = vpop.f32.mrb[0].mxu0
  %488 = vmatprep.mubr.bf16.mxu0 0
  %489 = vmatmul.mubr.bf16.gmra.mrb[0].mxu0 %v321
  %v490 = vpop.f32.mrb[0].mxu0
  %v491 = vadd.f32 %v394, %v490
  %v492 = vpop.f32.mrb[0].mxu0
  %v493 = vpop.f32.mrb[0].mxu0
  %v494 = vadd.f32 %v397, %v493
  %v495 = vpop.f32.mrb[0].mxu0
  %496 = vmatprep.mubr.bf16.mxu0 0
  %497 = vmatmul.mubr.bf16.gmra.mrb[0].mxu0 %v324
  %v498 = vpop.f32.mrb[0].mxu0
  %v499 = vadd.f32 %v402, %v498
  %v500 = vpop.f32.mrb[0].mxu0
  %v501 = vpop.f32.mrb[0].mxu0
  %v502 = vadd.f32 %v405, %v501
  %v503 = vpop.f32.mrb[0].mxu0
  %504 = vmatprep.mubr.bf16.mxu0 0
  %505 = vmatmul.mubr.bf16.gmra.mrb[0].mxu0 %v327
  %v506 = vpop.f32.mrb[0].mxu0
  %v507 = vadd.f32 %v410, %v506
  %v508 = vpop.f32.mrb[0].mxu0
  %v509 = vpop.f32.mrb[0].mxu0
  %v510 = vadd.f32 %v413, %v509
  %v511 = vpop.f32.mrb[0].mxu0
  %512 = vmatprep.mubr.bf16.mxu0 0
  %513 = vmatmul.mubr.bf16.gmra.mrb[0].mxu0 %v330
  %v514 = vpop.f32.mrb[0].mxu0
  %v515 = vadd.f32 %v418, %v514
  %v516 = vpop.f32.mrb[0].mxu0
  %v517 = vpop.f32.mrb[0].mxu0
  %v518 = vadd.f32 %v421, %v517
  %v519 = vpop.f32.mrb[0].mxu0
  %520 = vmatprep.mubr.bf16.mxu0 0
  %521 = vmatmul.mubr.bf16.gmra.mrb[0].mxu0 %v333
  %v522 = vpop.f32.mrb[0].mxu0
  %v523 = vadd.f32 %v426, %v522
  %v524 = vpop.f32.mrb[0].mxu0
  %v525 = vpop.f32.mrb[0].mxu0
  %v526 = vadd.f32 %v429, %v525
  %v527 = vpop.f32.mrb[0].mxu0
  %528 = vdwg.mxu0
  %vm529 = vcmask 130048
  %530 = vst.msk [vmem:[%s2] sm:$0xff] %vm529, %v467
  %531 = vst.msk [vmem:[%s2 + $0x8] sm:$0xff] %vm529, %v470
  %532 = vst.msk [vmem:[%s2 + $0x10] sm:$0xff] %vm529, %v475
  %533 = vst.msk [vmem:[%s2 + $0x18] sm:$0xff] %vm529, %v478
  %534 = vst.msk [vmem:[%s2 + $0x20] sm:$0xff] %vm529, %v483
  %535 = vst.msk [vmem:[%s2 + $0x28] sm:$0xff] %vm529, %v486
  %536 = vst.msk [vmem:[%s2 + $0x30] sm:$0xff] %vm529, %v491
  %537 = vst.msk [vmem:[%s2 + $0x38] sm:$0xff] %vm529, %v494
  %538 = vst.msk [vmem:[%s2 + $0x40] sm:$0xff] %vm529, %v499
  %539 = vst.msk [vmem:[%s2 + $0x48] sm:$0xff] %vm529, %v502
  %540 = vst.msk [vmem:[%s2 + $0x50] sm:$0xff] %vm529, %v507
  %541 = vst.msk [vmem:[%s2 + $0x58] sm:$0xff] %vm529, %v510
  %542 = vst.msk [vmem:[%s2 + $0x60] sm:$0xff] %vm529, %v515
  %543 = vst.msk [vmem:[%s2 + $0x68] sm:$0xff] %vm529, %v518
  %544 = vst.msk [vmem:[%s2 + $0x70] sm:$0xff] %vm529, %v523
  %545 = vst.msk [vmem:[%s2 + $0x78] sm:$0xff] %vm529, %v526
  %v546 = vsel %vm529, %v467, 0.0
  %v547 = vsel %vm529, %v470, 0.0
  %v548 = vadd.f32 %v546, %v547
  %v549 = vsel %vm529, %v475, 0.0
  %v550 = vadd.f32 %v548, %v549
  %v551 = vsel %vm529, %v478, 0.0
  %v552 = vadd.f32 %v550, %v551
  %v553 = vsel %vm529, %v483, 0.0
  %v554 = vadd.f32 %v552, %v553
  %v555 = vsel %vm529, %v486, 0.0
  %v556 = vadd.f32 %v554, %v555
  %v557 = vsel %vm529, %v491, 0.0
  %v558 = vadd.f32 %v556, %v557
  %v559 = vsel %vm529, %v494, 0.0
  %v560 = vadd.f32 %v558, %v559
  %v561 = vsel %vm529, %v499, 0.0
  %v562 = vadd.f32 %v560, %v561
  %v563 = vsel %vm529, %v502, 0.0
  %v564 = vadd.f32 %v562, %v563
  %v565 = vsel %vm529, %v507, 0.0
  %v566 = vadd.f32 %v564, %v565
  %v567 = vsel %vm529, %v510, 0.0
  %v568 = vadd.f32 %v566, %v567
  %v569 = vsel %vm529, %v515, 0.0
  %v570 = vadd.f32 %v568, %v569
  %v571 = vsel %vm529, %v518, 0.0
  %v572 = vadd.f32 %v570, %v571
  %v573 = vsel %vm529, %v523, 0.0
  %v574 = vadd.f32 %v572, %v573
  %v575 = vsel %vm529, %v526, 0.0
  %v576 = vadd.f32 %v574, %v575
  %v577 = vrot.slane %v576, 4
  %v578 = vadd.f32 %v576, %v577
  %v579 = vrot.slane %v578, 2
  %v580 = vadd.f32 %v578, %v579
  %v581 = vrot.slane %v580, 1
  %v582 = vadd.f32 %v580, %v581
  %v583 = vmul.f32 %v467, %v467
  %v584 = vmul.f32 %v470, %v470
  %v585 = vmul.f32 %v475, %v475
  %v586 = vmul.f32 %v478, %v478
  %v587 = vmul.f32 %v483, %v483
  %v588 = vmul.f32 %v486, %v486
  %v589 = vmul.f32 %v491, %v491
  %v590 = vmul.f32 %v494, %v494
  %v591 = vmul.f32 %v499, %v499
  %v592 = vmul.f32 %v502, %v502
  %v593 = vmul.f32 %v507, %v507
  %v594 = vmul.f32 %v510, %v510
  %v595 = vmul.f32 %v515, %v515
  %v596 = vmul.f32 %v518, %v518
  %v597 = vmul.f32 %v523, %v523
  %v598 = vmul.f32 %v526, %v526
  %v599 = vsel %vm529, %v583, 0.0
  %v600 = vsel %vm529, %v584, 0.0
  %v601 = vadd.f32 %v599, %v600
  %v602 = vsel %vm529, %v585, 0.0
  %v603 = vadd.f32 %v601, %v602
  %v604 = vsel %vm529, %v586, 0.0
  %v605 = vadd.f32 %v603, %v604
  %v606 = vsel %vm529, %v587, 0.0
  %v607 = vadd.f32 %v605, %v606
  %v608 = vsel %vm529, %v588, 0.0
  %v609 = vadd.f32 %v607, %v608
  %v610 = vsel %vm529, %v589, 0.0
  %v611 = vadd.f32 %v609, %v610
  %v612 = vsel %vm529, %v590, 0.0
  %v613 = vadd.f32 %v611, %v612
  %v614 = vsel %vm529, %v591, 0.0
  %v615 = vadd.f32 %v613, %v614
  %v616 = vsel %vm529, %v592, 0.0
  %v617 = vadd.f32 %v615, %v616
  %v618 = vsel %vm529, %v593, 0.0
  %v619 = vadd.f32 %v617, %v618
  %v620 = vsel %vm529, %v594, 0.0
  %v621 = vadd.f32 %v619, %v620
  %v622 = vsel %vm529, %v595, 0.0
  %v623 = vadd.f32 %v621, %v622
  %v624 = vsel %vm529, %v596, 0.0
  %v625 = vadd.f32 %v623, %v624
  %v626 = vsel %vm529, %v597, 0.0
  %v627 = vadd.f32 %v625, %v626
  %v628 = vsel %vm529, %v598, 0.0
  %v629 = vadd.f32 %v627, %v628
  %v630 = vrot.slane %v629, 4
  %v631 = vadd.f32 %v629, %v630
  %v632 = vrot.slane %v631, 2
  %v633 = vadd.f32 %v631, %v632
  %v634 = vrot.slane %v633, 1
  %v635 = vadd.f32 %v633, %v634
  %vm636 = vcmask 1040384
  %v637 = vsel %vm636, %v582, %v635
  %vm638 = vcmask 123904
  %639 = vst.msk [vmem:[%s3] sm:$0x3] %vm638, %v637
  // Predicated region
  $region10: #{unet_forward.39} parent=0 // pred_check
    _
  $region11: #{unet_forward.39} parent=0 // pred_check_branch
    %641 = sbr.rel (0) target = $region13
  $region12: #{unet_forward.39} parent=0 // pred_region
    _
  $region13: #{unet_forward.39} parent=0 // pred_fallthru
    _
  // Predicated region
  $region14: #{unet_forward.39} parent=0 // pred_check
    _
  $region15: #{unet_forward.39} parent=0 // pred_check_branch
    %643 = sbr.rel (0) target = $region17
  $region16: #{unet_forward.39} parent=0 // pred_region
    _
  $region17: #{unet_forward.39} parent=0 // pred_fallthru
    _
  // Predicated region
  $region18: #{unet_forward.39} parent=0 // pred_check
    _
  $region19: #{unet_forward.39} parent=0 // pred_check_branch
    %645 = sbr.rel (0) target = $region21
  $region20: #{unet_forward.39} parent=0 // pred_region
    _
  $region21: #{unet_forward.39} parent=0 // pred_fallthru
    _
  // Predicated region
  $region22: #{unet_forward.39} parent=0 // pred_check
    _
  $region23: #{unet_forward.39} parent=0 // pred_check_branch
    %647 = sbr.rel (0) target = $region25
  $region24: #{unet_forward.39} parent=0 // pred_region
    _
  $region25: #{unet_forward.39} parent=0 // pred_fallthru
    _

// kernel: unet_forward.44
$region0: #{unet_forward.44}
  #allocation0 [shape = 'u32[]', space=smem, size = 0x4, offset = 0x4, fixed_abs, tag = 'smem constant byte address 0x4 - core index']
  #allocation1 [shape = 'u32[144,128]{1,0:T(1,128)}', space=vmem, size = 0x12000, scoped, tag = 'internal scratch']
  %s0 = inlined_call_operand.vmem [shape: bf16[512,144], index: 0, kind: input, shape index: {}]
  %s1 = inlined_call_operand.vmem [shape: bf16[144,8], index: 1, kind: input, shape index: {}]
  %s2 = inlined_call_operand.vmem [shape: f32[512,8], index: 2, kind: output, shape index: {0}]
  %s3 = inlined_call_operand.vmem [shape: f32[1,2,8], index: 3, kind: output, shape index: {1}]
  %4 = xla_tuple %s2, %s3
  %s5 = sld [smem:[#allocation0]]
  $region26: #{unet_forward.44} parent=0
    _
  %s7 = ssub.s32 1, %s5
  %s8 = scalar_select 0, %s7, %s5
  // Predicated region
  $region2: #{unet_forward.44} parent=0 // pred_check
    _
  $region3: #{unet_forward.44} parent=0 // pred_check_branch
    %10 = sbr.rel (0) target = $region5
  $region4: #{unet_forward.44} parent=0 // pred_region
    _
  $region5: #{unet_forward.44} parent=0 // pred_fallthru
    _
  // Predicated region
  $region6: #{unet_forward.44} parent=0 // pred_check
    _
  $region7: #{unet_forward.44} parent=0 // pred_check_branch
    %12 = sbr.rel (0) target = $region9
  $region8: #{unet_forward.44} parent=0 // pred_region
    _
  $region9: #{unet_forward.44} parent=0 // pred_fallthru
    _
  %v14 = vld [vmem:[%s0] sm:$0xff]
  %v15 = vld [vmem:[%s0 + $0x8] sm:$0xff]
  %v16 = vld [vmem:[%s0 + $0x10] sm:$0xff]
  %v17 = vld [vmem:[%s0 + $0x18] sm:$0xff]
  %v18 = vld [vmem:[%s0 + $0x20] sm:$0xff]
  %v19 = vld [vmem:[%s0 + $0x28] sm:$0xff]
  %v20 = vld [vmem:[%s0 + $0x30] sm:$0xff]
  %v21 = vld [vmem:[%s0 + $0x38] sm:$0xff]
  %v22 = vld [vmem:[%s0 + $0x40] sm:$0xff]
  %v23 = vld [vmem:[%s0 + $0x48] sm:$0xff]
  %v24 = vld [vmem:[%s0 + $0x50] sm:$0xff]
  %v25 = vld [vmem:[%s0 + $0x58] sm:$0xff]
  %v26 = vld [vmem:[%s0 + $0x60] sm:$0xff]
  %v27 = vld [vmem:[%s0 + $0x68] sm:$0xff]
  %v28 = vld [vmem:[%s0 + $0x70] sm:$0xff]
  %v29 = vld [vmem:[%s0 + $0x78] sm:$0xff]
  %v30 = vld [vmem:[%s0 + $0x80] sm:$0xff]
  %v31 = vld [vmem:[%s0 + $0x88] sm:$0xff]
  %v32 = vld [vmem:[%s0 + $0x90] sm:$0xff]
  %v33 = vld [vmem:[%s0 + $0x98] sm:$0xff]
  %v34 = vld [vmem:[%s0 + $0xa0] sm:$0xff]
  %v35 = vld [vmem:[%s0 + $0xa8] sm:$0xff]
  %v36 = vld [vmem:[%s0 + $0xb0] sm:$0xff]
  %v37 = vld [vmem:[%s0 + $0xb8] sm:$0xff]
  %v38 = vld [vmem:[%s0 + $0xc0] sm:$0xff]
  %v39 = vld [vmem:[%s0 + $0xc8] sm:$0xff]
  %v40 = vld [vmem:[%s0 + $0xd0] sm:$0xff]
  %v41 = vld [vmem:[%s0 + $0xd8] sm:$0xff]
  %v42 = vld [vmem:[%s0 + $0xe0] sm:$0xff]
  %v43 = vld [vmem:[%s0 + $0xe8] sm:$0xff]
  %v44 = vld [vmem:[%s0 + $0xf0] sm:$0xff]
  %v45 = vld [vmem:[%s0 + $0xf8] sm:$0xff]
  %v46 = vld [vmem:[%s0 + $0x100] sm:$0xff]
  %v47 = vld [vmem:[%s0 + $0x108] sm:$0xff]
  %v48 = vld [vmem:[%s0 + $0x110] sm:$0xff]
  %v49 = vld [vmem:[%s0 + $0x118] sm:$0xff]
  %v50 = vld [vmem:[%s0 + $0x120] sm:$0xff]
  %v51 = vld [vmem:[%s0 + $0x128] sm:$0xff]
  %v52 = vld [vmem:[%s0 + $0x130] sm:$0xff]
  %v53 = vld [vmem:[%s0 + $0x138] sm:$0xff]
  %v54 = vld [vmem:[%s0 + $0x140] sm:$0xff]
  %v55 = vld [vmem:[%s0 + $0x148] sm:$0xff]
  %v56 = vld [vmem:[%s0 + $0x150] sm:$0xff]
  %v57 = vld [vmem:[%s0 + $0x158] sm:$0xff]
  %v58 = vld [vmem:[%s0 + $0x160] sm:$0xff]
  %v59 = vld [vmem:[%s0 + $0x168] sm:$0xff]
  %v60 = vld [vmem:[%s0 + $0x170] sm:$0xff]
  %v61 = vld [vmem:[%s0 + $0x178] sm:$0xff]
  %v62 = vld [vmem:[%s0 + $0x180] sm:$0xff]
  %v63 = vld [vmem:[%s0 + $0x188] sm:$0xff]
  %v64 = vld [vmem:[%s0 + $0x190] sm:$0xff]
  %v65 = vld [vmem:[%s0 + $0x198] sm:$0xff]
  %v66 = vld [vmem:[%s0 + $0x1a0] sm:$0xff]
  %v67 = vld [vmem:[%s0 + $0x1a8] sm:$0xff]
  %v68 = vld [vmem:[%s0 + $0x1b0] sm:$0xff]
  %v69 = vld [vmem:[%s0 + $0x1b8] sm:$0xff]
  %v70 = vld [vmem:[%s0 + $0x1c0] sm:$0xff]
  %v71 = vld [vmem:[%s0 + $0x1c8] sm:$0xff]
  %v72 = vld [vmem:[%s0 + $0x1d0] sm:$0xff]
  %v73 = vld [vmem:[%s0 + $0x1d8] sm:$0xff]
  %v74 = vld [vmem:[%s0 + $0x1e0] sm:$0xff]
  %v75 = vld [vmem:[%s0 + $0x1e8] sm:$0xff]
  %v76 = vld [vmem:[%s0 + $0x1f0] sm:$0xff]
  %v77 = vld [vmem:[%s0 + $0x1f8] sm:$0xff]
  %v78 = vld [vmem:[%s1] sm:$0xf]
  %v79 = vld [vmem:[%s1 + $0x4] sm:$0xf]
  %v80 = vld [vmem:[%s1 + $0x8] sm:$0xf]
  %v81 = vld [vmem:[%s1 + $0xc] sm:$0xf]
  %v82 = vld [vmem:[%s1 + $0x10] sm:$0xf]
  %v83 = vld [vmem:[%s1 + $0x14] sm:$0xf]
  %v84 = vld [vmem:[%s1 + $0x18] sm:$0xf]
  %v85 = vld [vmem:[%s1 + $0x1c] sm:$0xf]
  %v86 = vld [vmem:[%s1 + $0x20] sm:$0xf]
  %v87 = vld [vmem:[%s1 + $0x24] sm:$0xf]
  %v88 = vld [vmem:[%s1 + $0x28] sm:$0xf]
  %v89 = vld [vmem:[%s1 + $0x2c] sm:$0xf]
  %v90 = vld [vmem:[%s1 + $0x30] sm:$0xf]
  %v91 = vld [vmem:[%s1 + $0x34] sm:$0xf]
  %v92 = vld [vmem:[%s1 + $0x38] sm:$0xf]
  %v93 = vld [vmem:[%s1 + $0x3c] sm:$0xf]
  %v94 = vld [vmem:[%s1 + $0x40] sm:$0xf]
  %v95 = vld [vmem:[%s1 + $0x44] sm:$0xf]
  %v160 = vunpack.c.l.b16 %v14
  %v161 = vunpack.c.h.b16 %v14
  %v162 = vunpack.c.l.b16 %v15
  %v163 = vunpack.c.h.b16 %v15
  %v164 = vunpack.c.l.b16 %v16
  %v165 = vunpack.c.h.b16 %v16
  %v166 = vunpack.c.l.b16 %v17
  %v167 = vunpack.c.h.b16 %v17
  %v168 = vunpack.c.l.b16 %v18
  %v169 = vunpack.c.h.b16 %v18
  %v170 = vunpack.c.l.b16 %v19
  %v171 = vunpack.c.h.b16 %v19
  %v172 = vunpack.c.l.b16 %v20
  %v173 = vunpack.c.h.b16 %v20
  %v174 = vunpack.c.l.b16 %v21
  %v175 = vunpack.c.h.b16 %v21
  %v176 = vunpack.c.l.b16 %v22
  %v177 = vunpack.c.h.b16 %v22
  %v178 = vunpack.c.l.b16 %v23
  %v179 = vunpack.c.h.b16 %v23
  %v180 = vunpack.c.l.b16 %v24
  %v181 = vunpack.c.h.b16 %v24
  %v182 = vunpack.c.l.b16 %v25
  %v183 = vunpack.c.h.b16 %v25
  %v184 = vunpack.c.l.b16 %v26
  %v185 = vunpack.c.h.b16 %v26
  %v186 = vunpack.c.l.b16 %v27
  %v187 = vunpack.c.h.b16 %v27
  %v188 = vunpack.c.l.b16 %v28
  %v189 = vunpack.c.h.b16 %v28
  %v190 = vunpack.c.l.b16 %v29
  %v191 = vunpack.c.h.b16 %v29
  %v192 = vunpack.c.l.b16 %v30
  %v193 = vunpack.c.h.b16 %v30
  %v194 = vunpack.c.l.b16 %v31
  %v195 = vunpack.c.h.b16 %v31
  %v196 = vunpack.c.l.b16 %v32
  %v197 = vunpack.c.h.b16 %v32
  %v198 = vunpack.c.l.b16 %v33
  %v199 = vunpack.c.h.b16 %v33
  %v200 = vunpack.c.l.b16 %v34
  %v201 = vunpack.c.h.b16 %v34
  %v202 = vunpack.c.l.b16 %v35
  %v203 = vunpack.c.h.b16 %v35
  %v204 = vunpack.c.l.b16 %v36
  %v205 = vunpack.c.h.b16 %v36
  %v206 = vunpack.c.l.b16 %v37
  %v207 = vunpack.c.h.b16 %v37
  %v208 = vunpack.c.l.b16 %v38
  %v209 = vunpack.c.h.b16 %v38
  %v210 = vunpack.c.l.b16 %v39
  %v211 = vunpack.c.h.b16 %v39
  %v212 = vunpack.c.l.b16 %v40
  %v213 = vunpack.c.h.b16 %v40
  %v214 = vunpack.c.l.b16 %v41
  %v215 = vunpack.c.h.b16 %v41
  %v216 = vunpack.c.l.b16 %v42
  %v217 = vunpack.c.h.b16 %v42
  %v218 = vunpack.c.l.b16 %v43
  %v219 = vunpack.c.h.b16 %v43
  %v220 = vunpack.c.l.b16 %v44
  %v221 = vunpack.c.h.b16 %v44
  %v222 = vunpack.c.l.b16 %v45
  %v223 = vunpack.c.h.b16 %v45
  %v224 = vunpack.c.l.b16 %v46
  %v225 = vunpack.c.h.b16 %v46
  %v226 = vunpack.c.l.b16 %v47
  %v227 = vunpack.c.h.b16 %v47
  %v228 = vunpack.c.l.b16 %v48
  %v229 = vunpack.c.h.b16 %v48
  %v230 = vunpack.c.l.b16 %v49
  %v231 = vunpack.c.h.b16 %v49
  %v232 = vunpack.c.l.b16 %v50
  %v233 = vunpack.c.h.b16 %v50
  %v234 = vunpack.c.l.b16 %v51
  %v235 = vunpack.c.h.b16 %v51
  %v236 = vunpack.c.l.b16 %v52
  %v237 = vunpack.c.h.b16 %v52
  %v238 = vunpack.c.l.b16 %v53
  %v239 = vunpack.c.h.b16 %v53
  %v240 = vunpack.c.l.b16 %v54
  %v241 = vunpack.c.h.b16 %v54
  %v242 = vunpack.c.l.b16 %v55
  %v243 = vunpack.c.h.b16 %v55
  %v244 = vunpack.c.l.b16 %v56
  %v245 = vunpack.c.h.b16 %v56
  %v246 = vunpack.c.l.b16 %v57
  %v247 = vunpack.c.h.b16 %v57
  %v248 = vunpack.c.l.b16 %v58
  %v249 = vunpack.c.h.b16 %v58
  %v250 = vunpack.c.l.b16 %v59
  %v251 = vunpack.c.h.b16 %v59
  %v252 = vunpack.c.l.b16 %v60
  %v253 = vunpack.c.h.b16 %v60
  %v254 = vunpack.c.l.b16 %v61
  %v255 = vunpack.c.h.b16 %v61
  %v256 = vunpack.c.l.b16 %v62
  %v257 = vunpack.c.h.b16 %v62
  %v258 = vunpack.c.l.b16 %v63
  %v259 = vunpack.c.h.b16 %v63
  %v260 = vunpack.c.l.b16 %v64
  %v261 = vunpack.c.h.b16 %v64
  %v262 = vunpack.c.l.b16 %v65
  %v263 = vunpack.c.h.b16 %v65
  %v264 = vunpack.c.l.b16 %v66
  %v265 = vunpack.c.h.b16 %v66
  %v266 = vunpack.c.l.b16 %v67
  %v267 = vunpack.c.h.b16 %v67
  %v268 = vunpack.c.l.b16 %v68
  %v269 = vunpack.c.h.b16 %v68
  %v270 = vunpack.c.l.b16 %v69
  %v271 = vunpack.c.h.b16 %v69
  %v272 = vunpack.c.l.b16 %v70
  %v273 = vunpack.c.h.b16 %v70
  %v274 = vunpack.c.l.b16 %v71
  %v275 = vunpack.c.h.b16 %v71
  %v276 = vunpack.c.l.b16 %v72
  %v277 = vunpack.c.h.b16 %v72
  %v278 = vunpack.c.l.b16 %v73
  %v279 = vunpack.c.h.b16 %v73
  %v280 = vunpack.c.l.b16 %v74
  %v281 = vunpack.c.h.b16 %v74
  %v282 = vunpack.c.l.b16 %v75
  %v283 = vunpack.c.h.b16 %v75
  %v284 = vunpack.c.l.b16 %v76
  %v285 = vunpack.c.h.b16 %v76
  %v286 = vunpack.c.l.b16 %v77
  %v287 = vunpack.c.h.b16 %v77
  %v288 = vpack.c.b16 %v162, %v160
  %v289 = vpack.c.b16 %v163, %v161
  %v290 = vpack.c.b16 %v166, %v164
  %v291 = vpack.c.b16 %v167, %v165
  %v292 = vpack.c.b16 %v170, %v168
  %v293 = vpack.c.b16 %v171, %v169
  %v294 = vpack.c.b16 %v174, %v172
  %v295 = vpack.c.b16 %v175, %v173
  %v296 = vpack.c.b16 %v178, %v176
  %v297 = vpack.c.b16 %v179, %v177
  %v298 = vpack.c.b16 %v182, %v180
  %v299 = vpack.c.b16 %v183, %v181
  %v300 = vpack.c.b16 %v186, %v184
  %v301 = vpack.c.b16 %v187, %v185
  %v302 = vpack.c.b16 %v190, %v188
  %v303 = vpack.c.b16 %v191, %v189
  %v304 = vpack.c.b16 %v194, %v192
  %v305 = vpack.c.b16 %v195, %v193
  %v306 = vpack.c.b16 %v198, %v196
  %v307 = vpack.c.b16 %v199, %v197
  %v308 = vpack.c.b16 %v202, %v200
  %v309 = vpack.c.b16 %v203, %v201
  %v310 = vpack.c.b16 %v206, %v204
  %v311 = vpack.c.b16 %v207, %v205
  %v312 = vpack.c.b16 %v210, %v208
  %v313 = vpack.c.b16 %v211, %v209
  %v314 = vpack.c.b16 %v214, %v212
  %v315 = vpack.c.b16 %v215, %v213
  %v316 = vpack.c.b16 %v218, %v216
  %v317 = vpack.c.b16 %v219, %v217
  %v318 = vpack.c.b16 %v222, %v220
  %v319 = vpack.c.b16 %v223, %v221
  %v320 = vpack.c.b16 %v226, %v224
  %v321 = vpack.c.b16 %v227, %v225
  %v322 = vpack.c.b16 %v230, %v228
  %v323 = vpack.c.b16 %v231, %v229
  %v324 = vpack.c.b16 %v234, %v232
  %v325 = vpack.c.b16 %v235, %v233
  %v326 = vpack.c.b16 %v238, %v236
  %v327 = vpack.c.b16 %v239, %v237
  %v328 = vpack.c.b16 %v242, %v240
  %v329 = vpack.c.b16 %v243, %v241
  %v330 = vpack.c.b16 %v246, %v244
  %v331 = vpack.c.b16 %v247, %v245
  %v332 = vpack.c.b16 %v250, %v248
  %v333 = vpack.c.b16 %v251, %v249
  %v334 = vpack.c.b16 %v254, %v252
  %v335 = vpack.c.b16 %v255, %v253
  %v336 = vpack.c.b16 %v258, %v256
  %v337 = vpack.c.b16 %v259, %v257
  %v338 = vpack.c.b16 %v262, %v260
  %v339 = vpack.c.b16 %v263, %v261
  %v340 = vpack.c.b16 %v266, %v264
  %v341 = vpack.c.b16 %v267, %v265
  %v342 = vpack.c.b16 %v270, %v268
  %v343 = vpack.c.b16 %v271, %v269
  %v344 = vpack.c.b16 %v274, %v272
  %v345 = vpack.c.b16 %v275, %v273
  %v346 = vpack.c.b16 %v278, %v276
  %v347 = vpack.c.b16 %v279, %v277
  %v348 = vpack.c.b16 %v282, %v280
  %v349 = vpack.c.b16 %v283, %v281
  %v350 = vpack.c.b16 %v286, %v284
  %v351 = vpack.c.b16 %v287, %v285
  %v402 = vunpack.c.l.b16 %v78
  %v403 = vunpack.c.l.b16 %v79
  %v404 = vunpack.c.l.b16 %v80
  %v405 = vunpack.c.l.b16 %v81
  %v406 = vunpack.c.l.b16 %v82
  %v407 = vunpack.c.l.b16 %v83
  %v408 = vunpack.c.l.b16 %v84
  %v409 = vunpack.c.l.b16 %v85
  %v410 = vunpack.c.l.b16 %v86
  %v411 = vunpack.c.l.b16 %v87
  %v412 = vunpack.c.l.b16 %v88
  %v413 = vunpack.c.l.b16 %v89
  %v414 = vunpack.c.l.b16 %v90
  %v415 = vunpack.c.l.b16 %v91
  %v416 = vunpack.c.l.b16 %v92
  %v417 = vunpack.c.l.b16 %v93
  %v418 = vunpack.c.l.b16 %v94
  %v419 = vunpack.c.l.b16 %v95
  %v420 = vpack.c.b16 %v403, %v402
  %v421 = vpack.c.b16 %v405, %v404
  %v422 = vpack.c.b16 %v407, %v406
  %v423 = vpack.c.b16 %v409, %v408
  %v424 = vpack.c.b16 %v411, %v410
  %v425 = vpack.c.b16 %v413, %v412
  %v426 = vpack.c.b16 %v415, %v414
  %v427 = vpack.c.b16 %v417, %v416
  %v428 = vpack.c.b16 %v419, %v418
  %vm438 = vcmask 130048
  %v440 = vsel %vm438, %v289, 0
  %v443 = vsel %vm438, %v291, 0
  %v446 = vsel %vm438, %v293, 0
  %v449 = vsel %vm438, %v295, 0
  %v452 = vsel %vm438, %v297, 0
  %v455 = vsel %vm438, %v299, 0
  %v458 = vsel %vm438, %v301, 0
  %v461 = vsel %vm438, %v303, 0
  %v464 = vsel %vm438, %v305, 0
  %v467 = vsel %vm438, %v307, 0
  %v470 = vsel %vm438, %v309, 0
  %v473 = vsel %vm438, %v311, 0
  %v476 = vsel %vm438, %v313, 0
  %v479 = vsel %vm438, %v315, 0
  %v482 = vsel %vm438, %v317, 0
  %v485 = vsel %vm438, %v319, 0
  %v488 = vsel %vm438, %v321, 0
  %v491 = vsel %vm438, %v323, 0
  %v494 = vsel %vm438, %v325, 0
  %v497 = vsel %vm438, %v327, 0
  %v500 = vsel %vm438, %v329, 0
  %v503 = vsel %vm438, %v331, 0
  %v506 = vsel %vm438, %v333, 0
  %v509 = vsel %vm438, %v335, 0
  %v512 = vsel %vm438, %v337, 0
  %v515 = vsel %vm438, %v339, 0
  %v518 = vsel %vm438, %v341, 0
  %v521 = vsel %vm438, %v343, 0
  %v524 = vsel %vm438, %v345, 0
  %v527 = vsel %vm438, %v347, 0
  %v530 = vsel %vm438, %v349, 0
  %v533 = vsel %vm438, %v351, 0
  %535 = vmatprep.subr.bf16.mxu0 0
  %536 = vmatpush1.bf16.msra.mxu0 %v420
  %537 = vmatprep.subr.bf16.mxu0 0
  %538 = vmatpush1.bf16.msra.mxu0 %v421
  %539 = vmatprep.subr.bf16.mxu0 0
  %540 = vmatpush1.bf16.msra.mxu0 %v422
  %541 = vmatprep.subr.bf16.mxu0 0
  %542 = vmatpush1.bf16.msra.mxu0 %v423
  %543 = vmatprep.subr.bf16.mxu0 0
  %544 = vmatpush1.bf16.msra.mxu0 %v424
  %545 = vmatprep.subr.bf16.mxu0 0
  %546 = vmatpush1.bf16.msra.mxu0 %v425
  %547 = vmatprep.subr.bf16.mxu0 0
  %548 = vmatpush1.bf16.msra.mxu0 %v426
  %549 = vmatprep.subr.bf16.mxu0 0
  %550 = vmatpush1.bf16.msra.mxu0 %v427
  %551 = vmatprep.subr.bf16.mxu0 0
  %552 = vmatpush1.bf16.msra.mxu0 %v428
  %553 = vmatprep.subr.bf16.mxu0 0
  %554 = vmatpush1.bf16.msra.mxu0 0
  %555 = vmatprep.subr.bf16.mxu0 0
  %556 = vmatpush1.bf16.msra.mxu0 0
  %557 = vmatprep.subr.bf16.mxu0 0
  %558 = vmatpush1.bf16.msra.mxu0 0
  %559 = vmatprep.subr.bf16.mxu0 0
  %560 = vmatpush1.bf16.msra.mxu0 0
  %561 = vmatprep.subr.bf16.mxu0 0
  %562 = vmatpush1.bf16.msra.mxu0 0
  %563 = vmatprep.subr.bf16.mxu0 0
  %564 = vmatpush1.bf16.msra.mxu0 0
  %565 = vmatprep.subr.bf16.mxu0 0
  %566 = vmatpush1.bf16.msra.mxu0 0
  %567 = vmatprep.mubr.bf16.mxu0 %v440
  %568 = vmatmul.mubr.bf16.gmra.mrb[0].mxu0 %v288
  %v569 = vpop.f32.mrb[0].mxu0
  %v570 = vadd.f32 0.0, %v569
  %v571 = vpop.f32.mrb[0].mxu0
  %v572 = vpop.f32.mrb[0].mxu0
  %v573 = vadd.f32 0.0, %v572
  %v574 = vpop.f32.mrb[0].mxu0
  %575 = vmatprep.mubr.bf16.mxu0 %v443
  %576 = vmatmul.mubr.bf16.gmra.mrb[0].mxu0 %v290
  %v577 = vpop.f32.mrb[0].mxu0
  %v578 = vadd.f32 0.0, %v577
  %v579 = vpop.f32.mrb[0].mxu0
  %v580 = vpop.f32.mrb[0].mxu0
  %v581 = vadd.f32 0.0, %v580
  %v582 = vpop.f32.mrb[0].mxu0
  %583 = vmatprep.mubr.bf16.mxu0 %v446
  %584 = vmatmul.mubr.bf16.gmra.mrb[0].mxu0 %v292
  %v585 = vpop.f32.mrb[0].mxu0
  %v586 = vadd.f32 0.0, %v585
  %v587 = vpop.f32.mrb[0].mxu0
  %v588 = vpop.f32.mrb[0].mxu0
  %v589 = vadd.f32 0.0, %v588
  %v590 = vpop.f32.mrb[0].mxu0
  %591 = vmatprep.mubr.bf16.mxu0 %v449
  %592 = vmatmul.mubr.bf16.gmra.mrb[0].mxu0 %v294
  %v593 = vpop.f32.mrb[0].mxu0
  %v594 = vadd.f32 0.0, %v593
  %v595 = vpop.f32.mrb[0].mxu0
  %v596 = vpop.f32.mrb[0].mxu0
  %v597 = vadd.f32 0.0, %v596
  %v598 = vpop.f32.mrb[0].mxu0
  %599 = vmatprep.mubr.bf16.mxu0 %v452
  %600 = vmatmul.mubr.bf16.gmra.mrb[0].mxu0 %v296
  %v601 = vpop.f32.mrb[0].mxu0
  %v602 = vadd.f32 0.0, %v601
  %v603 = vpop.f32.mrb[0].mxu0
  %v604 = vpop.f32.mrb[0].mxu0
  %v605 = vadd.f32 0.0, %v604
  %v606 = vpop.f32.mrb[0].mxu0
  %607 = vmatprep.mubr.bf16.mxu0 %v455
  %608 = vmatmul.mubr.bf16.gmra.mrb[0].mxu0 %v298
  %v609 = vpop.f32.mrb[0].mxu0
  %v610 = vadd.f32 0.0, %v609
  %v611 = vpop.f32.mrb[0].mxu0
  %v612 = vpop.f32.mrb[0].mxu0
  %v613 = vadd.f32 0.0, %v612
  %v614 = vpop.f32.mrb[0].mxu0
  %615 = vmatprep.mubr.bf16.mxu0 %v458
  %616 = vmatmul.mubr.bf16.gmra.mrb[0].mxu0 %v300
  %v617 = vpop.f32.mrb[0].mxu0
  %v618 = vadd.f32 0.0, %v617
  %v619 = vpop.f32.mrb[0].mxu0
  %v620 = vpop.f32.mrb[0].mxu0
  %v621 = vadd.f32 0.0, %v620
  %v622 = vpop.f32.mrb[0].mxu0
  %623 = vmatprep.mubr.bf16.mxu0 %v461
  %624 = vmatmul.mubr.bf16.gmra.mrb[0].mxu0 %v302
  %v625 = vpop.f32.mrb[0].mxu0
  %v626 = vadd.f32 0.0, %v625
  %v627 = vpop.f32.mrb[0].mxu0
  %v628 = vpop.f32.mrb[0].mxu0
  %v629 = vadd.f32 0.0, %v628
  %v630 = vpop.f32.mrb[0].mxu0
  %631 = vmatprep.mubr.bf16.mxu0 %v464
  %632 = vmatmul.mubr.bf16.gmra.mrb[0].mxu0 %v304
  %v633 = vpop.f32.mrb[0].mxu0
  %v634 = vadd.f32 0.0, %v633
  %v635 = vpop.f32.mrb[0].mxu0
  %v636 = vpop.f32.mrb[0].mxu0
  %v637 = vadd.f32 0.0, %v636
  %v638 = vpop.f32.mrb[0].mxu0
  %639 = vmatprep.mubr.bf16.mxu0 %v467
  %640 = vmatmul.mubr.bf16.gmra.mrb[0].mxu0 %v306
  %v641 = vpop.f32.mrb[0].mxu0
  %v642 = vadd.f32 0.0, %v641
  %v643 = vpop.f32.mrb[0].mxu0
  %v644 = vpop.f32.mrb[0].mxu0
  %v645 = vadd.f32 0.0, %v644
  %v646 = vpop.f32.mrb[0].mxu0
  %647 = vmatprep.mubr.bf16.mxu0 %v470
  %648 = vmatmul.mubr.bf16.gmra.mrb[0].mxu0 %v308
  %v649 = vpop.f32.mrb[0].mxu0
  %v650 = vadd.f32 0.0, %v649
  %v651 = vpop.f32.mrb[0].mxu0
  %v652 = vpop.f32.mrb[0].mxu0
  %v653 = vadd.f32 0.0, %v652
  %v654 = vpop.f32.mrb[0].mxu0
  %655 = vmatprep.mubr.bf16.mxu0 %v473
  %656 = vmatmul.mubr.bf16.gmra.mrb[0].mxu0 %v310
  %v657 = vpop.f32.mrb[0].mxu0
  %v658 = vadd.f32 0.0, %v657
  %v659 = vpop.f32.mrb[0].mxu0
  %v660 = vpop.f32.mrb[0].mxu0
  %v661 = vadd.f32 0.0, %v660
  %v662 = vpop.f32.mrb[0].mxu0
  %663 = vmatprep.mubr.bf16.mxu0 %v476
  %664 = vmatmul.mubr.bf16.gmra.mrb[0].mxu0 %v312
  %v665 = vpop.f32.mrb[0].mxu0
  %v666 = vadd.f32 0.0, %v665
  %v667 = vpop.f32.mrb[0].mxu0
  %v668 = vpop.f32.mrb[0].mxu0
  %v669 = vadd.f32 0.0, %v668
  %v670 = vpop.f32.mrb[0].mxu0
  %671 = vmatprep.mubr.bf16.mxu0 %v479
  %672 = vmatmul.mubr.bf16.gmra.mrb[0].mxu0 %v314
  %v673 = vpop.f32.mrb[0].mxu0
  %v674 = vadd.f32 0.0, %v673
  %v675 = vpop.f32.mrb[0].mxu0
  %v676 = vpop.f32.mrb[0].mxu0
  %v677 = vadd.f32 0.0, %v676
  %v678 = vpop.f32.mrb[0].mxu0
  %679 = vmatprep.mubr.bf16.mxu0 %v482
  %680 = vmatmul.mubr.bf16.gmra.mrb[0].mxu0 %v316
  %v681 = vpop.f32.mrb[0].mxu0
  %v682 = vadd.f32 0.0, %v681
  %v683 = vpop.f32.mrb[0].mxu0
  %v684 = vpop.f32.mrb[0].mxu0
  %v685 = vadd.f32 0.0, %v684
  %v686 = vpop.f32.mrb[0].mxu0
  %687 = vmatprep.mubr.bf16.mxu0 %v485
  %688 = vmatmul.mubr.bf16.gmra.mrb[0].mxu0 %v318
  %v689 = vpop.f32.mrb[0].mxu0
  %v690 = vadd.f32 0.0, %v689
  %v691 = vpop.f32.mrb[0].mxu0
  %v692 = vpop.f32.mrb[0].mxu0
  %v693 = vadd.f32 0.0, %v692
  %v694 = vpop.f32.mrb[0].mxu0
  %695 = vmatprep.mubr.bf16.mxu0 %v488
  %696 = vmatmul.mubr.bf16.gmra.mrb[0].mxu0 %v320
  %v697 = vpop.f32.mrb[0].mxu0
  %v698 = vadd.f32 0.0, %v697
  %v699 = vpop.f32.mrb[0].mxu0
  %v700 = vpop.f32.mrb[0].mxu0
  %v701 = vadd.f32 0.0, %v700
  %v702 = vpop.f32.mrb[0].mxu0
  %703 = vmatprep.mubr.bf16.mxu0 %v491
  %704 = vmatmul.mubr.bf16.gmra.mrb[0].mxu0 %v322
  %v705 = vpop.f32.mrb[0].mxu0
  %v706 = vadd.f32 0.0, %v705
  %v707 = vpop.f32.mrb[0].mxu0
  %v708 = vpop.f32.mrb[0].mxu0
  %v709 = vadd.f32 0.0, %v708
  %v710 = vpop.f32.mrb[0].mxu0
  %711 = vmatprep.mubr.bf16.mxu0 %v494
  %712 = vmatmul.mubr.bf16.gmra.mrb[0].mxu0 %v324
  %v713 = vpop.f32.mrb[0].mxu0
  %v714 = vadd.f32 0.0, %v713
  %v715 = vpop.f32.mrb[0].mxu0
  %v716 = vpop.f32.mrb[0].mxu0
  %v717 = vadd.f32 0.0, %v716
  %v718 = vpop.f32.mrb[0].mxu0
  %719 = vmatprep.mubr.bf16.mxu0 %v497
  %720 = vmatmul.mubr.bf16.gmra.mrb[0].mxu0 %v326
  %v721 = vpop.f32.mrb[0].mxu0
  %v722 = vadd.f32 0.0, %v721
  %v723 = vpop.f32.mrb[0].mxu0
  %v724 = vpop.f32.mrb[0].mxu0
  %v725 = vadd.f32 0.0, %v724
  %v726 = vpop.f32.mrb[0].mxu0
  %727 = vmatprep.mubr.bf16.mxu0 %v500
  %728 = vmatmul.mubr.bf16.gmra.mrb[0].mxu0 %v328
  %v729 = vpop.f32.mrb[0].mxu0
  %v730 = vadd.f32 0.0, %v729
  %v731 = vpop.f32.mrb[0].mxu0
  %v732 = vpop.f32.mrb[0].mxu0
  %v733 = vadd.f32 0.0, %v732
  %v734 = vpop.f32.mrb[0].mxu0
  %735 = vmatprep.mubr.bf16.mxu0 %v503
  %736 = vmatmul.mubr.bf16.gmra.mrb[0].mxu0 %v330
  %v737 = vpop.f32.mrb[0].mxu0
  %v738 = vadd.f32 0.0, %v737
  %v739 = vpop.f32.mrb[0].mxu0
  %v740 = vpop.f32.mrb[0].mxu0
  %v741 = vadd.f32 0.0, %v740
  %v742 = vpop.f32.mrb[0].mxu0
  %743 = vmatprep.mubr.bf16.mxu0 %v506
  %744 = vmatmul.mubr.bf16.gmra.mrb[0].mxu0 %v332
  %v745 = vpop.f32.mrb[0].mxu0
  %v746 = vadd.f32 0.0, %v745
  %v747 = vpop.f32.mrb[0].mxu0
  %v748 = vpop.f32.mrb[0].mxu0
  %v749 = vadd.f32 0.0, %v748
  %v750 = vpop.f32.mrb[0].mxu0
  %751 = vmatprep.mubr.bf16.mxu0 %v509
  %752 = vmatmul.mubr.bf16.gmra.mrb[0].mxu0 %v334
  %v753 = vpop.f32.mrb[0].mxu0
  %v754 = vadd.f32 0.0, %v753
  %v755 = vpop.f32.mrb[0].mxu0
  %v756 = vpop.f32.mrb[0].mxu0
  %v757 = vadd.f32 0.0, %v756
  %v758 = vpop.f32.mrb[0].mxu0
  %759 = vmatprep.mubr.bf16.mxu0 %v512
  %760 = vmatmul.mubr.bf16.gmra.mrb[0].mxu0 %v336
  %v761 = vpop.f32.mrb[0].mxu0
  %v762 = vadd.f32 0.0, %v761
  %v763 = vpop.f32.mrb[0].mxu0
  %v764 = vpop.f32.mrb[0].mxu0
  %v765 = vadd.f32 0.0, %v764
  %v766 = vpop.f32.mrb[0].mxu0
  %767 = vmatprep.mubr.bf16.mxu0 %v515
  %768 = vmatmul.mubr.bf16.gmra.mrb[0].mxu0 %v338
  %v769 = vpop.f32.mrb[0].mxu0
  %v770 = vadd.f32 0.0, %v769
  %v771 = vpop.f32.mrb[0].mxu0
  %v772 = vpop.f32.mrb[0].mxu0
  %v773 = vadd.f32 0.0, %v772
  %v774 = vpop.f32.mrb[0].mxu0
  %775 = vmatprep.mubr.bf16.mxu0 %v518
  %776 = vmatmul.mubr.bf16.gmra.mrb[0].mxu0 %v340
  %v777 = vpop.f32.mrb[0].mxu0
  %v778 = vadd.f32 0.0, %v777
  %v779 = vpop.f32.mrb[0].mxu0
  %v780 = vpop.f32.mrb[0].mxu0
  %v781 = vadd.f32 0.0, %v780
  %v782 = vpop.f32.mrb[0].mxu0
  %783 = vmatprep.mubr.bf16.mxu0 %v521
  %784 = vmatmul.mubr.bf16.gmra.mrb[0].mxu0 %v342
  %v785 = vpop.f32.mrb[0].mxu0
  %v786 = vadd.f32 0.0, %v785
  %v787 = vpop.f32.mrb[0].mxu0
  %v788 = vpop.f32.mrb[0].mxu0
  %v789 = vadd.f32 0.0, %v788
  %v790 = vpop.f32.mrb[0].mxu0
  %791 = vmatprep.mubr.bf16.mxu0 %v524
  %792 = vmatmul.mubr.bf16.gmra.mrb[0].mxu0 %v344
  %v793 = vpop.f32.mrb[0].mxu0
  %v794 = vadd.f32 0.0, %v793
  %v795 = vpop.f32.mrb[0].mxu0
  %v796 = vpop.f32.mrb[0].mxu0
  %v797 = vadd.f32 0.0, %v796
  %v798 = vpop.f32.mrb[0].mxu0
  %799 = vmatprep.mubr.bf16.mxu0 %v527
  %800 = vmatmul.mubr.bf16.gmra.mrb[0].mxu0 %v346
  %v801 = vpop.f32.mrb[0].mxu0
  %v802 = vadd.f32 0.0, %v801
  %v803 = vpop.f32.mrb[0].mxu0
  %v804 = vpop.f32.mrb[0].mxu0
  %v805 = vadd.f32 0.0, %v804
  %v806 = vpop.f32.mrb[0].mxu0
  %807 = vmatprep.mubr.bf16.mxu0 %v530
  %808 = vmatmul.mubr.bf16.gmra.mrb[0].mxu0 %v348
  %v809 = vpop.f32.mrb[0].mxu0
  %v810 = vadd.f32 0.0, %v809
  %v811 = vpop.f32.mrb[0].mxu0
  %v812 = vpop.f32.mrb[0].mxu0
  %v813 = vadd.f32 0.0, %v812
  %v814 = vpop.f32.mrb[0].mxu0
  %815 = vmatprep.mubr.bf16.mxu0 %v533
  %816 = vmatmul.mubr.bf16.gmra.mrb[0].mxu0 %v350
  %v817 = vpop.f32.mrb[0].mxu0
  %v818 = vadd.f32 0.0, %v817
  %v819 = vpop.f32.mrb[0].mxu0
  %v820 = vpop.f32.mrb[0].mxu0
  %v821 = vadd.f32 0.0, %v820
  %v822 = vpop.f32.mrb[0].mxu0
  %823 = vdwg.mxu0
  %vm824 = vcmask 64512
  %825 = vst.msk [vmem:[%s2] sm:$0xff] %vm824, %v570
  %826 = vst.msk [vmem:[%s2 + $0x8] sm:$0xff] %vm824, %v573
  %827 = vst.msk [vmem:[%s2 + $0x10] sm:$0xff] %vm824, %v578
  %828 = vst.msk [vmem:[%s2 + $0x18] sm:$0xff] %vm824, %v581
  %829 = vst.msk [vmem:[%s2 + $0x20] sm:$0xff] %vm824, %v586
  %830 = vst.msk [vmem:[%s2 + $0x28] sm:$0xff] %vm824, %v589
  %831 = vst.msk [vmem:[%s2 + $0x30] sm:$0xff] %vm824, %v594
  %832 = vst.msk [vmem:[%s2 + $0x38] sm:$0xff] %vm824, %v597
  %833 = vst.msk [vmem:[%s2 + $0x40] sm:$0xff] %vm824, %v602
  %834 = vst.msk [vmem:[%s2 + $0x48] sm:$0xff] %vm824, %v605
  %835 = vst.msk [vmem:[%s2 + $0x50] sm:$0xff] %vm824, %v610
  %836 = vst.msk [vmem:[%s2 + $0x58] sm:$0xff] %vm824, %v613
  %837 = vst.msk [vmem:[%s2 + $0x60] sm:$0xff] %vm824, %v618
  %838 = vst.msk [vmem:[%s2 + $0x68] sm:$0xff] %vm824, %v621
  %839 = vst.msk [vmem:[%s2 + $0x70] sm:$0xff] %vm824, %v626
  %840 = vst.msk [vmem:[%s2 + $0x78] sm:$0xff] %vm824, %v629
  %841 = vst.msk [vmem:[%s2 + $0x80] sm:$0xff] %vm824, %v634
  %842 = vst.msk [vmem:[%s2 + $0x88] sm:$0xff] %vm824, %v637
  %843 = vst.msk [vmem:[%s2 + $0x90] sm:$0xff] %vm824, %v642
  %844 = vst.msk [vmem:[%s2 + $0x98] sm:$0xff] %vm824, %v645
  %845 = vst.msk [vmem:[%s2 + $0xa0] sm:$0xff] %vm824, %v650
  %846 = vst.msk [vmem:[%s2 + $0xa8] sm:$0xff] %vm824, %v653
  %847 = vst.msk [vmem:[%s2 + $0xb0] sm:$0xff] %vm824, %v658
  %848 = vst.msk [vmem:[%s2 + $0xb8] sm:$0xff] %vm824, %v661
  %849 = vst.msk [vmem:[%s2 + $0xc0] sm:$0xff] %vm824, %v666
  %850 = vst.msk [vmem:[%s2 + $0xc8] sm:$0xff] %vm824, %v669
  %851 = vst.msk [vmem:[%s2 + $0xd0] sm:$0xff] %vm824, %v674
  %852 = vst.msk [vmem:[%s2 + $0xd8] sm:$0xff] %vm824, %v677
  %853 = vst.msk [vmem:[%s2 + $0xe0] sm:$0xff] %vm824, %v682
  %854 = vst.msk [vmem:[%s2 + $0xe8] sm:$0xff] %vm824, %v685
  %855 = vst.msk [vmem:[%s2 + $0xf0] sm:$0xff] %vm824, %v690
  %856 = vst.msk [vmem:[%s2 + $0xf8] sm:$0xff] %vm824, %v693
  %857 = vst.msk [vmem:[%s2 + $0x100] sm:$0xff] %vm824, %v698
  %858 = vst.msk [vmem:[%s2 + $0x108] sm:$0xff] %vm824, %v701
  %859 = vst.msk [vmem:[%s2 + $0x110] sm:$0xff] %vm824, %v706
  %860 = vst.msk [vmem:[%s2 + $0x118] sm:$0xff] %vm824, %v709
  %861 = vst.msk [vmem:[%s2 + $0x120] sm:$0xff] %vm824, %v714
  %862 = vst.msk [vmem:[%s2 + $0x128] sm:$0xff] %vm824, %v717
  %863 = vst.msk [vmem:[%s2 + $0x130] sm:$0xff] %vm824, %v722
  %864 = vst.msk [vmem:[%s2 + $0x138] sm:$0xff] %vm824, %v725
  %865 = vst.msk [vmem:[%s2 + $0x140] sm:$0xff] %vm824, %v730
  %866 = vst.msk [vmem:[%s2 + $0x148] sm:$0xff] %vm824, %v733
  %867 = vst.msk [vmem:[%s2 + $0x150] sm:$0xff] %vm824, %v738
  %868 = vst.msk [vmem:[%s2 + $0x158] sm:$0xff] %vm824, %v741
  %869 = vst.msk [vmem:[%s2 + $0x160] sm:$0xff] %vm824, %v746
  %870 = vst.msk [vmem:[%s2 + $0x168] sm:$0xff] %vm824, %v749
  %871 = vst.msk [vmem:[%s2 + $0x170] sm:$0xff] %vm824, %v754
  %872 = vst.msk [vmem:[%s2 + $0x178] sm:$0xff] %vm824, %v757
  %873 = vst.msk [vmem:[%s2 + $0x180] sm:$0xff] %vm824, %v762
  %874 = vst.msk [vmem:[%s2 + $0x188] sm:$0xff] %vm824, %v765
  %875 = vst.msk [vmem:[%s2 + $0x190] sm:$0xff] %vm824, %v770
  %876 = vst.msk [vmem:[%s2 + $0x198] sm:$0xff] %vm824, %v773
  %877 = vst.msk [vmem:[%s2 + $0x1a0] sm:$0xff] %vm824, %v778
  %878 = vst.msk [vmem:[%s2 + $0x1a8] sm:$0xff] %vm824, %v781
  %879 = vst.msk [vmem:[%s2 + $0x1b0] sm:$0xff] %vm824, %v786
  %880 = vst.msk [vmem:[%s2 + $0x1b8] sm:$0xff] %vm824, %v789
  %881 = vst.msk [vmem:[%s2 + $0x1c0] sm:$0xff] %vm824, %v794
  %882 = vst.msk [vmem:[%s2 + $0x1c8] sm:$0xff] %vm824, %v797
  %883 = vst.msk [vmem:[%s2 + $0x1d0] sm:$0xff] %vm824, %v802
  %884 = vst.msk [vmem:[%s2 + $0x1d8] sm:$0xff] %vm824, %v805
  %885 = vst.msk [vmem:[%s2 + $0x1e0] sm:$0xff] %vm824, %v810
  %886 = vst.msk [vmem:[%s2 + $0x1e8] sm:$0xff] %vm824, %v813
  %887 = vst.msk [vmem:[%s2 + $0x1f0] sm:$0xff] %vm824, %v818
  %888 = vst.msk [vmem:[%s2 + $0x1f8] sm:$0xff] %vm824, %v821
  %v889 = vsel %vm824, %v570, 0.0
  %v890 = vsel %vm824, %v573, 0.0
  %v891 = vadd.f32 %v889, %v890
  %v892 = vsel %vm824, %v578, 0.0
  %v893 = vadd.f32 %v891, %v892
  %v894 = vsel %vm824, %v581, 0.0
  %v895 = vadd.f32 %v893, %v894
  %v896 = vsel %vm824, %v586, 0.0
  %v897 = vadd.f32 %v895, %v896
  %v898 = vsel %vm824, %v589, 0.0
  %v899 = vadd.f32 %v897, %v898
  %v900 = vsel %vm824, %v594, 0.0
  %v901 = vadd.f32 %v899, %v900
  %v902 = vsel %vm824, %v597, 0.0
  %v903 = vadd.f32 %v901, %v902
  %v904 = vsel %vm824, %v602, 0.0
  %v905 = vadd.f32 %v903, %v904
  %v906 = vsel %vm824, %v605, 0.0
  %v907 = vadd.f32 %v905, %v906
  %v908 = vsel %vm824, %v610, 0.0
  %v909 = vadd.f32 %v907, %v908
  %v910 = vsel %vm824, %v613, 0.0
  %v911 = vadd.f32 %v909, %v910
  %v912 = vsel %vm824, %v618, 0.0
  %v913 = vadd.f32 %v911, %v912
  %v914 = vsel %vm824, %v621, 0.0
  %v915 = vadd.f32 %v913, %v914
  %v916 = vsel %vm824, %v626, 0.0
  %v917 = vadd.f32 %v915, %v916
  %v918 = vsel %vm824, %v629, 0.0
  %v919 = vadd.f32 %v917, %v918
  %v920 = vsel %vm824, %v634, 0.0
  %v921 = vadd.f32 %v919, %v920
  %v922 = vsel %vm824, %v637, 0.0
  %v923 = vadd.f32 %v921, %v922
  %v924 = vsel %vm824, %v642, 0.0
  %v925 = vadd.f32 %v923, %v924
  %v926 = vsel %vm824, %v645, 0.0
  %v927 = vadd.f32 %v925, %v926
  %v928 = vsel %vm824, %v650, 0.0
  %v929 = vadd.f32 %v927, %v928
  %v930 = vsel %vm824, %v653, 0.0
  %v931 = vadd.f32 %v929, %v930
  %v932 = vsel %vm824, %v658, 0.0
  %v933 = vadd.f32 %v931, %v932
  %v934 = vsel %vm824, %v661, 0.0
  %v935 = vadd.f32 %v933, %v934
  %v936 = vsel %vm824, %v666, 0.0
  %v937 = vadd.f32 %v935, %v936
  %v938 = vsel %vm824, %v669, 0.0
  %v939 = vadd.f32 %v937, %v938
  %v940 = vsel %vm824, %v674, 0.0
  %v941 = vadd.f32 %v939, %v940
  %v942 = vsel %vm824, %v677, 0.0
  %v943 = vadd.f32 %v941, %v942
  %v944 = vsel %vm824, %v682, 0.0
  %v945 = vadd.f32 %v943, %v944
  %v946 = vsel %vm824, %v685, 0.0
  %v947 = vadd.f32 %v945, %v946
  %v948 = vsel %vm824, %v690, 0.0
  %v949 = vadd.f32 %v947, %v948
  %v950 = vsel %vm824, %v693, 0.0
  %v951 = vadd.f32 %v949, %v950
  %v952 = vsel %vm824, %v698, 0.0
  %v953 = vadd.f32 %v951, %v952
  %v954 = vsel %vm824, %v701, 0.0
  %v955 = vadd.f32 %v953, %v954
  %v956 = vsel %vm824, %v706, 0.0
  %v957 = vadd.f32 %v955, %v956
  %v958 = vsel %vm824, %v709, 0.0
  %v959 = vadd.f32 %v957, %v958
  %v960 = vsel %vm824, %v714, 0.0
  %v961 = vadd.f32 %v959, %v960
  %v962 = vsel %vm824, %v717, 0.0
  %v963 = vadd.f32 %v961, %v962
  %v964 = vsel %vm824, %v722, 0.0
  %v965 = vadd.f32 %v963, %v964
  %v966 = vsel %vm824, %v725, 0.0
  %v967 = vadd.f32 %v965, %v966
  %v968 = vsel %vm824, %v730, 0.0
  %v969 = vadd.f32 %v967, %v968
  %v970 = vsel %vm824, %v733, 0.0
  %v971 = vadd.f32 %v969, %v970
  %v972 = vsel %vm824, %v738, 0.0
  %v973 = vadd.f32 %v971, %v972
  %v974 = vsel %vm824, %v741, 0.0
  %v975 = vadd.f32 %v973, %v974
  %v976 = vsel %vm824, %v746, 0.0
  %v977 = vadd.f32 %v975, %v976
  %v978 = vsel %vm824, %v749, 0.0
  %v979 = vadd.f32 %v977, %v978
  %v980 = vsel %vm824, %v754, 0.0
  %v981 = vadd.f32 %v979, %v980
  %v982 = vsel %vm824, %v757, 0.0
  %v983 = vadd.f32 %v981, %v982
  %v984 = vsel %vm824, %v762, 0.0
  %v985 = vadd.f32 %v983, %v984
  %v986 = vsel %vm824, %v765, 0.0
  %v987 = vadd.f32 %v985, %v986
  %v988 = vsel %vm824, %v770, 0.0
  %v989 = vadd.f32 %v987, %v988
  %v990 = vsel %vm824, %v773, 0.0
  %v991 = vadd.f32 %v989, %v990
  %v992 = vsel %vm824, %v778, 0.0
  %v993 = vadd.f32 %v991, %v992
  %v994 = vsel %vm824, %v781, 0.0
  %v995 = vadd.f32 %v993, %v994
  %v996 = vsel %vm824, %v786, 0.0
  %v997 = vadd.f32 %v995, %v996
  %v998 = vsel %vm824, %v789, 0.0
  %v999 = vadd.f32 %v997, %v998
  %v1000 = vsel %vm824, %v794, 0.0
  %v1001 = vadd.f32 %v999, %v1000
  %v1002 = vsel %vm824, %v797, 0.0
  %v1003 = vadd.f32 %v1001, %v1002
  %v1004 = vsel %vm824, %v802, 0.0
  %v1005 = vadd.f32 %v1003, %v1004
  %v1006 = vsel %vm824, %v805, 0.0
  %v1007 = vadd.f32 %v1005, %v1006
  %v1008 = vsel %vm824, %v810, 0.0
  %v1009 = vadd.f32 %v1007, %v1008
  %v1010 = vsel %vm824, %v813, 0.0
  %v1011 = vadd.f32 %v1009, %v1010
  %v1012 = vsel %vm824, %v818, 0.0
  %v1013 = vadd.f32 %v1011, %v1012
  %v1014 = vsel %vm824, %v821, 0.0
  %v1015 = vadd.f32 %v1013, %v1014
  %v1016 = vrot.slane %v1015, 4
  %v1017 = vadd.f32 %v1015, %v1016
  %v1018 = vrot.slane %v1017, 2
  %v1019 = vadd.f32 %v1017, %v1018
  %v1020 = vrot.slane %v1019, 1
  %v1021 = vadd.f32 %v1019, %v1020
  %v1022 = vmul.f32 %v570, %v570
  %v1023 = vmul.f32 %v573, %v573
  %v1024 = vmul.f32 %v578, %v578
  %v1025 = vmul.f32 %v581, %v581
  %v1026 = vmul.f32 %v586, %v586
  %v1027 = vmul.f32 %v589, %v589
  %v1028 = vmul.f32 %v594, %v594
  %v1029 = vmul.f32 %v597, %v597
  %v1030 = vmul.f32 %v602, %v602
  %v1031 = vmul.f32 %v605, %v605
  %v1032 = vmul.f32 %v610, %v610
  %v1033 = vmul.f32 %v613, %v613
  %v1034 = vmul.f32 %v618, %v618
  %v1035 = vmul.f32 %v621, %v621
  %v1036 = vmul.f32 %v626, %v626
  %v1037 = vmul.f32 %v629, %v629
  %v1038 = vmul.f32 %v634, %v634
  %v1039 = vmul.f32 %v637, %v637
  %v1040 = vmul.f32 %v642, %v642
  %v1041 = vmul.f32 %v645, %v645
  %v1042 = vmul.f32 %v650, %v650
  %v1043 = vmul.f32 %v653, %v653
  %v1044 = vmul.f32 %v658, %v658
  %v1045 = vmul.f32 %v661, %v661
  %v1046 = vmul.f32 %v666, %v666
  %v1047 = vmul.f32 %v669, %v669
  %v1048 = vmul.f32 %v674, %v674
  %v1049 = vmul.f32 %v677, %v677
  %v1050 = vmul.f32 %v682, %v682
  %v1051 = vmul.f32 %v685, %v685
  %v1052 = vmul.f32 %v690, %v690
  %v1053 = vmul.f32 %v693, %v693
  %v1054 = vmul.f32 %v698, %v698
  %v1055 = vmul.f32 %v701, %v701
  %v1056 = vmul.f32 %v706, %v706
  %v1057 = vmul.f32 %v709, %v709
  %v1058 = vmul.f32 %v714, %v714
  %v1059 = vmul.f32 %v717, %v717
  %v1060 = vmul.f32 %v722, %v722
  %v1061 = vmul.f32 %v725, %v725
  %v1062 = vmul.f32 %v730, %v730
  %v1063 = vmul.f32 %v733, %v733
  %v1064 = vmul.f32 %v738, %v738
  %v1065 = vmul.f32 %v741, %v741
  %v1066 = vmul.f32 %v746, %v746
  %v1067 = vmul.f32 %v749, %v749
  %v1068 = vmul.f32 %v754, %v754
  %v1069 = vmul.f32 %v757, %v757
  %v1070 = vmul.f32 %v762, %v762
  %v1071 = vmul.f32 %v765, %v765
  %v1072 = vmul.f32 %v770, %v770
  %v1073 = vmul.f32 %v773, %v773
  %v1074 = vmul.f32 %v778, %v778
  %v1075 = vmul.f32 %v781, %v781
  %v1076 = vmul.f32 %v786, %v786
  %v1077 = vmul.f32 %v789, %v789
  %v1078 = vmul.f32 %v794, %v794
  %v1079 = vmul.f32 %v797, %v797
  %v1080 = vmul.f32 %v802, %v802
  %v1081 = vmul.f32 %v805, %v805
  %v1082 = vmul.f32 %v810, %v810
  %v1083 = vmul.f32 %v813, %v813
  %v1084 = vmul.f32 %v818, %v818
  %v1085 = vmul.f32 %v821, %v821
  %v1086 = vsel %vm824, %v1022, 0.0
  %v1087 = vsel %vm824, %v1023, 0.0
  %v1088 = vadd.f32 %v1086, %v1087
  %v1089 = vsel %vm824, %v1024, 0.0
  %v1090 = vadd.f32 %v1088, %v1089
  %v1091 = vsel %vm824, %v1025, 0.0
  %v1092 = vadd.f32 %v1090, %v1091
  %v1093 = vsel %vm824, %v1026, 0.0
  %v1094 = vadd.f32 %v1092, %v1093
  %v1095 = vsel %vm824, %v1027, 0.0
  %v1096 = vadd.f32 %v1094, %v1095
  %v1097 = vsel %vm824, %v1028, 0.0
  %v1098 = vadd.f32 %v1096, %v1097
  %v1099 = vsel %vm824, %v1029, 0.0
  %v1100 = vadd.f32 %v1098, %v1099
  %v1101 = vsel %vm824, %v1030, 0.0
  %v1102 = vadd.f32 %v1100, %v1101
  %v1103 = vsel %vm824, %v1031, 0.0
  %v1104 = vadd.f32 %v1102, %v1103
  %v1105 = vsel %vm824, %v1032, 0.0
  %v1106 = vadd.f32 %v1104, %v1105
  %v1107 = vsel %vm824, %v1033, 0.0
  %v1108 = vadd.f32 %v1106, %v1107
  %v1109 = vsel %vm824, %v1034, 0.0
  %v1110 = vadd.f32 %v1108, %v1109
  %v1111 = vsel %vm824, %v1035, 0.0
  %v1112 = vadd.f32 %v1110, %v1111
  %v1113 = vsel %vm824, %v1036, 0.0
  %v1114 = vadd.f32 %v1112, %v1113
  %v1115 = vsel %vm824, %v1037, 0.0
  %v1116 = vadd.f32 %v1114, %v1115
  %v1117 = vsel %vm824, %v1038, 0.0
  %v1118 = vadd.f32 %v1116, %v1117
  %v1119 = vsel %vm824, %v1039, 0.0
  %v1120 = vadd.f32 %v1118, %v1119
  %v1121 = vsel %vm824, %v1040, 0.0
  %v1122 = vadd.f32 %v1120, %v1121
  %v1123 = vsel %vm824, %v1041, 0.0
  %v1124 = vadd.f32 %v1122, %v1123
  %v1125 = vsel %vm824, %v1042, 0.0
  %v1126 = vadd.f32 %v1124, %v1125
  %v1127 = vsel %vm824, %v1043, 0.0
  %v1128 = vadd.f32 %v1126, %v1127
  %v1129 = vsel %vm824, %v1044, 0.0
  %v1130 = vadd.f32 %v1128, %v1129
  %v1131 = vsel %vm824, %v1045, 0.0
  %v1132 = vadd.f32 %v1130, %v1131
  %v1133 = vsel %vm824, %v1046, 0.0
  %v1134 = vadd.f32 %v1132, %v1133
  %v1135 = vsel %vm824, %v1047, 0.0
  %v1136 = vadd.f32 %v1134, %v1135
  %v1137 = vsel %vm824, %v1048, 0.0
  %v1138 = vadd.f32 %v1136, %v1137
  %v1139 = vsel %vm824, %v1049, 0.0
  %v1140 = vadd.f32 %v1138, %v1139
  %v1141 = vsel %vm824, %v1050, 0.0
  %v1142 = vadd.f32 %v1140, %v1141
  %v1143 = vsel %vm824, %v1051, 0.0
  %v1144 = vadd.f32 %v1142, %v1143
  %v1145 = vsel %vm824, %v1052, 0.0
  %v1146 = vadd.f32 %v1144, %v1145
  %v1147 = vsel %vm824, %v1053, 0.0
  %v1148 = vadd.f32 %v1146, %v1147
  %v1149 = vsel %vm824, %v1054, 0.0
  %v1150 = vadd.f32 %v1148, %v1149
  %v1151 = vsel %vm824, %v1055, 0.0
  %v1152 = vadd.f32 %v1150, %v1151
  %v1153 = vsel %vm824, %v1056, 0.0
  %v1154 = vadd.f32 %v1152, %v1153
  %v1155 = vsel %vm824, %v1057, 0.0
  %v1156 = vadd.f32 %v1154, %v1155
  %v1157 = vsel %vm824, %v1058, 0.0
  %v1158 = vadd.f32 %v1156, %v1157
  %v1159 = vsel %vm824, %v1059, 0.0
  %v1160 = vadd.f32 %v1158, %v1159
  %v1161 = vsel %vm824, %v1060, 0.0
  %v1162 = vadd.f32 %v1160, %v1161
  %v1163 = vsel %vm824, %v1061, 0.0
  %v1164 = vadd.f32 %v1162, %v1163
  %v1165 = vsel %vm824, %v1062, 0.0
  %v1166 = vadd.f32 %v1164, %v1165
  %v1167 = vsel %vm824, %v1063, 0.0
  %v1168 = vadd.f32 %v1166, %v1167
  %v1169 = vsel %vm824, %v1064, 0.0
  %v1170 = vadd.f32 %v1168, %v1169
  %v1171 = vsel %vm824, %v1065, 0.0
  %v1172 = vadd.f32 %v1170, %v1171
  %v1173 = vsel %vm824, %v1066, 0.0
  %v1174 = vadd.f32 %v1172, %v1173
  %v1175 = vsel %vm824, %v1067, 0.0
  %v1176 = vadd.f32 %v1174, %v1175
  %v1177 = vsel %vm824, %v1068, 0.0
  %v1178 = vadd.f32 %v1176, %v1177
  %v1179 = vsel %vm824, %v1069, 0.0
  %v1180 = vadd.f32 %v1178, %v1179
  %v1181 = vsel %vm824, %v1070, 0.0
  %v1182 = vadd.f32 %v1180, %v1181
  %v1183 = vsel %vm824, %v1071, 0.0
  %v1184 = vadd.f32 %v1182, %v1183
  %v1185 = vsel %vm824, %v1072, 0.0
  %v1186 = vadd.f32 %v1184, %v1185
  %v1187 = vsel %vm824, %v1073, 0.0
  %v1188 = vadd.f32 %v1186, %v1187
  %v1189 = vsel %vm824, %v1074, 0.0
  %v1190 = vadd.f32 %v1188, %v1189
  %v1191 = vsel %vm824, %v1075, 0.0
  %v1192 = vadd.f32 %v1190, %v1191
  %v1193 = vsel %vm824, %v1076, 0.0
  %v1194 = vadd.f32 %v1192, %v1193
  %v1195 = vsel %vm824, %v1077, 0.0
  %v1196 = vadd.f32 %v1194, %v1195
  %v1197 = vsel %vm824, %v1078, 0.0
  %v1198 = vadd.f32 %v1196, %v1197
  %v1199 = vsel %vm824, %v1079, 0.0
  %v1200 = vadd.f32 %v1198, %v1199
  %v1201 = vsel %vm824, %v1080, 0.0
  %v1202 = vadd.f32 %v1200, %v1201
  %v1203 = vsel %vm824, %v1081, 0.0
  %v1204 = vadd.f32 %v1202, %v1203
  %v1205 = vsel %vm824, %v1082, 0.0
  %v1206 = vadd.f32 %v1204, %v1205
  %v1207 = vsel %vm824, %v1083, 0.0
  %v1208 = vadd.f32 %v1206, %v1207
  %v1209 = vsel %vm824, %v1084, 0.0
  %v1210 = vadd.f32 %v1208, %v1209
  %v1211 = vsel %vm824, %v1085, 0.0
  %v1212 = vadd.f32 %v1210, %v1211
  %v1213 = vrot.slane %v1212, 4
  %v1214 = vadd.f32 %v1212, %v1213
  %v1215 = vrot.slane %v1214, 2
  %v1216 = vadd.f32 %v1214, %v1215
  %v1217 = vrot.slane %v1216, 1
  %v1218 = vadd.f32 %v1216, %v1217
  %vm1219 = vcmask 1040384
  %v1220 = vsel %vm1219, %v1021, %v1218
  %vm1221 = vcmask 58368
  %1222 = vst.msk [vmem:[%s3] sm:$0x3] %vm1221, %v1220
  // Predicated region
  $region10: #{unet_forward.44} parent=0 // pred_check
    _
  $region11: #{unet_forward.44} parent=0 // pred_check_branch
    %1224 = sbr.rel (0) target = $region13
  $region12: #{unet_forward.44} parent=0 // pred_region
    _
  $region13: #{unet_forward.44} parent=0 // pred_fallthru
    _
  // Predicated region
  $region14: #{unet_forward.44} parent=0 // pred_check
    _
  $region15: #{unet_forward.44} parent=0 // pred_check_branch
    %1226 = sbr.rel (0) target = $region17
  $region16: #{unet_forward.44} parent=0 // pred_region
    _
  $region17: #{unet_forward.44} parent=0 // pred_fallthru
    _
  // Predicated region
  $region18: #{unet_forward.44} parent=0 // pred_check
    _
  $region19: #{unet_forward.44} parent=0 // pred_check_branch
    %1228 = sbr.rel (0) target = $region21
  $region20: #{unet_forward.44} parent=0 // pred_region
    _
  $region21: #{unet_forward.44} parent=0 // pred_fallthru
    _
  // Predicated region
  $region22: #{unet_forward.44} parent=0 // pred_check
    _
  $region23: #{unet_forward.44} parent=0 // pred_check_branch
    %1230 = sbr.rel (0) target = $region25
  $region24: #{unet_forward.44} parent=0 // pred_region
    _
  $region25: #{unet_forward.44} parent=0 // pred_fallthru
    _

// kernel: unet_forward.47
$region0: #{unet_forward.47}
  #allocation0 [shape = 'u32[]', space=smem, size = 0x4, offset = 0x4, fixed_abs, tag = 'smem constant byte address 0x4 - core index']
  #allocation1 [shape = 'u32[144,128]{1,0:T(1,128)}', space=vmem, size = 0x12000, scoped, tag = 'internal scratch']
  #allocation2 [shape = 'f32[1,1]{1,0:T(1,128)S(1)}', space=vmem, size = 0x200, scoped, tag = 'scoped memory for unet_forward.47']
  %s0 = inlined_call_operand.vmem [shape: f32[512,8], index: 0, kind: input, shape index: {}]
  %s1 = inlined_call_operand.vmem [shape: f32[1,8], index: 1, kind: input, shape index: {}]
  %s2 = inlined_call_operand.vmem [shape: f32[1,8], index: 2, kind: input, shape index: {}]
  %s3 = inlined_call_operand.vmem [shape: f32[8,1], index: 3, kind: input, shape index: {}]
  %s4 = inlined_call_operand.<no memory space> [shape: f32[1,1], index: 4, kind: input, shape index: {}]
  %s5 = inlined_call_operand.vmem [shape: f32[512,1], index: 5, kind: output, shape index: {}]
  %s6 = sld [smem:[#allocation0]]
  $region30: #{unet_forward.47} parent=0
    _
  %s8 = ssub.s32 1, %s6
  %s9 = scalar_select 0, %s8, %s6
  %v10 = vstv %s4
  %11 = vst [vmem:[#allocation2] sm:$0x1] %v10
  // Predicated region
  $region2: #{unet_forward.47} parent=0 // pred_check
    _
  $region3: #{unet_forward.47} parent=0 // pred_check_branch
    %13 = sbr.rel (0) target = $region5
  $region4: #{unet_forward.47} parent=0 // pred_region
    _
  $region5: #{unet_forward.47} parent=0 // pred_fallthru
    _
  // Predicated region
  $region6: #{unet_forward.47} parent=0 // pred_check
    _
  $region7: #{unet_forward.47} parent=0 // pred_check_branch
    %15 = sbr.rel (0) target = $region9
  $region8: #{unet_forward.47} parent=0 // pred_region
    _
  $region9: #{unet_forward.47} parent=0 // pred_fallthru
    _
  // Predicated region
  $region10: #{unet_forward.47} parent=0 // pred_check
    _
  $region11: #{unet_forward.47} parent=0 // pred_check_branch
    %17 = sbr.rel (0) target = $region13
  $region12: #{unet_forward.47} parent=0 // pred_region
    _
  $region13: #{unet_forward.47} parent=0 // pred_fallthru
    _
  // Predicated region
  $region14: #{unet_forward.47} parent=0 // pred_check
    _
  $region15: #{unet_forward.47} parent=0 // pred_check_branch
    %19 = sbr.rel (0) target = $region17
  $region16: #{unet_forward.47} parent=0 // pred_region
    _
  $region17: #{unet_forward.47} parent=0 // pred_fallthru
    _
  // Predicated region
  $region18: #{unet_forward.47} parent=0 // pred_check
    _
  $region19: #{unet_forward.47} parent=0 // pred_check_branch
    %21 = sbr.rel (0) target = $region21
  $region20: #{unet_forward.47} parent=0 // pred_region
    _
  $region21: #{unet_forward.47} parent=0 // pred_fallthru
    _
  %v22 = vld [vmem:[%s0] sm:$0xff]
  %v23 = vld [vmem:[%s0 + $0x8] sm:$0xff]
  %v24 = vld [vmem:[%s0 + $0x10] sm:$0xff]
  %v25 = vld [vmem:[%s0 + $0x18] sm:$0xff]
  %v26 = vld [vmem:[%s0 + $0x20] sm:$0xff]
  %v27 = vld [vmem:[%s0 + $0x28] sm:$0xff]
  %v28 = vld [vmem:[%s0 + $0x30] sm:$0xff]
  %v29 = vld [vmem:[%s0 + $0x38] sm:$0xff]
  %v30 = vld [vmem:[%s0 + $0x40] sm:$0xff]
  %v31 = vld [vmem:[%s0 + $0x48] sm:$0xff]
  %v32 = vld [vmem:[%s0 + $0x50] sm:$0xff]
  %v33 = vld [vmem:[%s0 + $0x58] sm:$0xff]
  %v34 = vld [vmem:[%s0 + $0x60] sm:$0xff]
  %v35 = vld [vmem:[%s0 + $0x68] sm:$0xff]
  %v36 = vld [vmem:[%s0 + $0x70] sm:$0xff]
  %v37 = vld [vmem:[%s0 + $0x78] sm:$0xff]
  %v38 = vld [vmem:[%s0 + $0x80] sm:$0xff]
  %v39 = vld [vmem:[%s0 + $0x88] sm:$0xff]
  %v40 = vld [vmem:[%s0 + $0x90] sm:$0xff]
  %v41 = vld [vmem:[%s0 + $0x98] sm:$0xff]
  %v42 = vld [vmem:[%s0 + $0xa0] sm:$0xff]
  %v43 = vld [vmem:[%s0 + $0xa8] sm:$0xff]
  %v44 = vld [vmem:[%s0 + $0xb0] sm:$0xff]
  %v45 = vld [vmem:[%s0 + $0xb8] sm:$0xff]
  %v46 = vld [vmem:[%s0 + $0xc0] sm:$0xff]
  %v47 = vld [vmem:[%s0 + $0xc8] sm:$0xff]
  %v48 = vld [vmem:[%s0 + $0xd0] sm:$0xff]
  %v49 = vld [vmem:[%s0 + $0xd8] sm:$0xff]
  %v50 = vld [vmem:[%s0 + $0xe0] sm:$0xff]
  %v51 = vld [vmem:[%s0 + $0xe8] sm:$0xff]
  %v52 = vld [vmem:[%s0 + $0xf0] sm:$0xff]
  %v53 = vld [vmem:[%s0 + $0xf8] sm:$0xff]
  %v54 = vld [vmem:[%s0 + $0x100] sm:$0xff]
  %v55 = vld [vmem:[%s0 + $0x108] sm:$0xff]
  %v56 = vld [vmem:[%s0 + $0x110] sm:$0xff]
  %v57 = vld [vmem:[%s0 + $0x118] sm:$0xff]
  %v58 = vld [vmem:[%s0 + $0x120] sm:$0xff]
  %v59 = vld [vmem:[%s0 + $0x128] sm:$0xff]
  %v60 = vld [vmem:[%s0 + $0x130] sm:$0xff]
  %v61 = vld [vmem:[%s0 + $0x138] sm:$0xff]
  %v62 = vld [vmem:[%s0 + $0x140] sm:$0xff]
  %v63 = vld [vmem:[%s0 + $0x148] sm:$0xff]
  %v64 = vld [vmem:[%s0 + $0x150] sm:$0xff]
  %v65 = vld [vmem:[%s0 + $0x158] sm:$0xff]
  %v66 = vld [vmem:[%s0 + $0x160] sm:$0xff]
  %v67 = vld [vmem:[%s0 + $0x168] sm:$0xff]
  %v68 = vld [vmem:[%s0 + $0x170] sm:$0xff]
  %v69 = vld [vmem:[%s0 + $0x178] sm:$0xff]
  %v70 = vld [vmem:[%s0 + $0x180] sm:$0xff]
  %v71 = vld [vmem:[%s0 + $0x188] sm:$0xff]
  %v72 = vld [vmem:[%s0 + $0x190] sm:$0xff]
  %v73 = vld [vmem:[%s0 + $0x198] sm:$0xff]
  %v74 = vld [vmem:[%s0 + $0x1a0] sm:$0xff]
  %v75 = vld [vmem:[%s0 + $0x1a8] sm:$0xff]
  %v76 = vld [vmem:[%s0 + $0x1b0] sm:$0xff]
  %v77 = vld [vmem:[%s0 + $0x1b8] sm:$0xff]
  %v78 = vld [vmem:[%s0 + $0x1c0] sm:$0xff]
  %v79 = vld [vmem:[%s0 + $0x1c8] sm:$0xff]
  %v80 = vld [vmem:[%s0 + $0x1d0] sm:$0xff]
  %v81 = vld [vmem:[%s0 + $0x1d8] sm:$0xff]
  %v82 = vld [vmem:[%s0 + $0x1e0] sm:$0xff]
  %v83 = vld [vmem:[%s0 + $0x1e8] sm:$0xff]
  %v84 = vld [vmem:[%s0 + $0x1f0] sm:$0xff]
  %v85 = vld [vmem:[%s0 + $0x1f8] sm:$0xff]
  %v86 = vld [vmem:[%s1] sm:$0x1]
  %v88 = vlaneseq
  %v89 = vshrl.u32 %v88, 7
  %v90 = vsub.s32 0, %v89
  %v91 = vrot.slane %v86, %v90
  %v93 = vmul.f32 %v22, %v91
  %v94 = vmul.f32 %v23, %v91
  %v95 = vmul.f32 %v24, %v91
  %v96 = vmul.f32 %v25, %v91
  %v97 = vmul.f32 %v26, %v91
  %v98 = vmul.f32 %v27, %v91
  %v99 = vmul.f32 %v28, %v91
  %v100 = vmul.f32 %v29, %v91
  %v101 = vmul.f32 %v30, %v91
  %v102 = vmul.f32 %v31, %v91
  %v103 = vmul.f32 %v32, %v91
  %v104 = vmul.f32 %v33, %v91
  %v105 = vmul.f32 %v34, %v91
  %v106 = vmul.f32 %v35, %v91
  %v107 = vmul.f32 %v36, %v91
  %v108 = vmul.f32 %v37, %v91
  %v109 = vmul.f32 %v38, %v91
  %v110 = vmul.f32 %v39, %v91
  %v111 = vmul.f32 %v40, %v91
  %v112 = vmul.f32 %v41, %v91
  %v113 = vmul.f32 %v42, %v91
  %v114 = vmul.f32 %v43, %v91
  %v115 = vmul.f32 %v44, %v91
  %v116 = vmul.f32 %v45, %v91
  %v117 = vmul.f32 %v46, %v91
  %v118 = vmul.f32 %v47, %v91
  %v119 = vmul.f32 %v48, %v91
  %v120 = vmul.f32 %v49, %v91
  %v121 = vmul.f32 %v50, %v91
  %v122 = vmul.f32 %v51, %v91
  %v123 = vmul.f32 %v52, %v91
  %v124 = vmul.f32 %v53, %v91
  %v125 = vmul.f32 %v54, %v91
  %v126 = vmul.f32 %v55, %v91
  %v127 = vmul.f32 %v56, %v91
  %v128 = vmul.f32 %v57, %v91
  %v129 = vmul.f32 %v58, %v91
  %v130 = vmul.f32 %v59, %v91
  %v131 = vmul.f32 %v60, %v91
  %v132 = vmul.f32 %v61, %v91
  %v133 = vmul.f32 %v62, %v91
  %v134 = vmul.f32 %v63, %v91
  %v135 = vmul.f32 %v64, %v91
  %v136 = vmul.f32 %v65, %v91
  %v137 = vmul.f32 %v66, %v91
  %v138 = vmul.f32 %v67, %v91
  %v139 = vmul.f32 %v68, %v91
  %v140 = vmul.f32 %v69, %v91
  %v141 = vmul.f32 %v70, %v91
  %v142 = vmul.f32 %v71, %v91
  %v143 = vmul.f32 %v72, %v91
  %v144 = vmul.f32 %v73, %v91
  %v145 = vmul.f32 %v74, %v91
  %v146 = vmul.f32 %v75, %v91
  %v147 = vmul.f32 %v76, %v91
  %v148 = vmul.f32 %v77, %v91
  %v149 = vmul.f32 %v78, %v91
  %v150 = vmul.f32 %v79, %v91
  %v151 = vmul.f32 %v80, %v91
  %v152 = vmul.f32 %v81, %v91
  %v153 = vmul.f32 %v82, %v91
  %v154 = vmul.f32 %v83, %v91
  %v155 = vmul.f32 %v84, %v91
  %v156 = vmul.f32 %v85, %v91
  %v157 = vld [vmem:[%s2] sm:$0x1]
  %v159 = vlaneseq
  %v160 = vshrl.u32 %v159, 7
  %v161 = vsub.s32 0, %v160
  %v162 = vrot.slane %v157, %v161
  %v164 = vadd.f32 %v93, %v162
  %v165 = vadd.f32 %v94, %v162
  %v166 = vadd.f32 %v95, %v162
  %v167 = vadd.f32 %v96, %v162
  %v168 = vadd.f32 %v97, %v162
  %v169 = vadd.f32 %v98, %v162
  %v170 = vadd.f32 %v99, %v162
  %v171 = vadd.f32 %v100, %v162
  %v172 = vadd.f32 %v101, %v162
  %v173 = vadd.f32 %v102, %v162
  %v174 = vadd.f32 %v103, %v162
  %v175 = vadd.f32 %v104, %v162
  %v176 = vadd.f32 %v105, %v162
  %v177 = vadd.f32 %v106, %v162
  %v178 = vadd.f32 %v107, %v162
  %v179 = vadd.f32 %v108, %v162
  %v180 = vadd.f32 %v109, %v162
  %v181 = vadd.f32 %v110, %v162
  %v182 = vadd.f32 %v111, %v162
  %v183 = vadd.f32 %v112, %v162
  %v184 = vadd.f32 %v113, %v162
  %v185 = vadd.f32 %v114, %v162
  %v186 = vadd.f32 %v115, %v162
  %v187 = vadd.f32 %v116, %v162
  %v188 = vadd.f32 %v117, %v162
  %v189 = vadd.f32 %v118, %v162
  %v190 = vadd.f32 %v119, %v162
  %v191 = vadd.f32 %v120, %v162
  %v192 = vadd.f32 %v121, %v162
  %v193 = vadd.f32 %v122, %v162
  %v194 = vadd.f32 %v123, %v162
  %v195 = vadd.f32 %v124, %v162
  %v196 = vadd.f32 %v125, %v162
  %v197 = vadd.f32 %v126, %v162
  %v198 = vadd.f32 %v127, %v162
  %v199 = vadd.f32 %v128, %v162
  %v200 = vadd.f32 %v129, %v162
  %v201 = vadd.f32 %v130, %v162
  %v202 = vadd.f32 %v131, %v162
  %v203 = vadd.f32 %v132, %v162
  %v204 = vadd.f32 %v133, %v162
  %v205 = vadd.f32 %v134, %v162
  %v206 = vadd.f32 %v135, %v162
  %v207 = vadd.f32 %v136, %v162
  %v208 = vadd.f32 %v137, %v162
  %v209 = vadd.f32 %v138, %v162
  %v210 = vadd.f32 %v139, %v162
  %v211 = vadd.f32 %v140, %v162
  %v212 = vadd.f32 %v141, %v162
  %v213 = vadd.f32 %v142, %v162
  %v214 = vadd.f32 %v143, %v162
  %v215 = vadd.f32 %v144, %v162
  %v216 = vadd.f32 %v145, %v162
  %v217 = vadd.f32 %v146, %v162
  %v218 = vadd.f32 %v147, %v162
  %v219 = vadd.f32 %v148, %v162
  %v220 = vadd.f32 %v149, %v162
  %v221 = vadd.f32 %v150, %v162
  %v222 = vadd.f32 %v151, %v162
  %v223 = vadd.f32 %v152, %v162
  %v224 = vadd.f32 %v153, %v162
  %v225 = vadd.f32 %v154, %v162
  %v226 = vadd.f32 %v155, %v162
  %v227 = vadd.f32 %v156, %v162
  %v228 = vmax.f32 %v164, 0.0
  %v229 = vmax.f32 %v165, 0.0
  %v230 = vmax.f32 %v166, 0.0
  %v231 = vmax.f32 %v167, 0.0
  %v232 = vmax.f32 %v168, 0.0
  %v233 = vmax.f32 %v169, 0.0
  %v234 = vmax.f32 %v170, 0.0
  %v235 = vmax.f32 %v171, 0.0
  %v236 = vmax.f32 %v172, 0.0
  %v237 = vmax.f32 %v173, 0.0
  %v238 = vmax.f32 %v174, 0.0
  %v239 = vmax.f32 %v175, 0.0
  %v240 = vmax.f32 %v176, 0.0
  %v241 = vmax.f32 %v177, 0.0
  %v242 = vmax.f32 %v178, 0.0
  %v243 = vmax.f32 %v179, 0.0
  %v244 = vmax.f32 %v180, 0.0
  %v245 = vmax.f32 %v181, 0.0
  %v246 = vmax.f32 %v182, 0.0
  %v247 = vmax.f32 %v183, 0.0
  %v248 = vmax.f32 %v184, 0.0
  %v249 = vmax.f32 %v185, 0.0
  %v250 = vmax.f32 %v186, 0.0
  %v251 = vmax.f32 %v187, 0.0
  %v252 = vmax.f32 %v188, 0.0
  %v253 = vmax.f32 %v189, 0.0
  %v254 = vmax.f32 %v190, 0.0
  %v255 = vmax.f32 %v191, 0.0
  %v256 = vmax.f32 %v192, 0.0
  %v257 = vmax.f32 %v193, 0.0
  %v258 = vmax.f32 %v194, 0.0
  %v259 = vmax.f32 %v195, 0.0
  %v260 = vmax.f32 %v196, 0.0
  %v261 = vmax.f32 %v197, 0.0
  %v262 = vmax.f32 %v198, 0.0
  %v263 = vmax.f32 %v199, 0.0
  %v264 = vmax.f32 %v200, 0.0
  %v265 = vmax.f32 %v201, 0.0
  %v266 = vmax.f32 %v202, 0.0
  %v267 = vmax.f32 %v203, 0.0
  %v268 = vmax.f32 %v204, 0.0
  %v269 = vmax.f32 %v205, 0.0
  %v270 = vmax.f32 %v206, 0.0
  %v271 = vmax.f32 %v207, 0.0
  %v272 = vmax.f32 %v208, 0.0
  %v273 = vmax.f32 %v209, 0.0
  %v274 = vmax.f32 %v210, 0.0
  %v275 = vmax.f32 %v211, 0.0
  %v276 = vmax.f32 %v212, 0.0
  %v277 = vmax.f32 %v213, 0.0
  %v278 = vmax.f32 %v214, 0.0
  %v279 = vmax.f32 %v215, 0.0
  %v280 = vmax.f32 %v216, 0.0
  %v281 = vmax.f32 %v217, 0.0
  %v282 = vmax.f32 %v218, 0.0
  %v283 = vmax.f32 %v219, 0.0
  %v284 = vmax.f32 %v220, 0.0
  %v285 = vmax.f32 %v221, 0.0
  %v286 = vmax.f32 %v222, 0.0
  %v287 = vmax.f32 %v223, 0.0
  %v288 = vmax.f32 %v224, 0.0
  %v289 = vmax.f32 %v225, 0.0
  %v290 = vmax.f32 %v226, 0.0
  %v291 = vmax.f32 %v227, 0.0
  %v292 = vld [vmem:[%s3] sm:$0xff]
  %v293 = vld [vmem:[#allocation2] sm:$0x1]
  %v295 = vlaneseq
  %v296 = vshrl.u32 %v295, 7
  %v297 = vsub.s32 0, %v296
  %v298 = vrot.slane %v293, %v297
  %vm300 = vcmask 64512
  %v302 = vsel %vm300, %v228, 0
  %v305 = vsel %vm300, %v229, 0
  %v308 = vsel %vm300, %v230, 0
  %v311 = vsel %vm300, %v231, 0
  %v314 = vsel %vm300, %v232, 0
  %v317 = vsel %vm300, %v233, 0
  %v320 = vsel %vm300, %v234, 0
  %v323 = vsel %vm300, %v235, 0
  %v326 = vsel %vm300, %v236, 0
  %v329 = vsel %vm300, %v237, 0
  %v332 = vsel %vm300, %v238, 0
  %v335 = vsel %vm300, %v239, 0
  %v338 = vsel %vm300, %v240, 0
  %v341 = vsel %vm300, %v241, 0
  %v344 = vsel %vm300, %v242, 0
  %v347 = vsel %vm300, %v243, 0
  %v350 = vsel %vm300, %v244, 0
  %v353 = vsel %vm300, %v245, 0
  %v356 = vsel %vm300, %v246, 0
  %v359 = vsel %vm300, %v247, 0
  %v362 = vsel %vm300, %v248, 0
  %v365 = vsel %vm300, %v249, 0
  %v368 = vsel %vm300, %v250, 0
  %v371 = vsel %vm300, %v251, 0
  %v374 = vsel %vm300, %v252, 0
  %v377 = vsel %vm300, %v253, 0
  %v380 = vsel %vm300, %v254, 0
  %v383 = vsel %vm300, %v255, 0
  %v386 = vsel %vm300, %v256, 0
  %v389 = vsel %vm300, %v257, 0
  %v392 = vsel %vm300, %v258, 0
  %v395 = vsel %vm300, %v259, 0
  %v398 = vsel %vm300, %v260, 0
  %v401 = vsel %vm300, %v261, 0
  %v404 = vsel %vm300, %v262, 0
  %v407 = vsel %vm300, %v263, 0
  %v410 = vsel %vm300, %v264, 0
  %v413 = vsel %vm300, %v265, 0
  %v416 = vsel %vm300, %v266, 0
  %v419 = vsel %vm300, %v267, 0
  %v422 = vsel %vm300, %v268, 0
  %v425 = vsel %vm300, %v269, 0
  %v428 = vsel %vm300, %v270, 0
  %v431 = vsel %vm300, %v271, 0
  %v434 = vsel %vm300, %v272, 0
  %v437 = vsel %vm300, %v273, 0
  %v440 = vsel %vm300, %v274, 0
  %v443 = vsel %vm300, %v275, 0
  %v446 = vsel %vm300, %v276, 0
  %v449 = vsel %vm300, %v277, 0
  %v452 = vsel %vm300, %v278, 0
  %v455 = vsel %vm300, %v279, 0
  %v458 = vsel %vm300, %v280, 0
  %v461 = vsel %vm300, %v281, 0
  %v464 = vsel %vm300, %v282, 0
  %v467 = vsel %vm300, %v283, 0
  %v470 = vsel %vm300, %v284, 0
  %v473 = vsel %vm300, %v285, 0
  %v476 = vsel %vm300, %v286, 0
  %v479 = vsel %vm300, %v287, 0
  %v482 = vsel %vm300, %v288, 0
  %v485 = vsel %vm300, %v289, 0
  %v488 = vsel %vm300, %v290, 0
  %v491 = vsel %vm300, %v291, 0
  %493 = vmatprep.subr.mxu0 0.0
  %494 = vmatpush1.msra.mxu0 %v292
  %495 = vmatprep.subr.mxu0 0.0
  %496 = vmatpush1.msra.mxu0 0.0
  %497 = vmatprep.subr.mxu0 0.0
  %498 = vmatpush1.msra.mxu0 0.0
  %499 = vmatprep.subr.mxu0 0.0
  %500 = vmatpush1.msra.mxu0 0.0
  %501 = vmatprep.subr.mxu0 0.0
  %502 = vmatpush1.msra.mxu0 0.0
  %503 = vmatprep.subr.mxu0 0.0
  %504 = vmatpush1.msra.mxu0 0.0
  %505 = vmatprep.subr.mxu0 0.0
  %506 = vmatpush1.msra.mxu0 0.0
  %507 = vmatprep.subr.mxu0 0.0
  %508 = vmatpush1.msra.mxu0 0.0
  %509 = vmatprep.subr.mxu0 0.0
  %510 = vmatpush1.msra.mxu0 0.0
  %511 = vmatprep.subr.mxu0 0.0
  %512 = vmatpush1.msra.mxu0 0.0
  %513 = vmatprep.subr.mxu0 0.0
  %514 = vmatpush1.msra.mxu0 0.0
  %515 = vmatprep.subr.mxu0 0.0
  %516 = vmatpush1.msra.mxu0 0.0
  %517 = vmatprep.subr.mxu0 0.0
  %518 = vmatpush1.msra.mxu0 0.0
  %519 = vmatprep.subr.mxu0 0.0
  %520 = vmatpush1.msra.mxu0 0.0
  %521 = vmatprep.subr.mxu0 0.0
  %522 = vmatpush1.msra.mxu0 0.0
  %523 = vmatprep.subr.mxu0 0.0
  %524 = vmatpush1.msra.mxu0 0.0
  %525 = vmatprep.subr.mxu0 0.0
  %526 = vmatpush1.msra.mxu0 0.0
  %527 = vmatprep.subr.mxu0 0.0
  %528 = vmatpush1.msra.mxu0 0.0
  %529 = vmatprep.subr.mxu0 0.0
  %530 = vmatpush1.msra.mxu0 0.0
  %531 = vmatprep.subr.mxu0 0.0
  %532 = vmatpush1.msra.mxu0 0.0
  %533 = vmatprep.subr.mxu0 0.0
  %534 = vmatpush1.msra.mxu0 0.0
  %535 = vmatprep.subr.mxu0 0.0
  %536 = vmatpush1.msra.mxu0 0.0
  %537 = vmatprep.subr.mxu0 0.0
  %538 = vmatpush1.msra.mxu0 0.0
  %539 = vmatprep.subr.mxu0 0.0
  %540 = vmatpush1.msra.mxu0 0.0
  %541 = vmatprep.subr.mxu0 0.0
  %542 = vmatpush1.msra.mxu0 0.0
  %543 = vmatprep.subr.mxu0 0.0
  %544 = vmatpush1.msra.mxu0 0.0
  %545 = vmatprep.subr.mxu0 0.0
  %546 = vmatpush1.msra.mxu0 0.0
  %547 = vmatprep.subr.mxu0 0.0
  %548 = vmatpush1.msra.mxu0 0.0
  %549 = vmatprep.subr.mxu0 0.0
  %550 = vmatpush1.msra.mxu0 0.0
  %551 = vmatprep.subr.mxu0 0.0
  %552 = vmatpush1.msra.mxu0 0.0
  %553 = vmatprep.subr.mxu0 0.0
  %554 = vmatpush1.msra.mxu0 0.0
  %555 = vmatprep.subr.mxu0 0.0
  %556 = vmatpush1.msra.mxu0 0.0
  %557 = vmatprep.mubr.f32.mxu0 0.0
  %558 = vmatmul.mubr.f32.gmra.mrb[0].mxu0 %v302
  %v559 = vpop.f32.mrb[0].mxu0
  %v560 = vadd.f32 %v298, %v559
  %v561 = vpop.f32.mrb[0].mxu0
  %562 = vmatprep.mubr.f32.mxu0 0.0
  %563 = vmatmul.mubr.f32.gmra.mrb[0].mxu0 %v305
  %v564 = vpop.f32.mrb[0].mxu0
  %v565 = vadd.f32 %v298, %v564
  %v566 = vpop.f32.mrb[0].mxu0
  %567 = vmatprep.mubr.f32.mxu0 0.0
  %568 = vmatmul.mubr.f32.gmra.mrb[0].mxu0 %v308
  %v569 = vpop.f32.mrb[0].mxu0
  %v570 = vadd.f32 %v298, %v569
  %v571 = vpop.f32.mrb[0].mxu0
  %572 = vmatprep.mubr.f32.mxu0 0.0
  %573 = vmatmul.mubr.f32.gmra.mrb[0].mxu0 %v311
  %v574 = vpop.f32.mrb[0].mxu0
  %v575 = vadd.f32 %v298, %v574
  %v576 = vpop.f32.mrb[0].mxu0
  %577 = vmatprep.mubr.f32.mxu0 0.0
  %578 = vmatmul.mubr.f32.gmra.mrb[0].mxu0 %v314
  %v579 = vpop.f32.mrb[0].mxu0
  %v580 = vadd.f32 %v298, %v579
  %v581 = vpop.f32.mrb[0].mxu0
  %582 = vmatprep.mubr.f32.mxu0 0.0
  %583 = vmatmul.mubr.f32.gmra.mrb[0].mxu0 %v317
  %v584 = vpop.f32.mrb[0].mxu0
  %v585 = vadd.f32 %v298, %v584
  %v586 = vpop.f32.mrb[0].mxu0
  %587 = vmatprep.mubr.f32.mxu0 0.0
  %588 = vmatmul.mubr.f32.gmra.mrb[0].mxu0 %v320
  %v589 = vpop.f32.mrb[0].mxu0
  %v590 = vadd.f32 %v298, %v589
  %v591 = vpop.f32.mrb[0].mxu0
  %592 = vmatprep.mubr.f32.mxu0 0.0
  %593 = vmatmul.mubr.f32.gmra.mrb[0].mxu0 %v323
  %v594 = vpop.f32.mrb[0].mxu0
  %v595 = vadd.f32 %v298, %v594
  %v596 = vpop.f32.mrb[0].mxu0
  %597 = vmatprep.mubr.f32.mxu0 0.0
  %598 = vmatmul.mubr.f32.gmra.mrb[0].mxu0 %v326
  %v599 = vpop.f32.mrb[0].mxu0
  %v600 = vadd.f32 %v298, %v599
  %v601 = vpop.f32.mrb[0].mxu0
  %602 = vmatprep.mubr.f32.mxu0 0.0
  %603 = vmatmul.mubr.f32.gmra.mrb[0].mxu0 %v329
  %v604 = vpop.f32.mrb[0].mxu0
  %v605 = vadd.f32 %v298, %v604
  %v606 = vpop.f32.mrb[0].mxu0
  %607 = vmatprep.mubr.f32.mxu0 0.0
  %608 = vmatmul.mubr.f32.gmra.mrb[0].mxu0 %v332
  %v609 = vpop.f32.mrb[0].mxu0
  %v610 = vadd.f32 %v298, %v609
  %v611 = vpop.f32.mrb[0].mxu0
  %612 = vmatprep.mubr.f32.mxu0 0.0
  %613 = vmatmul.mubr.f32.gmra.mrb[0].mxu0 %v335
  %v614 = vpop.f32.mrb[0].mxu0
  %v615 = vadd.f32 %v298, %v614
  %v616 = vpop.f32.mrb[0].mxu0
  %617 = vmatprep.mubr.f32.mxu0 0.0
  %618 = vmatmul.mubr.f32.gmra.mrb[0].mxu0 %v338
  %v619 = vpop.f32.mrb[0].mxu0
  %v620 = vadd.f32 %v298, %v619
  %v621 = vpop.f32.mrb[0].mxu0
  %622 = vmatprep.mubr.f32.mxu0 0.0
  %623 = vmatmul.mubr.f32.gmra.mrb[0].mxu0 %v341
  %v624 = vpop.f32.mrb[0].mxu0
  %v625 = vadd.f32 %v298, %v624
  %v626 = vpop.f32.mrb[0].mxu0
  %627 = vmatprep.mubr.f32.mxu0 0.0
  %628 = vmatmul.mubr.f32.gmra.mrb[0].mxu0 %v344
  %v629 = vpop.f32.mrb[0].mxu0
  %v630 = vadd.f32 %v298, %v629
  %v631 = vpop.f32.mrb[0].mxu0
  %632 = vmatprep.mubr.f32.mxu0 0.0
  %633 = vmatmul.mubr.f32.gmra.mrb[0].mxu0 %v347
  %v634 = vpop.f32.mrb[0].mxu0
  %v635 = vadd.f32 %v298, %v634
  %v636 = vpop.f32.mrb[0].mxu0
  %637 = vmatprep.mubr.f32.mxu0 0.0
  %638 = vmatmul.mubr.f32.gmra.mrb[0].mxu0 %v350
  %v639 = vpop.f32.mrb[0].mxu0
  %v640 = vadd.f32 %v298, %v639
  %v641 = vpop.f32.mrb[0].mxu0
  %642 = vmatprep.mubr.f32.mxu0 0.0
  %643 = vmatmul.mubr.f32.gmra.mrb[0].mxu0 %v353
  %v644 = vpop.f32.mrb[0].mxu0
  %v645 = vadd.f32 %v298, %v644
  %v646 = vpop.f32.mrb[0].mxu0
  %647 = vmatprep.mubr.f32.mxu0 0.0
  %648 = vmatmul.mubr.f32.gmra.mrb[0].mxu0 %v356
  %v649 = vpop.f32.mrb[0].mxu0
  %v650 = vadd.f32 %v298, %v649
  %v651 = vpop.f32.mrb[0].mxu0
  %652 = vmatprep.mubr.f32.mxu0 0.0
  %653 = vmatmul.mubr.f32.gmra.mrb[0].mxu0 %v359
  %v654 = vpop.f32.mrb[0].mxu0
  %v655 = vadd.f32 %v298, %v654
  %v656 = vpop.f32.mrb[0].mxu0
  %657 = vmatprep.mubr.f32.mxu0 0.0
  %658 = vmatmul.mubr.f32.gmra.mrb[0].mxu0 %v362
  %v659 = vpop.f32.mrb[0].mxu0
  %v660 = vadd.f32 %v298, %v659
  %v661 = vpop.f32.mrb[0].mxu0
  %662 = vmatprep.mubr.f32.mxu0 0.0
  %663 = vmatmul.mubr.f32.gmra.mrb[0].mxu0 %v365
  %v664 = vpop.f32.mrb[0].mxu0
  %v665 = vadd.f32 %v298, %v664
  %v666 = vpop.f32.mrb[0].mxu0
  %667 = vmatprep.mubr.f32.mxu0 0.0
  %668 = vmatmul.mubr.f32.gmra.mrb[0].mxu0 %v368
  %v669 = vpop.f32.mrb[0].mxu0
  %v670 = vadd.f32 %v298, %v669
  %v671 = vpop.f32.mrb[0].mxu0
  %672 = vmatprep.mubr.f32.mxu0 0.0
  %673 = vmatmul.mubr.f32.gmra.mrb[0].mxu0 %v371
  %v674 = vpop.f32.mrb[0].mxu0
  %v675 = vadd.f32 %v298, %v674
  %v676 = vpop.f32.mrb[0].mxu0
  %677 = vmatprep.mubr.f32.mxu0 0.0
  %678 = vmatmul.mubr.f32.gmra.mrb[0].mxu0 %v374
  %v679 = vpop.f32.mrb[0].mxu0
  %v680 = vadd.f32 %v298, %v679
  %v681 = vpop.f32.mrb[0].mxu0
  %682 = vmatprep.mubr.f32.mxu0 0.0
  %683 = vmatmul.mubr.f32.gmra.mrb[0].mxu0 %v377
  %v684 = vpop.f32.mrb[0].mxu0
  %v685 = vadd.f32 %v298, %v684
  %v686 = vpop.f32.mrb[0].mxu0
  %687 = vmatprep.mubr.f32.mxu0 0.0
  %688 = vmatmul.mubr.f32.gmra.mrb[0].mxu0 %v380
  %v689 = vpop.f32.mrb[0].mxu0
  %v690 = vadd.f32 %v298, %v689
  %v691 = vpop.f32.mrb[0].mxu0
  %692 = vmatprep.mubr.f32.mxu0 0.0
  %693 = vmatmul.mubr.f32.gmra.mrb[0].mxu0 %v383
  %v694 = vpop.f32.mrb[0].mxu0
  %v695 = vadd.f32 %v298, %v694
  %v696 = vpop.f32.mrb[0].mxu0
  %697 = vmatprep.mubr.f32.mxu0 0.0
  %698 = vmatmul.mubr.f32.gmra.mrb[0].mxu0 %v386
  %v699 = vpop.f32.mrb[0].mxu0
  %v700 = vadd.f32 %v298, %v699
  %v701 = vpop.f32.mrb[0].mxu0
  %702 = vmatprep.mubr.f32.mxu0 0.0
  %703 = vmatmul.mubr.f32.gmra.mrb[0].mxu0 %v389
  %v704 = vpop.f32.mrb[0].mxu0
  %v705 = vadd.f32 %v298, %v704
  %v706 = vpop.f32.mrb[0].mxu0
  %707 = vmatprep.mubr.f32.mxu0 0.0
  %708 = vmatmul.mubr.f32.gmra.mrb[0].mxu0 %v392
  %v709 = vpop.f32.mrb[0].mxu0
  %v710 = vadd.f32 %v298, %v709
  %v711 = vpop.f32.mrb[0].mxu0
  %712 = vmatprep.mubr.f32.mxu0 0.0
  %713 = vmatmul.mubr.f32.gmra.mrb[0].mxu0 %v395
  %v714 = vpop.f32.mrb[0].mxu0
  %v715 = vadd.f32 %v298, %v714
  %v716 = vpop.f32.mrb[0].mxu0
  %717 = vmatprep.mubr.f32.mxu0 0.0
  %718 = vmatmul.mubr.f32.gmra.mrb[0].mxu0 %v398
  %v719 = vpop.f32.mrb[0].mxu0
  %v720 = vadd.f32 %v298, %v719
  %v721 = vpop.f32.mrb[0].mxu0
  %722 = vmatprep.mubr.f32.mxu0 0.0
  %723 = vmatmul.mubr.f32.gmra.mrb[0].mxu0 %v401
  %v724 = vpop.f32.mrb[0].mxu0
  %v725 = vadd.f32 %v298, %v724
  %v726 = vpop.f32.mrb[0].mxu0
  %727 = vmatprep.mubr.f32.mxu0 0.0
  %728 = vmatmul.mubr.f32.gmra.mrb[0].mxu0 %v404
  %v729 = vpop.f32.mrb[0].mxu0
  %v730 = vadd.f32 %v298, %v729
  %v731 = vpop.f32.mrb[0].mxu0
  %732 = vmatprep.mubr.f32.mxu0 0.0
  %733 = vmatmul.mubr.f32.gmra.mrb[0].mxu0 %v407
  %v734 = vpop.f32.mrb[0].mxu0
  %v735 = vadd.f32 %v298, %v734
  %v736 = vpop.f32.mrb[0].mxu0
  %737 = vmatprep.mubr.f32.mxu0 0.0
  %738 = vmatmul.mubr.f32.gmra.mrb[0].mxu0 %v410
  %v739 = vpop.f32.mrb[0].mxu0
  %v740 = vadd.f32 %v298, %v739
  %v741 = vpop.f32.mrb[0].mxu0
  %742 = vmatprep.mubr.f32.mxu0 0.0
  %743 = vmatmul.mubr.f32.gmra.mrb[0].mxu0 %v413
  %v744 = vpop.f32.mrb[0].mxu0
  %v745 = vadd.f32 %v298, %v744
  %v746 = vpop.f32.mrb[0].mxu0
  %747 = vmatprep.mubr.f32.mxu0 0.0
  %748 = vmatmul.mubr.f32.gmra.mrb[0].mxu0 %v416
  %v749 = vpop.f32.mrb[0].mxu0
  %v750 = vadd.f32 %v298, %v749
  %v751 = vpop.f32.mrb[0].mxu0
  %752 = vmatprep.mubr.f32.mxu0 0.0
  %753 = vmatmul.mubr.f32.gmra.mrb[0].mxu0 %v419
  %v754 = vpop.f32.mrb[0].mxu0
  %v755 = vadd.f32 %v298, %v754
  %v756 = vpop.f32.mrb[0].mxu0
  %757 = vmatprep.mubr.f32.mxu0 0.0
  %758 = vmatmul.mubr.f32.gmra.mrb[0].mxu0 %v422
  %v759 = vpop.f32.mrb[0].mxu0
  %v760 = vadd.f32 %v298, %v759
  %v761 = vpop.f32.mrb[0].mxu0
  %762 = vmatprep.mubr.f32.mxu0 0.0
  %763 = vmatmul.mubr.f32.gmra.mrb[0].mxu0 %v425
  %v764 = vpop.f32.mrb[0].mxu0
  %v765 = vadd.f32 %v298, %v764
  %v766 = vpop.f32.mrb[0].mxu0
  %767 = vmatprep.mubr.f32.mxu0 0.0
  %768 = vmatmul.mubr.f32.gmra.mrb[0].mxu0 %v428
  %v769 = vpop.f32.mrb[0].mxu0
  %v770 = vadd.f32 %v298, %v769
  %v771 = vpop.f32.mrb[0].mxu0
  %772 = vmatprep.mubr.f32.mxu0 0.0
  %773 = vmatmul.mubr.f32.gmra.mrb[0].mxu0 %v431
  %v774 = vpop.f32.mrb[0].mxu0
  %v775 = vadd.f32 %v298, %v774
  %v776 = vpop.f32.mrb[0].mxu0
  %777 = vmatprep.mubr.f32.mxu0 0.0
  %778 = vmatmul.mubr.f32.gmra.mrb[0].mxu0 %v434
  %v779 = vpop.f32.mrb[0].mxu0
  %v780 = vadd.f32 %v298, %v779
  %v781 = vpop.f32.mrb[0].mxu0
  %782 = vmatprep.mubr.f32.mxu0 0.0
  %783 = vmatmul.mubr.f32.gmra.mrb[0].mxu0 %v437
  %v784 = vpop.f32.mrb[0].mxu0
  %v785 = vadd.f32 %v298, %v784
  %v786 = vpop.f32.mrb[0].mxu0
  %787 = vmatprep.mubr.f32.mxu0 0.0
  %788 = vmatmul.mubr.f32.gmra.mrb[0].mxu0 %v440
  %v789 = vpop.f32.mrb[0].mxu0
  %v790 = vadd.f32 %v298, %v789
  %v791 = vpop.f32.mrb[0].mxu0
  %792 = vmatprep.mubr.f32.mxu0 0.0
  %793 = vmatmul.mubr.f32.gmra.mrb[0].mxu0 %v443
  %v794 = vpop.f32.mrb[0].mxu0
  %v795 = vadd.f32 %v298, %v794
  %v796 = vpop.f32.mrb[0].mxu0
  %797 = vmatprep.mubr.f32.mxu0 0.0
  %798 = vmatmul.mubr.f32.gmra.mrb[0].mxu0 %v446
  %v799 = vpop.f32.mrb[0].mxu0
  %v800 = vadd.f32 %v298, %v799
  %v801 = vpop.f32.mrb[0].mxu0
  %802 = vmatprep.mubr.f32.mxu0 0.0
  %803 = vmatmul.mubr.f32.gmra.mrb[0].mxu0 %v449
  %v804 = vpop.f32.mrb[0].mxu0
  %v805 = vadd.f32 %v298, %v804
  %v806 = vpop.f32.mrb[0].mxu0
  %807 = vmatprep.mubr.f32.mxu0 0.0
  %808 = vmatmul.mubr.f32.gmra.mrb[0].mxu0 %v452
  %v809 = vpop.f32.mrb[0].mxu0
  %v810 = vadd.f32 %v298, %v809
  %v811 = vpop.f32.mrb[0].mxu0
  %812 = vmatprep.mubr.f32.mxu0 0.0
  %813 = vmatmul.mubr.f32.gmra.mrb[0].mxu0 %v455
  %v814 = vpop.f32.mrb[0].mxu0
  %v815 = vadd.f32 %v298, %v814
  %v816 = vpop.f32.mrb[0].mxu0
  %817 = vmatprep.mubr.f32.mxu0 0.0
  %818 = vmatmul.mubr.f32.gmra.mrb[0].mxu0 %v458
  %v819 = vpop.f32.mrb[0].mxu0
  %v820 = vadd.f32 %v298, %v819
  %v821 = vpop.f32.mrb[0].mxu0
  %822 = vmatprep.mubr.f32.mxu0 0.0
  %823 = vmatmul.mubr.f32.gmra.mrb[0].mxu0 %v461
  %v824 = vpop.f32.mrb[0].mxu0
  %v825 = vadd.f32 %v298, %v824
  %v826 = vpop.f32.mrb[0].mxu0
  %827 = vmatprep.mubr.f32.mxu0 0.0
  %828 = vmatmul.mubr.f32.gmra.mrb[0].mxu0 %v464
  %v829 = vpop.f32.mrb[0].mxu0
  %v830 = vadd.f32 %v298, %v829
  %v831 = vpop.f32.mrb[0].mxu0
  %832 = vmatprep.mubr.f32.mxu0 0.0
  %833 = vmatmul.mubr.f32.gmra.mrb[0].mxu0 %v467
  %v834 = vpop.f32.mrb[0].mxu0
  %v835 = vadd.f32 %v298, %v834
  %v836 = vpop.f32.mrb[0].mxu0
  %837 = vmatprep.mubr.f32.mxu0 0.0
  %838 = vmatmul.mubr.f32.gmra.mrb[0].mxu0 %v470
  %v839 = vpop.f32.mrb[0].mxu0
  %v840 = vadd.f32 %v298, %v839
  %v841 = vpop.f32.mrb[0].mxu0
  %842 = vmatprep.mubr.f32.mxu0 0.0
  %843 = vmatmul.mubr.f32.gmra.mrb[0].mxu0 %v473
  %v844 = vpop.f32.mrb[0].mxu0
  %v845 = vadd.f32 %v298, %v844
  %v846 = vpop.f32.mrb[0].mxu0
  %847 = vmatprep.mubr.f32.mxu0 0.0
  %848 = vmatmul.mubr.f32.gmra.mrb[0].mxu0 %v476
  %v849 = vpop.f32.mrb[0].mxu0
  %v850 = vadd.f32 %v298, %v849
  %v851 = vpop.f32.mrb[0].mxu0
  %852 = vmatprep.mubr.f32.mxu0 0.0
  %853 = vmatmul.mubr.f32.gmra.mrb[0].mxu0 %v479
  %v854 = vpop.f32.mrb[0].mxu0
  %v855 = vadd.f32 %v298, %v854
  %v856 = vpop.f32.mrb[0].mxu0
  %857 = vmatprep.mubr.f32.mxu0 0.0
  %858 = vmatmul.mubr.f32.gmra.mrb[0].mxu0 %v482
  %v859 = vpop.f32.mrb[0].mxu0
  %v860 = vadd.f32 %v298, %v859
  %v861 = vpop.f32.mrb[0].mxu0
  %862 = vmatprep.mubr.f32.mxu0 0.0
  %863 = vmatmul.mubr.f32.gmra.mrb[0].mxu0 %v485
  %v864 = vpop.f32.mrb[0].mxu0
  %v865 = vadd.f32 %v298, %v864
  %v866 = vpop.f32.mrb[0].mxu0
  %867 = vmatprep.mubr.f32.mxu0 0.0
  %868 = vmatmul.mubr.f32.gmra.mrb[0].mxu0 %v488
  %v869 = vpop.f32.mrb[0].mxu0
  %v870 = vadd.f32 %v298, %v869
  %v871 = vpop.f32.mrb[0].mxu0
  %872 = vmatprep.mubr.f32.mxu0 0.0
  %873 = vmatmul.mubr.f32.gmra.mrb[0].mxu0 %v491
  %v874 = vpop.f32.mrb[0].mxu0
  %v875 = vadd.f32 %v298, %v874
  %v876 = vpop.f32.mrb[0].mxu0
  %877 = vdwg.mxu0
  %vm878 = vcmask 7168
  %879 = vst.msk [vmem:[%s5] sm:$0xff] %vm878, %v560
  %880 = vst.msk [vmem:[%s5 + $0x8] sm:$0xff] %vm878, %v565
  %881 = vst.msk [vmem:[%s5 + $0x10] sm:$0xff] %vm878, %v570
  %882 = vst.msk [vmem:[%s5 + $0x18] sm:$0xff] %vm878, %v575
  %883 = vst.msk [vmem:[%s5 + $0x20] sm:$0xff] %vm878, %v580
  %884 = vst.msk [vmem:[%s5 + $0x28] sm:$0xff] %vm878, %v585
  %885 = vst.msk [vmem:[%s5 + $0x30] sm:$0xff] %vm878, %v590
  %886 = vst.msk [vmem:[%s5 + $0x38] sm:$0xff] %vm878, %v595
  %887 = vst.msk [vmem:[%s5 + $0x40] sm:$0xff] %vm878, %v600
  %888 = vst.msk [vmem:[%s5 + $0x48] sm:$0xff] %vm878, %v605
  %889 = vst.msk [vmem:[%s5 + $0x50] sm:$0xff] %vm878, %v610
  %890 = vst.msk [vmem:[%s5 + $0x58] sm:$0xff] %vm878, %v615
  %891 = vst.msk [vmem:[%s5 + $0x60] sm:$0xff] %vm878, %v620
  %892 = vst.msk [vmem:[%s5 + $0x68] sm:$0xff] %vm878, %v625
  %893 = vst.msk [vmem:[%s5 + $0x70] sm:$0xff] %vm878, %v630
  %894 = vst.msk [vmem:[%s5 + $0x78] sm:$0xff] %vm878, %v635
  %895 = vst.msk [vmem:[%s5 + $0x80] sm:$0xff] %vm878, %v640
  %896 = vst.msk [vmem:[%s5 + $0x88] sm:$0xff] %vm878, %v645
  %897 = vst.msk [vmem:[%s5 + $0x90] sm:$0xff] %vm878, %v650
  %898 = vst.msk [vmem:[%s5 + $0x98] sm:$0xff] %vm878, %v655
  %899 = vst.msk [vmem:[%s5 + $0xa0] sm:$0xff] %vm878, %v660
  %900 = vst.msk [vmem:[%s5 + $0xa8] sm:$0xff] %vm878, %v665
  %901 = vst.msk [vmem:[%s5 + $0xb0] sm:$0xff] %vm878, %v670
  %902 = vst.msk [vmem:[%s5 + $0xb8] sm:$0xff] %vm878, %v675
  %903 = vst.msk [vmem:[%s5 + $0xc0] sm:$0xff] %vm878, %v680
  %904 = vst.msk [vmem:[%s5 + $0xc8] sm:$0xff] %vm878, %v685
  %905 = vst.msk [vmem:[%s5 + $0xd0] sm:$0xff] %vm878, %v690
  %906 = vst.msk [vmem:[%s5 + $0xd8] sm:$0xff] %vm878, %v695
  %907 = vst.msk [vmem:[%s5 + $0xe0] sm:$0xff] %vm878, %v700
  %908 = vst.msk [vmem:[%s5 + $0xe8] sm:$0xff] %vm878, %v705
  %909 = vst.msk [vmem:[%s5 + $0xf0] sm:$0xff] %vm878, %v710
  %910 = vst.msk [vmem:[%s5 + $0xf8] sm:$0xff] %vm878, %v715
  %911 = vst.msk [vmem:[%s5 + $0x100] sm:$0xff] %vm878, %v720
  %912 = vst.msk [vmem:[%s5 + $0x108] sm:$0xff] %vm878, %v725
  %913 = vst.msk [vmem:[%s5 + $0x110] sm:$0xff] %vm878, %v730
  %914 = vst.msk [vmem:[%s5 + $0x118] sm:$0xff] %vm878, %v735
  %915 = vst.msk [vmem:[%s5 + $0x120] sm:$0xff] %vm878, %v740
  %916 = vst.msk [vmem:[%s5 + $0x128] sm:$0xff] %vm878, %v745
  %917 = vst.msk [vmem:[%s5 + $0x130] sm:$0xff] %vm878, %v750
  %918 = vst.msk [vmem:[%s5 + $0x138] sm:$0xff] %vm878, %v755
  %919 = vst.msk [vmem:[%s5 + $0x140] sm:$0xff] %vm878, %v760
  %920 = vst.msk [vmem:[%s5 + $0x148] sm:$0xff] %vm878, %v765
  %921 = vst.msk [vmem:[%s5 + $0x150] sm:$0xff] %vm878, %v770
  %922 = vst.msk [vmem:[%s5 + $0x158] sm:$0xff] %vm878, %v775
  %923 = vst.msk [vmem:[%s5 + $0x160] sm:$0xff] %vm878, %v780
  %924 = vst.msk [vmem:[%s5 + $0x168] sm:$0xff] %vm878, %v785
  %925 = vst.msk [vmem:[%s5 + $0x170] sm:$0xff] %vm878, %v790
  %926 = vst.msk [vmem:[%s5 + $0x178] sm:$0xff] %vm878, %v795
  %927 = vst.msk [vmem:[%s5 + $0x180] sm:$0xff] %vm878, %v800
  %928 = vst.msk [vmem:[%s5 + $0x188] sm:$0xff] %vm878, %v805
  %929 = vst.msk [vmem:[%s5 + $0x190] sm:$0xff] %vm878, %v810
  %930 = vst.msk [vmem:[%s5 + $0x198] sm:$0xff] %vm878, %v815
  %931 = vst.msk [vmem:[%s5 + $0x1a0] sm:$0xff] %vm878, %v820
  %932 = vst.msk [vmem:[%s5 + $0x1a8] sm:$0xff] %vm878, %v825
  %933 = vst.msk [vmem:[%s5 + $0x1b0] sm:$0xff] %vm878, %v830
  %934 = vst.msk [vmem:[%s5 + $0x1b8] sm:$0xff] %vm878, %v835
  %935 = vst.msk [vmem:[%s5 + $0x1c0] sm:$0xff] %vm878, %v840
  %936 = vst.msk [vmem:[%s5 + $0x1c8] sm:$0xff] %vm878, %v845
  %937 = vst.msk [vmem:[%s5 + $0x1d0] sm:$0xff] %vm878, %v850
  %938 = vst.msk [vmem:[%s5 + $0x1d8] sm:$0xff] %vm878, %v855
  %939 = vst.msk [vmem:[%s5 + $0x1e0] sm:$0xff] %vm878, %v860
  %940 = vst.msk [vmem:[%s5 + $0x1e8] sm:$0xff] %vm878, %v865
  %941 = vst.msk [vmem:[%s5 + $0x1f0] sm:$0xff] %vm878, %v870
  %942 = vst.msk [vmem:[%s5 + $0x1f8] sm:$0xff] %vm878, %v875
  // Predicated region
  $region22: #{unet_forward.47} parent=0 // pred_check
    _
  $region23: #{unet_forward.47} parent=0 // pred_check_branch
    %944 = sbr.rel (0) target = $region25
  $region24: #{unet_forward.47} parent=0 // pred_region
    _
  $region25: #{unet_forward.47} parent=0 // pred_fallthru
    _
  // Predicated region
  $region26: #{unet_forward.47} parent=0 // pred_check
    _
  $region27: #{unet_forward.47} parent=0 // pred_check_branch
    %946 = sbr.rel (0) target = $region29
  $region28: #{unet_forward.47} parent=0 // pred_region
    _
  $region29: #{unet_forward.47} parent=0 // pred_fallthru
    _

</llo_original>
